<compile_context>
chip_gen: v5e
topology: v5e:2x2
jax: 0.10.0
libtpu: 0.0.40
codegen_flags: <defaults>
</compile_context>

<pallas_src>
import functools

import numpy as np

import jax
import jax.numpy as jnp
from jax.experimental import pallas as pl
from jax.experimental.pallas import tpu as pltpu

# ----------------------------- configuration --------------------------------
NUM_CLASSES = 6                 # torch default: 21
FEAT_DIM = 16                   # torch: 128
KEY_DIM = 16                    # torch: 128
ASPP_OUT = 32                   # torch: 256
C_BACKBONE = (16, 16, 32, 48, 64)   # torch resnet50 stages: (64, 256, 512, 1024, 2048)
ATROUS_RATES = (6, 12, 18)
BN_EPS = 1e-5

MATMUL_TM = 512                 # M tile (rows)
MATMUL_TN = 256                 # N tile (lanes); v5e: 128 is enough (4x128 MXU)
MATMUL_TK_MAX = 2048            # single K step up to this size
HW_TILE = 1024                  # spatial tile for the fused per-batch kernels


def _round_up(v, m):
    return (v + m - 1) // m * m


def _hw_tile(hw, target=HW_TILE):
    """Largest divisor of hw that is <= target and a multiple of 8 (or hw)."""
    if hw <= target:
        return hw
    for t in range(target, 7, -1):
        if hw % t == 0 and t % 8 == 0:
            return t
    return hw


# ----------------------- Pallas kernel 1: tiled matmul ----------------------
def _matmul_nok_kernel(x_ref, w_ref, b_ref, o_ref, *, relu):
    y = jnp.dot(x_ref[...], w_ref[...],
                preferred_element_type=jnp.float32) + b_ref[...]
    if relu:
        y = jnp.maximum(y, 0.0)
    o_ref[...] = y.astype(o_ref.dtype)


def _matmul_acc_kernel(x_ref, w_ref, b_ref, o_ref, acc_ref, *, relu):
    @pl.when(pl.program_id(2) == 0)
    def _():
        acc_ref[...] = jnp.zeros_like(acc_ref)

    acc_ref[...] += jnp.dot(x_ref[...], w_ref[...],
                            preferred_element_type=jnp.float32)

    @pl.when(pl.program_id(2) == pl.num_programs(2) - 1)
    def _():
        y = acc_ref[...] + b_ref[...]
        if relu:
            y = jnp.maximum(y, 0.0)
        o_ref[...] = y.astype(o_ref.dtype)


def pallas_matmul(x, w, b, relu=False, out_dtype=jnp.float32):
    """y = [relu](x @ w + b);  x:(M,K) w:(K,N) b:(N,).

    (M, N, K) grid with an f32 VMEM accumulator; MXU inputs keep x's dtype
    (callers feed bf16 patches), f32 accumulate/epilogue.  No HBM pad/cast
    copies of the operands: M/N use full blocks or cdiv grids (boundary blocks
    are masked), K is only padded in a rare fallback when no tile divides it.
    """
    M, K = x.shape
    N = w.shape[1]
    w = w.astype(x.dtype)                       # weights are small; cheap cast
    b2 = b.astype(jnp.float32).reshape(1, N)

    tm = M if M <= MATMUL_TM else MATMUL_TM
    tn = N if N <= MATMUL_TN else MATMUL_TN
    if K <= MATMUL_TK_MAX:
        tk = K
    else:
        tk = next((c for c in (2048, 1536, 1024, 768, 512, 384, 256, 128)
                   if K % c == 0), 0)
        if tk == 0:                             # rare fallback: the only pad copy
            tk = 512
            Kp = _round_up(K, tk)
            x = jnp.pad(x, ((0, 0), (0, Kp - K)))
            w = jnp.pad(w, ((0, Kp - K), (0, 0)))
            K = Kp
    nk = K // tk

    if nk == 1:
        kernel = functools.partial(_matmul_nok_kernel, relu=relu)
        scratch = []
    else:
        kernel = functools.partial(_matmul_acc_kernel, relu=relu)
        scratch = [pltpu.VMEM((tm, tn), jnp.float32)]

    grid = (pl.cdiv(M, tm), pl.cdiv(N, tn), nk)
    return pl.pallas_call(
        kernel,
        grid=grid,
        in_specs=[
            pl.BlockSpec((tm, tk), lambda i, j, k: (i, k)),
            pl.BlockSpec((tk, tn), lambda i, j, k: (k, j)),
            pl.BlockSpec((1, tn), lambda i, j, k: (0, j)),
        ],
        out_specs=pl.BlockSpec((tm, tn), lambda i, j, k: (i, j)),
        out_shape=jax.ShapeDtypeStruct((M, N), out_dtype),
        scratch_shapes=scratch,
        compiler_params=pltpu.CompilerParams(
            dimension_semantics=("parallel", "parallel", "arbitrary"),
            vmem_limit_bytes=32 * 1024 * 1024),
    )(x, w, b2)


# ------------- Pallas kernel 2: classifier-argmax class prototypes ----------
def _proto_kernel(feat_ref, wcls_ref, bcls_ref, mp_ref, proto_ref,
                  sum_ref, cnt_ref):
    t = pl.program_id(1)

    @pl.when(t == 0)
    def _():
        sum_ref[...] = jnp.zeros_like(sum_ref)
        cnt_ref[...] = jnp.zeros_like(cnt_ref)

    feat = feat_ref[0]                                     # (tHW, C) bf16
    logits = jnp.dot(feat, wcls_ref[...],
                     preferred_element_type=jnp.float32) + bcls_ref[...]
    thw, nc = logits.shape
    # first-index argmax over the class channel (matches torch.argmax)
    mx = jnp.max(logits, axis=-1, keepdims=True)
    lane = jax.lax.broadcasted_iota(jnp.int32, (thw, nc), 1)
    cand = jnp.where(logits == mx, lane, nc)
    cls_id = jnp.min(cand, axis=-1, keepdims=True)         # (tHW, 1)
    oh = (cls_id == lane).astype(jnp.float32) * mp_ref[0]  # (tHW, NC)

    # per-class feature sums (transposed matmul) and pixel counts (ones column)
    sum_ref[...] += jax.lax.dot_general(
        oh, feat.astype(jnp.float32), (((0,), (0,)), ((), ())),
        preferred_element_type=jnp.float32)                # (NC, C)
    ones_col = jnp.ones((thw, 1), jnp.float32)
    cnt_ref[...] += jax.lax.dot_general(
        oh, ones_col, (((0,), (0,)), ((), ())),
        preferred_element_type=jnp.float32)                # (NC, 1)

    @pl.when(t == pl.num_programs(1) - 1)
    def _():
        # exact reciprocal; absent class => sums == 0 => exactly the torch
        # zero_prototype (and matches sums / (count + 1e-5) otherwise).
        proto_ref[0] = sum_ref[...] * (1.0 / (cnt_ref[...] + 1e-5))


def pallas_prototypes(feat, wcls, bcls, mask_param):
    """feat:(B,HW,C) bf16, wcls:(C,NC), bcls:(NC,), mask_param:(B,HW,1) -> (B,NC,C)."""
    B, HW, C = feat.shape
    NC = wcls.shape[1]
    thw = _hw_tile(HW)
    # TODO(synk): on v7x with small B, split HW tiles across the two TensorCores
    # with per-core partial accumulators and a tiny combine.
    return pl.pallas_call(
        _proto_kernel,
        grid=(B, HW // thw),
        in_specs=[
            pl.BlockSpec((1, thw, C), lambda b, t: (b, t, 0)),
            pl.BlockSpec((C, NC), lambda b, t: (0, 0)),
            pl.BlockSpec((1, NC), lambda b, t: (0, 0)),
            pl.BlockSpec((1, thw, 1), lambda b, t: (b, t, 0)),
        ],
        out_specs=pl.BlockSpec((1, NC, C), lambda b, t: (b, 0, 0)),
        out_shape=jax.ShapeDtypeStruct((B, NC, C), jnp.float32),
        scratch_shapes=[pltpu.VMEM((NC, C), jnp.float32),
                        pltpu.VMEM((NC, 1), jnp.float32)],
        compiler_params=pltpu.CompilerParams(
            dimension_semantics=("parallel", "arbitrary")),
    )(feat, wcls.astype(feat.dtype), bcls.reshape(1, NC).astype(jnp.float32),
      mask_param.astype(jnp.float32))


# ------ Pallas kernel 3: key/query similarity + re-weighting + classifier ---
def _attn_kernel(feat_ref, q_ref, wk_ref, bk_ref, wcls_ref, bcls_ref,
                 out_ref, wfeat_ref):
    feat = feat_ref[0]                                     # (tHW, C) bf16
    q = q_ref[0]                                           # (NC, Dk) f32
    k = jnp.dot(feat, wk_ref[...],
                preferred_element_type=jnp.float32) + bk_ref[...]   # (tHW, Dk)
    # similarity laid out (tHW, NC) so softmax-over-classes runs on lanes
    sim = jax.lax.dot_general(k, q, (((1,), (1,)), ((), ())),
                              preferred_element_type=jnp.float32)
    m = jnp.max(sim, axis=-1, keepdims=True)
    e = jnp.exp(sim - m)
    p = e / jnp.sum(e, axis=-1, keepdims=True)             # exact softmax
    wmax = jnp.max(p, axis=-1, keepdims=True)              # (tHW, 1)
    wfeat = feat.astype(jnp.float32) * wmax
    wfeat_ref[0] = wfeat
    # classifier weight is zero-padded to 128 classes -> lane-dense store
    out_ref[0] = jnp.dot(wfeat, wcls_ref[...],
                         preferred_element_type=jnp.float32) + bcls_ref[...]


def pallas_attention(feat, q, wk, bk, wcls, bcls):
    B, HW, C = feat.shape
    NC, DK = q.shape[1], q.shape[2]
    NCP = _round_up(max(NC, 128), 128)                     # lane-dense class pad
    thw = _hw_tile(HW)
    wcls_pad = jnp.zeros((C, NCP), jnp.float32).at[:, :NC].set(
        wcls.astype(jnp.float32))
    bcls_pad = jnp.zeros((1, NCP), jnp.float32).at[:, :NC].set(
        bcls.reshape(1, NC).astype(jnp.float32))
    return pl.pallas_call(
        _attn_kernel,
        grid=(B, HW // thw),
        in_specs=[
            pl.BlockSpec((1, thw, C), lambda b, t: (b, t, 0)),
            pl.BlockSpec((1, NC, DK), lambda b, t: (b, 0, 0)),
            pl.BlockSpec((C, DK), lambda b, t: (0, 0)),
            pl.BlockSpec((1, DK), lambda b, t: (0, 0)),
            pl.BlockSpec((C, NCP), lambda b, t: (0, 0)),
            pl.BlockSpec((1, NCP), lambda b, t: (0, 0)),
        ],
        out_specs=(
            pl.BlockSpec((1, thw, NCP), lambda b, t: (b, t, 0)),
            pl.BlockSpec((1, thw, C), lambda b, t: (b, t, 0)),
        ),
        out_shape=(
            jax.ShapeDtypeStruct((B, HW, NCP), jnp.float32),
            jax.ShapeDtypeStruct((B, HW, C), jnp.float32),
        ),
        compiler_params=pltpu.CompilerParams(
            dimension_semantics=("parallel", "parallel")),
    )(feat, q.astype(jnp.float32), wk.astype(feat.dtype),
      bk.reshape(1, DK).astype(jnp.float32), wcls_pad, bcls_pad)


# ------ Pallas kernel 4: fused ASPP projection (concat-free 1x1 conv) -------
def _aspp_project_kernel(b1_ref, b2_ref, b3_ref, w1_ref, w2_ref, w3_ref,
                         bias_ref, o_ref):
    acc = jnp.dot(b1_ref[0], w1_ref[...], preferred_element_type=jnp.float32)
    acc += jnp.dot(b2_ref[0], w2_ref[...], preferred_element_type=jnp.float32)
    acc += jnp.dot(b3_ref[0], w3_ref[...], preferred_element_type=jnp.float32)
    acc += bias_ref[0]          # per-batch row: pooled branch + folded BN bias
    o_ref[0] = jnp.maximum(acc, 0.0).astype(o_ref.dtype)


def pallas_aspp_project(branches, w_splits, bias_rows, out_dtype=jnp.bfloat16):
    """project(cat(branches, pool)) without materializing the concat in HBM."""
    B, H, W, C = branches[0].shape
    Cout = w_splits[0].shape[1]
    HW = H * W
    thw = _hw_tile(HW)
    feats = [br.reshape(B, HW, C) for br in branches]      # already bf16 upstream
    ws = [wv.astype(branches[0].dtype) for wv in w_splits]
    bias3 = bias_rows.reshape(B, 1, Cout).astype(jnp.float32)
    y = pl.pallas_call(
        _aspp_project_kernel,
        grid=(B, HW // thw),
        in_specs=[pl.BlockSpec((1, thw, C), lambda b, t: (b, t, 0))] * 3
        + [pl.BlockSpec((C, Cout), lambda b, t: (0, 0))] * 3
        + [pl.BlockSpec((1, 1, Cout), lambda b, t: (b, 0, 0))],
        out_specs=pl.BlockSpec((1, thw, Cout), lambda b, t: (b, t, 0)),
        out_shape=jax.ShapeDtypeStruct((B, HW, Cout), out_dtype),
        compiler_params=pltpu.CompilerParams(
            dimension_semantics=("parallel", "parallel")),
    )(*feats, *ws, bias3)
    return y.reshape(B, H, W, Cout)


# ------ Pallas kernel 5: fused stride-2 ConvTranspose2d (parity decomposed) -
def _deconv_kernel(x00_ref, x01_ref, x10_ref, x11_ref, wall_ref, weo_ref,
                   woe_ref, woo1_ref, woo2_ref, woo3_ref, b4_ref, o_ref, *, C):
    x00 = x00_ref[0]
    x01 = x01_ref[0]
    x10 = x10_ref[0]
    x11 = x11_ref[0]
    # x00 feeds all four parities through one wide matmul (lane order ee|eo|oe|oo)
    base = jnp.dot(x00, wall_ref[...], preferred_element_type=jnp.float32)
    eo = base[:, C:2 * C] + jnp.dot(x01, weo_ref[...],
                                    preferred_element_type=jnp.float32)
    oe = base[:, 2 * C:3 * C] + jnp.dot(x10, woe_ref[...],
                                        preferred_element_type=jnp.float32)
    oo = (base[:, 3 * C:]
          + jnp.dot(x01, woo1_ref[...], preferred_element_type=jnp.float32)
          + jnp.dot(x10, woo2_ref[...], preferred_element_type=jnp.float32)
          + jnp.dot(x11, woo3_ref[...], preferred_element_type=jnp.float32))
    y = jnp.concatenate([base[:, :C], eo, oe, oo], axis=-1) + b4_ref[...]
    o_ref[0] = jnp.maximum(y, 0.0).astype(o_ref.dtype)


def pallas_deconv_s2(x_nhwc, wt, bias, out_dtype=jnp.bfloat16):
    """PyTorch ConvTranspose2d(k=3, stride=2, padding=1, output_padding=1) + ReLU.

    One fused kernel: the shared x tile drives all four output parities; the
    result is a lane-dense (HW, 4*Cout) slab interleaved by a single XLA
    reshape/transpose (no strided scatters).  wt is torch layout (Cin,Cout,3,3).
    """
    B, H, W, Cin = x_nhwc.shape
    Cout = wt.shape[1]
    HW = H * W
    x = x_nhwc.astype(jnp.bfloat16)
    # TODO(synk): the three shifted copies could be removed entirely with an
    # in-kernel pltpu.roll + boundary mask (zero extra HBM traffic).
    xp = jnp.pad(x, ((0, 0), (0, 1), (0, 1), (0, 0)))
    x00 = x.reshape(B, HW, Cin)
    x01 = xp[:, :H, 1:, :].reshape(B, HW, Cin)              # x[m, n+1]
    x10 = xp[:, 1:, :W, :].reshape(B, HW, Cin)              # x[m+1, n]
    x11 = xp[:, 1:, 1:, :].reshape(B, HW, Cin)               # x[m+1, n+1]

    Wk = jnp.transpose(wt, (2, 3, 0, 1)).astype(jnp.bfloat16)   # (kh,kw,Cin,Cout)
    w_all = jnp.concatenate([Wk[1, 1], Wk[1, 2], Wk[2, 1], Wk[2, 2]], axis=-1)
    b4 = jnp.tile(bias.reshape(1, Cout).astype(jnp.float32), (1, 4))
    thw = _hw_tile(HW)

    out4 = pl.pallas_call(
        functools.partial(_deconv_kernel, C=Cout),
        grid=(B, HW // thw),
        in_specs=[pl.BlockSpec((1, thw, Cin), lambda b, t: (b, t, 0))] * 4
        + [pl.BlockSpec((Cin, 4 * Cout), lambda b, t: (0, 0))]
        + [pl.BlockSpec((Cin, Cout), lambda b, t: (0, 0))] * 5
        + [pl.BlockSpec((1, 4 * Cout), lambda b, t: (0, 0))],
        out_specs=pl.BlockSpec((1, thw, 4 * Cout), lambda b, t: (b, t, 0)),
        out_shape=jax.ShapeDtypeStruct((B, HW, 4 * Cout), out_dtype),
        compiler_params=pltpu.CompilerParams(
            dimension_semantics=("parallel", "parallel")),
    )(x00, x01, x10, x11, w_all, Wk[1, 0], Wk[0, 1], Wk[2, 0], Wk[0, 2],
      Wk[0, 0], b4)

    out6 = out4.reshape(B, H, W, 2, 2, Cout)                 # (b, m, n, ph, pw, c)
    return jnp.transpose(out6, (0, 1, 3, 2, 4, 5)).reshape(B, 2 * H, 2 * W, Cout)


# ------ Pallas kernel 6: fused bilinear (align_corners=True) upsample -------
def _upsample_kernel(x_ref, rh_ref, rwt_ref, o_ref, *, sb):
    rh = rh_ref[...]
    rwt = rwt_ref[...]
    for s in range(sb):                                      # static unroll
        t = jnp.dot(x_ref[s], rwt, preferred_element_type=jnp.float32)
        o_ref[s] = jnp.dot(rh, t, preferred_element_type=jnp.float32)


def _interp_matrix(out_size, in_size):
    """Bilinear (align_corners=True) resampling matrix (out_size, in_size)."""
    if in_size == 1:
        return jnp.ones((out_size, 1), jnp.float32)
    src = np.arange(out_size, dtype=np.float64) * (in_size - 1) / max(out_size - 1, 1)
    i0 = np.clip(np.floor(src).astype(np.int64), 0, in_size - 2)
    frac = (src - i0).astype(np.float32)
    R = np.zeros((out_size, in_size), np.float32)
    rows = np.arange(out_size)
    R[rows, i0] += 1.0 - frac
    R[rows, i0 + 1] += frac
    return jnp.asarray(R)


def bilinear_upsample_chw(x_slabs, out_h, out_w, slabs_per_step=1):
    """x_slabs:(S,H,W) -> (S,out_h,out_w) as Rh @ X @ Rw^T, several slabs/step."""
    S, H, W = x_slabs.shape
    sb = slabs_per_step if (slabs_per_step > 0 and S % slabs_per_step == 0) else 1
    Rh = _interp_matrix(out_h, H)          # (out_h, H)
    Rwt = _interp_matrix(out_w, W).T       # (W, out_w)
    return pl.pallas_call(
        functools.partial(_upsample_kernel, sb=sb),
        grid=(S // sb,),
        in_specs=[
            pl.BlockSpec((sb, H, W), lambda s: (s, 0, 0)),
            pl.BlockSpec((out_h, H), lambda s: (0, 0)),
            pl.BlockSpec((W, out_w), lambda s: (0, 0)),
        ],
        out_specs=pl.BlockSpec((sb, out_h, out_w), lambda s: (s, 0, 0)),
        out_shape=jax.ShapeDtypeStruct((S, out_h, out_w), jnp.float32),
        compiler_params=pltpu.CompilerParams(dimension_semantics=("parallel",)),
    )(x_slabs.astype(jnp.float32), Rh, Rwt)


# ------------------------------ conv helpers ---------------------------------
def _im2col(x, kh, kw, stride, dilation, padding):
    """x:(B,H,W,C) -> patches (B,Ho,Wo,kh*kw*C); taps ordered row-major (kh,kw)."""
    # TODO(synk): replace HBM im2col with a direct-conv Pallas kernel (tap loop
    # over a K grid axis) for production resolutions to cut the 9x/49x traffic.
    B, H, W, C = x.shape
    xp = jnp.pad(x, ((0, 0), (padding, padding), (padding, padding), (0, 0)))
    Hp, Wp = H + 2 * padding, W + 2 * padding
    Ho = (Hp - dilation * (kh - 1) - 1) // stride + 1
    Wo = (Wp - dilation * (kw - 1) - 1) // stride + 1
    cols = []
    for i in range(kh):
        for j in range(kw):
            cols.append(xp[:, i * dilation:i * dilation + (Ho - 1) * stride + 1:stride,
                              j * dilation:j * dilation + (Wo - 1) * stride + 1:stride, :])
    return jnp.concatenate(cols, axis=-1), Ho, Wo


def conv2d(x, w, b, stride=1, dilation=1, padding=0, relu=False,
           out_dtype=jnp.float32):
    """w:(kh,kw,Cin,Cout), b:(Cout,). bf16 patches feed the tiled Pallas matmul."""
    kh, kw, cin, cout = w.shape
    patches, Ho, Wo = _im2col(x.astype(jnp.bfloat16), kh, kw, stride, dilation, padding)
    B = x.shape[0]
    y = pallas_matmul(patches.reshape(B * Ho * Wo, kh * kw * cin),
                      w.reshape(kh * kw * cin, cout), b, relu=relu,
                      out_dtype=out_dtype)
    return y.reshape(B, Ho, Wo, cout)


def fold_bn(w, bn):
    """Fold inference-mode BatchNorm into conv weight (…,Cout) -> (w', bias')."""
    gamma, beta, mean, var = bn
    scale = gamma / jnp.sqrt(var + BN_EPS)
    return w * scale, beta - mean * scale


def maxpool_3x3_s2_p1(x):
    # PyTorch MaxPool2d(3, stride=2, padding=1) — pooling glue (not a matmul hot path)
    xp = jnp.pad(x, ((0, 0), (1, 1), (1, 1), (0, 0)), constant_values=-np.inf)
    return jax.lax.reduce_window(xp, jnp.asarray(-np.inf, xp.dtype), jax.lax.max,
                                 (1, 3, 3, 1), (1, 2, 2, 1), 'VALID')


# ------------------------------- model pieces --------------------------------
def backbone(x, p):
    # TODO(synk): stand-in for the pretrained ResNet-50 backbone (checkpoint load
    # is out of scope); same stem + stride schedule (/32), one conv-bn-relu per stage.
    w, b = fold_bn(p['conv1_w'], p['bn1'])
    x = conv2d(x, w, b, stride=2, padding=3, relu=True, out_dtype=jnp.bfloat16)
    x = maxpool_3x3_s2_p1(x)
    for i, s in enumerate((1, 2, 2, 2)):
        w, b = fold_bn(p[f'layer{i + 1}_w'], p[f'bn_layer{i + 1}'])
        x = conv2d(x, w, b, stride=s, padding=1, relu=True, out_dtype=jnp.bfloat16)
    return x


def aspp_module(x, p):
    branches = []
    for r, (wbr, bnbr) in zip(ATROUS_RATES, p['branches']):
        wf, bf = fold_bn(wbr, bnbr)
        branches.append(conv2d(x, wf, bf, stride=1, dilation=r, padding=r,
                               relu=True, out_dtype=jnp.bfloat16))
    # image-pooling branch: AdaptiveAvgPool2d(1) -> 1x1 conv -> BN -> ReLU
    pooled = jnp.mean(x.astype(jnp.float32), axis=(1, 2))         # (B, Cin)
    wp, bnp_ = p['pool']
    wpf, bpf = fold_bn(wp, bnp_)
    pooled_feat = pallas_matmul(pooled, wpf, bpf, relu=True)      # (B, ASPP_OUT)
    # projection 1x1 conv (+BN+ReLU), fused: sum of per-branch matmuls; the pooled
    # branch (constant over H,W) folds into a per-batch bias row.
    wpr, bnpr = p['project']
    wprf, bprj = fold_bn(wpr, bnpr)                               # (4C, C), (C,)
    w_sl = [wprf[i * ASPP_OUT:(i + 1) * ASPP_OUT] for i in range(4)]
    bias_rows = pallas_matmul(pooled_feat, w_sl[3], bprj)         # (B, C) f32
    return pallas_aspp_project(branches, w_sl[:3], bias_rows)     # bf16 NHWC


def deeplab_forward(params, x_nchw, mask_param=None):
    # TODO(synk): DomainLabel==1 / external ProtoInput path not implemented
    # (data-dependent Python control flow); this is the DomainLabel==0 path.
    B, _, h, w = x_nchw.shape
    x = jnp.transpose(x_nchw, (0, 2, 3, 1))                       # NCHW -> NHWC
    x4 = backbone(x, params['backbone'])                          # bf16
    a = aspp_module(x4, params['aspp'])                           # bf16
    assp_features = pallas_deconv_s2(a, params['deconv_w'], params['deconv_b'])
    _, Hf, Wf, C = assp_features.shape
    HW = Hf * Wf
    feat = assp_features.reshape(B, HW, C)                        # bf16, read twice

    mp = (jnp.ones((B, HW, 1), jnp.float32) if mask_param is None
          else mask_param.reshape(B, HW, 1).astype(jnp.float32))

    wcls, bcls = params['cls_w'], params['cls_b']
    # prototypes from the pseudo-label argmax mask (fused Pallas kernel)
    protos = pallas_prototypes(feat, wcls, bcls, mp)              # (B, NC, C) f32

    # per-class query projection: tiny batched contraction -> plain XLA einsum
    qout = (jnp.einsum('bnc,nck->bnk', protos, params['query_w'])
            + params['query_b'][None])                            # "GetProto"

    out_pad, wfeat_flat = pallas_attention(
        feat, qout, params['key_w'], params['key_b'], wcls, bcls)
    out_flat = out_pad[:, :, :NUM_CLASSES]

    out_nhwc = out_flat.reshape(B, Hf, Wf, NUM_CLASSES)
    out_nchw = jnp.transpose(out_nhwc, (0, 3, 1, 2))
    xup = bilinear_upsample_chw(out_nchw.reshape(B * NUM_CLASSES, Hf, Wf),
                                h // 4, w // 4,
                                slabs_per_step=NUM_CLASSES
                                ).reshape(B, NUM_CLASSES, h // 4, w // 4)
    asspF = jnp.transpose(assp_features, (0, 3, 1, 2)).astype(jnp.float32)
    asspFW = jnp.transpose(wfeat_flat.reshape(B, Hf, Wf, C), (0, 3, 1, 2))
    proto_list = [protos[:, i, :] for i in range(NUM_CLASSES)]

    return ({'out': out_nchw, 'outUp': xup},
            {'CurrentPorotype': None, 'GetProto': qout, 'query': proto_list},
            {'asspF': asspF, 'asspFW': asspFW})


# ------------------------------ parameter init --------------------------------
def init_params(key):
    def nrm(k, shape, fan_in):
        return jax.random.normal(k, shape, jnp.float32) / jnp.sqrt(float(fan_in))

    def bn_init(c):   # (gamma, beta, running_mean, running_var)
        return (jnp.ones(c), jnp.zeros(c), jnp.zeros(c), jnp.ones(c))

    ks = iter(jax.random.split(key, 32))
    C0, C1, C2, C3, C4 = C_BACKBONE
    backbone_p = {
        'conv1_w': nrm(next(ks), (7, 7, 3, C0), 7 * 7 * 3), 'bn1': bn_init(C0),
        'layer1_w': nrm(next(ks), (3, 3, C0, C1), 9 * C0), 'bn_layer1': bn_init(C1),
        'layer2_w': nrm(next(ks), (3, 3, C1, C2), 9 * C1), 'bn_layer2': bn_init(C2),
        'layer3_w': nrm(next(ks), (3, 3, C2, C3), 9 * C2), 'bn_layer3': bn_init(C3),
        'layer4_w': nrm(next(ks), (3, 3, C3, C4), 9 * C3), 'bn_layer4': bn_init(C4),
    }
    aspp_p = {
        'branches': [(nrm(next(ks), (3, 3, C4, ASPP_OUT), 9 * C4), bn_init(ASPP_OUT))
                     for _ in ATROUS_RATES],
        'pool': (nrm(next(ks), (C4, ASPP_OUT), C4), bn_init(ASPP_OUT)),
        'project': (nrm(next(ks), ((len(ATROUS_RATES) + 1) * ASPP_OUT, ASPP_OUT),
                        (len(ATROUS_RATES) + 1) * ASPP_OUT), bn_init(ASPP_OUT)),
    }
    return {
        'backbone': backbone_p,
        'aspp': aspp_p,
        # ConvTranspose2d weight in torch layout (Cin, Cout, kh, kw)
        'deconv_w': nrm(next(ks), (ASPP_OUT, FEAT_DIM, 3, 3), 9 * ASPP_OUT),
        'deconv_b': jnp.zeros(FEAT_DIM),
        'cls_w': nrm(next(ks), (FEAT_DIM, NUM_CLASSES), FEAT_DIM),
        'cls_b': jnp.zeros(NUM_CLASSES),
        'key_w': nrm(next(ks), (FEAT_DIM, KEY_DIM), FEAT_DIM),
        'key_b': jnp.zeros(KEY_DIM),
        'query_w': nrm(next(ks), (NUM_CLASSES, FEAT_DIM, KEY_DIM), FEAT_DIM),
        'query_b': jnp.zeros((NUM_CLASSES, KEY_DIM)),
    }


# ----------------------------------- main --------------------------------------
if __name__ == "__main__":
    key = jax.random.PRNGKey(0)
    pkey, xkey = jax.random.split(key)
    params = init_params(pkey)
    x = jax.random.normal(xkey, (2, 3, 64, 64), jnp.float32)   # NCHW, like PyTorch

    fwd = jax.jit(functools.partial(deeplab_forward, params))
    seg, proto_out, feats = fwd(x)
    jax.block_until_ready(seg['out'])
    jax.block_until_ready(seg['outUp'])
    jax.block_until_ready(proto_out['GetProto'])
    jax.block_until_ready(feats['asspFW'])

    assert seg['out'].shape == (2, NUM_CLASSES, 4, 4)
    assert seg['outUp'].shape == (2, NUM_CLASSES, 16, 16)
    assert proto_out['GetProto'].shape == (2, NUM_CLASSES, KEY_DIM)
    assert feats['asspF'].shape == (2, FEAT_DIM, 4, 4)
    assert feats['asspFW'].shape == (2, FEAT_DIM, 4, 4)
    assert len(proto_out['query']) == NUM_CLASSES
    assert proto_out['query'][0].shape == (2, FEAT_DIM)
    print("KERNEL_OK")
</pallas_src>

<mosaic_0001>
module attributes {stable_mosaic.version = 11 : i64} {
  func.func @_matmul_nok_kernel(%arg0: i32, %arg1: i32, %arg2: i32, %arg3: memref<512x147xbf16, #tpu.memory_space<vmem>>, %arg4: memref<147x16xbf16, #tpu.memory_space<vmem>>, %arg5: memref<1x16xf32, #tpu.memory_space<vmem>>, %arg6: memref<512x16xbf16, #tpu.memory_space<vmem>>) attributes {dimension_semantics = [#tpu.dimension_semantics<parallel>, #tpu.dimension_semantics<parallel>, #tpu.dimension_semantics<arbitrary>], iteration_bounds = array<i64: 4, 1, 1>, scalar_prefetch = 0 : i64, scratch_operands = 0 : i64, tpu.core_type = #tpu.core_type<tc>, window_params = [{transform_indices = @transform_0, window_bounds = array<i64: 512, 147>}, {transform_indices = @transform_1, window_bounds = array<i64: 147, 16>}, {transform_indices = @transform_2, window_bounds = array<i64: 1, 16>}, {transform_indices = @transform_3, window_bounds = array<i64: 512, 16>}]} {
    %c0 = arith.constant 0 : index
    %c0_0 = arith.constant 0 : index
    %0 = vector.load %arg3[%c0, %c0_0] : memref<512x147xbf16, #tpu.memory_space<vmem>>, vector<512x147xbf16>
    %c0_1 = arith.constant 0 : index
    %c0_2 = arith.constant 0 : index
    %1 = vector.load %arg4[%c0_1, %c0_2] : memref<147x16xbf16, #tpu.memory_space<vmem>>, vector<147x16xbf16>
    %cst = arith.constant dense<0.000000e+00> : vector<512x16xf32>
    %2 = tpu.matmul %0, %1, %cst {dimension_numbers = #tpu.dot_dimension_numbers<[1], [0], [0], [1], [0, 0, 1, 1], [], []>} : vector<512x147xbf16>, vector<147x16xbf16>, vector<512x16xf32> -> vector<512x16xf32>
    %c0_3 = arith.constant 0 : index
    %c0_4 = arith.constant 0 : index
    %3 = vector.load %arg5[%c0_3, %c0_4] : memref<1x16xf32, #tpu.memory_space<vmem>>, vector<1x16xf32>
    %4 = vector.broadcast %3 : vector<1x16xf32> to vector<512x16xf32>
    %5 = arith.addf %2, %4 : vector<512x16xf32>
    %cst_5 = arith.constant 0.000000e+00 : f32
    %6 = vector.broadcast %cst_5 : f32 to vector<512x16xf32>
    %7 = arith.maximumf %5, %6 : vector<512x16xf32>
    %8 = arith.truncf %7 : vector<512x16xf32> to vector<512x16xbf16>
    %c0_6 = arith.constant 0 : index
    %c0_7 = arith.constant 0 : index
    %9 = vector.load %arg6[%c0_6, %c0_7] : memref<512x16xbf16, #tpu.memory_space<vmem>>, vector<512x16xbf16>
    tpu.vector_store %arg6[%c0_6, %c0_7], %8 {strides = array<i32>} : memref<512x16xbf16, #tpu.memory_space<vmem>>, vector<512x16xbf16>,
    return
  }
  func.func @transform_0(%arg0: i32, %arg1: i32, %arg2: i32) -> (i32, i32) {
    %c0_i32 = arith.constant 0 : i32
    return %arg0, %arg2 : i32, i32
  }
  func.func @transform_1(%arg0: i32, %arg1: i32, %arg2: i32) -> (i32, i32) {
    %c0_i32 = arith.constant 0 : i32
    return %arg2, %arg1 : i32, i32
  }
  func.func @transform_2(%arg0: i32, %arg1: i32, %arg2: i32) -> (i32, i32) {
    %c0_i32 = arith.constant 0 : i32
    %c0_i32_0 = arith.constant 0 : i32
    return %c0_i32, %arg1 : i32, i32
  }
  func.func @transform_3(%arg0: i32, %arg1: i32, %arg2: i32) -> (i32, i32) {
    %c0_i32 = arith.constant 0 : i32
    return %arg0, %arg1 : i32, i32
  }
}

module attributes {stable_mosaic.version = 11 : i64} {
  func.func @_matmul_nok_kernel(%arg0: i32, %arg1: i32, %arg2: i32, %arg3: memref<512x144xbf16, #tpu.memory_space<vmem>>, %arg4: memref<144x16xbf16, #tpu.memory_space<vmem>>, %arg5: memref<1x16xf32, #tpu.memory_space<vmem>>, %arg6: memref<512x16xbf16, #tpu.memory_space<vmem>>) attributes {dimension_semantics = [#tpu.dimension_semantics<parallel>, #tpu.dimension_semantics<parallel>, #tpu.dimension_semantics<arbitrary>], iteration_bounds = array<i64: 1, 1, 1>, scalar_prefetch = 0 : i64, scratch_operands = 0 : i64, tpu.core_type = #tpu.core_type<tc>, window_params = [{transform_indices = @transform_0, window_bounds = array<i64: 512, 144>}, {transform_indices = @transform_1, window_bounds = array<i64: 144, 16>}, {transform_indices = @transform_2, window_bounds = array<i64: 1, 16>}, {transform_indices = @transform_3, window_bounds = array<i64: 512, 16>}]} {
    %c0 = arith.constant 0 : index
    %c0_0 = arith.constant 0 : index
    %0 = vector.load %arg3[%c0, %c0_0] : memref<512x144xbf16, #tpu.memory_space<vmem>>, vector<512x144xbf16>
    %c0_1 = arith.constant 0 : index
    %c0_2 = arith.constant 0 : index
    %1 = vector.load %arg4[%c0_1, %c0_2] : memref<144x16xbf16, #tpu.memory_space<vmem>>, vector<144x16xbf16>
    %cst = arith.constant dense<0.000000e+00> : vector<512x16xf32>
    %2 = tpu.matmul %0, %1, %cst {dimension_numbers = #tpu.dot_dimension_numbers<[1], [0], [0], [1], [0, 0, 1, 1], [], []>} : vector<512x144xbf16>, vector<144x16xbf16>, vector<512x16xf32> -> vector<512x16xf32>
    %c0_3 = arith.constant 0 : index
    %c0_4 = arith.constant 0 : index
    %3 = vector.load %arg5[%c0_3, %c0_4] : memref<1x16xf32, #tpu.memory_space<vmem>>, vector<1x16xf32>
    %4 = vector.broadcast %3 : vector<1x16xf32> to vector<512x16xf32>
    %5 = arith.addf %2, %4 : vector<512x16xf32>
    %cst_5 = arith.constant 0.000000e+00 : f32
    %6 = vector.broadcast %cst_5 : f32 to vector<512x16xf32>
    %7 = arith.maximumf %5, %6 : vector<512x16xf32>
    %8 = arith.truncf %7 : vector<512x16xf32> to vector<512x16xbf16>
    %c0_6 = arith.constant 0 : index
    %c0_7 = arith.constant 0 : index
    %9 = vector.load %arg6[%c0_6, %c0_7] : memref<512x16xbf16, #tpu.memory_space<vmem>>, vector<512x16xbf16>
    tpu.vector_store %arg6[%c0_6, %c0_7], %8 {strides = array<i32>} : memref<512x16xbf16, #tpu.memory_space<vmem>>, vector<512x16xbf16>,
    return
  }
  func.func @transform_0(%arg0: i32, %arg1: i32, %arg2: i32) -> (i32, i32) {
    %c0_i32 = arith.constant 0 : i32
    return %arg0, %arg2 : i32, i32
  }
  func.func @transform_1(%arg0: i32, %arg1: i32, %arg2: i32) -> (i32, i32) {
    %c0_i32 = arith.constant 0 : i32
    return %arg2, %arg1 : i32, i32
  }
  func.func @transform_2(%arg0: i32, %arg1: i32, %arg2: i32) -> (i32, i32) {
    %c0_i32 = arith.constant 0 : i32
    %c0_i32_0 = arith.constant 0 : i32
    return %c0_i32, %arg1 : i32, i32
  }
  func.func @transform_3(%arg0: i32, %arg1: i32, %arg2: i32) -> (i32, i32) {
    %c0_i32 = arith.constant 0 : i32
    return %arg0, %arg1 : i32, i32
  }
}

module attributes {stable_mosaic.version = 11 : i64} {
  func.func @_matmul_nok_kernel(%arg0: i32, %arg1: i32, %arg2: i32, %arg3: memref<128x144xbf16, #tpu.memory_space<vmem>>, %arg4: memref<144x32xbf16, #tpu.memory_space<vmem>>, %arg5: memref<1x32xf32, #tpu.memory_space<vmem>>, %arg6: memref<128x32xbf16, #tpu.memory_space<vmem>>) attributes {dimension_semantics = [#tpu.dimension_semantics<parallel>, #tpu.dimension_semantics<parallel>, #tpu.dimension_semantics<arbitrary>], iteration_bounds = array<i64: 1, 1, 1>, scalar_prefetch = 0 : i64, scratch_operands = 0 : i64, tpu.core_type = #tpu.core_type<tc>, window_params = [{transform_indices = @transform_0, window_bounds = array<i64: 128, 144>}, {transform_indices = @transform_1, window_bounds = array<i64: 144, 32>}, {transform_indices = @transform_2, window_bounds = array<i64: 1, 32>}, {transform_indices = @transform_3, window_bounds = array<i64: 128, 32>}]} {
    %c0 = arith.constant 0 : index
    %c0_0 = arith.constant 0 : index
    %0 = vector.load %arg3[%c0, %c0_0] : memref<128x144xbf16, #tpu.memory_space<vmem>>, vector<128x144xbf16>
    %c0_1 = arith.constant 0 : index
    %c0_2 = arith.constant 0 : index
    %1 = vector.load %arg4[%c0_1, %c0_2] : memref<144x32xbf16, #tpu.memory_space<vmem>>, vector<144x32xbf16>
    %cst = arith.constant dense<0.000000e+00> : vector<128x32xf32>
    %2 = tpu.matmul %0, %1, %cst {dimension_numbers = #tpu.dot_dimension_numbers<[1], [0], [0], [1], [0, 0, 1, 1], [], []>} : vector<128x144xbf16>, vector<144x32xbf16>, vector<128x32xf32> -> vector<128x32xf32>
    %c0_3 = arith.constant 0 : index
    %c0_4 = arith.constant 0 : index
    %3 = vector.load %arg5[%c0_3, %c0_4] : memref<1x32xf32, #tpu.memory_space<vmem>>, vector<1x32xf32>
    %4 = vector.broadcast %3 : vector<1x32xf32> to vector<128x32xf32>
    %5 = arith.addf %2, %4 : vector<128x32xf32>
    %cst_5 = arith.constant 0.000000e+00 : f32
    %6 = vector.broadcast %cst_5 : f32 to vector<128x32xf32>
    %7 = arith.maximumf %5, %6 : vector<128x32xf32>
    %8 = arith.truncf %7 : vector<128x32xf32> to vector<128x32xbf16>
    %c0_6 = arith.constant 0 : index
    %c0_7 = arith.constant 0 : index
    %9 = vector.load %arg6[%c0_6, %c0_7] : memref<128x32xbf16, #tpu.memory_space<vmem>>, vector<128x32xbf16>
    tpu.vector_store %arg6[%c0_6, %c0_7], %8 {strides = array<i32>} : memref<128x32xbf16, #tpu.memory_space<vmem>>, vector<128x32xbf16>,
    return
  }
  func.func @transform_0(%arg0: i32, %arg1: i32, %arg2: i32) -> (i32, i32) {
    %c0_i32 = arith.constant 0 : i32
    return %arg0, %arg2 : i32, i32
  }
  func.func @transform_1(%arg0: i32, %arg1: i32, %arg2: i32) -> (i32, i32) {
    %c0_i32 = arith.constant 0 : i32
    return %arg2, %arg1 : i32, i32
  }
  func.func @transform_2(%arg0: i32, %arg1: i32, %arg2: i32) -> (i32, i32) {
    %c0_i32 = arith.constant 0 : i32
    %c0_i32_0 = arith.constant 0 : i32
    return %c0_i32, %arg1 : i32, i32
  }
  func.func @transform_3(%arg0: i32, %arg1: i32, %arg2: i32) -> (i32, i32) {
    %c0_i32 = arith.constant 0 : i32
    return %arg0, %arg1 : i32, i32
  }
}

module attributes {stable_mosaic.version = 11 : i64} {
  func.func @_matmul_nok_kernel(%arg0: i32, %arg1: i32, %arg2: i32, %arg3: memref<32x288xbf16, #tpu.memory_space<vmem>>, %arg4: memref<288x48xbf16, #tpu.memory_space<vmem>>, %arg5: memref<1x48xf32, #tpu.memory_space<vmem>>, %arg6: memref<32x48xbf16, #tpu.memory_space<vmem>>) attributes {dimension_semantics = [#tpu.dimension_semantics<parallel>, #tpu.dimension_semantics<parallel>, #tpu.dimension_semantics<arbitrary>], iteration_bounds = array<i64: 1, 1, 1>, scalar_prefetch = 0 : i64, scratch_operands = 0 : i64, tpu.core_type = #tpu.core_type<tc>, window_params = [{transform_indices = @transform_0, window_bounds = array<i64: 32, 288>}, {transform_indices = @transform_1, window_bounds = array<i64: 288, 48>}, {transform_indices = @transform_2, window_bounds = array<i64: 1, 48>}, {transform_indices = @transform_3, window_bounds = array<i64: 32, 48>}]} {
    %c0 = arith.constant 0 : index
    %c0_0 = arith.constant 0 : index
    %0 = vector.load %arg3[%c0, %c0_0] : memref<32x288xbf16, #tpu.memory_space<vmem>>, vector<32x288xbf16>
    %c0_1 = arith.constant 0 : index
    %c0_2 = arith.constant 0 : index
    %1 = vector.load %arg4[%c0_1, %c0_2] : memref<288x48xbf16, #tpu.memory_space<vmem>>, vector<288x48xbf16>
    %cst = arith.constant dense<0.000000e+00> : vector<32x48xf32>
    %2 = tpu.matmul %0, %1, %cst {dimension_numbers = #tpu.dot_dimension_numbers<[1], [0], [0], [1], [0, 0, 1, 1], [], []>} : vector<32x288xbf16>, vector<288x48xbf16>, vector<32x48xf32> -> vector<32x48xf32>
    %c0_3 = arith.constant 0 : index
    %c0_4 = arith.constant 0 : index
    %3 = vector.load %arg5[%c0_3, %c0_4] : memref<1x48xf32, #tpu.memory_space<vmem>>, vector<1x48xf32>
    %4 = vector.broadcast %3 : vector<1x48xf32> to vector<32x48xf32>
    %5 = arith.addf %2, %4 : vector<32x48xf32>
    %cst_5 = arith.constant 0.000000e+00 : f32
    %6 = vector.broadcast %cst_5 : f32 to vector<32x48xf32>
    %7 = arith.maximumf %5, %6 : vector<32x48xf32>
    %8 = arith.truncf %7 : vector<32x48xf32> to vector<32x48xbf16>
    %c0_6 = arith.constant 0 : index
    %c0_7 = arith.constant 0 : index
    %9 = vector.load %arg6[%c0_6, %c0_7] : memref<32x48xbf16, #tpu.memory_space<vmem>>, vector<32x48xbf16>
    tpu.vector_store %arg6[%c0_6, %c0_7], %8 {strides = array<i32>} : memref<32x48xbf16, #tpu.memory_space<vmem>>, vector<32x48xbf16>,
    return
  }
  func.func @transform_0(%arg0: i32, %arg1: i32, %arg2: i32) -> (i32, i32) {
    %c0_i32 = arith.constant 0 : i32
    return %arg0, %arg2 : i32, i32
  }
  func.func @transform_1(%arg0: i32, %arg1: i32, %arg2: i32) -> (i32, i32) {
    %c0_i32 = arith.constant 0 : i32
    return %arg2, %arg1 : i32, i32
  }
  func.func @transform_2(%arg0: i32, %arg1: i32, %arg2: i32) -> (i32, i32) {
    %c0_i32 = arith.constant 0 : i32
    %c0_i32_0 = arith.constant 0 : i32
    return %c0_i32, %arg1 : i32, i32
  }
  func.func @transform_3(%arg0: i32, %arg1: i32, %arg2: i32) -> (i32, i32) {
    %c0_i32 = arith.constant 0 : i32
    return %arg0, %arg1 : i32, i32
  }
}

module attributes {stable_mosaic.version = 11 : i64} {
  func.func @_matmul_nok_kernel(%arg0: i32, %arg1: i32, %arg2: i32, %arg3: memref<8x432xbf16, #tpu.memory_space<vmem>>, %arg4: memref<432x64xbf16, #tpu.memory_space<vmem>>, %arg5: memref<1x64xf32, #tpu.memory_space<vmem>>, %arg6: memref<8x64xbf16, #tpu.memory_space<vmem>>) attributes {dimension_semantics = [#tpu.dimension_semantics<parallel>, #tpu.dimension_semantics<parallel>, #tpu.dimension_semantics<arbitrary>], iteration_bounds = array<i64: 1, 1, 1>, scalar_prefetch = 0 : i64, scratch_operands = 0 : i64, tpu.core_type = #tpu.core_type<tc>, window_params = [{transform_indices = @transform_0, window_bounds = array<i64: 8, 432>}, {transform_indices = @transform_1, window_bounds = array<i64: 432, 64>}, {transform_indices = @transform_2, window_bounds = array<i64: 1, 64>}, {transform_indices = @transform_3, window_bounds = array<i64: 8, 64>}]} {
    %c0 = arith.constant 0 : index
    %c0_0 = arith.constant 0 : index
    %0 = vector.load %arg3[%c0, %c0_0] : memref<8x432xbf16, #tpu.memory_space<vmem>>, vector<8x432xbf16>
    %c0_1 = arith.constant 0 : index
    %c0_2 = arith.constant 0 : index
    %1 = vector.load %arg4[%c0_1, %c0_2] : memref<432x64xbf16, #tpu.memory_space<vmem>>, vector<432x64xbf16>
    %cst = arith.constant dense<0.000000e+00> : vector<8x64xf32>
    %2 = tpu.matmul %0, %1, %cst {dimension_numbers = #tpu.dot_dimension_numbers<[1], [0], [0], [1], [0, 0, 1, 1], [], []>} : vector<8x432xbf16>, vector<432x64xbf16>, vector<8x64xf32> -> vector<8x64xf32>
    %c0_3 = arith.constant 0 : index
    %c0_4 = arith.constant 0 : index
    %3 = vector.load %arg5[%c0_3, %c0_4] : memref<1x64xf32, #tpu.memory_space<vmem>>, vector<1x64xf32>
    %4 = vector.broadcast %3 : vector<1x64xf32> to vector<8x64xf32>
    %5 = arith.addf %2, %4 : vector<8x64xf32>
    %cst_5 = arith.constant 0.000000e+00 : f32
    %6 = vector.broadcast %cst_5 : f32 to vector<8x64xf32>
    %7 = arith.maximumf %5, %6 : vector<8x64xf32>
    %8 = arith.truncf %7 : vector<8x64xf32> to vector<8x64xbf16>
    %c0_6 = arith.constant 0 : index
    %c0_7 = arith.constant 0 : index
    %9 = vector.load %arg6[%c0_6, %c0_7] : memref<8x64xbf16, #tpu.memory_space<vmem>>, vector<8x64xbf16>
    tpu.vector_store %arg6[%c0_6, %c0_7], %8 {strides = array<i32>} : memref<8x64xbf16, #tpu.memory_space<vmem>>, vector<8x64xbf16>,
    return
  }
  func.func @transform_0(%arg0: i32, %arg1: i32, %arg2: i32) -> (i32, i32) {
    %c0_i32 = arith.constant 0 : i32
    return %arg0, %arg2 : i32, i32
  }
  func.func @transform_1(%arg0: i32, %arg1: i32, %arg2: i32) -> (i32, i32) {
    %c0_i32 = arith.constant 0 : i32
    return %arg2, %arg1 : i32, i32
  }
  func.func @transform_2(%arg0: i32, %arg1: i32, %arg2: i32) -> (i32, i32) {
    %c0_i32 = arith.constant 0 : i32
    %c0_i32_0 = arith.constant 0 : i32
    return %c0_i32, %arg1 : i32, i32
  }
  func.func @transform_3(%arg0: i32, %arg1: i32, %arg2: i32) -> (i32, i32) {
    %c0_i32 = arith.constant 0 : i32
    return %arg0, %arg1 : i32, i32
  }
}

module attributes {stable_mosaic.version = 11 : i64} {
  func.func @_matmul_nok_kernel(%arg0: i32, %arg1: i32, %arg2: i32, %arg3: memref<8x576xbf16, #tpu.memory_space<vmem>>, %arg4: memref<576x32xbf16, #tpu.memory_space<vmem>>, %arg5: memref<1x32xf32, #tpu.memory_space<vmem>>, %arg6: memref<8x32xbf16, #tpu.memory_space<vmem>>) attributes {dimension_semantics = [#tpu.dimension_semantics<parallel>, #tpu.dimension_semantics<parallel>, #tpu.dimension_semantics<arbitrary>], iteration_bounds = array<i64: 1, 1, 1>, scalar_prefetch = 0 : i64, scratch_operands = 0 : i64, tpu.core_type = #tpu.core_type<tc>, window_params = [{transform_indices = @transform_0, window_bounds = array<i64: 8, 576>}, {transform_indices = @transform_1, window_bounds = array<i64: 576, 32>}, {transform_indices = @transform_2, window_bounds = array<i64: 1, 32>}, {transform_indices = @transform_3, window_bounds = array<i64: 8, 32>}]} {
    %c0 = arith.constant 0 : index
    %c0_0 = arith.constant 0 : index
    %0 = vector.load %arg3[%c0, %c0_0] : memref<8x576xbf16, #tpu.memory_space<vmem>>, vector<8x576xbf16>
    %c0_1 = arith.constant 0 : index
    %c0_2 = arith.constant 0 : index
    %1 = vector.load %arg4[%c0_1, %c0_2] : memref<576x32xbf16, #tpu.memory_space<vmem>>, vector<576x32xbf16>
    %cst = arith.constant dense<0.000000e+00> : vector<8x32xf32>
    %2 = tpu.matmul %0, %1, %cst {dimension_numbers = #tpu.dot_dimension_numbers<[1], [0], [0], [1], [0, 0, 1, 1], [], []>} : vector<8x576xbf16>, vector<576x32xbf16>, vector<8x32xf32> -> vector<8x32xf32>
    %c0_3 = arith.constant 0 : index
    %c0_4 = arith.constant 0 : index
    %3 = vector.load %arg5[%c0_3, %c0_4] : memref<1x32xf32, #tpu.memory_space<vmem>>, vector<1x32xf32>
    %4 = vector.broadcast %3 : vector<1x32xf32> to vector<8x32xf32>
    %5 = arith.addf %2, %4 : vector<8x32xf32>
    %cst_5 = arith.constant 0.000000e+00 : f32
    %6 = vector.broadcast %cst_5 : f32 to vector<8x32xf32>
    %7 = arith.maximumf %5, %6 : vector<8x32xf32>
    %8 = arith.truncf %7 : vector<8x32xf32> to vector<8x32xbf16>
    %c0_6 = arith.constant 0 : index
    %c0_7 = arith.constant 0 : index
    %9 = vector.load %arg6[%c0_6, %c0_7] : memref<8x32xbf16, #tpu.memory_space<vmem>>, vector<8x32xbf16>
    tpu.vector_store %arg6[%c0_6, %c0_7], %8 {strides = array<i32>} : memref<8x32xbf16, #tpu.memory_space<vmem>>, vector<8x32xbf16>,
    return
  }
  func.func @transform_0(%arg0: i32, %arg1: i32, %arg2: i32) -> (i32, i32) {
    %c0_i32 = arith.constant 0 : i32
    return %arg0, %arg2 : i32, i32
  }
  func.func @transform_1(%arg0: i32, %arg1: i32, %arg2: i32) -> (i32, i32) {
    %c0_i32 = arith.constant 0 : i32
    return %arg2, %arg1 : i32, i32
  }
  func.func @transform_2(%arg0: i32, %arg1: i32, %arg2: i32) -> (i32, i32) {
    %c0_i32 = arith.constant 0 : i32
    %c0_i32_0 = arith.constant 0 : i32
    return %c0_i32, %arg1 : i32, i32
  }
  func.func @transform_3(%arg0: i32, %arg1: i32, %arg2: i32) -> (i32, i32) {
    %c0_i32 = arith.constant 0 : i32
    return %arg0, %arg1 : i32, i32
  }
}

module attributes {stable_mosaic.version = 11 : i64} {
  func.func @_matmul_nok_kernel(%arg0: i32, %arg1: i32, %arg2: i32, %arg3: memref<2x64xf32, #tpu.memory_space<vmem>>, %arg4: memref<64x32xf32, #tpu.memory_space<vmem>>, %arg5: memref<1x32xf32, #tpu.memory_space<vmem>>, %arg6: memref<2x32xf32, #tpu.memory_space<vmem>>) attributes {dimension_semantics = [#tpu.dimension_semantics<parallel>, #tpu.dimension_semantics<parallel>, #tpu.dimension_semantics<arbitrary>], iteration_bounds = array<i64: 1, 1, 1>, scalar_prefetch = 0 : i64, scratch_operands = 0 : i64, tpu.core_type = #tpu.core_type<tc>, window_params = [{transform_indices = @transform_0, window_bounds = array<i64: 2, 64>}, {transform_indices = @transform_1, window_bounds = array<i64: 64, 32>}, {transform_indices = @transform_2, window_bounds = array<i64: 1, 32>}, {transform_indices = @transform_3, window_bounds = array<i64: 2, 32>}]} {
    %c0 = arith.constant 0 : index
    %c0_0 = arith.constant 0 : index
    %0 = vector.load %arg3[%c0, %c0_0] : memref<2x64xf32, #tpu.memory_space<vmem>>, vector<2x64xf32>
    %c0_1 = arith.constant 0 : index
    %c0_2 = arith.constant 0 : index
    %1 = vector.load %arg4[%c0_1, %c0_2] : memref<64x32xf32, #tpu.memory_space<vmem>>, vector<64x32xf32>
    %cst = arith.constant dense<0.000000e+00> : vector<2x32xf32>
    %2 = tpu.matmul %0, %1, %cst {dimension_numbers = #tpu.dot_dimension_numbers<[1], [0], [0], [1], [0, 0, 1, 1], [], []>} : vector<2x64xf32>, vector<64x32xf32>, vector<2x32xf32> -> vector<2x32xf32>
    %c0_3 = arith.constant 0 : index
    %c0_4 = arith.constant 0 : index
    %3 = vector.load %arg5[%c0_3, %c0_4] : memref<1x32xf32, #tpu.memory_space<vmem>>, vector<1x32xf32>
    %4 = vector.broadcast %3 : vector<1x32xf32> to vector<2x32xf32>
    %5 = arith.addf %2, %4 : vector<2x32xf32>
    %cst_5 = arith.constant 0.000000e+00 : f32
    %6 = vector.broadcast %cst_5 : f32 to vector<2x32xf32>
    %7 = arith.maximumf %5, %6 : vector<2x32xf32>
    %c0_6 = arith.constant 0 : index
    %c0_7 = arith.constant 0 : index
    %8 = vector.load %arg6[%c0_6, %c0_7] : memref<2x32xf32, #tpu.memory_space<vmem>>, vector<2x32xf32>
    tpu.vector_store %arg6[%c0_6, %c0_7], %7 {strides = array<i32>} : memref<2x32xf32, #tpu.memory_space<vmem>>, vector<2x32xf32>,
    return
  }
  func.func @transform_0(%arg0: i32, %arg1: i32, %arg2: i32) -> (i32, i32) {
    %c0_i32 = arith.constant 0 : i32
    return %arg0, %arg2 : i32, i32
  }
  func.func @transform_1(%arg0: i32, %arg1: i32, %arg2: i32) -> (i32, i32) {
    %c0_i32 = arith.constant 0 : i32
    return %arg2, %arg1 : i32, i32
  }
  func.func @transform_2(%arg0: i32, %arg1: i32, %arg2: i32) -> (i32, i32) {
    %c0_i32 = arith.constant 0 : i32
    %c0_i32_0 = arith.constant 0 : i32
    return %c0_i32, %arg1 : i32, i32
  }
  func.func @transform_3(%arg0: i32, %arg1: i32, %arg2: i32) -> (i32, i32) {
    %c0_i32 = arith.constant 0 : i32
    return %arg0, %arg1 : i32, i32
  }
}

module attributes {stable_mosaic.version = 11 : i64} {
  func.func @_matmul_nok_kernel(%arg0: i32, %arg1: i32, %arg2: i32, %arg3: memref<2x32xf32, #tpu.memory_space<vmem>>, %arg4: memref<32x32xf32, #tpu.memory_space<vmem>>, %arg5: memref<1x32xf32, #tpu.memory_space<vmem>>, %arg6: memref<2x32xf32, #tpu.memory_space<vmem>>) attributes {dimension_semantics = [#tpu.dimension_semantics<parallel>, #tpu.dimension_semantics<parallel>, #tpu.dimension_semantics<arbitrary>], iteration_bounds = array<i64: 1, 1, 1>, scalar_prefetch = 0 : i64, scratch_operands = 0 : i64, tpu.core_type = #tpu.core_type<tc>, window_params = [{transform_indices = @transform_0, window_bounds = array<i64: 2, 32>}, {transform_indices = @transform_1, window_bounds = array<i64: 32, 32>}, {transform_indices = @transform_2, window_bounds = array<i64: 1, 32>}, {transform_indices = @transform_3, window_bounds = array<i64: 2, 32>}]} {
    %c0 = arith.constant 0 : index
    %c0_0 = arith.constant 0 : index
    %0 = vector.load %arg3[%c0, %c0_0] : memref<2x32xf32, #tpu.memory_space<vmem>>, vector<2x32xf32>
    %c0_1 = arith.constant 0 : index
    %c0_2 = arith.constant 0 : index
    %1 = vector.load %arg4[%c0_1, %c0_2] : memref<32x32xf32, #tpu.memory_space<vmem>>, vector<32x32xf32>
    %cst = arith.constant dense<0.000000e+00> : vector<2x32xf32>
    %2 = tpu.matmul %0, %1, %cst {dimension_numbers = #tpu.dot_dimension_numbers<[1], [0], [0], [1], [0, 0, 1, 1], [], []>} : vector<2x32xf32>, vector<32x32xf32>, vector<2x32xf32> -> vector<2x32xf32>
    %c0_3 = arith.constant 0 : index
    %c0_4 = arith.constant 0 : index
    %3 = vector.load %arg5[%c0_3, %c0_4] : memref<1x32xf32, #tpu.memory_space<vmem>>, vector<1x32xf32>
    %4 = vector.broadcast %3 : vector<1x32xf32> to vector<2x32xf32>
    %5 = arith.addf %2, %4 : vector<2x32xf32>
    %c0_5 = arith.constant 0 : index
    %c0_6 = arith.constant 0 : index
    %6 = vector.load %arg6[%c0_5, %c0_6] : memref<2x32xf32, #tpu.memory_space<vmem>>, vector<2x32xf32>
    tpu.vector_store %arg6[%c0_5, %c0_6], %5 {strides = array<i32>} : memref<2x32xf32, #tpu.memory_space<vmem>>, vector<2x32xf32>,
    return
  }
  func.func @transform_0(%arg0: i32, %arg1: i32, %arg2: i32) -> (i32, i32) {
    %c0_i32 = arith.constant 0 : i32
    return %arg0, %arg2 : i32, i32
  }
  func.func @transform_1(%arg0: i32, %arg1: i32, %arg2: i32) -> (i32, i32) {
    %c0_i32 = arith.constant 0 : i32
    return %arg2, %arg1 : i32, i32
  }
  func.func @transform_2(%arg0: i32, %arg1: i32, %arg2: i32) -> (i32, i32) {
    %c0_i32 = arith.constant 0 : i32
    %c0_i32_0 = arith.constant 0 : i32
    return %c0_i32, %arg1 : i32, i32
  }
  func.func @transform_3(%arg0: i32, %arg1: i32, %arg2: i32) -> (i32, i32) {
    %c0_i32 = arith.constant 0 : i32
    return %arg0, %arg1 : i32, i32
  }
}

module attributes {stable_mosaic.version = 11 : i64} {
  func.func @_deconv_kernel(%arg0: i32, %arg1: i32, %arg2: memref<1x4x32xbf16, #tpu.memory_space<vmem>>, %arg3: memref<1x4x32xbf16, #tpu.memory_space<vmem>>, %arg4: memref<1x4x32xbf16, #tpu.memory_space<vmem>>, %arg5: memref<1x4x32xbf16, #tpu.memory_space<vmem>>, %arg6: memref<32x64xbf16, #tpu.memory_space<vmem>>, %arg7: memref<32x16xbf16, #tpu.memory_space<vmem>>, %arg8: memref<32x16xbf16, #tpu.memory_space<vmem>>, %arg9: memref<32x16xbf16, #tpu.memory_space<vmem>>, %arg10: memref<32x16xbf16, #tpu.memory_space<vmem>>, %arg11: memref<32x16xbf16, #tpu.memory_space<vmem>>, %arg12: memref<1x64xf32, #tpu.memory_space<vmem>>, %arg13: memref<1x4x64xbf16, #tpu.memory_space<vmem>>) attributes {dimension_semantics = [#tpu.dimension_semantics<parallel>, #tpu.dimension_semantics<parallel>], iteration_bounds = array<i64: 2, 1>, scalar_prefetch = 0 : i64, scratch_operands = 0 : i64, tpu.core_type = #tpu.core_type<tc>, window_params = [{transform_indices = @transform_0, window_bounds = array<i64: 1, 4, 32>}, {transform_indices = @transform_1, window_bounds = array<i64: 1, 4, 32>}, {transform_indices = @transform_2, window_bounds = array<i64: 1, 4, 32>}, {transform_indices = @transform_3, window_bounds = array<i64: 1, 4, 32>}, {pipeline_mode = #tpu.pipeline_mode<synchronous>, transform_indices = @transform_4, window_bounds = array<i64: 32, 64>}, {pipeline_mode = #tpu.pipeline_mode<synchronous>, transform_indices = @transform_5, window_bounds = array<i64: 32, 16>}, {pipeline_mode = #tpu.pipeline_mode<synchronous>, transform_indices = @transform_6, window_bounds = array<i64: 32, 16>}, {pipeline_mode = #tpu.pipeline_mode<synchronous>, transform_indices = @transform_7, window_bounds = array<i64: 32, 16>}, {pipeline_mode = #tpu.pipeline_mode<synchronous>, transform_indices = @transform_8, window_bounds = array<i64: 32, 16>}, {pipeline_mode = #tpu.pipeline_mode<synchronous>, transform_indices = @transform_9, window_bounds = array<i64: 32, 16>}, {pipeline_mode = #tpu.pipeline_mode<synchronous>, transform_indices = @transform_10, window_bounds = array<i64: 1, 64>}, {transform_indices = @transform_11, window_bounds = array<i64: 1, 4, 64>}]} {
    %c0 = arith.constant 0 : index
    %c0_0 = arith.constant 0 : index
    %c0_1 = arith.constant 0 : index
    %0 = vector.load %arg2[%c0, %c0_0, %c0_1] : memref<1x4x32xbf16, #tpu.memory_space<vmem>>, vector<1x4x32xbf16>
    %1 = vector.shape_cast %0 : vector<1x4x32xbf16> to vector<4x32xbf16>
    %c0_2 = arith.constant 0 : index
    %c0_3 = arith.constant 0 : index
    %c0_4 = arith.constant 0 : index
    %2 = vector.load %arg3[%c0_2, %c0_3, %c0_4] : memref<1x4x32xbf16, #tpu.memory_space<vmem>>, vector<1x4x32xbf16>
    %3 = vector.shape_cast %2 : vector<1x4x32xbf16> to vector<4x32xbf16>
    %c0_5 = arith.constant 0 : index
    %c0_6 = arith.constant 0 : index
    %c0_7 = arith.constant 0 : index
    %4 = vector.load %arg4[%c0_5, %c0_6, %c0_7] : memref<1x4x32xbf16, #tpu.memory_space<vmem>>, vector<1x4x32xbf16>
    %5 = vector.shape_cast %4 : vector<1x4x32xbf16> to vector<4x32xbf16>
    %c0_8 = arith.constant 0 : index
    %c0_9 = arith.constant 0 : index
    %c0_10 = arith.constant 0 : index
    %6 = vector.load %arg5[%c0_8, %c0_9, %c0_10] : memref<1x4x32xbf16, #tpu.memory_space<vmem>>, vector<1x4x32xbf16>
    %7 = vector.shape_cast %6 : vector<1x4x32xbf16> to vector<4x32xbf16>
    %c0_11 = arith.constant 0 : index
    %c0_12 = arith.constant 0 : index
    %8 = vector.load %arg6[%c0_11, %c0_12] : memref<32x64xbf16, #tpu.memory_space<vmem>>, vector<32x64xbf16>
    %cst = arith.constant dense<0.000000e+00> : vector<4x64xf32>
    %9 = tpu.matmul %1, %8, %cst {dimension_numbers = #tpu.dot_dimension_numbers<[1], [0], [0], [1], [0, 0, 1, 1], [], []>} : vector<4x32xbf16>, vector<32x64xbf16>, vector<4x64xf32> -> vector<4x64xf32>
    %10 = vector.extract_strided_slice %9 {offsets = [0, 16], sizes = [4, 16], strides = [1, 1]} : vector<4x64xf32> to vector<4x16xf32>
    %c0_13 = arith.constant 0 : index
    %c0_14 = arith.constant 0 : index
    %11 = vector.load %arg7[%c0_13, %c0_14] : memref<32x16xbf16, #tpu.memory_space<vmem>>, vector<32x16xbf16>
    %cst_15 = arith.constant dense<0.000000e+00> : vector<4x16xf32>
    %12 = tpu.matmul %3, %11, %cst_15 {dimension_numbers = #tpu.dot_dimension_numbers<[1], [0], [0], [1], [0, 0, 1, 1], [], []>} : vector<4x32xbf16>, vector<32x16xbf16>, vector<4x16xf32> -> vector<4x16xf32>
    %13 = arith.addf %10, %12 : vector<4x16xf32>
    %14 = vector.extract_strided_slice %9 {offsets = [0, 32], sizes = [4, 16], strides = [1, 1]} : vector<4x64xf32> to vector<4x16xf32>
    %c0_16 = arith.constant 0 : index
    %c0_17 = arith.constant 0 : index
    %15 = vector.load %arg8[%c0_16, %c0_17] : memref<32x16xbf16, #tpu.memory_space<vmem>>, vector<32x16xbf16>
    %cst_18 = arith.constant dense<0.000000e+00> : vector<4x16xf32>
    %16 = tpu.matmul %5, %15, %cst_18 {dimension_numbers = #tpu.dot_dimension_numbers<[1], [0], [0], [1], [0, 0, 1, 1], [], []>} : vector<4x32xbf16>, vector<32x16xbf16>, vector<4x16xf32> -> vector<4x16xf32>
    %17 = arith.addf %14, %16 : vector<4x16xf32>
    %18 = vector.extract_strided_slice %9 {offsets = [0, 48], sizes = [4, 16], strides = [1, 1]} : vector<4x64xf32> to vector<4x16xf32>
    %c0_19 = arith.constant 0 : index
    %c0_20 = arith.constant 0 : index
    %19 = vector.load %arg9[%c0_19, %c0_20] : memref<32x16xbf16, #tpu.memory_space<vmem>>, vector<32x16xbf16>
    %cst_21 = arith.constant dense<0.000000e+00> : vector<4x16xf32>
    %20 = tpu.matmul %3, %19, %cst_21 {dimension_numbers = #tpu.dot_dimension_numbers<[1], [0], [0], [1], [0, 0, 1, 1], [], []>} : vector<4x32xbf16>, vector<32x16xbf16>, vector<4x16xf32> -> vector<4x16xf32>
    %21 = arith.addf %18, %20 : vector<4x16xf32>
    %c0_22 = arith.constant 0 : index
    %c0_23 = arith.constant 0 : index
    %22 = vector.load %arg10[%c0_22, %c0_23] : memref<32x16xbf16, #tpu.memory_space<vmem>>, vector<32x16xbf16>
    %cst_24 = arith.constant dense<0.000000e+00> : vector<4x16xf32>
    %23 = tpu.matmul %5, %22, %cst_24 {dimension_numbers = #tpu.dot_dimension_numbers<[1], [0], [0], [1], [0, 0, 1, 1], [], []>} : vector<4x32xbf16>, vector<32x16xbf16>, vector<4x16xf32> -> vector<4x16xf32>
    %24 = arith.addf %21, %23 : vector<4x16xf32>
    %c0_25 = arith.constant 0 : index
    %c0_26 = arith.constant 0 : index
    %25 = vector.load %arg11[%c0_25, %c0_26] : memref<32x16xbf16, #tpu.memory_space<vmem>>, vector<32x16xbf16>
    %cst_27 = arith.constant dense<0.000000e+00> : vector<4x16xf32>
    %26 = tpu.matmul %7, %25, %cst_27 {dimension_numbers = #tpu.dot_dimension_numbers<[1], [0], [0], [1], [0, 0, 1, 1], [], []>} : vector<4x32xbf16>, vector<32x16xbf16>, vector<4x16xf32> -> vector<4x16xf32>
    %27 = arith.addf %24, %26 : vector<4x16xf32>
    %28 = vector.extract_strided_slice %9 {offsets = [0, 0], sizes = [4, 16], strides = [1, 1]} : vector<4x64xf32> to vector<4x16xf32>
    %29 = tpu.concatenate %28, %13, %17, %27 in 1 : vector<4x16xf32>, vector<4x16xf32>, vector<4x16xf32>, vector<4x16xf32> -> vector<4x64xf32>
    %c0_28 = arith.constant 0 : index
    %c0_29 = arith.constant 0 : index
    %30 = vector.load %arg12[%c0_28, %c0_29] : memref<1x64xf32, #tpu.memory_space<vmem>>, vector<1x64xf32>
    %31 = vector.broadcast %30 : vector<1x64xf32> to vector<4x64xf32>
    %32 = arith.addf %29, %31 : vector<4x64xf32>
    %cst_30 = arith.constant 0.000000e+00 : f32
    %33 = vector.broadcast %cst_30 : f32 to vector<4x64xf32>
    %34 = arith.maximumf %32, %33 : vector<4x64xf32>
    %35 = arith.truncf %34 : vector<4x64xf32> to vector<4x64xbf16>
    %c0_31 = arith.constant 0 : index
    %c0_32 = arith.constant 0 : index
    %c0_33 = arith.constant 0 : index
    %36 = vector.load %arg13[%c0_31, %c0_32, %c0_33] : memref<1x4x64xbf16, #tpu.memory_space<vmem>>, vector<1x4x64xbf16>
    %37 = vector.shape_cast %36 : vector<1x4x64xbf16> to vector<4x64xbf16>
    %38 = vector.shape_cast %35 : vector<4x64xbf16> to vector<1x4x64xbf16>
    tpu.vector_store %arg13[%c0_31, %c0_32, %c0_33], %38 {strides = array<i32>} : memref<1x4x64xbf16, #tpu.memory_space<vmem>>, vector<1x4x64xbf16>,
    return
  }
  func.func @transform_0(%arg0: i32, %arg1: i32) -> (i32, i32, i32) {
    %c0_i32 = arith.constant 0 : i32
    %c0_i32_0 = arith.constant 0 : i32
    return %arg0, %arg1, %c0_i32 : i32, i32, i32
  }
  func.func @transform_1(%arg0: i32, %arg1: i32) -> (i32, i32, i32) {
    %c0_i32 = arith.constant 0 : i32
    %c0_i32_0 = arith.constant 0 : i32
    return %arg0, %arg1, %c0_i32 : i32, i32, i32
  }
  func.func @transform_2(%arg0: i32, %arg1: i32) -> (i32, i32, i32) {
    %c0_i32 = arith.constant 0 : i32
    %c0_i32_0 = arith.constant 0 : i32
    return %arg0, %arg1, %c0_i32 : i32, i32, i32
  }
  func.func @transform_3(%arg0: i32, %arg1: i32) -> (i32, i32, i32) {
    %c0_i32 = arith.constant 0 : i32
    %c0_i32_0 = arith.constant 0 : i32
    return %arg0, %arg1, %c0_i32 : i32, i32, i32
  }
  func.func @transform_4(%arg0: i32, %arg1: i32) -> (i32, i32) {
    %c0_i32 = arith.constant 0 : i32
    %c0_i32_0 = arith.constant 0 : i32
    %c0_i32_1 = arith.constant 0 : i32
    return %c0_i32, %c0_i32_0 : i32, i32
  }
  func.func @transform_5(%arg0: i32, %arg1: i32) -> (i32, i32) {
    %c0_i32 = arith.constant 0 : i32
    %c0_i32_0 = arith.constant 0 : i32
    %c0_i32_1 = arith.constant 0 : i32
    return %c0_i32, %c0_i32_0 : i32, i32
  }
  func.func @transform_6(%arg0: i32, %arg1: i32) -> (i32, i32) {
    %c0_i32 = arith.constant 0 : i32
    %c0_i32_0 = arith.constant 0 : i32
    %c0_i32_1 = arith.constant 0 : i32
    return %c0_i32, %c0_i32_0 : i32, i32
  }
  func.func @transform_7(%arg0: i32, %arg1: i32) -> (i32, i32) {
    %c0_i32 = arith.constant 0 : i32
    %c0_i32_0 = arith.constant 0 : i32
    %c0_i32_1 = arith.constant 0 : i32
    return %c0_i32, %c0_i32_0 : i32, i32
  }
  func.func @transform_8(%arg0: i32, %arg1: i32) -> (i32, i32) {
    %c0_i32 = arith.constant 0 : i32
    %c0_i32_0 = arith.constant 0 : i32
    %c0_i32_1 = arith.constant 0 : i32
    return %c0_i32, %c0_i32_0 : i32, i32
  }
  func.func @transform_9(%arg0: i32, %arg1: i32) -> (i32, i32) {
    %c0_i32 = arith.constant 0 : i32
    %c0_i32_0 = arith.constant 0 : i32
    %c0_i32_1 = arith.constant 0 : i32
    return %c0_i32, %c0_i32_0 : i32, i32
  }
  func.func @transform_10(%arg0: i32, %arg1: i32) -> (i32, i32) {
    %c0_i32 = arith.constant 0 : i32
    %c0_i32_0 = arith.constant 0 : i32
    %c0_i32_1 = arith.constant 0 : i32
    return %c0_i32, %c0_i32_0 : i32, i32
  }
  func.func @transform_11(%arg0: i32, %arg1: i32) -> (i32, i32, i32) {
    %c0_i32 = arith.constant 0 : i32
    %c0_i32_0 = arith.constant 0 : i32
    return %arg0, %arg1, %c0_i32 : i32, i32, i32
  }
}

module attributes {stable_mosaic.version = 11 : i64} {
  func.func @_aspp_project_kernel(%arg0: i32, %arg1: i32, %arg2: memref<1x4x32xbf16, #tpu.memory_space<vmem>>, %arg3: memref<1x4x32xbf16, #tpu.memory_space<vmem>>, %arg4: memref<1x4x32xbf16, #tpu.memory_space<vmem>>, %arg5: memref<32x32xbf16, #tpu.memory_space<vmem>>, %arg6: memref<32x32xbf16, #tpu.memory_space<vmem>>, %arg7: memref<32x32xbf16, #tpu.memory_space<vmem>>, %arg8: memref<1x1x32xf32, #tpu.memory_space<vmem>>, %arg9: memref<1x4x32xbf16, #tpu.memory_space<vmem>>) attributes {dimension_semantics = [#tpu.dimension_semantics<parallel>, #tpu.dimension_semantics<parallel>], iteration_bounds = array<i64: 2, 1>, scalar_prefetch = 0 : i64, scratch_operands = 0 : i64, tpu.core_type = #tpu.core_type<tc>, window_params = [{transform_indices = @transform_0, window_bounds = array<i64: 1, 4, 32>}, {transform_indices = @transform_1, window_bounds = array<i64: 1, 4, 32>}, {transform_indices = @transform_2, window_bounds = array<i64: 1, 4, 32>}, {pipeline_mode = #tpu.pipeline_mode<synchronous>, transform_indices = @transform_3, window_bounds = array<i64: 32, 32>}, {pipeline_mode = #tpu.pipeline_mode<synchronous>, transform_indices = @transform_4, window_bounds = array<i64: 32, 32>}, {pipeline_mode = #tpu.pipeline_mode<synchronous>, transform_indices = @transform_5, window_bounds = array<i64: 32, 32>}, {transform_indices = @transform_6, window_bounds = array<i64: 1, 1, 32>}, {transform_indices = @transform_7, window_bounds = array<i64: 1, 4, 32>}]} {
    %c0 = arith.constant 0 : index
    %c0_0 = arith.constant 0 : index
    %c0_1 = arith.constant 0 : index
    %0 = vector.load %arg2[%c0, %c0_0, %c0_1] : memref<1x4x32xbf16, #tpu.memory_space<vmem>>, vector<1x4x32xbf16>
    %1 = vector.shape_cast %0 : vector<1x4x32xbf16> to vector<4x32xbf16>
    %c0_2 = arith.constant 0 : index
    %c0_3 = arith.constant 0 : index
    %2 = vector.load %arg5[%c0_2, %c0_3] : memref<32x32xbf16, #tpu.memory_space<vmem>>, vector<32x32xbf16>
    %cst = arith.constant dense<0.000000e+00> : vector<4x32xf32>
    %3 = tpu.matmul %1, %2, %cst {dimension_numbers = #tpu.dot_dimension_numbers<[1], [0], [0], [1], [0, 0, 1, 1], [], []>} : vector<4x32xbf16>, vector<32x32xbf16>, vector<4x32xf32> -> vector<4x32xf32>
    %c0_4 = arith.constant 0 : index
    %c0_5 = arith.constant 0 : index
    %c0_6 = arith.constant 0 : index
    %4 = vector.load %arg3[%c0_4, %c0_5, %c0_6] : memref<1x4x32xbf16, #tpu.memory_space<vmem>>, vector<1x4x32xbf16>
    %5 = vector.shape_cast %4 : vector<1x4x32xbf16> to vector<4x32xbf16>
    %c0_7 = arith.constant 0 : index
    %c0_8 = arith.constant 0 : index
    %6 = vector.load %arg6[%c0_7, %c0_8] : memref<32x32xbf16, #tpu.memory_space<vmem>>, vector<32x32xbf16>
    %cst_9 = arith.constant dense<0.000000e+00> : vector<4x32xf32>
    %7 = tpu.matmul %5, %6, %cst_9 {dimension_numbers = #tpu.dot_dimension_numbers<[1], [0], [0], [1], [0, 0, 1, 1], [], []>} : vector<4x32xbf16>, vector<32x32xbf16>, vector<4x32xf32> -> vector<4x32xf32>
    %8 = arith.addf %3, %7 : vector<4x32xf32>
    %c0_10 = arith.constant 0 : index
    %c0_11 = arith.constant 0 : index
    %c0_12 = arith.constant 0 : index
    %9 = vector.load %arg4[%c0_10, %c0_11, %c0_12] : memref<1x4x32xbf16, #tpu.memory_space<vmem>>, vector<1x4x32xbf16>
    %10 = vector.shape_cast %9 : vector<1x4x32xbf16> to vector<4x32xbf16>
    %c0_13 = arith.constant 0 : index
    %c0_14 = arith.constant 0 : index
    %11 = vector.load %arg7[%c0_13, %c0_14] : memref<32x32xbf16, #tpu.memory_space<vmem>>, vector<32x32xbf16>
    %cst_15 = arith.constant dense<0.000000e+00> : vector<4x32xf32>
    %12 = tpu.matmul %10, %11, %cst_15 {dimension_numbers = #tpu.dot_dimension_numbers<[1], [0], [0], [1], [0, 0, 1, 1], [], []>} : vector<4x32xbf16>, vector<32x32xbf16>, vector<4x32xf32> -> vector<4x32xf32>
    %13 = arith.addf %8, %12 : vector<4x32xf32>
    %c0_16 = arith.constant 0 : index
    %c0_17 = arith.constant 0 : index
    %c0_18 = arith.constant 0 : index
    %14 = vector.load %arg8[%c0_16, %c0_17, %c0_18] : memref<1x1x32xf32, #tpu.memory_space<vmem>>, vector<1x1x32xf32>
    %15 = vector.shape_cast %14 : vector<1x1x32xf32> to vector<1x32xf32>
    %16 = vector.broadcast %15 : vector<1x32xf32> to vector<4x32xf32>
    %17 = arith.addf %13, %16 : vector<4x32xf32>
    %cst_19 = arith.constant 0.000000e+00 : f32
    %18 = vector.broadcast %cst_19 : f32 to vector<4x32xf32>
    %19 = arith.maximumf %17, %18 : vector<4x32xf32>
    %20 = arith.truncf %19 : vector<4x32xf32> to vector<4x32xbf16>
    %c0_20 = arith.constant 0 : index
    %c0_21 = arith.constant 0 : index
    %c0_22 = arith.constant 0 : index
    %21 = vector.load %arg9[%c0_20, %c0_21, %c0_22] : memref<1x4x32xbf16, #tpu.memory_space<vmem>>, vector<1x4x32xbf16>
    %22 = vector.shape_cast %21 : vector<1x4x32xbf16> to vector<4x32xbf16>
    %23 = vector.shape_cast %20 : vector<4x32xbf16> to vector<1x4x32xbf16>
    tpu.vector_store %arg9[%c0_20, %c0_21, %c0_22], %23 {strides = array<i32>} : memref<1x4x32xbf16, #tpu.memory_space<vmem>>, vector<1x4x32xbf16>,
    return
  }
  func.func @transform_0(%arg0: i32, %arg1: i32) -> (i32, i32, i32) {
    %c0_i32 = arith.constant 0 : i32
    %c0_i32_0 = arith.constant 0 : i32
    return %arg0, %arg1, %c0_i32 : i32, i32, i32
  }
  func.func @transform_1(%arg0: i32, %arg1: i32) -> (i32, i32, i32) {
    %c0_i32 = arith.constant 0 : i32
    %c0_i32_0 = arith.constant 0 : i32
    return %arg0, %arg1, %c0_i32 : i32, i32, i32
  }
  func.func @transform_2(%arg0: i32, %arg1: i32) -> (i32, i32, i32) {
    %c0_i32 = arith.constant 0 : i32
    %c0_i32_0 = arith.constant 0 : i32
    return %arg0, %arg1, %c0_i32 : i32, i32, i32
  }
  func.func @transform_3(%arg0: i32, %arg1: i32) -> (i32, i32) {
    %c0_i32 = arith.constant 0 : i32
    %c0_i32_0 = arith.constant 0 : i32
    %c0_i32_1 = arith.constant 0 : i32
    return %c0_i32, %c0_i32_0 : i32, i32
  }
  func.func @transform_4(%arg0: i32, %arg1: i32) -> (i32, i32) {
    %c0_i32 = arith.constant 0 : i32
    %c0_i32_0 = arith.constant 0 : i32
    %c0_i32_1 = arith.constant 0 : i32
    return %c0_i32, %c0_i32_0 : i32, i32
  }
  func.func @transform_5(%arg0: i32, %arg1: i32) -> (i32, i32) {
    %c0_i32 = arith.constant 0 : i32
    %c0_i32_0 = arith.constant 0 : i32
    %c0_i32_1 = arith.constant 0 : i32
    return %c0_i32, %c0_i32_0 : i32, i32
  }
  func.func @transform_6(%arg0: i32, %arg1: i32) -> (i32, i32, i32) {
    %c0_i32 = arith.constant 0 : i32
    %c0_i32_0 = arith.constant 0 : i32
    %c0_i32_1 = arith.constant 0 : i32
    return %arg0, %c0_i32, %c0_i32_0 : i32, i32, i32
  }
  func.func @transform_7(%arg0: i32, %arg1: i32) -> (i32, i32, i32) {
    %c0_i32 = arith.constant 0 : i32
    %c0_i32_0 = arith.constant 0 : i32
    return %arg0, %arg1, %c0_i32 : i32, i32, i32
  }
}

module attributes {stable_mosaic.version = 11 : i64} {
  func.func @_proto_kernel(%arg0: i32, %arg1: i32, %arg2: memref<1x16x16xbf16, #tpu.memory_space<vmem>>, %arg3: memref<16x6xbf16, #tpu.memory_space<vmem>>, %arg4: memref<1x6xf32, #tpu.memory_space<vmem>>, %arg5: memref<1x16x1xf32, #tpu.memory_space<vmem>>, %arg6: memref<1x6x16xf32, #tpu.memory_space<vmem>>, %arg7: memref<6x16xf32, #tpu.memory_space<vmem>>, %arg8: memref<6x1xf32, #tpu.memory_space<vmem>>) attributes {dimension_semantics = [#tpu.dimension_semantics<parallel>, #tpu.dimension_semantics<arbitrary>], iteration_bounds = array<i64: 2, 1>, scalar_prefetch = 0 : i64, scratch_operands = 2 : i64, tpu.core_type = #tpu.core_type<tc>, window_params = [{transform_indices = @transform_0, window_bounds = array<i64: 1, 16, 16>}, {pipeline_mode = #tpu.pipeline_mode<synchronous>, transform_indices = @transform_1, window_bounds = array<i64: 16, 6>}, {pipeline_mode = #tpu.pipeline_mode<synchronous>, transform_indices = @transform_2, window_bounds = array<i64: 1, 6>}, {transform_indices = @transform_3, window_bounds = array<i64: 1, 16, 1>}, {transform_indices = @transform_4, window_bounds = array<i64: 1, 6, 16>}]} {
    %c0_i32 = arith.constant 0 : i32
    %0 = arith.cmpi eq, %arg1, %c0_i32 : i32
    %1 = arith.extui %0 : i1 to i32
    %c0_i32_0 = arith.constant 0 : i32
    %2 = arith.cmpi ne, %1, %c0_i32_0 : i32
    scf.if %2 {
      %cst_25 = arith.constant 0.000000e+00 : f32
      %40 = vector.broadcast %cst_25 : f32 to vector<6x16xf32>
      %c0_26 = arith.constant 0 : index
      %c0_27 = arith.constant 0 : index
      %41 = vector.load %arg7[%c0_26, %c0_27] : memref<6x16xf32, #tpu.memory_space<vmem>>, vector<6x16xf32>
      tpu.vector_store %arg7[%c0_26, %c0_27], %40 {strides = array<i32>} : memref<6x16xf32, #tpu.memory_space<vmem>>, vector<6x16xf32>,
      %cst_28 = arith.constant 0.000000e+00 : f32
      %42 = vector.broadcast %cst_28 : f32 to vector<6x1xf32>
      %c0_29 = arith.constant 0 : index
      %c0_30 = arith.constant 0 : index
      %43 = vector.load %arg8[%c0_29, %c0_30] : memref<6x1xf32, #tpu.memory_space<vmem>>, vector<6x1xf32>
      tpu.vector_store %arg8[%c0_29, %c0_30], %42 {strides = array<i32>} : memref<6x1xf32, #tpu.memory_space<vmem>>, vector<6x1xf32>,
    } else {
    }
    %c0 = arith.constant 0 : index
    %c0_1 = arith.constant 0 : index
    %c0_2 = arith.constant 0 : index
    %3 = vector.load %arg2[%c0, %c0_1, %c0_2] : memref<1x16x16xbf16, #tpu.memory_space<vmem>>, vector<1x16x16xbf16>
    %4 = vector.shape_cast %3 : vector<1x16x16xbf16> to vector<16x16xbf16>
    %c0_3 = arith.constant 0 : index
    %c0_4 = arith.constant 0 : index
    %5 = vector.load %arg3[%c0_3, %c0_4] : memref<16x6xbf16, #tpu.memory_space<vmem>>, vector<16x6xbf16>
    %cst = arith.constant dense<0.000000e+00> : vector<16x6xf32>
    %6 = tpu.matmul %4, %5, %cst {dimension_numbers = #tpu.dot_dimension_numbers<[1], [0], [0], [1], [0, 0, 1, 1], [], []>} : vector<16x16xbf16>, vector<16x6xbf16>, vector<16x6xf32> -> vector<16x6xf32>
    %c0_5 = arith.constant 0 : index
    %c0_6 = arith.constant 0 : index
    %7 = vector.load %arg4[%c0_5, %c0_6] : memref<1x6xf32, #tpu.memory_space<vmem>>, vector<1x6xf32>
    %8 = vector.broadcast %7 : vector<1x6xf32> to vector<16x6xf32>
    %9 = arith.addf %6, %8 : vector<16x6xf32>
    %cst_7 = arith.constant dense<0xFF800000> : vector<16xf32>
    %10 = vector.multi_reduction <maximumf>, %9, %cst_7 [1] : vector<16x6xf32> to vector<16xf32>
    %11 = vector.shape_cast %10 : vector<16xf32> to vector<16x1xf32>
    %12 = tpu.iota {dimensions = array<i32: 1>} : vector<16x6xi32>
    %13 = vector.broadcast %11 : vector<16x1xf32> to vector<16x6xf32>
    %14 = arith.cmpf oeq, %9, %13 : vector<16x6xf32>
    %c6_i32 = arith.constant 6 : i32
    %15 = vector.broadcast %c6_i32 : i32 to vector<16x6xi32>
    %16 = arith.select %14, %12, %15 : vector<16x6xi1>, vector<16x6xi32>
    %cst_8 = arith.constant dense<2147483647> : vector<16xi32>
    %17 = vector.multi_reduction <minsi>, %16, %cst_8 [1] : vector<16x6xi32> to vector<16xi32>
    %18 = vector.shape_cast %17 : vector<16xi32> to vector<16x1xi32>
    %19 = vector.broadcast %18 : vector<16x1xi32> to vector<16x6xi32>
    %20 = arith.cmpi eq, %19, %12 : vector<16x6xi32>
    %21 = arith.extui %20 : vector<16x6xi1> to vector<16x6xi32>
    %22 = arith.sitofp %21 : vector<16x6xi32> to vector<16x6xf32>
    %c0_9 = arith.constant 0 : index
    %c0_10 = arith.constant 0 : index
    %c0_11 = arith.constant 0 : index
    %23 = vector.load %arg5[%c0_9, %c0_10, %c0_11] : memref<1x16x1xf32, #tpu.memory_space<vmem>>, vector<1x16x1xf32>
    %24 = vector.shape_cast %23 : vector<1x16x1xf32> to vector<16x1xf32>
    %25 = vector.broadcast %24 : vector<16x1xf32> to vector<16x6xf32>
    %26 = arith.mulf %22, %25 : vector<16x6xf32>
    %c0_12 = arith.constant 0 : index
    %c0_13 = arith.constant 0 : index
    %27 = vector.load %arg7[%c0_12, %c0_13] : memref<6x16xf32, #tpu.memory_space<vmem>>, vector<6x16xf32>
    %28 = arith.extf %4 : vector<16x16xbf16> to vector<16x16xf32>
    %cst_14 = arith.constant dense<0.000000e+00> : vector<6x16xf32>
    %29 = tpu.matmul %26, %28, %cst_14 {dimension_numbers = #tpu.dot_dimension_numbers<[0], [0], [1], [1], [0, 1, 1, 1], [], []>} : vector<16x6xf32>, vector<16x16xf32>, vector<6x16xf32> -> vector<6x16xf32>
    %30 = arith.addf %27, %29 : vector<6x16xf32>
    %c0_15 = arith.constant 0 : index
    %c0_16 = arith.constant 0 : index
    %31 = vector.load %arg7[%c0_15, %c0_16] : memref<6x16xf32, #tpu.memory_space<vmem>>, vector<6x16xf32>
    tpu.vector_store %arg7[%c0_15, %c0_16], %30 {strides = array<i32>} : memref<6x16xf32, #tpu.memory_space<vmem>>, vector<6x16xf32>,
    %cst_17 = arith.constant 1.000000e+00 : f32
    %32 = vector.broadcast %cst_17 : f32 to vector<16x1xf32>
    %c0_18 = arith.constant 0 : index
    %c0_19 = arith.constant 0 : index
    %33 = vector.load %arg8[%c0_18, %c0_19] : memref<6x1xf32, #tpu.memory_space<vmem>>, vector<6x1xf32>
    %cst_20 = arith.constant dense<0.000000e+00> : vector<6x1xf32>
    %34 = tpu.matmul %26, %32, %cst_20 {dimension_numbers = #tpu.dot_dimension_numbers<[0], [0], [1], [1], [0, 1, 1, 1], [], []>} : vector<16x6xf32>, vector<16x1xf32>, vector<6x1xf32> -> vector<6x1xf32>
    %35 = arith.addf %33, %34 : vector<6x1xf32>
    %c0_21 = arith.constant 0 : index
    %c0_22 = arith.constant 0 : index
    %36 = vector.load %arg8[%c0_21, %c0_22] : memref<6x1xf32, #tpu.memory_space<vmem>>, vector<6x1xf32>
    tpu.vector_store %arg8[%c0_21, %c0_22], %35 {strides = array<i32>} : memref<6x1xf32, #tpu.memory_space<vmem>>, vector<6x1xf32>,
    %c0_i32_23 = arith.constant 0 : i32
    %37 = arith.cmpi eq, %arg1, %c0_i32_23 : i32
    %38 = arith.extui %37 : i1 to i32
    %c0_i32_24 = arith.constant 0 : i32
    %39 = arith.cmpi ne, %38, %c0_i32_24 : i32
    scf.if %39 {
      %c0_25 = arith.constant 0 : index
      %c0_26 = arith.constant 0 : index
      %40 = vector.load %arg7[%c0_25, %c0_26] : memref<6x16xf32, #tpu.memory_space<vmem>>, vector<6x16xf32>
      %c0_27 = arith.constant 0 : index
      %c0_28 = arith.constant 0 : index
      %41 = vector.load %arg8[%c0_27, %c0_28] : memref<6x1xf32, #tpu.memory_space<vmem>>, vector<6x1xf32>
      %cst_29 = arith.constant 9.99999974E-6 : f32
      %42 = vector.broadcast %cst_29 : f32 to vector<6x1xf32>
      %43 = arith.addf %41, %42 : vector<6x1xf32>
      %cst_30 = arith.constant 1.000000e+00 : f32
      %44 = vector.broadcast %cst_30 : f32 to vector<6x1xf32>
      %45 = arith.divf %44, %43 : vector<6x1xf32>
      %46 = vector.broadcast %45 : vector<6x1xf32> to vector<6x16xf32>
      %47 = arith.mulf %40, %46 : vector<6x16xf32>
      %c0_31 = arith.constant 0 : index
      %c0_32 = arith.constant 0 : index
      %c0_33 = arith.constant 0 : index
      %48 = vector.load %arg6[%c0_31, %c0_32, %c0_33] : memref<1x6x16xf32, #tpu.memory_space<vmem>>, vector<1x6x16xf32>
      %49 = vector.shape_cast %48 : vector<1x6x16xf32> to vector<6x16xf32>
      %50 = vector.shape_cast %47 : vector<6x16xf32> to vector<1x6x16xf32>
      tpu.vector_store %arg6[%c0_31, %c0_32, %c0_33], %50 {strides = array<i32>} : memref<1x6x16xf32, #tpu.memory_space<vmem>>, vector<1x6x16xf32>,
    } else {
    }
    return
  }
  func.func @transform_0(%arg0: i32, %arg1: i32) -> (i32, i32, i32) {
    %c0_i32 = arith.constant 0 : i32
    %c0_i32_0 = arith.constant 0 : i32
    return %arg0, %arg1, %c0_i32 : i32, i32, i32
  }
  func.func @transform_1(%arg0: i32, %arg1: i32) -> (i32, i32) {
    %c0_i32 = arith.constant 0 : i32
    %c0_i32_0 = arith.constant 0 : i32
    %c0_i32_1 = arith.constant 0 : i32
    return %c0_i32, %c0_i32_0 : i32, i32
  }
  func.func @transform_2(%arg0: i32, %arg1: i32) -> (i32, i32) {
    %c0_i32 = arith.constant 0 : i32
    %c0_i32_0 = arith.constant 0 : i32
    %c0_i32_1 = arith.constant 0 : i32
    return %c0_i32, %c0_i32_0 : i32, i32
  }
  func.func @transform_3(%arg0: i32, %arg1: i32) -> (i32, i32, i32) {
    %c0_i32 = arith.constant 0 : i32
    %c0_i32_0 = arith.constant 0 : i32
    return %arg0, %arg1, %c0_i32 : i32, i32, i32
  }
  func.func @transform_4(%arg0: i32, %arg1: i32) -> (i32, i32, i32) {
    %c0_i32 = arith.constant 0 : i32
    %c0_i32_0 = arith.constant 0 : i32
    %c0_i32_1 = arith.constant 0 : i32
    return %arg0, %c0_i32, %c0_i32_0 : i32, i32, i32
  }
}

module attributes {stable_mosaic.version = 11 : i64} {
  func.func @_attn_kernel(%arg0: i32, %arg1: i32, %arg2: memref<1x16x16xbf16, #tpu.memory_space<vmem>>, %arg3: memref<1x6x16xf32, #tpu.memory_space<vmem>>, %arg4: memref<16x16xbf16, #tpu.memory_space<vmem>>, %arg5: memref<1x16xf32, #tpu.memory_space<vmem>>, %arg6: memref<16x128xf32, #tpu.memory_space<vmem>>, %arg7: memref<1x128xf32, #tpu.memory_space<vmem>>, %arg8: memref<1x16x128xf32, #tpu.memory_space<vmem>>, %arg9: memref<1x16x16xf32, #tpu.memory_space<vmem>>) attributes {dimension_semantics = [#tpu.dimension_semantics<parallel>, #tpu.dimension_semantics<parallel>], iteration_bounds = array<i64: 2, 1>, scalar_prefetch = 0 : i64, scratch_operands = 0 : i64, tpu.core_type = #tpu.core_type<tc>, window_params = [{transform_indices = @transform_0, window_bounds = array<i64: 1, 16, 16>}, {transform_indices = @transform_1, window_bounds = array<i64: 1, 6, 16>}, {pipeline_mode = #tpu.pipeline_mode<synchronous>, transform_indices = @transform_2, window_bounds = array<i64: 16, 16>}, {pipeline_mode = #tpu.pipeline_mode<synchronous>, transform_indices = @transform_3, window_bounds = array<i64: 1, 16>}, {pipeline_mode = #tpu.pipeline_mode<synchronous>, transform_indices = @transform_4, window_bounds = array<i64: 16, 128>}, {pipeline_mode = #tpu.pipeline_mode<synchronous>, transform_indices = @transform_5, window_bounds = array<i64: 1, 128>}, {transform_indices = @transform_6, window_bounds = array<i64: 1, 16, 128>}, {transform_indices = @transform_7, window_bounds = array<i64: 1, 16, 16>}]} {
    %c0 = arith.constant 0 : index
    %c0_0 = arith.constant 0 : index
    %c0_1 = arith.constant 0 : index
    %0 = vector.load %arg2[%c0, %c0_0, %c0_1] : memref<1x16x16xbf16, #tpu.memory_space<vmem>>, vector<1x16x16xbf16>
    %1 = vector.shape_cast %0 : vector<1x16x16xbf16> to vector<16x16xbf16>
    %c0_2 = arith.constant 0 : index
    %c0_3 = arith.constant 0 : index
    %c0_4 = arith.constant 0 : index
    %2 = vector.load %arg3[%c0_2, %c0_3, %c0_4] : memref<1x6x16xf32, #tpu.memory_space<vmem>>, vector<1x6x16xf32>
    %3 = vector.shape_cast %2 : vector<1x6x16xf32> to vector<6x16xf32>
    %c0_5 = arith.constant 0 : index
    %c0_6 = arith.constant 0 : index
    %4 = vector.load %arg4[%c0_5, %c0_6] : memref<16x16xbf16, #tpu.memory_space<vmem>>, vector<16x16xbf16>
    %cst = arith.constant dense<0.000000e+00> : vector<16x16xf32>
    %5 = tpu.matmul %1, %4, %cst {dimension_numbers = #tpu.dot_dimension_numbers<[1], [0], [0], [1], [0, 0, 1, 1], [], []>} : vector<16x16xbf16>, vector<16x16xbf16>, vector<16x16xf32> -> vector<16x16xf32>
    %c0_7 = arith.constant 0 : index
    %c0_8 = arith.constant 0 : index
    %6 = vector.load %arg5[%c0_7, %c0_8] : memref<1x16xf32, #tpu.memory_space<vmem>>, vector<1x16xf32>
    %7 = vector.broadcast %6 : vector<1x16xf32> to vector<16x16xf32>
    %8 = arith.addf %5, %7 : vector<16x16xf32>
    %cst_9 = arith.constant dense<0.000000e+00> : vector<16x6xf32>
    %9 = tpu.matmul %8, %3, %cst_9 {dimension_numbers = #tpu.dot_dimension_numbers<[1], [1], [0], [0], [0, 0, 1, 0], [], []>} : vector<16x16xf32>, vector<6x16xf32>, vector<16x6xf32> -> vector<16x6xf32>
    %cst_10 = arith.constant dense<0xFF800000> : vector<16xf32>
    %10 = vector.multi_reduction <maximumf>, %9, %cst_10 [1] : vector<16x6xf32> to vector<16xf32>
    %11 = vector.shape_cast %10 : vector<16xf32> to vector<16x1xf32>
    %12 = vector.broadcast %11 : vector<16x1xf32> to vector<16x6xf32>
    %13 = arith.subf %9, %12 : vector<16x6xf32>
    %14 = math.exp %13 : vector<16x6xf32>
    %cst_11 = arith.constant dense<0.000000e+00> : vector<16xf32>
    %15 = vector.multi_reduction <add>, %14, %cst_11 [1] : vector<16x6xf32> to vector<16xf32>
    %16 = vector.shape_cast %15 : vector<16xf32> to vector<16x1xf32>
    %17 = vector.broadcast %16 : vector<16x1xf32> to vector<16x6xf32>
    %18 = arith.divf %14, %17 : vector<16x6xf32>
    %cst_12 = arith.constant dense<0xFF800000> : vector<16xf32>
    %19 = vector.multi_reduction <maximumf>, %18, %cst_12 [1] : vector<16x6xf32> to vector<16xf32>
    %20 = vector.shape_cast %19 : vector<16xf32> to vector<16x1xf32>
    %21 = arith.extf %1 : vector<16x16xbf16> to vector<16x16xf32>
    %22 = vector.broadcast %20 : vector<16x1xf32> to vector<16x16xf32>
    %23 = arith.mulf %21, %22 : vector<16x16xf32>
    %c0_13 = arith.constant 0 : index
    %c0_14 = arith.constant 0 : index
    %c0_15 = arith.constant 0 : index
    %24 = vector.load %arg9[%c0_13, %c0_14, %c0_15] : memref<1x16x16xf32, #tpu.memory_space<vmem>>, vector<1x16x16xf32>
    %25 = vector.shape_cast %24 : vector<1x16x16xf32> to vector<16x16xf32>
    %26 = vector.shape_cast %23 : vector<16x16xf32> to vector<1x16x16xf32>
    tpu.vector_store %arg9[%c0_13, %c0_14, %c0_15], %26 {strides = array<i32>} : memref<1x16x16xf32, #tpu.memory_space<vmem>>, vector<1x16x16xf32>,
    %c0_16 = arith.constant 0 : index
    %c0_17 = arith.constant 0 : index
    %27 = vector.load %arg6[%c0_16, %c0_17] : memref<16x128xf32, #tpu.memory_space<vmem>>, vector<16x128xf32>
    %cst_18 = arith.constant dense<0.000000e+00> : vector<16x128xf32>
    %28 = tpu.matmul %23, %27, %cst_18 {dimension_numbers = #tpu.dot_dimension_numbers<[1], [0], [0], [1], [0, 0, 1, 1], [], []>} : vector<16x16xf32>, vector<16x128xf32>, vector<16x128xf32> -> vector<16x128xf32>
    %c0_19 = arith.constant 0 : index
    %c0_20 = arith.constant 0 : index
    %29 = vector.load %arg7[%c0_19, %c0_20] : memref<1x128xf32, #tpu.memory_space<vmem>>, vector<1x128xf32>
    %30 = vector.broadcast %29 : vector<1x128xf32> to vector<16x128xf32>
    %31 = arith.addf %28, %30 : vector<16x128xf32>
    %c0_21 = arith.constant 0 : index
    %c0_22 = arith.constant 0 : index
    %c0_23 = arith.constant 0 : index
    %32 = vector.load %arg8[%c0_21, %c0_22, %c0_23] : memref<1x16x128xf32, #tpu.memory_space<vmem>>, vector<1x16x128xf32>
    %33 = vector.shape_cast %32 : vector<1x16x128xf32> to vector<16x128xf32>
    %34 = vector.shape_cast %31 : vector<16x128xf32> to vector<1x16x128xf32>
    tpu.vector_store %arg8[%c0_21, %c0_22, %c0_23], %34 {strides = array<i32>} : memref<1x16x128xf32, #tpu.memory_space<vmem>>, vector<1x16x128xf32>,
    return
  }
  func.func @transform_0(%arg0: i32, %arg1: i32) -> (i32, i32, i32) {
    %c0_i32 = arith.constant 0 : i32
    %c0_i32_0 = arith.constant 0 : i32
    return %arg0, %arg1, %c0_i32 : i32, i32, i32
  }
  func.func @transform_1(%arg0: i32, %arg1: i32) -> (i32, i32, i32) {
    %c0_i32 = arith.constant 0 : i32
    %c0_i32_0 = arith.constant 0 : i32
    %c0_i32_1 = arith.constant 0 : i32
    return %arg0, %c0_i32, %c0_i32_0 : i32, i32, i32
  }
  func.func @transform_2(%arg0: i32, %arg1: i32) -> (i32, i32) {
    %c0_i32 = arith.constant 0 : i32
    %c0_i32_0 = arith.constant 0 : i32
    %c0_i32_1 = arith.constant 0 : i32
    return %c0_i32, %c0_i32_0 : i32, i32
  }
  func.func @transform_3(%arg0: i32, %arg1: i32) -> (i32, i32) {
    %c0_i32 = arith.constant 0 : i32
    %c0_i32_0 = arith.constant 0 : i32
    %c0_i32_1 = arith.constant 0 : i32
    return %c0_i32, %c0_i32_0 : i32, i32
  }
  func.func @transform_4(%arg0: i32, %arg1: i32) -> (i32, i32) {
    %c0_i32 = arith.constant 0 : i32
    %c0_i32_0 = arith.constant 0 : i32
    %c0_i32_1 = arith.constant 0 : i32
    return %c0_i32, %c0_i32_0 : i32, i32
  }
  func.func @transform_5(%arg0: i32, %arg1: i32) -> (i32, i32) {
    %c0_i32 = arith.constant 0 : i32
    %c0_i32_0 = arith.constant 0 : i32
    %c0_i32_1 = arith.constant 0 : i32
    return %c0_i32, %c0_i32_0 : i32, i32
  }
  func.func @transform_6(%arg0: i32, %arg1: i32) -> (i32, i32, i32) {
    %c0_i32 = arith.constant 0 : i32
    %c0_i32_0 = arith.constant 0 : i32
    return %arg0, %arg1, %c0_i32 : i32, i32, i32
  }
  func.func @transform_7(%arg0: i32, %arg1: i32) -> (i32, i32, i32) {
    %c0_i32 = arith.constant 0 : i32
    %c0_i32_0 = arith.constant 0 : i32
    return %arg0, %arg1, %c0_i32 : i32, i32, i32
  }
}

module attributes {stable_mosaic.version = 11 : i64} {
  func.func @_upsample_kernel(%arg0: i32, %arg1: memref<6x4x4xf32, #tpu.memory_space<vmem>>, %arg2: memref<16x4xf32, #tpu.memory_space<vmem>>, %arg3: memref<4x16xf32, #tpu.memory_space<vmem>>, %arg4: memref<6x16x16xf32, #tpu.memory_space<vmem>>) attributes {dimension_semantics = [#tpu.dimension_semantics<parallel>], iteration_bounds = array<i64: 2>, scalar_prefetch = 0 : i64, scratch_operands = 0 : i64, tpu.core_type = #tpu.core_type<tc>, window_params = [{transform_indices = @transform_0, window_bounds = array<i64: 6, 4, 4>}, {pipeline_mode = #tpu.pipeline_mode<synchronous>, transform_indices = @transform_1, window_bounds = array<i64: 16, 4>}, {pipeline_mode = #tpu.pipeline_mode<synchronous>, transform_indices = @transform_2, window_bounds = array<i64: 4, 16>}, {transform_indices = @transform_3, window_bounds = array<i64: 6, 16, 16>}]} {
    %c0 = arith.constant 0 : index
    %c0_0 = arith.constant 0 : index
    %0 = vector.load %arg2[%c0, %c0_0] : memref<16x4xf32, #tpu.memory_space<vmem>>, vector<16x4xf32>
    %c0_1 = arith.constant 0 : index
    %c0_2 = arith.constant 0 : index
    %1 = vector.load %arg3[%c0_1, %c0_2] : memref<4x16xf32, #tpu.memory_space<vmem>>, vector<4x16xf32>
    %c0_3 = arith.constant 0 : index
    %c0_4 = arith.constant 0 : index
    %c0_5 = arith.constant 0 : index
    %2 = vector.load %arg1[%c0_3, %c0_4, %c0_5] : memref<6x4x4xf32, #tpu.memory_space<vmem>>, vector<1x4x4xf32>
    %3 = vector.shape_cast %2 : vector<1x4x4xf32> to vector<4x4xf32>
    %cst = arith.constant dense<0.000000e+00> : vector<4x16xf32>
    %4 = tpu.matmul %3, %1, %cst {dimension_numbers = #tpu.dot_dimension_numbers<[1], [0], [0], [1], [0, 0, 1, 1], [], []>} : vector<4x4xf32>, vector<4x16xf32>, vector<4x16xf32> -> vector<4x16xf32>
    %cst_6 = arith.constant dense<0.000000e+00> : vector<16x16xf32>
    %5 = tpu.matmul %0, %4, %cst_6 {dimension_numbers = #tpu.dot_dimension_numbers<[1], [0], [0], [1], [0, 0, 1, 1], [], []>} : vector<16x4xf32>, vector<4x16xf32>, vector<16x16xf32> -> vector<16x16xf32>
    %c0_7 = arith.constant 0 : index
    %c0_8 = arith.constant 0 : index
    %c0_9 = arith.constant 0 : index
    %6 = vector.load %arg4[%c0_7, %c0_8, %c0_9] : memref<6x16x16xf32, #tpu.memory_space<vmem>>, vector<1x16x16xf32>
    %7 = vector.shape_cast %6 : vector<1x16x16xf32> to vector<16x16xf32>
    %8 = vector.shape_cast %5 : vector<16x16xf32> to vector<1x16x16xf32>
    tpu.vector_store %arg4[%c0_7, %c0_8, %c0_9], %8 {strides = array<i32>} : memref<6x16x16xf32, #tpu.memory_space<vmem>>, vector<1x16x16xf32>,
    %c1 = arith.constant 1 : index
    %c0_10 = arith.constant 0 : index
    %c0_11 = arith.constant 0 : index
    %9 = vector.load %arg1[%c1, %c0_10, %c0_11] : memref<6x4x4xf32, #tpu.memory_space<vmem>>, vector<1x4x4xf32>
    %10 = vector.shape_cast %9 : vector<1x4x4xf32> to vector<4x4xf32>
    %cst_12 = arith.constant dense<0.000000e+00> : vector<4x16xf32>
    %11 = tpu.matmul %10, %1, %cst_12 {dimension_numbers = #tpu.dot_dimension_numbers<[1], [0], [0], [1], [0, 0, 1, 1], [], []>} : vector<4x4xf32>, vector<4x16xf32>, vector<4x16xf32> -> vector<4x16xf32>
    %cst_13 = arith.constant dense<0.000000e+00> : vector<16x16xf32>
    %12 = tpu.matmul %0, %11, %cst_13 {dimension_numbers = #tpu.dot_dimension_numbers<[1], [0], [0], [1], [0, 0, 1, 1], [], []>} : vector<16x4xf32>, vector<4x16xf32>, vector<16x16xf32> -> vector<16x16xf32>
    %c1_14 = arith.constant 1 : index
    %c0_15 = arith.constant 0 : index
    %c0_16 = arith.constant 0 : index
    %13 = vector.load %arg4[%c1_14, %c0_15, %c0_16] : memref<6x16x16xf32, #tpu.memory_space<vmem>>, vector<1x16x16xf32>
    %14 = vector.shape_cast %13 : vector<1x16x16xf32> to vector<16x16xf32>
    %15 = vector.shape_cast %12 : vector<16x16xf32> to vector<1x16x16xf32>
    tpu.vector_store %arg4[%c1_14, %c0_15, %c0_16], %15 {strides = array<i32>} : memref<6x16x16xf32, #tpu.memory_space<vmem>>, vector<1x16x16xf32>,
    %c2 = arith.constant 2 : index
    %c0_17 = arith.constant 0 : index
    %c0_18 = arith.constant 0 : index
    %16 = vector.load %arg1[%c2, %c0_17, %c0_18] : memref<6x4x4xf32, #tpu.memory_space<vmem>>, vector<1x4x4xf32>
    %17 = vector.shape_cast %16 : vector<1x4x4xf32> to vector<4x4xf32>
    %cst_19 = arith.constant dense<0.000000e+00> : vector<4x16xf32>
    %18 = tpu.matmul %17, %1, %cst_19 {dimension_numbers = #tpu.dot_dimension_numbers<[1], [0], [0], [1], [0, 0, 1, 1], [], []>} : vector<4x4xf32>, vector<4x16xf32>, vector<4x16xf32> -> vector<4x16xf32>
    %cst_20 = arith.constant dense<0.000000e+00> : vector<16x16xf32>
    %19 = tpu.matmul %0, %18, %cst_20 {dimension_numbers = #tpu.dot_dimension_numbers<[1], [0], [0], [1], [0, 0, 1, 1], [], []>} : vector<16x4xf32>, vector<4x16xf32>, vector<16x16xf32> -> vector<16x16xf32>
    %c2_21 = arith.constant 2 : index
    %c0_22 = arith.constant 0 : index
    %c0_23 = arith.constant 0 : index
    %20 = vector.load %arg4[%c2_21, %c0_22, %c0_23] : memref<6x16x16xf32, #tpu.memory_space<vmem>>, vector<1x16x16xf32>
    %21 = vector.shape_cast %20 : vector<1x16x16xf32> to vector<16x16xf32>
    %22 = vector.shape_cast %19 : vector<16x16xf32> to vector<1x16x16xf32>
    tpu.vector_store %arg4[%c2_21, %c0_22, %c0_23], %22 {strides = array<i32>} : memref<6x16x16xf32, #tpu.memory_space<vmem>>, vector<1x16x16xf32>,
    %c3 = arith.constant 3 : index
    %c0_24 = arith.constant 0 : index
    %c0_25 = arith.constant 0 : index
    %23 = vector.load %arg1[%c3, %c0_24, %c0_25] : memref<6x4x4xf32, #tpu.memory_space<vmem>>, vector<1x4x4xf32>
    %24 = vector.shape_cast %23 : vector<1x4x4xf32> to vector<4x4xf32>
    %cst_26 = arith.constant dense<0.000000e+00> : vector<4x16xf32>
    %25 = tpu.matmul %24, %1, %cst_26 {dimension_numbers = #tpu.dot_dimension_numbers<[1], [0], [0], [1], [0, 0, 1, 1], [], []>} : vector<4x4xf32>, vector<4x16xf32>, vector<4x16xf32> -> vector<4x16xf32>
    %cst_27 = arith.constant dense<0.000000e+00> : vector<16x16xf32>
    %26 = tpu.matmul %0, %25, %cst_27 {dimension_numbers = #tpu.dot_dimension_numbers<[1], [0], [0], [1], [0, 0, 1, 1], [], []>} : vector<16x4xf32>, vector<4x16xf32>, vector<16x16xf32> -> vector<16x16xf32>
    %c3_28 = arith.constant 3 : index
    %c0_29 = arith.constant 0 : index
    %c0_30 = arith.constant 0 : index
    %27 = vector.load %arg4[%c3_28, %c0_29, %c0_30] : memref<6x16x16xf32, #tpu.memory_space<vmem>>, vector<1x16x16xf32>
    %28 = vector.shape_cast %27 : vector<1x16x16xf32> to vector<16x16xf32>
    %29 = vector.shape_cast %26 : vector<16x16xf32> to vector<1x16x16xf32>
    tpu.vector_store %arg4[%c3_28, %c0_29, %c0_30], %29 {strides = array<i32>} : memref<6x16x16xf32, #tpu.memory_space<vmem>>, vector<1x16x16xf32>,
    %c4 = arith.constant 4 : index
    %c0_31 = arith.constant 0 : index
    %c0_32 = arith.constant 0 : index
    %30 = vector.load %arg1[%c4, %c0_31, %c0_32] : memref<6x4x4xf32, #tpu.memory_space<vmem>>, vector<1x4x4xf32>
    %31 = vector.shape_cast %30 : vector<1x4x4xf32> to vector<4x4xf32>
    %cst_33 = arith.constant dense<0.000000e+00> : vector<4x16xf32>
    %32 = tpu.matmul %31, %1, %cst_33 {dimension_numbers = #tpu.dot_dimension_numbers<[1], [0], [0], [1], [0, 0, 1, 1], [], []>} : vector<4x4xf32>, vector<4x16xf32>, vector<4x16xf32> -> vector<4x16xf32>
    %cst_34 = arith.constant dense<0.000000e+00> : vector<16x16xf32>
    %33 = tpu.matmul %0, %32, %cst_34 {dimension_numbers = #tpu.dot_dimension_numbers<[1], [0], [0], [1], [0, 0, 1, 1], [], []>} : vector<16x4xf32>, vector<4x16xf32>, vector<16x16xf32> -> vector<16x16xf32>
    %c4_35 = arith.constant 4 : index
    %c0_36 = arith.constant 0 : index
    %c0_37 = arith.constant 0 : index
    %34 = vector.load %arg4[%c4_35, %c0_36, %c0_37] : memref<6x16x16xf32, #tpu.memory_space<vmem>>, vector<1x16x16xf32>
    %35 = vector.shape_cast %34 : vector<1x16x16xf32> to vector<16x16xf32>
    %36 = vector.shape_cast %33 : vector<16x16xf32> to vector<1x16x16xf32>
    tpu.vector_store %arg4[%c4_35, %c0_36, %c0_37], %36 {strides = array<i32>} : memref<6x16x16xf32, #tpu.memory_space<vmem>>, vector<1x16x16xf32>,
    %c5 = arith.constant 5 : index
    %c0_38 = arith.constant 0 : index
    %c0_39 = arith.constant 0 : index
    %37 = vector.load %arg1[%c5, %c0_38, %c0_39] : memref<6x4x4xf32, #tpu.memory_space<vmem>>, vector<1x4x4xf32>
    %38 = vector.shape_cast %37 : vector<1x4x4xf32> to vector<4x4xf32>
    %cst_40 = arith.constant dense<0.000000e+00> : vector<4x16xf32>
    %39 = tpu.matmul %38, %1, %cst_40 {dimension_numbers = #tpu.dot_dimension_numbers<[1], [0], [0], [1], [0, 0, 1, 1], [], []>} : vector<4x4xf32>, vector<4x16xf32>, vector<4x16xf32> -> vector<4x16xf32>
    %cst_41 = arith.constant dense<0.000000e+00> : vector<16x16xf32>
    %40 = tpu.matmul %0, %39, %cst_41 {dimension_numbers = #tpu.dot_dimension_numbers<[1], [0], [0], [1], [0, 0, 1, 1], [], []>} : vector<16x4xf32>, vector<4x16xf32>, vector<16x16xf32> -> vector<16x16xf32>
    %c5_42 = arith.constant 5 : index
    %c0_43 = arith.constant 0 : index
    %c0_44 = arith.constant 0 : index
    %41 = vector.load %arg4[%c5_42, %c0_43, %c0_44] : memref<6x16x16xf32, #tpu.memory_space<vmem>>, vector<1x16x16xf32>
    %42 = vector.shape_cast %41 : vector<1x16x16xf32> to vector<16x16xf32>
    %43 = vector.shape_cast %40 : vector<16x16xf32> to vector<1x16x16xf32>
    tpu.vector_store %arg4[%c5_42, %c0_43, %c0_44], %43 {strides = array<i32>} : memref<6x16x16xf32, #tpu.memory_space<vmem>>, vector<1x16x16xf32>,
    return
  }
  func.func @transform_0(%arg0: i32) -> (i32, i32, i32) {
    %c0_i32 = arith.constant 0 : i32
    %c0_i32_0 = arith.constant 0 : i32
    %c0_i32_1 = arith.constant 0 : i32
    return %arg0, %c0_i32, %c0_i32_0 : i32, i32, i32
  }
  func.func @transform_1(%arg0: i32) -> (i32, i32) {
    %c0_i32 = arith.constant 0 : i32
    %c0_i32_0 = arith.constant 0 : i32
    %c0_i32_1 = arith.constant 0 : i32
    return %c0_i32, %c0_i32_0 : i32, i32
  }
  func.func @transform_2(%arg0: i32) -> (i32, i32) {
    %c0_i32 = arith.constant 0 : i32
    %c0_i32_0 = arith.constant 0 : i32
    %c0_i32_1 = arith.constant 0 : i32
    return %c0_i32, %c0_i32_0 : i32, i32
  }
  func.func @transform_3(%arg0: i32) -> (i32, i32, i32) {
    %c0_i32 = arith.constant 0 : i32
    %c0_i32_0 = arith.constant 0 : i32
    %c0_i32_1 = arith.constant 0 : i32
    return %arg0, %c0_i32, %c0_i32_0 : i32, i32, i32
  }
}

</mosaic_0001>

<llo_original>
// kernel: deeplab_forward.15
$region0: #{deeplab_forward.15}
  #allocation0 [shape = 'u32[]', space=smem, size = 0x4, offset = 0x4, fixed_abs, tag = 'smem constant byte address 0x4 - core index']
  #allocation1 [shape = 'u32[72,128]{1,0:T(1,128)}', space=vmem, size = 0x9000, scoped, tag = 'internal scratch']
  %s0 = inlined_call_operand.vmem [shape: bf16[2048,147], index: 0, kind: input, shape index: {}]
  %s1 = inlined_call_operand.vmem [shape: bf16[147,16], index: 1, kind: input, shape index: {}]
  %s2 = inlined_call_operand.vmem [shape: f32[1,16], index: 2, kind: input, shape index: {}]
  %s3 = inlined_call_operand.vmem [shape: bf16[2048,16], index: 3, kind: output, shape index: {}]
  %s4 = sld [smem:[#allocation0]]
  $region45: #{deeplab_forward.15} parent=0
    _
  %s6 = ssub.s32 1, %s4
  %s7 = scalar_select 0, %s6, %s4
  loop: start=0, step=1, limit=6
  $region2: #{deeplab_forward.15} parent=0 // loop_pre_header
    _
  $region3: #{deeplab_forward.15} parent=0 // loop_header
    %s9 = sphi 0, %s13
    %p10 = scmp.ge.s32.totalorder %s9, 6
    %s16 = sphi 0, %s35
    %s17 = sphi 0, %s31
    %s18 = sphi 0, %s27
    %s19 = sphi 0, %s16
    %s20 = sphi 0, %s17
    %s21 = sphi 0, %s18
    %s22 = sphi 0, %s19
    %s23 = sphi 0, %s20
    %s24 = sphi 0, %s21
    %s40 = sphi 0, %s42
    %s43 = sphi 0, %s40
    %s44 = sphi 0, %s43
    %s60 = sphi 0, %s44
    %s68 = sphi 0, %s70
    %s71 = sphi 0, %s68
    %s72 = sphi 0, %s71
    %s88 = sphi 0, %s72
    %s94 = sphi 0, %s96
    %s97 = sphi 0, %s94
    %s98 = sphi 0, %s97
    %s114 = sphi 0, %s98
    %s122 = sphi 0, %s124
    %s125 = sphi 0, %s122
    %s126 = sphi 0, %s125
    %s142 = sphi 0, %s126
  $region4: #{deeplab_forward.15} parent=0 // loop_header_branch
    %12 = sbr.rel (%p10) target = $region8
  $region5: #{deeplab_forward.15} parent=0 // loop_body
    %s14 = ssub.s32 %s9, 1
    %s15 = ssub.s32 %s9, 2
    %s25 = sadd.s32 1, %s18
    %p26 = scmp.ge.s32.totalorder %s25, 1
    %s27 = scalar_select %p26, 0, %s25
    %s28 = sadd.s32 1, %s17
    %s29 = scalar_select %p26, %s28, %s17
    %p30 = scmp.ge.s32.totalorder %s29, 1
    %s31 = scalar_select %p30, 0, %s29
    %s32 = sadd.s32 1, %s16
    %s33 = scalar_select %p30, %s32, %s16
    %p34 = scmp.ge.s32.totalorder %s33, 4
    %s35 = scalar_select %p34, 0, %s33
    %s36 = ssub.s32 %s16, %s35
    %s37 = ssub.s32 %s18, %s27
    %s38 = sor.u32 %s36, %s37
    %p39 = scmp.eq.s32.totalorder %s38, 0
    %s41 = sadd.s32 %s40, 1
    %s42 = scalar_select %p39, %s40, %s41
    %p45 = pneg %p39
    %p46 = scmp.eq.s32.totalorder %s9, 3
    %p47 = por %p45, %p46
    %p48 = scmp.ne.s32.totalorder %s40, %s43
    %p49 = scmp.eq.s32.totalorder %s9, 0
    %p50 = por %p48, %p49
    %p51 = scmp.ne.s32.totalorder %s40, %s43
    %p52 = scmp.eq.s32.totalorder %s14, 3
    %p53 = por %p51, %p52
    %p54 = scmp.ne.s32.totalorder %s43, %s44
    %p55 = scmp.eq.s32.totalorder %s14, 0
    %p56 = por %p54, %p55
    %p57 = scmp.ne.s32.totalorder %s43, %s44
    %p58 = scmp.eq.s32.totalorder %s15, 3
    %p59 = por %p57, %p58
    %p61 = scmp.ne.s32.totalorder %s44, %s60
    %p62 = scmp.eq.s32.totalorder %s15, 0
    %p63 = por %p61, %p62
    %s64 = ssub.s32 %s18, %s27
    %s65 = ssub.s32 %s17, %s31
    %s66 = sor.u32 %s64, %s65
    %p67 = scmp.eq.s32.totalorder %s66, 0
    %s69 = sadd.s32 %s68, 1
    %s70 = scalar_select %p67, %s68, %s69
    %p73 = pneg %p67
    %p74 = scmp.eq.s32.totalorder %s9, 3
    %p75 = por %p73, %p74
    %p76 = scmp.ne.s32.totalorder %s68, %s71
    %p77 = scmp.eq.s32.totalorder %s9, 0
    %p78 = por %p76, %p77
    %p79 = scmp.ne.s32.totalorder %s68, %s71
    %p80 = scmp.eq.s32.totalorder %s14, 3
    %p81 = por %p79, %p80
    %p82 = scmp.ne.s32.totalorder %s71, %s72
    %p83 = scmp.eq.s32.totalorder %s14, 0
    %p84 = por %p82, %p83
    %p85 = scmp.ne.s32.totalorder %s71, %s72
    %p86 = scmp.eq.s32.totalorder %s15, 3
    %p87 = por %p85, %p86
    %p89 = scmp.ne.s32.totalorder %s72, %s88
    %p90 = scmp.eq.s32.totalorder %s15, 0
    %p91 = por %p89, %p90
    %s92 = ssub.s32 %s17, %s31
    %p93 = scmp.eq.s32.totalorder %s92, 0
    %s95 = sadd.s32 %s94, 1
    %s96 = scalar_select %p93, %s94, %s95
    %p99 = pneg %p93
    %p100 = scmp.eq.s32.totalorder %s9, 3
    %p101 = por %p99, %p100
    %p102 = scmp.ne.s32.totalorder %s94, %s97
    %p103 = scmp.eq.s32.totalorder %s9, 0
    %p104 = por %p102, %p103
    %p105 = scmp.ne.s32.totalorder %s94, %s97
    %p106 = scmp.eq.s32.totalorder %s14, 3
    %p107 = por %p105, %p106
    %p108 = scmp.ne.s32.totalorder %s97, %s98
    %p109 = scmp.eq.s32.totalorder %s14, 0
    %p110 = por %p108, %p109
    %p111 = scmp.ne.s32.totalorder %s97, %s98
    %p112 = scmp.eq.s32.totalorder %s15, 3
    %p113 = por %p111, %p112
    %p115 = scmp.ne.s32.totalorder %s98, %s114
    %p116 = scmp.eq.s32.totalorder %s15, 0
    %p117 = por %p115, %p116
    %s118 = ssub.s32 %s16, %s35
    %s119 = ssub.s32 %s17, %s31
    %s120 = sor.u32 %s118, %s119
    %p121 = scmp.eq.s32.totalorder %s120, 0
    %s123 = sadd.s32 %s122, 1
    %s124 = scalar_select %p121, %s122, %s123
    %p127 = pneg %p121
    %p128 = scmp.eq.s32.totalorder %s9, 3
    %p129 = por %p127, %p128
    %p130 = scmp.ne.s32.totalorder %s122, %s125
    %p131 = scmp.eq.s32.totalorder %s9, 0
    %p132 = por %p130, %p131
    %p133 = scmp.ne.s32.totalorder %s122, %s125
    %p134 = scmp.eq.s32.totalorder %s14, 3
    %p135 = por %p133, %p134
    %p136 = scmp.ne.s32.totalorder %s125, %s126
    %p137 = scmp.eq.s32.totalorder %s14, 0
    %p138 = por %p136, %p137
    %p139 = scmp.ne.s32.totalorder %s125, %s126
    %p140 = scmp.eq.s32.totalorder %s15, 3
    %p141 = por %p139, %p140
    %p143 = scmp.ne.s32.totalorder %s126, %s142
    %p144 = scmp.eq.s32.totalorder %s15, 0
    %p145 = por %p143, %p144
    %p146 = scmp.le.s32.totalorder 1, %s9
    %p147 = scmp.lt.s32.totalorder %s9, 5
    %p148 = pnand %p146, %p147
    %p149 = pneg %p148
    // Predicated region
    $region9: #{deeplab_forward.15} parent=5 // pred_check
      _
    $region10: #{deeplab_forward.15} parent=5 // pred_check_branch
      %151 = sbr.rel (%p148) target = $region12
    $region11: #{deeplab_forward.15} parent=5 // pred_region
      %s152 = ssub.s32 %s9, 1
      // Predicated region
      $region13: #{deeplab_forward.15} parent=11 // pred_check
        %p153 = pneg %p84
      $region14: #{deeplab_forward.15} parent=11 // pred_check_branch
        %155 = sbr.rel (%p153) target = $region16
      $region15: #{deeplab_forward.15} parent=11 // pred_region
        %s156 = smul.u32 19, %s21
        %p157 = scmp.lt.s32.totalorder %s156, 18
        %s158 = scalar_select %p157, %s156, 18
        %p159 = scmp.lt.s32.totalorder %s20, 0
        %s160 = scalar_select %p159, %s20, 0
        %s161 = sadd.s32 %s160, %s158
        %s162 = smul.addr %s161, 4
        %s163 = scalar_lea.vmem %s1, %s162
        %s164 = smul.u32 19, %s21
      $region16: #{deeplab_forward.15} parent=11 // pred_fallthru
        _
      // Predicated region
      $region17: #{deeplab_forward.15} parent=11 // pred_check
        %p165 = pneg %p110
      $region18: #{deeplab_forward.15} parent=11 // pred_check_branch
        %167 = sbr.rel (%p165) target = $region20
      $region19: #{deeplab_forward.15} parent=11 // pred_region
        %p168 = scmp.lt.s32.totalorder %s20, 0
        %s169 = scalar_select %p168, %s20, 0
        %s170 = scalar_lea.vmem %s2, %s169
      $region20: #{deeplab_forward.15} parent=11 // pred_fallthru
        _
    $region12: #{deeplab_forward.15} parent=5 // pred_fallthru
      _
    %p171 = scmp.lt.s32.totalorder %s9, 4
    // Predicated region
    $region21: #{deeplab_forward.15} parent=5 // pred_check
      %p172 = pneg %p171
    $region22: #{deeplab_forward.15} parent=5 // pred_check_branch
      %174 = sbr.rel (%p172) target = $region24
    $region23: #{deeplab_forward.15} parent=5 // pred_region
      // Predicated region
      $region25: #{deeplab_forward.15} parent=23 // pred_check
        %p175 = pneg %p50
      $region26: #{deeplab_forward.15} parent=23 // pred_check_branch
        %177 = sbr.rel (%p175) target = $region28
      $region27: #{deeplab_forward.15} parent=23 // pred_region
        %s178 = smul.u32 64, %s16
        %s179 = smul.u32 2, %s18
        %p180 = scmp.lt.s32.totalorder %s178, 255
        %s181 = scalar_select %p180, %s178, 255
        %p182 = scmp.lt.s32.totalorder %s179, 1
        %s183 = scalar_select %p182, %s179, 1
        %s184 = smul.addr %s181, 2
        %s185 = sadd.s32 %s183, %s184
        %s186 = smul.addr %s185, 4
        %s187 = scalar_lea.vmem %s0, %s186
        %s188 = smul.u32 64, %s16
        %s189 = smul.u32 2, %s18
      $region28: #{deeplab_forward.15} parent=23 // pred_fallthru
        _
    $region24: #{deeplab_forward.15} parent=5 // pred_fallthru
      _
    %p190 = scmp.le.s32.totalorder 1, %s9
    %p191 = scmp.lt.s32.totalorder %s9, 5
    %p192 = pnand %p190, %p191
    %p193 = pneg %p192
    // Predicated region
    $region29: #{deeplab_forward.15} parent=5 // pred_check
      _
    $region30: #{deeplab_forward.15} parent=5 // pred_check_branch
      %195 = sbr.rel (%p192) target = $region32
    $region31: #{deeplab_forward.15} parent=5 // pred_region
      %s196 = ssub.s32 %s9, 1
      %s197 = smul.u32 64, %s19
      %s198 = smul.u32 2, %s21
      %p199 = scmp.lt.s32.totalorder %s197, 255
      %s200 = scalar_select %p199, %s197, 255
      %p201 = scmp.lt.s32.totalorder %s198, 1
      %s202 = scalar_select %p201, %s198, 1
      %s203 = smul.addr %s200, 2
      %s204 = sadd.s32 %s202, %s203
      %s205 = smul.addr %s204, 4
      %s206 = scalar_lea.vmem %s0, %s205
      %p207 = pneg %p56
      %p208 = pneg %p53
      %s209 = smul.u32 19, %s21
      %p210 = scmp.lt.s32.totalorder %s209, 18
      %s211 = scalar_select %p210, %s209, 18
      %p212 = scmp.lt.s32.totalorder %s20, 0
      %s213 = scalar_select %p212, %s20, 0
      %s214 = sadd.s32 %s213, %s211
      %s215 = smul.addr %s214, 4
      %s216 = scalar_lea.vmem %s1, %s215
      %p217 = pneg %p84
      %p218 = pneg %p81
      %p219 = scmp.lt.s32.totalorder %s20, 0
      %s220 = scalar_select %p219, %s20, 0
      %s221 = scalar_lea.vmem %s2, %s220
      %p222 = pneg %p110
      %p223 = pneg %p107
      %p224 = pneg %p138
      %p225 = pneg %p135
      %s226 = smul.u32 64, %s19
      %p227 = scmp.lt.s32.totalorder %s226, 255
      %s228 = scalar_select %p227, %s226, 255
      %p229 = scmp.lt.s32.totalorder %s20, 0
      %s230 = scalar_select %p229, %s20, 0
      %s231 = sadd.s32 %s230, %s228
      %s232 = smul.addr %s231, 4
      %s233 = scalar_lea.vmem %s3, %s232
      %s234 = smul.u32 64, %s19
      %s235 = smul.u32 2, %s21
      %p236 = scmp.lt.s32.totalorder %s234, 255
      %s237 = scalar_select %p236, %s234, 255
      %p238 = scmp.lt.s32.totalorder %s235, 1
      %s239 = scalar_select %p238, %s235, 1
      %s240 = smul.addr %s237, 2
      %s241 = sadd.s32 %s239, %s240
      %s242 = smul.addr %s241, 4
      %s243 = scalar_lea.vmem %s0, %s242
      %s244 = smul.u32 64, %s19
      %s245 = smul.u32 2, %s21
      %s246 = smul.u32 19, %s21
      %p247 = scmp.lt.s32.totalorder %s246, 18
      %s248 = scalar_select %p247, %s246, 18
      %p249 = scmp.lt.s32.totalorder %s20, 0
      %s250 = scalar_select %p249, %s20, 0
      %s251 = sadd.s32 %s250, %s248
      %s252 = smul.addr %s251, 4
      %s253 = scalar_lea.vmem %s1, %s252
      %s254 = smul.u32 19, %s21
      %p255 = scmp.lt.s32.totalorder %s20, 0
      %s256 = scalar_select %p255, %s20, 0
      %s257 = scalar_lea.vmem %s2, %s256
      %s258 = smul.u32 64, %s19
      %p259 = scmp.lt.s32.totalorder %s258, 255
      %s260 = scalar_select %p259, %s258, 255
      %p261 = scmp.lt.s32.totalorder %s20, 0
      %s262 = scalar_select %p261, %s20, 0
      %s263 = sadd.s32 %s262, %s260
      %s264 = smul.addr %s263, 4
      %s265 = scalar_lea.vmem %s3, %s264
      %s266 = smul.u32 64, %s19
      %v268 = vld [vmem:[%s243] sm:$0xff]
      %v269 = vld [vmem:[%s243 + $0x8] sm:$0xff]
      %v270 = vld [vmem:[%s243 + $0x10] sm:$0xff]
      %v271 = vld [vmem:[%s243 + $0x18] sm:$0xff]
      %v272 = vld [vmem:[%s243 + $0x20] sm:$0xff]
      %v273 = vld [vmem:[%s243 + $0x28] sm:$0xff]
      %v274 = vld [vmem:[%s243 + $0x30] sm:$0xff]
      %v275 = vld [vmem:[%s243 + $0x38] sm:$0xff]
      %v276 = vld [vmem:[%s243 + $0x40] sm:$0xff]
      %v277 = vld [vmem:[%s243 + $0x48] sm:$0xff]
      %v278 = vld [vmem:[%s243 + $0x50] sm:$0xff]
      %v279 = vld [vmem:[%s243 + $0x58] sm:$0xff]
      %v280 = vld [vmem:[%s243 + $0x60] sm:$0xff]
      %v281 = vld [vmem:[%s243 + $0x68] sm:$0xff]
      %v282 = vld [vmem:[%s243 + $0x70] sm:$0xff]
      %v283 = vld [vmem:[%s243 + $0x78] sm:$0xff]
      %v284 = vld [vmem:[%s243 + $0x80] sm:$0xff]
      %v285 = vld [vmem:[%s243 + $0x88] sm:$0xff]
      %v286 = vld [vmem:[%s243 + $0x90] sm:$0xff]
      %v287 = vld [vmem:[%s243 + $0x98] sm:$0xff]
      %v288 = vld [vmem:[%s243 + $0xa0] sm:$0xff]
      %v289 = vld [vmem:[%s243 + $0xa8] sm:$0xff]
      %v290 = vld [vmem:[%s243 + $0xb0] sm:$0xff]
      %v291 = vld [vmem:[%s243 + $0xb8] sm:$0xff]
      %v292 = vld [vmem:[%s243 + $0xc0] sm:$0xff]
      %v293 = vld [vmem:[%s243 + $0xc8] sm:$0xff]
      %v294 = vld [vmem:[%s243 + $0xd0] sm:$0xff]
      %v295 = vld [vmem:[%s243 + $0xd8] sm:$0xff]
      %v296 = vld [vmem:[%s243 + $0xe0] sm:$0xff]
      %v297 = vld [vmem:[%s243 + $0xe8] sm:$0xff]
      %v298 = vld [vmem:[%s243 + $0xf0] sm:$0xff]
      %v299 = vld [vmem:[%s243 + $0xf8] sm:$0xff]
      %v300 = vld [vmem:[%s243 + $0x100] sm:$0xff]
      %v301 = vld [vmem:[%s243 + $0x108] sm:$0xff]
      %v302 = vld [vmem:[%s243 + $0x110] sm:$0xff]
      %v303 = vld [vmem:[%s243 + $0x118] sm:$0xff]
      %v304 = vld [vmem:[%s243 + $0x120] sm:$0xff]
      %v305 = vld [vmem:[%s243 + $0x128] sm:$0xff]
      %v306 = vld [vmem:[%s243 + $0x130] sm:$0xff]
      %v307 = vld [vmem:[%s243 + $0x138] sm:$0xff]
      %v308 = vld [vmem:[%s243 + $0x140] sm:$0xff]
      %v309 = vld [vmem:[%s243 + $0x148] sm:$0xff]
      %v310 = vld [vmem:[%s243 + $0x150] sm:$0xff]
      %v311 = vld [vmem:[%s243 + $0x158] sm:$0xff]
      %v312 = vld [vmem:[%s243 + $0x160] sm:$0xff]
      %v313 = vld [vmem:[%s243 + $0x168] sm:$0xff]
      %v314 = vld [vmem:[%s243 + $0x170] sm:$0xff]
      %v315 = vld [vmem:[%s243 + $0x178] sm:$0xff]
      %v316 = vld [vmem:[%s243 + $0x180] sm:$0xff]
      %v317 = vld [vmem:[%s243 + $0x188] sm:$0xff]
      %v318 = vld [vmem:[%s243 + $0x190] sm:$0xff]
      %v319 = vld [vmem:[%s243 + $0x198] sm:$0xff]
      %v320 = vld [vmem:[%s243 + $0x1a0] sm:$0xff]
      %v321 = vld [vmem:[%s243 + $0x1a8] sm:$0xff]
      %v322 = vld [vmem:[%s243 + $0x1b0] sm:$0xff]
      %v323 = vld [vmem:[%s243 + $0x1b8] sm:$0xff]
      %v324 = vld [vmem:[%s243 + $0x1c0] sm:$0xff]
      %v325 = vld [vmem:[%s243 + $0x1c8] sm:$0xff]
      %v326 = vld [vmem:[%s243 + $0x1d0] sm:$0xff]
      %v327 = vld [vmem:[%s243 + $0x1d8] sm:$0xff]
      %v328 = vld [vmem:[%s243 + $0x1e0] sm:$0xff]
      %v329 = vld [vmem:[%s243 + $0x1e8] sm:$0xff]
      %v330 = vld [vmem:[%s243 + $0x1f0] sm:$0xff]
      %v331 = vld [vmem:[%s243 + $0x1f8] sm:$0xff]
      %v332 = vld [vmem:[%s253] sm:$0xf]
      %v333 = vld [vmem:[%s253 + $0x4] sm:$0xf]
      %v334 = vld [vmem:[%s253 + $0x8] sm:$0xf]
      %v335 = vld [vmem:[%s253 + $0xc] sm:$0xf]
      %v336 = vld [vmem:[%s253 + $0x10] sm:$0xf]
      %v337 = vld [vmem:[%s253 + $0x14] sm:$0xf]
      %v338 = vld [vmem:[%s253 + $0x18] sm:$0xf]
      %v339 = vld [vmem:[%s253 + $0x1c] sm:$0xf]
      %v340 = vld [vmem:[%s253 + $0x20] sm:$0xf]
      %v341 = vld [vmem:[%s253 + $0x24] sm:$0xf]
      %v342 = vld [vmem:[%s253 + $0x28] sm:$0xf]
      %v343 = vld [vmem:[%s253 + $0x2c] sm:$0xf]
      %v344 = vld [vmem:[%s253 + $0x30] sm:$0xf]
      %v345 = vld [vmem:[%s253 + $0x34] sm:$0xf]
      %v346 = vld [vmem:[%s253 + $0x38] sm:$0xf]
      %v347 = vld [vmem:[%s253 + $0x3c] sm:$0xf]
      %v348 = vld [vmem:[%s253 + $0x40] sm:$0xf]
      %v349 = vld [vmem:[%s253 + $0x44] sm:$0xf]
      %v350 = vld [vmem:[%s253 + $0x48] sm:$0x3]
      %v351 = vld [vmem:[%s257] sm:$0x1]
      %v353 = vperm.slane %v351, 0
      %v419 = vunpack.c.l.b16 %v268
      %v420 = vunpack.c.h.b16 %v268
      %v421 = vunpack.c.l.b16 %v269
      %v422 = vunpack.c.h.b16 %v269
      %v423 = vunpack.c.l.b16 %v270
      %v424 = vunpack.c.h.b16 %v270
      %v425 = vunpack.c.l.b16 %v271
      %v426 = vunpack.c.h.b16 %v271
      %v427 = vunpack.c.l.b16 %v272
      %v428 = vunpack.c.h.b16 %v272
      %v429 = vunpack.c.l.b16 %v273
      %v430 = vunpack.c.h.b16 %v273
      %v431 = vunpack.c.l.b16 %v274
      %v432 = vunpack.c.h.b16 %v274
      %v433 = vunpack.c.l.b16 %v275
      %v434 = vunpack.c.h.b16 %v275
      %v435 = vunpack.c.l.b16 %v276
      %v436 = vunpack.c.h.b16 %v276
      %v437 = vunpack.c.l.b16 %v277
      %v438 = vunpack.c.h.b16 %v277
      %v439 = vunpack.c.l.b16 %v278
      %v440 = vunpack.c.h.b16 %v278
      %v441 = vunpack.c.l.b16 %v279
      %v442 = vunpack.c.h.b16 %v279
      %v443 = vunpack.c.l.b16 %v280
      %v444 = vunpack.c.h.b16 %v280
      %v445 = vunpack.c.l.b16 %v281
      %v446 = vunpack.c.h.b16 %v281
      %v447 = vunpack.c.l.b16 %v282
      %v448 = vunpack.c.h.b16 %v282
      %v449 = vunpack.c.l.b16 %v283
      %v450 = vunpack.c.h.b16 %v283
      %v451 = vunpack.c.l.b16 %v284
      %v452 = vunpack.c.h.b16 %v284
      %v453 = vunpack.c.l.b16 %v285
      %v454 = vunpack.c.h.b16 %v285
      %v455 = vunpack.c.l.b16 %v286
      %v456 = vunpack.c.h.b16 %v286
      %v457 = vunpack.c.l.b16 %v287
      %v458 = vunpack.c.h.b16 %v287
      %v459 = vunpack.c.l.b16 %v288
      %v460 = vunpack.c.h.b16 %v288
      %v461 = vunpack.c.l.b16 %v289
      %v462 = vunpack.c.h.b16 %v289
      %v463 = vunpack.c.l.b16 %v290
      %v464 = vunpack.c.h.b16 %v290
      %v465 = vunpack.c.l.b16 %v291
      %v466 = vunpack.c.h.b16 %v291
      %v467 = vunpack.c.l.b16 %v292
      %v468 = vunpack.c.h.b16 %v292
      %v469 = vunpack.c.l.b16 %v293
      %v470 = vunpack.c.h.b16 %v293
      %v471 = vunpack.c.l.b16 %v294
      %v472 = vunpack.c.h.b16 %v294
      %v473 = vunpack.c.l.b16 %v295
      %v474 = vunpack.c.h.b16 %v295
      %v475 = vunpack.c.l.b16 %v296
      %v476 = vunpack.c.h.b16 %v296
      %v477 = vunpack.c.l.b16 %v297
      %v478 = vunpack.c.h.b16 %v297
      %v479 = vunpack.c.l.b16 %v298
      %v480 = vunpack.c.h.b16 %v298
      %v481 = vunpack.c.l.b16 %v299
      %v482 = vunpack.c.h.b16 %v299
      %v483 = vunpack.c.l.b16 %v300
      %v484 = vunpack.c.h.b16 %v300
      %v485 = vunpack.c.l.b16 %v301
      %v486 = vunpack.c.h.b16 %v301
      %v487 = vunpack.c.l.b16 %v302
      %v488 = vunpack.c.h.b16 %v302
      %v489 = vunpack.c.l.b16 %v303
      %v490 = vunpack.c.h.b16 %v303
      %v491 = vunpack.c.l.b16 %v304
      %v492 = vunpack.c.h.b16 %v304
      %v493 = vunpack.c.l.b16 %v305
      %v494 = vunpack.c.h.b16 %v305
      %v495 = vunpack.c.l.b16 %v306
      %v496 = vunpack.c.h.b16 %v306
      %v497 = vunpack.c.l.b16 %v307
      %v498 = vunpack.c.h.b16 %v307
      %v499 = vunpack.c.l.b16 %v308
      %v500 = vunpack.c.h.b16 %v308
      %v501 = vunpack.c.l.b16 %v309
      %v502 = vunpack.c.h.b16 %v309
      %v503 = vunpack.c.l.b16 %v310
      %v504 = vunpack.c.h.b16 %v310
      %v505 = vunpack.c.l.b16 %v311
      %v506 = vunpack.c.h.b16 %v311
      %v507 = vunpack.c.l.b16 %v312
      %v508 = vunpack.c.h.b16 %v312
      %v509 = vunpack.c.l.b16 %v313
      %v510 = vunpack.c.h.b16 %v313
      %v511 = vunpack.c.l.b16 %v314
      %v512 = vunpack.c.h.b16 %v314
      %v513 = vunpack.c.l.b16 %v315
      %v514 = vunpack.c.h.b16 %v315
      %v515 = vunpack.c.l.b16 %v316
      %v516 = vunpack.c.h.b16 %v316
      %v517 = vunpack.c.l.b16 %v317
      %v518 = vunpack.c.h.b16 %v317
      %v519 = vunpack.c.l.b16 %v318
      %v520 = vunpack.c.h.b16 %v318
      %v521 = vunpack.c.l.b16 %v319
      %v522 = vunpack.c.h.b16 %v319
      %v523 = vunpack.c.l.b16 %v320
      %v524 = vunpack.c.h.b16 %v320
      %v525 = vunpack.c.l.b16 %v321
      %v526 = vunpack.c.h.b16 %v321
      %v527 = vunpack.c.l.b16 %v322
      %v528 = vunpack.c.h.b16 %v322
      %v529 = vunpack.c.l.b16 %v323
      %v530 = vunpack.c.h.b16 %v323
      %v531 = vunpack.c.l.b16 %v324
      %v532 = vunpack.c.h.b16 %v324
      %v533 = vunpack.c.l.b16 %v325
      %v534 = vunpack.c.h.b16 %v325
      %v535 = vunpack.c.l.b16 %v326
      %v536 = vunpack.c.h.b16 %v326
      %v537 = vunpack.c.l.b16 %v327
      %v538 = vunpack.c.h.b16 %v327
      %v539 = vunpack.c.l.b16 %v328
      %v540 = vunpack.c.h.b16 %v328
      %v541 = vunpack.c.l.b16 %v329
      %v542 = vunpack.c.h.b16 %v329
      %v543 = vunpack.c.l.b16 %v330
      %v544 = vunpack.c.h.b16 %v330
      %v545 = vunpack.c.l.b16 %v331
      %v546 = vunpack.c.h.b16 %v331
      %v547 = vpack.c.b16 %v421, %v419
      %v548 = vpack.c.b16 %v422, %v420
      %v549 = vpack.c.b16 %v425, %v423
      %v550 = vpack.c.b16 %v426, %v424
      %v551 = vpack.c.b16 %v429, %v427
      %v552 = vpack.c.b16 %v430, %v428
      %v553 = vpack.c.b16 %v433, %v431
      %v554 = vpack.c.b16 %v434, %v432
      %v555 = vpack.c.b16 %v437, %v435
      %v556 = vpack.c.b16 %v438, %v436
      %v557 = vpack.c.b16 %v441, %v439
      %v558 = vpack.c.b16 %v442, %v440
      %v559 = vpack.c.b16 %v445, %v443
      %v560 = vpack.c.b16 %v446, %v444
      %v561 = vpack.c.b16 %v449, %v447
      %v562 = vpack.c.b16 %v450, %v448
      %v563 = vpack.c.b16 %v453, %v451
      %v564 = vpack.c.b16 %v454, %v452
      %v565 = vpack.c.b16 %v457, %v455
      %v566 = vpack.c.b16 %v458, %v456
      %v567 = vpack.c.b16 %v461, %v459
      %v568 = vpack.c.b16 %v462, %v460
      %v569 = vpack.c.b16 %v465, %v463
      %v570 = vpack.c.b16 %v466, %v464
      %v571 = vpack.c.b16 %v469, %v467
      %v572 = vpack.c.b16 %v470, %v468
      %v573 = vpack.c.b16 %v473, %v471
      %v574 = vpack.c.b16 %v474, %v472
      %v575 = vpack.c.b16 %v477, %v475
      %v576 = vpack.c.b16 %v478, %v476
      %v577 = vpack.c.b16 %v481, %v479
      %v578 = vpack.c.b16 %v482, %v480
      %v579 = vpack.c.b16 %v485, %v483
      %v580 = vpack.c.b16 %v486, %v484
      %v581 = vpack.c.b16 %v489, %v487
      %v582 = vpack.c.b16 %v490, %v488
      %v583 = vpack.c.b16 %v493, %v491
      %v584 = vpack.c.b16 %v494, %v492
      %v585 = vpack.c.b16 %v497, %v495
      %v586 = vpack.c.b16 %v498, %v496
      %v587 = vpack.c.b16 %v501, %v499
      %v588 = vpack.c.b16 %v502, %v500
      %v589 = vpack.c.b16 %v505, %v503
      %v590 = vpack.c.b16 %v506, %v504
      %v591 = vpack.c.b16 %v509, %v507
      %v592 = vpack.c.b16 %v510, %v508
      %v593 = vpack.c.b16 %v513, %v511
      %v594 = vpack.c.b16 %v514, %v512
      %v595 = vpack.c.b16 %v517, %v515
      %v596 = vpack.c.b16 %v518, %v516
      %v597 = vpack.c.b16 %v521, %v519
      %v598 = vpack.c.b16 %v522, %v520
      %v599 = vpack.c.b16 %v525, %v523
      %v600 = vpack.c.b16 %v526, %v524
      %v601 = vpack.c.b16 %v529, %v527
      %v602 = vpack.c.b16 %v530, %v528
      %v603 = vpack.c.b16 %v533, %v531
      %v604 = vpack.c.b16 %v534, %v532
      %v605 = vpack.c.b16 %v537, %v535
      %v606 = vpack.c.b16 %v538, %v536
      %v607 = vpack.c.b16 %v541, %v539
      %v608 = vpack.c.b16 %v542, %v540
      %v609 = vpack.c.b16 %v545, %v543
      %v610 = vpack.c.b16 %v546, %v544
      %v662 = vunpack.c.l.b16 %v332
      %v663 = vunpack.c.l.b16 %v333
      %v664 = vunpack.c.l.b16 %v334
      %v665 = vunpack.c.l.b16 %v335
      %v666 = vunpack.c.l.b16 %v336
      %v667 = vunpack.c.l.b16 %v337
      %v668 = vunpack.c.l.b16 %v338
      %v669 = vunpack.c.l.b16 %v339
      %v670 = vunpack.c.l.b16 %v340
      %v671 = vunpack.c.l.b16 %v341
      %v672 = vunpack.c.l.b16 %v342
      %v673 = vunpack.c.l.b16 %v343
      %v674 = vunpack.c.l.b16 %v344
      %v675 = vunpack.c.l.b16 %v345
      %v676 = vunpack.c.l.b16 %v346
      %v677 = vunpack.c.l.b16 %v347
      %v678 = vunpack.c.l.b16 %v348
      %v679 = vunpack.c.l.b16 %v349
      %v680 = vunpack.c.l.b16 %v350
      %v681 = vpack.c.b16 %v663, %v662
      %v682 = vpack.c.b16 %v665, %v664
      %v683 = vpack.c.b16 %v667, %v666
      %v684 = vpack.c.b16 %v669, %v668
      %v685 = vpack.c.b16 %v671, %v670
      %v686 = vpack.c.b16 %v673, %v672
      %v687 = vpack.c.b16 %v675, %v674
      %v688 = vpack.c.b16 %v677, %v676
      %v689 = vpack.c.b16 %v679, %v678
      %v690 = vpack.c.b16 %v680, %v680
      %vm700 = vcmask 154624
      %v702 = vsel %vm700, %v548, 0
      %v705 = vsel %vm700, %v550, 0
      %v708 = vsel %vm700, %v552, 0
      %v711 = vsel %vm700, %v554, 0
      %v714 = vsel %vm700, %v556, 0
      %v717 = vsel %vm700, %v558, 0
      %v720 = vsel %vm700, %v560, 0
      %v723 = vsel %vm700, %v562, 0
      %v726 = vsel %vm700, %v564, 0
      %v729 = vsel %vm700, %v566, 0
      %v732 = vsel %vm700, %v568, 0
      %v735 = vsel %vm700, %v570, 0
      %v738 = vsel %vm700, %v572, 0
      %v741 = vsel %vm700, %v574, 0
      %v744 = vsel %vm700, %v576, 0
      %v747 = vsel %vm700, %v578, 0
      %v750 = vsel %vm700, %v580, 0
      %v753 = vsel %vm700, %v582, 0
      %v756 = vsel %vm700, %v584, 0
      %v759 = vsel %vm700, %v586, 0
      %v762 = vsel %vm700, %v588, 0
      %v765 = vsel %vm700, %v590, 0
      %v768 = vsel %vm700, %v592, 0
      %v771 = vsel %vm700, %v594, 0
      %v774 = vsel %vm700, %v596, 0
      %v777 = vsel %vm700, %v598, 0
      %v780 = vsel %vm700, %v600, 0
      %v783 = vsel %vm700, %v602, 0
      %v786 = vsel %vm700, %v604, 0
      %v789 = vsel %vm700, %v606, 0
      %v792 = vsel %vm700, %v608, 0
      %v795 = vsel %vm700, %v610, 0
      %vm797 = vcmask 1040384
      %vm798 = vcmask 1041408
      %v799 = vsel %vm797, 4294967295, 65535
      %v800 = vsel %vm798, %v799, 0
      %v802 = vand.u32 %v690, %v800
      %804 = vmatpush.bf16.msra.mxu0 %v688
      %805 = vmatpush.bf16.msra.mxu0 %v687
      %806 = vmatpush.bf16.msra.mxu0 %v686
      %807 = vmatpush.bf16.msra.mxu0 %v685
      %808 = vmatpush.bf16.msra.mxu0 %v684
      %809 = vmatpush.bf16.msra.mxu0 %v683
      %810 = vmatpush.bf16.msra.mxu0 %v682
      %811 = vmatpush.bf16.msra.mxu0 %v681
      %812 = vmatmul.bf16.gmra.mxu0 %v547
      %v813 = vpop.f32.mrf.mxu0
      %v814 = vadd.f32 %v353, %v813
      %v815 = vpop.f32.mrf.mxu0
      %v816 = vadd.f32 %v353, %v815
      %817 = vmatmul.bf16.gmra.mxu0 %v549
      %v818 = vpop.f32.mrf.mxu0
      %v819 = vadd.f32 %v353, %v818
      %v820 = vpop.f32.mrf.mxu0
      %v821 = vadd.f32 %v353, %v820
      %822 = vmatmul.bf16.gmra.mxu0 %v551
      %v823 = vpop.f32.mrf.mxu0
      %v824 = vadd.f32 %v353, %v823
      %v825 = vpop.f32.mrf.mxu0
      %v826 = vadd.f32 %v353, %v825
      %827 = vmatmul.bf16.gmra.mxu0 %v553
      %v828 = vpop.f32.mrf.mxu0
      %v829 = vadd.f32 %v353, %v828
      %v830 = vpop.f32.mrf.mxu0
      %v831 = vadd.f32 %v353, %v830
      %832 = vmatmul.bf16.gmra.mxu0 %v555
      %v833 = vpop.f32.mrf.mxu0
      %v834 = vadd.f32 %v353, %v833
      %v835 = vpop.f32.mrf.mxu0
      %v836 = vadd.f32 %v353, %v835
      %837 = vmatmul.bf16.gmra.mxu0 %v557
      %v838 = vpop.f32.mrf.mxu0
      %v839 = vadd.f32 %v353, %v838
      %v840 = vpop.f32.mrf.mxu0
      %v841 = vadd.f32 %v353, %v840
      %842 = vmatmul.bf16.gmra.mxu0 %v559
      %v843 = vpop.f32.mrf.mxu0
      %v844 = vadd.f32 %v353, %v843
      %v845 = vpop.f32.mrf.mxu0
      %v846 = vadd.f32 %v353, %v845
      %847 = vmatmul.bf16.gmra.mxu0 %v561
      %v848 = vpop.f32.mrf.mxu0
      %v849 = vadd.f32 %v353, %v848
      %v850 = vpop.f32.mrf.mxu0
      %v851 = vadd.f32 %v353, %v850
      %852 = vmatmul.bf16.gmra.mxu0 %v563
      %v853 = vpop.f32.mrf.mxu0
      %v854 = vadd.f32 %v353, %v853
      %v855 = vpop.f32.mrf.mxu0
      %v856 = vadd.f32 %v353, %v855
      %857 = vmatmul.bf16.gmra.mxu0 %v565
      %v858 = vpop.f32.mrf.mxu0
      %v859 = vadd.f32 %v353, %v858
      %v860 = vpop.f32.mrf.mxu0
      %v861 = vadd.f32 %v353, %v860
      %862 = vmatmul.bf16.gmra.mxu0 %v567
      %v863 = vpop.f32.mrf.mxu0
      %v864 = vadd.f32 %v353, %v863
      %v865 = vpop.f32.mrf.mxu0
      %v866 = vadd.f32 %v353, %v865
      %867 = vmatmul.bf16.gmra.mxu0 %v569
      %v868 = vpop.f32.mrf.mxu0
      %v869 = vadd.f32 %v353, %v868
      %v870 = vpop.f32.mrf.mxu0
      %v871 = vadd.f32 %v353, %v870
      %872 = vmatmul.bf16.gmra.mxu0 %v571
      %v873 = vpop.f32.mrf.mxu0
      %v874 = vadd.f32 %v353, %v873
      %v875 = vpop.f32.mrf.mxu0
      %v876 = vadd.f32 %v353, %v875
      %877 = vmatmul.bf16.gmra.mxu0 %v573
      %v878 = vpop.f32.mrf.mxu0
      %v879 = vadd.f32 %v353, %v878
      %v880 = vpop.f32.mrf.mxu0
      %v881 = vadd.f32 %v353, %v880
      %882 = vmatmul.bf16.gmra.mxu0 %v575
      %v883 = vpop.f32.mrf.mxu0
      %v884 = vadd.f32 %v353, %v883
      %v885 = vpop.f32.mrf.mxu0
      %v886 = vadd.f32 %v353, %v885
      %887 = vmatmul.bf16.gmra.mxu0 %v577
      %v888 = vpop.f32.mrf.mxu0
      %v889 = vadd.f32 %v353, %v888
      %v890 = vpop.f32.mrf.mxu0
      %v891 = vadd.f32 %v353, %v890
      %892 = vmatmul.bf16.gmra.mxu0 %v579
      %v893 = vpop.f32.mrf.mxu0
      %v894 = vadd.f32 %v353, %v893
      %v895 = vpop.f32.mrf.mxu0
      %v896 = vadd.f32 %v353, %v895
      %897 = vmatmul.bf16.gmra.mxu0 %v581
      %v898 = vpop.f32.mrf.mxu0
      %v899 = vadd.f32 %v353, %v898
      %v900 = vpop.f32.mrf.mxu0
      %v901 = vadd.f32 %v353, %v900
      %902 = vmatmul.bf16.gmra.mxu0 %v583
      %v903 = vpop.f32.mrf.mxu0
      %v904 = vadd.f32 %v353, %v903
      %v905 = vpop.f32.mrf.mxu0
      %v906 = vadd.f32 %v353, %v905
      %907 = vmatmul.bf16.gmra.mxu0 %v585
      %v908 = vpop.f32.mrf.mxu0
      %v909 = vadd.f32 %v353, %v908
      %v910 = vpop.f32.mrf.mxu0
      %v911 = vadd.f32 %v353, %v910
      %912 = vmatmul.bf16.gmra.mxu0 %v587
      %v913 = vpop.f32.mrf.mxu0
      %v914 = vadd.f32 %v353, %v913
      %v915 = vpop.f32.mrf.mxu0
      %v916 = vadd.f32 %v353, %v915
      %917 = vmatmul.bf16.gmra.mxu0 %v589
      %v918 = vpop.f32.mrf.mxu0
      %v919 = vadd.f32 %v353, %v918
      %v920 = vpop.f32.mrf.mxu0
      %v921 = vadd.f32 %v353, %v920
      %922 = vmatmul.bf16.gmra.mxu0 %v591
      %v923 = vpop.f32.mrf.mxu0
      %v924 = vadd.f32 %v353, %v923
      %v925 = vpop.f32.mrf.mxu0
      %v926 = vadd.f32 %v353, %v925
      %927 = vmatmul.bf16.gmra.mxu0 %v593
      %v928 = vpop.f32.mrf.mxu0
      %v929 = vadd.f32 %v353, %v928
      %v930 = vpop.f32.mrf.mxu0
      %v931 = vadd.f32 %v353, %v930
      %932 = vmatmul.bf16.gmra.mxu0 %v595
      %v933 = vpop.f32.mrf.mxu0
      %v934 = vadd.f32 %v353, %v933
      %v935 = vpop.f32.mrf.mxu0
      %v936 = vadd.f32 %v353, %v935
      %937 = vmatmul.bf16.gmra.mxu0 %v597
      %v938 = vpop.f32.mrf.mxu0
      %v939 = vadd.f32 %v353, %v938
      %v940 = vpop.f32.mrf.mxu0
      %v941 = vadd.f32 %v353, %v940
      %942 = vmatmul.bf16.gmra.mxu0 %v599
      %v943 = vpop.f32.mrf.mxu0
      %v944 = vadd.f32 %v353, %v943
      %v945 = vpop.f32.mrf.mxu0
      %v946 = vadd.f32 %v353, %v945
      %947 = vmatmul.bf16.gmra.mxu0 %v601
      %v948 = vpop.f32.mrf.mxu0
      %v949 = vadd.f32 %v353, %v948
      %v950 = vpop.f32.mrf.mxu0
      %v951 = vadd.f32 %v353, %v950
      %952 = vmatmul.bf16.gmra.mxu0 %v603
      %v953 = vpop.f32.mrf.mxu0
      %v954 = vadd.f32 %v353, %v953
      %v955 = vpop.f32.mrf.mxu0
      %v956 = vadd.f32 %v353, %v955
      %957 = vmatmul.bf16.gmra.mxu0 %v605
      %v958 = vpop.f32.mrf.mxu0
      %v959 = vadd.f32 %v353, %v958
      %v960 = vpop.f32.mrf.mxu0
      %v961 = vadd.f32 %v353, %v960
      %962 = vmatmul.bf16.gmra.mxu0 %v607
      %v963 = vpop.f32.mrf.mxu0
      %v964 = vadd.f32 %v353, %v963
      %v965 = vpop.f32.mrf.mxu0
      %v966 = vadd.f32 %v353, %v965
      %967 = vmatmul.bf16.gmra.mxu0 %v609
      %v968 = vpop.f32.mrf.mxu0
      %v969 = vadd.f32 %v353, %v968
      %v970 = vpop.f32.mrf.mxu0
      %v971 = vadd.f32 %v353, %v970
      %972 = vdwg.mxu0
      %973 = vmatpush.bf16.msra.mxu0 0
      %974 = vmatpush.bf16.msra.mxu0 0
      %975 = vmatpush.bf16.msra.mxu0 0
      %976 = vmatpush.bf16.msra.mxu0 0
      %977 = vmatpush.bf16.msra.mxu0 0
      %978 = vmatpush.bf16.msra.mxu0 0
      %979 = vmatpush.bf16.msra.mxu0 %v802
      %980 = vmatpush.bf16.msra.mxu0 %v689
      %981 = vmatmul.bf16.gmra.mxu0 %v702
      %v982 = vpop.f32.mrf.mxu0
      %v983 = vadd.f32 %v814, %v982
      %v984 = vpop.f32.mrf.mxu0
      %v985 = vadd.f32 %v816, %v984
      %986 = vmatmul.bf16.gmra.mxu0 %v705
      %v987 = vpop.f32.mrf.mxu0
      %v988 = vadd.f32 %v819, %v987
      %v989 = vpop.f32.mrf.mxu0
      %v990 = vadd.f32 %v821, %v989
      %991 = vmatmul.bf16.gmra.mxu0 %v708
      %v992 = vpop.f32.mrf.mxu0
      %v993 = vadd.f32 %v824, %v992
      %v994 = vpop.f32.mrf.mxu0
      %v995 = vadd.f32 %v826, %v994
      %996 = vmatmul.bf16.gmra.mxu0 %v711
      %v997 = vpop.f32.mrf.mxu0
      %v998 = vadd.f32 %v829, %v997
      %v999 = vpop.f32.mrf.mxu0
      %v1000 = vadd.f32 %v831, %v999
      %1001 = vmatmul.bf16.gmra.mxu0 %v714
      %v1002 = vpop.f32.mrf.mxu0
      %v1003 = vadd.f32 %v834, %v1002
      %v1004 = vpop.f32.mrf.mxu0
      %v1005 = vadd.f32 %v836, %v1004
      %1006 = vmatmul.bf16.gmra.mxu0 %v717
      %v1007 = vpop.f32.mrf.mxu0
      %v1008 = vadd.f32 %v839, %v1007
      %v1009 = vpop.f32.mrf.mxu0
      %v1010 = vadd.f32 %v841, %v1009
      %1011 = vmatmul.bf16.gmra.mxu0 %v720
      %v1012 = vpop.f32.mrf.mxu0
      %v1013 = vadd.f32 %v844, %v1012
      %v1014 = vpop.f32.mrf.mxu0
      %v1015 = vadd.f32 %v846, %v1014
      %1016 = vmatmul.bf16.gmra.mxu0 %v723
      %v1017 = vpop.f32.mrf.mxu0
      %v1018 = vadd.f32 %v849, %v1017
      %v1019 = vpop.f32.mrf.mxu0
      %v1020 = vadd.f32 %v851, %v1019
      %1021 = vmatmul.bf16.gmra.mxu0 %v726
      %v1022 = vpop.f32.mrf.mxu0
      %v1023 = vadd.f32 %v854, %v1022
      %v1024 = vpop.f32.mrf.mxu0
      %v1025 = vadd.f32 %v856, %v1024
      %1026 = vmatmul.bf16.gmra.mxu0 %v729
      %v1027 = vpop.f32.mrf.mxu0
      %v1028 = vadd.f32 %v859, %v1027
      %v1029 = vpop.f32.mrf.mxu0
      %v1030 = vadd.f32 %v861, %v1029
      %1031 = vmatmul.bf16.gmra.mxu0 %v732
      %v1032 = vpop.f32.mrf.mxu0
      %v1033 = vadd.f32 %v864, %v1032
      %v1034 = vpop.f32.mrf.mxu0
      %v1035 = vadd.f32 %v866, %v1034
      %1036 = vmatmul.bf16.gmra.mxu0 %v735
      %v1037 = vpop.f32.mrf.mxu0
      %v1038 = vadd.f32 %v869, %v1037
      %v1039 = vpop.f32.mrf.mxu0
      %v1040 = vadd.f32 %v871, %v1039
      %1041 = vmatmul.bf16.gmra.mxu0 %v738
      %v1042 = vpop.f32.mrf.mxu0
      %v1043 = vadd.f32 %v874, %v1042
      %v1044 = vpop.f32.mrf.mxu0
      %v1045 = vadd.f32 %v876, %v1044
      %1046 = vmatmul.bf16.gmra.mxu0 %v741
      %v1047 = vpop.f32.mrf.mxu0
      %v1048 = vadd.f32 %v879, %v1047
      %v1049 = vpop.f32.mrf.mxu0
      %v1050 = vadd.f32 %v881, %v1049
      %1051 = vmatmul.bf16.gmra.mxu0 %v744
      %v1052 = vpop.f32.mrf.mxu0
      %v1053 = vadd.f32 %v884, %v1052
      %v1054 = vpop.f32.mrf.mxu0
      %v1055 = vadd.f32 %v886, %v1054
      %1056 = vmatmul.bf16.gmra.mxu0 %v747
      %v1057 = vpop.f32.mrf.mxu0
      %v1058 = vadd.f32 %v889, %v1057
      %v1059 = vpop.f32.mrf.mxu0
      %v1060 = vadd.f32 %v891, %v1059
      %1061 = vmatmul.bf16.gmra.mxu0 %v750
      %v1062 = vpop.f32.mrf.mxu0
      %v1063 = vadd.f32 %v894, %v1062
      %v1064 = vpop.f32.mrf.mxu0
      %v1065 = vadd.f32 %v896, %v1064
      %1066 = vmatmul.bf16.gmra.mxu0 %v753
      %v1067 = vpop.f32.mrf.mxu0
      %v1068 = vadd.f32 %v899, %v1067
      %v1069 = vpop.f32.mrf.mxu0
      %v1070 = vadd.f32 %v901, %v1069
      %1071 = vmatmul.bf16.gmra.mxu0 %v756
      %v1072 = vpop.f32.mrf.mxu0
      %v1073 = vadd.f32 %v904, %v1072
      %v1074 = vpop.f32.mrf.mxu0
      %v1075 = vadd.f32 %v906, %v1074
      %1076 = vmatmul.bf16.gmra.mxu0 %v759
      %v1077 = vpop.f32.mrf.mxu0
      %v1078 = vadd.f32 %v909, %v1077
      %v1079 = vpop.f32.mrf.mxu0
      %v1080 = vadd.f32 %v911, %v1079
      %1081 = vmatmul.bf16.gmra.mxu0 %v762
      %v1082 = vpop.f32.mrf.mxu0
      %v1083 = vadd.f32 %v914, %v1082
      %v1084 = vpop.f32.mrf.mxu0
      %v1085 = vadd.f32 %v916, %v1084
      %1086 = vmatmul.bf16.gmra.mxu0 %v765
      %v1087 = vpop.f32.mrf.mxu0
      %v1088 = vadd.f32 %v919, %v1087
      %v1089 = vpop.f32.mrf.mxu0
      %v1090 = vadd.f32 %v921, %v1089
      %1091 = vmatmul.bf16.gmra.mxu0 %v768
      %v1092 = vpop.f32.mrf.mxu0
      %v1093 = vadd.f32 %v924, %v1092
      %v1094 = vpop.f32.mrf.mxu0
      %v1095 = vadd.f32 %v926, %v1094
      %1096 = vmatmul.bf16.gmra.mxu0 %v771
      %v1097 = vpop.f32.mrf.mxu0
      %v1098 = vadd.f32 %v929, %v1097
      %v1099 = vpop.f32.mrf.mxu0
      %v1100 = vadd.f32 %v931, %v1099
      %1101 = vmatmul.bf16.gmra.mxu0 %v774
      %v1102 = vpop.f32.mrf.mxu0
      %v1103 = vadd.f32 %v934, %v1102
      %v1104 = vpop.f32.mrf.mxu0
      %v1105 = vadd.f32 %v936, %v1104
      %1106 = vmatmul.bf16.gmra.mxu0 %v777
      %v1107 = vpop.f32.mrf.mxu0
      %v1108 = vadd.f32 %v939, %v1107
      %v1109 = vpop.f32.mrf.mxu0
      %v1110 = vadd.f32 %v941, %v1109
      %1111 = vmatmul.bf16.gmra.mxu0 %v780
      %v1112 = vpop.f32.mrf.mxu0
      %v1113 = vadd.f32 %v944, %v1112
      %v1114 = vpop.f32.mrf.mxu0
      %v1115 = vadd.f32 %v946, %v1114
      %1116 = vmatmul.bf16.gmra.mxu0 %v783
      %v1117 = vpop.f32.mrf.mxu0
      %v1118 = vadd.f32 %v949, %v1117
      %v1119 = vpop.f32.mrf.mxu0
      %v1120 = vadd.f32 %v951, %v1119
      %1121 = vmatmul.bf16.gmra.mxu0 %v786
      %v1122 = vpop.f32.mrf.mxu0
      %v1123 = vadd.f32 %v954, %v1122
      %v1124 = vpop.f32.mrf.mxu0
      %v1125 = vadd.f32 %v956, %v1124
      %1126 = vmatmul.bf16.gmra.mxu0 %v789
      %v1127 = vpop.f32.mrf.mxu0
      %v1128 = vadd.f32 %v959, %v1127
      %v1129 = vpop.f32.mrf.mxu0
      %v1130 = vadd.f32 %v961, %v1129
      %1131 = vmatmul.bf16.gmra.mxu0 %v792
      %v1132 = vpop.f32.mrf.mxu0
      %v1133 = vadd.f32 %v964, %v1132
      %v1134 = vpop.f32.mrf.mxu0
      %v1135 = vadd.f32 %v966, %v1134
      %1136 = vmatmul.bf16.gmra.mxu0 %v795
      %v1137 = vpop.f32.mrf.mxu0
      %v1138 = vadd.f32 %v969, %v1137
      %v1139 = vpop.f32.mrf.mxu0
      %v1140 = vadd.f32 %v971, %v1139
      %1141 = vdwg.mxu0
      %v1142 = vmax.f32 %v983, 0.0
      %v1143 = vmax.f32 %v985, 0.0
      %v1144 = vmax.f32 %v988, 0.0
      %v1145 = vmax.f32 %v990, 0.0
      %v1146 = vmax.f32 %v993, 0.0
      %v1147 = vmax.f32 %v995, 0.0
      %v1148 = vmax.f32 %v998, 0.0
      %v1149 = vmax.f32 %v1000, 0.0
      %v1150 = vmax.f32 %v1003, 0.0
      %v1151 = vmax.f32 %v1005, 0.0
      %v1152 = vmax.f32 %v1008, 0.0
      %v1153 = vmax.f32 %v1010, 0.0
      %v1154 = vmax.f32 %v1013, 0.0
      %v1155 = vmax.f32 %v1015, 0.0
      %v1156 = vmax.f32 %v1018, 0.0
      %v1157 = vmax.f32 %v1020, 0.0
      %v1158 = vmax.f32 %v1023, 0.0
      %v1159 = vmax.f32 %v1025, 0.0
      %v1160 = vmax.f32 %v1028, 0.0
      %v1161 = vmax.f32 %v1030, 0.0
      %v1162 = vmax.f32 %v1033, 0.0
      %v1163 = vmax.f32 %v1035, 0.0
      %v1164 = vmax.f32 %v1038, 0.0
      %v1165 = vmax.f32 %v1040, 0.0
      %v1166 = vmax.f32 %v1043, 0.0
      %v1167 = vmax.f32 %v1045, 0.0
      %v1168 = vmax.f32 %v1048, 0.0
      %v1169 = vmax.f32 %v1050, 0.0
      %v1170 = vmax.f32 %v1053, 0.0
      %v1171 = vmax.f32 %v1055, 0.0
      %v1172 = vmax.f32 %v1058, 0.0
      %v1173 = vmax.f32 %v1060, 0.0
      %v1174 = vmax.f32 %v1063, 0.0
      %v1175 = vmax.f32 %v1065, 0.0
      %v1176 = vmax.f32 %v1068, 0.0
      %v1177 = vmax.f32 %v1070, 0.0
      %v1178 = vmax.f32 %v1073, 0.0
      %v1179 = vmax.f32 %v1075, 0.0
      %v1180 = vmax.f32 %v1078, 0.0
      %v1181 = vmax.f32 %v1080, 0.0
      %v1182 = vmax.f32 %v1083, 0.0
      %v1183 = vmax.f32 %v1085, 0.0
      %v1184 = vmax.f32 %v1088, 0.0
      %v1185 = vmax.f32 %v1090, 0.0
      %v1186 = vmax.f32 %v1093, 0.0
      %v1187 = vmax.f32 %v1095, 0.0
      %v1188 = vmax.f32 %v1098, 0.0
      %v1189 = vmax.f32 %v1100, 0.0
      %v1190 = vmax.f32 %v1103, 0.0
      %v1191 = vmax.f32 %v1105, 0.0
      %v1192 = vmax.f32 %v1108, 0.0
      %v1193 = vmax.f32 %v1110, 0.0
      %v1194 = vmax.f32 %v1113, 0.0
      %v1195 = vmax.f32 %v1115, 0.0
      %v1196 = vmax.f32 %v1118, 0.0
      %v1197 = vmax.f32 %v1120, 0.0
      %v1198 = vmax.f32 %v1123, 0.0
      %v1199 = vmax.f32 %v1125, 0.0
      %v1200 = vmax.f32 %v1128, 0.0
      %v1201 = vmax.f32 %v1130, 0.0
      %v1202 = vmax.f32 %v1133, 0.0
      %v1203 = vmax.f32 %v1135, 0.0
      %v1204 = vmax.f32 %v1138, 0.0
      %v1205 = vmax.f32 %v1140, 0.0
      %v1206 = vpack.c.bf16 %v1142, %v1142
      %v1207 = vpack.c.bf16 %v1143, %v1143
      %v1208 = vpack.c.bf16 %v1144, %v1144
      %v1209 = vpack.c.bf16 %v1145, %v1145
      %v1210 = vpack.c.bf16 %v1146, %v1146
      %v1211 = vpack.c.bf16 %v1147, %v1147
      %v1212 = vpack.c.bf16 %v1148, %v1148
      %v1213 = vpack.c.bf16 %v1149, %v1149
      %v1214 = vpack.c.bf16 %v1150, %v1150
      %v1215 = vpack.c.bf16 %v1151, %v1151
      %v1216 = vpack.c.bf16 %v1152, %v1152
      %v1217 = vpack.c.bf16 %v1153, %v1153
      %v1218 = vpack.c.bf16 %v1154, %v1154
      %v1219 = vpack.c.bf16 %v1155, %v1155
      %v1220 = vpack.c.bf16 %v1156, %v1156
      %v1221 = vpack.c.bf16 %v1157, %v1157
      %v1222 = vpack.c.bf16 %v1158, %v1158
      %v1223 = vpack.c.bf16 %v1159, %v1159
      %v1224 = vpack.c.bf16 %v1160, %v1160
      %v1225 = vpack.c.bf16 %v1161, %v1161
      %v1226 = vpack.c.bf16 %v1162, %v1162
      %v1227 = vpack.c.bf16 %v1163, %v1163
      %v1228 = vpack.c.bf16 %v1164, %v1164
      %v1229 = vpack.c.bf16 %v1165, %v1165
      %v1230 = vpack.c.bf16 %v1166, %v1166
      %v1231 = vpack.c.bf16 %v1167, %v1167
      %v1232 = vpack.c.bf16 %v1168, %v1168
      %v1233 = vpack.c.bf16 %v1169, %v1169
      %v1234 = vpack.c.bf16 %v1170, %v1170
      %v1235 = vpack.c.bf16 %v1171, %v1171
      %v1236 = vpack.c.bf16 %v1172, %v1172
      %v1237 = vpack.c.bf16 %v1173, %v1173
      %v1238 = vpack.c.bf16 %v1174, %v1174
      %v1239 = vpack.c.bf16 %v1175, %v1175
      %v1240 = vpack.c.bf16 %v1176, %v1176
      %v1241 = vpack.c.bf16 %v1177, %v1177
      %v1242 = vpack.c.bf16 %v1178, %v1178
      %v1243 = vpack.c.bf16 %v1179, %v1179
      %v1244 = vpack.c.bf16 %v1180, %v1180
      %v1245 = vpack.c.bf16 %v1181, %v1181
      %v1246 = vpack.c.bf16 %v1182, %v1182
      %v1247 = vpack.c.bf16 %v1183, %v1183
      %v1248 = vpack.c.bf16 %v1184, %v1184
      %v1249 = vpack.c.bf16 %v1185, %v1185
      %v1250 = vpack.c.bf16 %v1186, %v1186
      %v1251 = vpack.c.bf16 %v1187, %v1187
      %v1252 = vpack.c.bf16 %v1188, %v1188
      %v1253 = vpack.c.bf16 %v1189, %v1189
      %v1254 = vpack.c.bf16 %v1190, %v1190
      %v1255 = vpack.c.bf16 %v1191, %v1191
      %v1256 = vpack.c.bf16 %v1192, %v1192
      %v1257 = vpack.c.bf16 %v1193, %v1193
      %v1258 = vpack.c.bf16 %v1194, %v1194
      %v1259 = vpack.c.bf16 %v1195, %v1195
      %v1260 = vpack.c.bf16 %v1196, %v1196
      %v1261 = vpack.c.bf16 %v1197, %v1197
      %v1262 = vpack.c.bf16 %v1198, %v1198
      %v1263 = vpack.c.bf16 %v1199, %v1199
      %v1264 = vpack.c.bf16 %v1200, %v1200
      %v1265 = vpack.c.bf16 %v1201, %v1201
      %v1266 = vpack.c.bf16 %v1202, %v1202
      %v1267 = vpack.c.bf16 %v1203, %v1203
      %v1268 = vpack.c.bf16 %v1204, %v1204
      %v1269 = vpack.c.bf16 %v1205, %v1205
      %vm1270 = vcmask 125952
      %1271 = vst.msk [vmem:[%s265] sm:$0xf] %vm1270, %v1206
      %1272 = vst.msk [vmem:[%s265 + $0x4] sm:$0xf] %vm1270, %v1207
      %1273 = vst.msk [vmem:[%s265 + $0x8] sm:$0xf] %vm1270, %v1208
      %1274 = vst.msk [vmem:[%s265 + $0xc] sm:$0xf] %vm1270, %v1209
      %1275 = vst.msk [vmem:[%s265 + $0x10] sm:$0xf] %vm1270, %v1210
      %1276 = vst.msk [vmem:[%s265 + $0x14] sm:$0xf] %vm1270, %v1211
      %1277 = vst.msk [vmem:[%s265 + $0x18] sm:$0xf] %vm1270, %v1212
      %1278 = vst.msk [vmem:[%s265 + $0x1c] sm:$0xf] %vm1270, %v1213
      %1279 = vst.msk [vmem:[%s265 + $0x20] sm:$0xf] %vm1270, %v1214
      %1280 = vst.msk [vmem:[%s265 + $0x24] sm:$0xf] %vm1270, %v1215
      %1281 = vst.msk [vmem:[%s265 + $0x28] sm:$0xf] %vm1270, %v1216
      %1282 = vst.msk [vmem:[%s265 + $0x2c] sm:$0xf] %vm1270, %v1217
      %1283 = vst.msk [vmem:[%s265 + $0x30] sm:$0xf] %vm1270, %v1218
      %1284 = vst.msk [vmem:[%s265 + $0x34] sm:$0xf] %vm1270, %v1219
      %1285 = vst.msk [vmem:[%s265 + $0x38] sm:$0xf] %vm1270, %v1220
      %1286 = vst.msk [vmem:[%s265 + $0x3c] sm:$0xf] %vm1270, %v1221
      %1287 = vst.msk [vmem:[%s265 + $0x40] sm:$0xf] %vm1270, %v1222
      %1288 = vst.msk [vmem:[%s265 + $0x44] sm:$0xf] %vm1270, %v1223
      %1289 = vst.msk [vmem:[%s265 + $0x48] sm:$0xf] %vm1270, %v1224
      %1290 = vst.msk [vmem:[%s265 + $0x4c] sm:$0xf] %vm1270, %v1225
      %1291 = vst.msk [vmem:[%s265 + $0x50] sm:$0xf] %vm1270, %v1226
      %1292 = vst.msk [vmem:[%s265 + $0x54] sm:$0xf] %vm1270, %v1227
      %1293 = vst.msk [vmem:[%s265 + $0x58] sm:$0xf] %vm1270, %v1228
      %1294 = vst.msk [vmem:[%s265 + $0x5c] sm:$0xf] %vm1270, %v1229
      %1295 = vst.msk [vmem:[%s265 + $0x60] sm:$0xf] %vm1270, %v1230
      %1296 = vst.msk [vmem:[%s265 + $0x64] sm:$0xf] %vm1270, %v1231
      %1297 = vst.msk [vmem:[%s265 + $0x68] sm:$0xf] %vm1270, %v1232
      %1298 = vst.msk [vmem:[%s265 + $0x6c] sm:$0xf] %vm1270, %v1233
      %1299 = vst.msk [vmem:[%s265 + $0x70] sm:$0xf] %vm1270, %v1234
      %1300 = vst.msk [vmem:[%s265 + $0x74] sm:$0xf] %vm1270, %v1235
      %1301 = vst.msk [vmem:[%s265 + $0x78] sm:$0xf] %vm1270, %v1236
      %1302 = vst.msk [vmem:[%s265 + $0x7c] sm:$0xf] %vm1270, %v1237
      %1303 = vst.msk [vmem:[%s265 + $0x80] sm:$0xf] %vm1270, %v1238
      %1304 = vst.msk [vmem:[%s265 + $0x84] sm:$0xf] %vm1270, %v1239
      %1305 = vst.msk [vmem:[%s265 + $0x88] sm:$0xf] %vm1270, %v1240
      %1306 = vst.msk [vmem:[%s265 + $0x8c] sm:$0xf] %vm1270, %v1241
      %1307 = vst.msk [vmem:[%s265 + $0x90] sm:$0xf] %vm1270, %v1242
      %1308 = vst.msk [vmem:[%s265 + $0x94] sm:$0xf] %vm1270, %v1243
      %1309 = vst.msk [vmem:[%s265 + $0x98] sm:$0xf] %vm1270, %v1244
      %1310 = vst.msk [vmem:[%s265 + $0x9c] sm:$0xf] %vm1270, %v1245
      %1311 = vst.msk [vmem:[%s265 + $0xa0] sm:$0xf] %vm1270, %v1246
      %1312 = vst.msk [vmem:[%s265 + $0xa4] sm:$0xf] %vm1270, %v1247
      %1313 = vst.msk [vmem:[%s265 + $0xa8] sm:$0xf] %vm1270, %v1248
      %1314 = vst.msk [vmem:[%s265 + $0xac] sm:$0xf] %vm1270, %v1249
      %1315 = vst.msk [vmem:[%s265 + $0xb0] sm:$0xf] %vm1270, %v1250
      %1316 = vst.msk [vmem:[%s265 + $0xb4] sm:$0xf] %vm1270, %v1251
      %1317 = vst.msk [vmem:[%s265 + $0xb8] sm:$0xf] %vm1270, %v1252
      %1318 = vst.msk [vmem:[%s265 + $0xbc] sm:$0xf] %vm1270, %v1253
      %1319 = vst.msk [vmem:[%s265 + $0xc0] sm:$0xf] %vm1270, %v1254
      %1320 = vst.msk [vmem:[%s265 + $0xc4] sm:$0xf] %vm1270, %v1255
      %1321 = vst.msk [vmem:[%s265 + $0xc8] sm:$0xf] %vm1270, %v1256
      %1322 = vst.msk [vmem:[%s265 + $0xcc] sm:$0xf] %vm1270, %v1257
      %1323 = vst.msk [vmem:[%s265 + $0xd0] sm:$0xf] %vm1270, %v1258
      %1324 = vst.msk [vmem:[%s265 + $0xd4] sm:$0xf] %vm1270, %v1259
      %1325 = vst.msk [vmem:[%s265 + $0xd8] sm:$0xf] %vm1270, %v1260
      %1326 = vst.msk [vmem:[%s265 + $0xdc] sm:$0xf] %vm1270, %v1261
      %1327 = vst.msk [vmem:[%s265 + $0xe0] sm:$0xf] %vm1270, %v1262
      %1328 = vst.msk [vmem:[%s265 + $0xe4] sm:$0xf] %vm1270, %v1263
      %1329 = vst.msk [vmem:[%s265 + $0xe8] sm:$0xf] %vm1270, %v1264
      %1330 = vst.msk [vmem:[%s265 + $0xec] sm:$0xf] %vm1270, %v1265
      %1331 = vst.msk [vmem:[%s265 + $0xf0] sm:$0xf] %vm1270, %v1266
      %1332 = vst.msk [vmem:[%s265 + $0xf4] sm:$0xf] %vm1270, %v1267
      %1333 = vst.msk [vmem:[%s265 + $0xf8] sm:$0xf] %vm1270, %v1268
      %1334 = vst.msk [vmem:[%s265 + $0xfc] sm:$0xf] %vm1270, %v1269
      %s1335 = smul.u32 64, %s19
      %p1336 = scmp.lt.s32.totalorder %s1335, 255
      %s1337 = scalar_select %p1336, %s1335, 255
      %p1338 = scmp.lt.s32.totalorder %s20, 0
      %s1339 = scalar_select %p1338, %s20, 0
      %s1340 = sadd.s32 %s1339, %s1337
      %s1341 = smul.addr %s1340, 4
      %s1342 = scalar_lea.vmem %s3, %s1341
      // Predicated region
      $region33: #{deeplab_forward.15} parent=31 // pred_check
        %p1343 = pneg %p135
      $region34: #{deeplab_forward.15} parent=31 // pred_check_branch
        %1345 = sbr.rel (%p1343) target = $region36
      $region35: #{deeplab_forward.15} parent=31 // pred_region
        %s1346 = smul.u32 64, %s19
      $region36: #{deeplab_forward.15} parent=31 // pred_fallthru
        _
    $region32: #{deeplab_forward.15} parent=5 // pred_fallthru
      _
    %p1347 = scmp.le.s32.totalorder 2, %s9
    // Predicated region
    $region37: #{deeplab_forward.15} parent=5 // pred_check
      %p1348 = pneg %p1347
    $region38: #{deeplab_forward.15} parent=5 // pred_check_branch
      %1350 = sbr.rel (%p1348) target = $region40
    $region39: #{deeplab_forward.15} parent=5 // pred_region
      %s1351 = ssub.s32 %s9, 2
      // Predicated region
      $region41: #{deeplab_forward.15} parent=39 // pred_check
        %p1352 = pneg %p141
      $region42: #{deeplab_forward.15} parent=39 // pred_check_branch
        %1354 = sbr.rel (%p1352) target = $region44
      $region43: #{deeplab_forward.15} parent=39 // pred_region
        %s1355 = smul.u32 64, %s22
        %p1356 = scmp.lt.s32.totalorder %s1355, 255
        %s1357 = scalar_select %p1356, %s1355, 255
        %p1358 = scmp.lt.s32.totalorder %s23, 0
        %s1359 = scalar_select %p1358, %s23, 0
        %s1360 = sadd.s32 %s1359, %s1357
        %s1361 = smul.addr %s1360, 4
        %s1362 = scalar_lea.vmem %s3, %s1361
      $region44: #{deeplab_forward.15} parent=39 // pred_fallthru
        _
    $region40: #{deeplab_forward.15} parent=5 // pred_fallthru
      _
  $region6: #{deeplab_forward.15} parent=0 // loop_footer
    %s13 = sadd.s32 1, %s9
  $region7: #{deeplab_forward.15} parent=0 // loop_footer_branch
    %8 = sbr.rel target = $region3
  $region8: #{deeplab_forward.15} parent=0 // loop_exit
    _

// kernel: deeplab_forward.16
$region0: #{deeplab_forward.16}
  #allocation0 [shape = 'u32[]', space=smem, size = 0x4, offset = 0x4, fixed_abs, tag = 'smem constant byte address 0x4 - core index']
  #allocation1 [shape = 'u32[72,128]{1,0:T(1,128)}', space=vmem, size = 0x9000, scoped, tag = 'internal scratch']
  %s0 = inlined_call_operand.vmem [shape: bf16[512,144], index: 0, kind: input, shape index: {}]
  %s1 = inlined_call_operand.vmem [shape: bf16[144,16], index: 1, kind: input, shape index: {}]
  %s2 = inlined_call_operand.vmem [shape: f32[1,16], index: 2, kind: input, shape index: {}]
  %s3 = inlined_call_operand.vmem [shape: bf16[512,16], index: 3, kind: output, shape index: {}]
  %s4 = sld [smem:[#allocation0]]
  $region22: #{deeplab_forward.16} parent=0
    _
  %s6 = ssub.s32 1, %s4
  %s7 = scalar_select 0, %s6, %s4
  // Predicated region
  $region2: #{deeplab_forward.16} parent=0 // pred_check
    _
  $region3: #{deeplab_forward.16} parent=0 // pred_check_branch
    %9 = sbr.rel (0) target = $region5
  $region4: #{deeplab_forward.16} parent=0 // pred_region
    _
  $region5: #{deeplab_forward.16} parent=0 // pred_fallthru
    _
  // Predicated region
  $region6: #{deeplab_forward.16} parent=0 // pred_check
    _
  $region7: #{deeplab_forward.16} parent=0 // pred_check_branch
    %11 = sbr.rel (0) target = $region9
  $region8: #{deeplab_forward.16} parent=0 // pred_region
    _
  $region9: #{deeplab_forward.16} parent=0 // pred_fallthru
    _
  // Predicated region
  $region10: #{deeplab_forward.16} parent=0 // pred_check
    _
  $region11: #{deeplab_forward.16} parent=0 // pred_check_branch
    %13 = sbr.rel (0) target = $region13
  $region12: #{deeplab_forward.16} parent=0 // pred_region
    _
  $region13: #{deeplab_forward.16} parent=0 // pred_fallthru
    _
  %v15 = vld [vmem:[%s0] sm:$0xff]
  %v16 = vld [vmem:[%s0 + $0x8] sm:$0xff]
  %v17 = vld [vmem:[%s0 + $0x10] sm:$0xff]
  %v18 = vld [vmem:[%s0 + $0x18] sm:$0xff]
  %v19 = vld [vmem:[%s0 + $0x20] sm:$0xff]
  %v20 = vld [vmem:[%s0 + $0x28] sm:$0xff]
  %v21 = vld [vmem:[%s0 + $0x30] sm:$0xff]
  %v22 = vld [vmem:[%s0 + $0x38] sm:$0xff]
  %v23 = vld [vmem:[%s0 + $0x40] sm:$0xff]
  %v24 = vld [vmem:[%s0 + $0x48] sm:$0xff]
  %v25 = vld [vmem:[%s0 + $0x50] sm:$0xff]
  %v26 = vld [vmem:[%s0 + $0x58] sm:$0xff]
  %v27 = vld [vmem:[%s0 + $0x60] sm:$0xff]
  %v28 = vld [vmem:[%s0 + $0x68] sm:$0xff]
  %v29 = vld [vmem:[%s0 + $0x70] sm:$0xff]
  %v30 = vld [vmem:[%s0 + $0x78] sm:$0xff]
  %v31 = vld [vmem:[%s0 + $0x80] sm:$0xff]
  %v32 = vld [vmem:[%s0 + $0x88] sm:$0xff]
  %v33 = vld [vmem:[%s0 + $0x90] sm:$0xff]
  %v34 = vld [vmem:[%s0 + $0x98] sm:$0xff]
  %v35 = vld [vmem:[%s0 + $0xa0] sm:$0xff]
  %v36 = vld [vmem:[%s0 + $0xa8] sm:$0xff]
  %v37 = vld [vmem:[%s0 + $0xb0] sm:$0xff]
  %v38 = vld [vmem:[%s0 + $0xb8] sm:$0xff]
  %v39 = vld [vmem:[%s0 + $0xc0] sm:$0xff]
  %v40 = vld [vmem:[%s0 + $0xc8] sm:$0xff]
  %v41 = vld [vmem:[%s0 + $0xd0] sm:$0xff]
  %v42 = vld [vmem:[%s0 + $0xd8] sm:$0xff]
  %v43 = vld [vmem:[%s0 + $0xe0] sm:$0xff]
  %v44 = vld [vmem:[%s0 + $0xe8] sm:$0xff]
  %v45 = vld [vmem:[%s0 + $0xf0] sm:$0xff]
  %v46 = vld [vmem:[%s0 + $0xf8] sm:$0xff]
  %v47 = vld [vmem:[%s0 + $0x100] sm:$0xff]
  %v48 = vld [vmem:[%s0 + $0x108] sm:$0xff]
  %v49 = vld [vmem:[%s0 + $0x110] sm:$0xff]
  %v50 = vld [vmem:[%s0 + $0x118] sm:$0xff]
  %v51 = vld [vmem:[%s0 + $0x120] sm:$0xff]
  %v52 = vld [vmem:[%s0 + $0x128] sm:$0xff]
  %v53 = vld [vmem:[%s0 + $0x130] sm:$0xff]
  %v54 = vld [vmem:[%s0 + $0x138] sm:$0xff]
  %v55 = vld [vmem:[%s0 + $0x140] sm:$0xff]
  %v56 = vld [vmem:[%s0 + $0x148] sm:$0xff]
  %v57 = vld [vmem:[%s0 + $0x150] sm:$0xff]
  %v58 = vld [vmem:[%s0 + $0x158] sm:$0xff]
  %v59 = vld [vmem:[%s0 + $0x160] sm:$0xff]
  %v60 = vld [vmem:[%s0 + $0x168] sm:$0xff]
  %v61 = vld [vmem:[%s0 + $0x170] sm:$0xff]
  %v62 = vld [vmem:[%s0 + $0x178] sm:$0xff]
  %v63 = vld [vmem:[%s0 + $0x180] sm:$0xff]
  %v64 = vld [vmem:[%s0 + $0x188] sm:$0xff]
  %v65 = vld [vmem:[%s0 + $0x190] sm:$0xff]
  %v66 = vld [vmem:[%s0 + $0x198] sm:$0xff]
  %v67 = vld [vmem:[%s0 + $0x1a0] sm:$0xff]
  %v68 = vld [vmem:[%s0 + $0x1a8] sm:$0xff]
  %v69 = vld [vmem:[%s0 + $0x1b0] sm:$0xff]
  %v70 = vld [vmem:[%s0 + $0x1b8] sm:$0xff]
  %v71 = vld [vmem:[%s0 + $0x1c0] sm:$0xff]
  %v72 = vld [vmem:[%s0 + $0x1c8] sm:$0xff]
  %v73 = vld [vmem:[%s0 + $0x1d0] sm:$0xff]
  %v74 = vld [vmem:[%s0 + $0x1d8] sm:$0xff]
  %v75 = vld [vmem:[%s0 + $0x1e0] sm:$0xff]
  %v76 = vld [vmem:[%s0 + $0x1e8] sm:$0xff]
  %v77 = vld [vmem:[%s0 + $0x1f0] sm:$0xff]
  %v78 = vld [vmem:[%s0 + $0x1f8] sm:$0xff]
  %v79 = vld [vmem:[%s1] sm:$0xf]
  %v80 = vld [vmem:[%s1 + $0x4] sm:$0xf]
  %v81 = vld [vmem:[%s1 + $0x8] sm:$0xf]
  %v82 = vld [vmem:[%s1 + $0xc] sm:$0xf]
  %v83 = vld [vmem:[%s1 + $0x10] sm:$0xf]
  %v84 = vld [vmem:[%s1 + $0x14] sm:$0xf]
  %v85 = vld [vmem:[%s1 + $0x18] sm:$0xf]
  %v86 = vld [vmem:[%s1 + $0x1c] sm:$0xf]
  %v87 = vld [vmem:[%s1 + $0x20] sm:$0xf]
  %v88 = vld [vmem:[%s1 + $0x24] sm:$0xf]
  %v89 = vld [vmem:[%s1 + $0x28] sm:$0xf]
  %v90 = vld [vmem:[%s1 + $0x2c] sm:$0xf]
  %v91 = vld [vmem:[%s1 + $0x30] sm:$0xf]
  %v92 = vld [vmem:[%s1 + $0x34] sm:$0xf]
  %v93 = vld [vmem:[%s1 + $0x38] sm:$0xf]
  %v94 = vld [vmem:[%s1 + $0x3c] sm:$0xf]
  %v95 = vld [vmem:[%s1 + $0x40] sm:$0xf]
  %v96 = vld [vmem:[%s1 + $0x44] sm:$0xf]
  %v97 = vld [vmem:[%s2] sm:$0x1]
  %v99 = vperm.slane %v97, 0
  %v165 = vunpack.c.l.b16 %v15
  %v166 = vunpack.c.h.b16 %v15
  %v167 = vunpack.c.l.b16 %v16
  %v168 = vunpack.c.h.b16 %v16
  %v169 = vunpack.c.l.b16 %v17
  %v170 = vunpack.c.h.b16 %v17
  %v171 = vunpack.c.l.b16 %v18
  %v172 = vunpack.c.h.b16 %v18
  %v173 = vunpack.c.l.b16 %v19
  %v174 = vunpack.c.h.b16 %v19
  %v175 = vunpack.c.l.b16 %v20
  %v176 = vunpack.c.h.b16 %v20
  %v177 = vunpack.c.l.b16 %v21
  %v178 = vunpack.c.h.b16 %v21
  %v179 = vunpack.c.l.b16 %v22
  %v180 = vunpack.c.h.b16 %v22
  %v181 = vunpack.c.l.b16 %v23
  %v182 = vunpack.c.h.b16 %v23
  %v183 = vunpack.c.l.b16 %v24
  %v184 = vunpack.c.h.b16 %v24
  %v185 = vunpack.c.l.b16 %v25
  %v186 = vunpack.c.h.b16 %v25
  %v187 = vunpack.c.l.b16 %v26
  %v188 = vunpack.c.h.b16 %v26
  %v189 = vunpack.c.l.b16 %v27
  %v190 = vunpack.c.h.b16 %v27
  %v191 = vunpack.c.l.b16 %v28
  %v192 = vunpack.c.h.b16 %v28
  %v193 = vunpack.c.l.b16 %v29
  %v194 = vunpack.c.h.b16 %v29
  %v195 = vunpack.c.l.b16 %v30
  %v196 = vunpack.c.h.b16 %v30
  %v197 = vunpack.c.l.b16 %v31
  %v198 = vunpack.c.h.b16 %v31
  %v199 = vunpack.c.l.b16 %v32
  %v200 = vunpack.c.h.b16 %v32
  %v201 = vunpack.c.l.b16 %v33
  %v202 = vunpack.c.h.b16 %v33
  %v203 = vunpack.c.l.b16 %v34
  %v204 = vunpack.c.h.b16 %v34
  %v205 = vunpack.c.l.b16 %v35
  %v206 = vunpack.c.h.b16 %v35
  %v207 = vunpack.c.l.b16 %v36
  %v208 = vunpack.c.h.b16 %v36
  %v209 = vunpack.c.l.b16 %v37
  %v210 = vunpack.c.h.b16 %v37
  %v211 = vunpack.c.l.b16 %v38
  %v212 = vunpack.c.h.b16 %v38
  %v213 = vunpack.c.l.b16 %v39
  %v214 = vunpack.c.h.b16 %v39
  %v215 = vunpack.c.l.b16 %v40
  %v216 = vunpack.c.h.b16 %v40
  %v217 = vunpack.c.l.b16 %v41
  %v218 = vunpack.c.h.b16 %v41
  %v219 = vunpack.c.l.b16 %v42
  %v220 = vunpack.c.h.b16 %v42
  %v221 = vunpack.c.l.b16 %v43
  %v222 = vunpack.c.h.b16 %v43
  %v223 = vunpack.c.l.b16 %v44
  %v224 = vunpack.c.h.b16 %v44
  %v225 = vunpack.c.l.b16 %v45
  %v226 = vunpack.c.h.b16 %v45
  %v227 = vunpack.c.l.b16 %v46
  %v228 = vunpack.c.h.b16 %v46
  %v229 = vunpack.c.l.b16 %v47
  %v230 = vunpack.c.h.b16 %v47
  %v231 = vunpack.c.l.b16 %v48
  %v232 = vunpack.c.h.b16 %v48
  %v233 = vunpack.c.l.b16 %v49
  %v234 = vunpack.c.h.b16 %v49
  %v235 = vunpack.c.l.b16 %v50
  %v236 = vunpack.c.h.b16 %v50
  %v237 = vunpack.c.l.b16 %v51
  %v238 = vunpack.c.h.b16 %v51
  %v239 = vunpack.c.l.b16 %v52
  %v240 = vunpack.c.h.b16 %v52
  %v241 = vunpack.c.l.b16 %v53
  %v242 = vunpack.c.h.b16 %v53
  %v243 = vunpack.c.l.b16 %v54
  %v244 = vunpack.c.h.b16 %v54
  %v245 = vunpack.c.l.b16 %v55
  %v246 = vunpack.c.h.b16 %v55
  %v247 = vunpack.c.l.b16 %v56
  %v248 = vunpack.c.h.b16 %v56
  %v249 = vunpack.c.l.b16 %v57
  %v250 = vunpack.c.h.b16 %v57
  %v251 = vunpack.c.l.b16 %v58
  %v252 = vunpack.c.h.b16 %v58
  %v253 = vunpack.c.l.b16 %v59
  %v254 = vunpack.c.h.b16 %v59
  %v255 = vunpack.c.l.b16 %v60
  %v256 = vunpack.c.h.b16 %v60
  %v257 = vunpack.c.l.b16 %v61
  %v258 = vunpack.c.h.b16 %v61
  %v259 = vunpack.c.l.b16 %v62
  %v260 = vunpack.c.h.b16 %v62
  %v261 = vunpack.c.l.b16 %v63
  %v262 = vunpack.c.h.b16 %v63
  %v263 = vunpack.c.l.b16 %v64
  %v264 = vunpack.c.h.b16 %v64
  %v265 = vunpack.c.l.b16 %v65
  %v266 = vunpack.c.h.b16 %v65
  %v267 = vunpack.c.l.b16 %v66
  %v268 = vunpack.c.h.b16 %v66
  %v269 = vunpack.c.l.b16 %v67
  %v270 = vunpack.c.h.b16 %v67
  %v271 = vunpack.c.l.b16 %v68
  %v272 = vunpack.c.h.b16 %v68
  %v273 = vunpack.c.l.b16 %v69
  %v274 = vunpack.c.h.b16 %v69
  %v275 = vunpack.c.l.b16 %v70
  %v276 = vunpack.c.h.b16 %v70
  %v277 = vunpack.c.l.b16 %v71
  %v278 = vunpack.c.h.b16 %v71
  %v279 = vunpack.c.l.b16 %v72
  %v280 = vunpack.c.h.b16 %v72
  %v281 = vunpack.c.l.b16 %v73
  %v282 = vunpack.c.h.b16 %v73
  %v283 = vunpack.c.l.b16 %v74
  %v284 = vunpack.c.h.b16 %v74
  %v285 = vunpack.c.l.b16 %v75
  %v286 = vunpack.c.h.b16 %v75
  %v287 = vunpack.c.l.b16 %v76
  %v288 = vunpack.c.h.b16 %v76
  %v289 = vunpack.c.l.b16 %v77
  %v290 = vunpack.c.h.b16 %v77
  %v291 = vunpack.c.l.b16 %v78
  %v292 = vunpack.c.h.b16 %v78
  %v293 = vpack.c.b16 %v167, %v165
  %v294 = vpack.c.b16 %v168, %v166
  %v295 = vpack.c.b16 %v171, %v169
  %v296 = vpack.c.b16 %v172, %v170
  %v297 = vpack.c.b16 %v175, %v173
  %v298 = vpack.c.b16 %v176, %v174
  %v299 = vpack.c.b16 %v179, %v177
  %v300 = vpack.c.b16 %v180, %v178
  %v301 = vpack.c.b16 %v183, %v181
  %v302 = vpack.c.b16 %v184, %v182
  %v303 = vpack.c.b16 %v187, %v185
  %v304 = vpack.c.b16 %v188, %v186
  %v305 = vpack.c.b16 %v191, %v189
  %v306 = vpack.c.b16 %v192, %v190
  %v307 = vpack.c.b16 %v195, %v193
  %v308 = vpack.c.b16 %v196, %v194
  %v309 = vpack.c.b16 %v199, %v197
  %v310 = vpack.c.b16 %v200, %v198
  %v311 = vpack.c.b16 %v203, %v201
  %v312 = vpack.c.b16 %v204, %v202
  %v313 = vpack.c.b16 %v207, %v205
  %v314 = vpack.c.b16 %v208, %v206
  %v315 = vpack.c.b16 %v211, %v209
  %v316 = vpack.c.b16 %v212, %v210
  %v317 = vpack.c.b16 %v215, %v213
  %v318 = vpack.c.b16 %v216, %v214
  %v319 = vpack.c.b16 %v219, %v217
  %v320 = vpack.c.b16 %v220, %v218
  %v321 = vpack.c.b16 %v223, %v221
  %v322 = vpack.c.b16 %v224, %v222
  %v323 = vpack.c.b16 %v227, %v225
  %v324 = vpack.c.b16 %v228, %v226
  %v325 = vpack.c.b16 %v231, %v229
  %v326 = vpack.c.b16 %v232, %v230
  %v327 = vpack.c.b16 %v235, %v233
  %v328 = vpack.c.b16 %v236, %v234
  %v329 = vpack.c.b16 %v239, %v237
  %v330 = vpack.c.b16 %v240, %v238
  %v331 = vpack.c.b16 %v243, %v241
  %v332 = vpack.c.b16 %v244, %v242
  %v333 = vpack.c.b16 %v247, %v245
  %v334 = vpack.c.b16 %v248, %v246
  %v335 = vpack.c.b16 %v251, %v249
  %v336 = vpack.c.b16 %v252, %v250
  %v337 = vpack.c.b16 %v255, %v253
  %v338 = vpack.c.b16 %v256, %v254
  %v339 = vpack.c.b16 %v259, %v257
  %v340 = vpack.c.b16 %v260, %v258
  %v341 = vpack.c.b16 %v263, %v261
  %v342 = vpack.c.b16 %v264, %v262
  %v343 = vpack.c.b16 %v267, %v265
  %v344 = vpack.c.b16 %v268, %v266
  %v345 = vpack.c.b16 %v271, %v269
  %v346 = vpack.c.b16 %v272, %v270
  %v347 = vpack.c.b16 %v275, %v273
  %v348 = vpack.c.b16 %v276, %v274
  %v349 = vpack.c.b16 %v279, %v277
  %v350 = vpack.c.b16 %v280, %v278
  %v351 = vpack.c.b16 %v283, %v281
  %v352 = vpack.c.b16 %v284, %v282
  %v353 = vpack.c.b16 %v287, %v285
  %v354 = vpack.c.b16 %v288, %v286
  %v355 = vpack.c.b16 %v291, %v289
  %v356 = vpack.c.b16 %v292, %v290
  %v407 = vunpack.c.l.b16 %v79
  %v408 = vunpack.c.l.b16 %v80
  %v409 = vunpack.c.l.b16 %v81
  %v410 = vunpack.c.l.b16 %v82
  %v411 = vunpack.c.l.b16 %v83
  %v412 = vunpack.c.l.b16 %v84
  %v413 = vunpack.c.l.b16 %v85
  %v414 = vunpack.c.l.b16 %v86
  %v415 = vunpack.c.l.b16 %v87
  %v416 = vunpack.c.l.b16 %v88
  %v417 = vunpack.c.l.b16 %v89
  %v418 = vunpack.c.l.b16 %v90
  %v419 = vunpack.c.l.b16 %v91
  %v420 = vunpack.c.l.b16 %v92
  %v421 = vunpack.c.l.b16 %v93
  %v422 = vunpack.c.l.b16 %v94
  %v423 = vunpack.c.l.b16 %v95
  %v424 = vunpack.c.l.b16 %v96
  %v425 = vpack.c.b16 %v408, %v407
  %v426 = vpack.c.b16 %v410, %v409
  %v427 = vpack.c.b16 %v412, %v411
  %v428 = vpack.c.b16 %v414, %v413
  %v429 = vpack.c.b16 %v416, %v415
  %v430 = vpack.c.b16 %v418, %v417
  %v431 = vpack.c.b16 %v420, %v419
  %v432 = vpack.c.b16 %v422, %v421
  %v433 = vpack.c.b16 %v424, %v423
  %vm443 = vcmask 130048
  %v445 = vsel %vm443, %v294, 0
  %v448 = vsel %vm443, %v296, 0
  %v451 = vsel %vm443, %v298, 0
  %v454 = vsel %vm443, %v300, 0
  %v457 = vsel %vm443, %v302, 0
  %v460 = vsel %vm443, %v304, 0
  %v463 = vsel %vm443, %v306, 0
  %v466 = vsel %vm443, %v308, 0
  %v469 = vsel %vm443, %v310, 0
  %v472 = vsel %vm443, %v312, 0
  %v475 = vsel %vm443, %v314, 0
  %v478 = vsel %vm443, %v316, 0
  %v481 = vsel %vm443, %v318, 0
  %v484 = vsel %vm443, %v320, 0
  %v487 = vsel %vm443, %v322, 0
  %v490 = vsel %vm443, %v324, 0
  %v493 = vsel %vm443, %v326, 0
  %v496 = vsel %vm443, %v328, 0
  %v499 = vsel %vm443, %v330, 0
  %v502 = vsel %vm443, %v332, 0
  %v505 = vsel %vm443, %v334, 0
  %v508 = vsel %vm443, %v336, 0
  %v511 = vsel %vm443, %v338, 0
  %v514 = vsel %vm443, %v340, 0
  %v517 = vsel %vm443, %v342, 0
  %v520 = vsel %vm443, %v344, 0
  %v523 = vsel %vm443, %v346, 0
  %v526 = vsel %vm443, %v348, 0
  %v529 = vsel %vm443, %v350, 0
  %v532 = vsel %vm443, %v352, 0
  %v535 = vsel %vm443, %v354, 0
  %v538 = vsel %vm443, %v356, 0
  %540 = vmatpush.bf16.msra.mxu0 %v432
  %541 = vmatpush.bf16.msra.mxu0 %v431
  %542 = vmatpush.bf16.msra.mxu0 %v430
  %543 = vmatpush.bf16.msra.mxu0 %v429
  %544 = vmatpush.bf16.msra.mxu0 %v428
  %545 = vmatpush.bf16.msra.mxu0 %v427
  %546 = vmatpush.bf16.msra.mxu0 %v426
  %547 = vmatpush.bf16.msra.mxu0 %v425
  %548 = vmatmul.bf16.gmra.mxu0 %v293
  %v549 = vpop.f32.mrf.mxu0
  %v550 = vadd.f32 %v99, %v549
  %v551 = vpop.f32.mrf.mxu0
  %v552 = vadd.f32 %v99, %v551
  %553 = vmatmul.bf16.gmra.mxu0 %v295
  %v554 = vpop.f32.mrf.mxu0
  %v555 = vadd.f32 %v99, %v554
  %v556 = vpop.f32.mrf.mxu0
  %v557 = vadd.f32 %v99, %v556
  %558 = vmatmul.bf16.gmra.mxu0 %v297
  %v559 = vpop.f32.mrf.mxu0
  %v560 = vadd.f32 %v99, %v559
  %v561 = vpop.f32.mrf.mxu0
  %v562 = vadd.f32 %v99, %v561
  %563 = vmatmul.bf16.gmra.mxu0 %v299
  %v564 = vpop.f32.mrf.mxu0
  %v565 = vadd.f32 %v99, %v564
  %v566 = vpop.f32.mrf.mxu0
  %v567 = vadd.f32 %v99, %v566
  %568 = vmatmul.bf16.gmra.mxu0 %v301
  %v569 = vpop.f32.mrf.mxu0
  %v570 = vadd.f32 %v99, %v569
  %v571 = vpop.f32.mrf.mxu0
  %v572 = vadd.f32 %v99, %v571
  %573 = vmatmul.bf16.gmra.mxu0 %v303
  %v574 = vpop.f32.mrf.mxu0
  %v575 = vadd.f32 %v99, %v574
  %v576 = vpop.f32.mrf.mxu0
  %v577 = vadd.f32 %v99, %v576
  %578 = vmatmul.bf16.gmra.mxu0 %v305
  %v579 = vpop.f32.mrf.mxu0
  %v580 = vadd.f32 %v99, %v579
  %v581 = vpop.f32.mrf.mxu0
  %v582 = vadd.f32 %v99, %v581
  %583 = vmatmul.bf16.gmra.mxu0 %v307
  %v584 = vpop.f32.mrf.mxu0
  %v585 = vadd.f32 %v99, %v584
  %v586 = vpop.f32.mrf.mxu0
  %v587 = vadd.f32 %v99, %v586
  %588 = vmatmul.bf16.gmra.mxu0 %v309
  %v589 = vpop.f32.mrf.mxu0
  %v590 = vadd.f32 %v99, %v589
  %v591 = vpop.f32.mrf.mxu0
  %v592 = vadd.f32 %v99, %v591
  %593 = vmatmul.bf16.gmra.mxu0 %v311
  %v594 = vpop.f32.mrf.mxu0
  %v595 = vadd.f32 %v99, %v594
  %v596 = vpop.f32.mrf.mxu0
  %v597 = vadd.f32 %v99, %v596
  %598 = vmatmul.bf16.gmra.mxu0 %v313
  %v599 = vpop.f32.mrf.mxu0
  %v600 = vadd.f32 %v99, %v599
  %v601 = vpop.f32.mrf.mxu0
  %v602 = vadd.f32 %v99, %v601
  %603 = vmatmul.bf16.gmra.mxu0 %v315
  %v604 = vpop.f32.mrf.mxu0
  %v605 = vadd.f32 %v99, %v604
  %v606 = vpop.f32.mrf.mxu0
  %v607 = vadd.f32 %v99, %v606
  %608 = vmatmul.bf16.gmra.mxu0 %v317
  %v609 = vpop.f32.mrf.mxu0
  %v610 = vadd.f32 %v99, %v609
  %v611 = vpop.f32.mrf.mxu0
  %v612 = vadd.f32 %v99, %v611
  %613 = vmatmul.bf16.gmra.mxu0 %v319
  %v614 = vpop.f32.mrf.mxu0
  %v615 = vadd.f32 %v99, %v614
  %v616 = vpop.f32.mrf.mxu0
  %v617 = vadd.f32 %v99, %v616
  %618 = vmatmul.bf16.gmra.mxu0 %v321
  %v619 = vpop.f32.mrf.mxu0
  %v620 = vadd.f32 %v99, %v619
  %v621 = vpop.f32.mrf.mxu0
  %v622 = vadd.f32 %v99, %v621
  %623 = vmatmul.bf16.gmra.mxu0 %v323
  %v624 = vpop.f32.mrf.mxu0
  %v625 = vadd.f32 %v99, %v624
  %v626 = vpop.f32.mrf.mxu0
  %v627 = vadd.f32 %v99, %v626
  %628 = vmatmul.bf16.gmra.mxu0 %v325
  %v629 = vpop.f32.mrf.mxu0
  %v630 = vadd.f32 %v99, %v629
  %v631 = vpop.f32.mrf.mxu0
  %v632 = vadd.f32 %v99, %v631
  %633 = vmatmul.bf16.gmra.mxu0 %v327
  %v634 = vpop.f32.mrf.mxu0
  %v635 = vadd.f32 %v99, %v634
  %v636 = vpop.f32.mrf.mxu0
  %v637 = vadd.f32 %v99, %v636
  %638 = vmatmul.bf16.gmra.mxu0 %v329
  %v639 = vpop.f32.mrf.mxu0
  %v640 = vadd.f32 %v99, %v639
  %v641 = vpop.f32.mrf.mxu0
  %v642 = vadd.f32 %v99, %v641
  %643 = vmatmul.bf16.gmra.mxu0 %v331
  %v644 = vpop.f32.mrf.mxu0
  %v645 = vadd.f32 %v99, %v644
  %v646 = vpop.f32.mrf.mxu0
  %v647 = vadd.f32 %v99, %v646
  %648 = vmatmul.bf16.gmra.mxu0 %v333
  %v649 = vpop.f32.mrf.mxu0
  %v650 = vadd.f32 %v99, %v649
  %v651 = vpop.f32.mrf.mxu0
  %v652 = vadd.f32 %v99, %v651
  %653 = vmatmul.bf16.gmra.mxu0 %v335
  %v654 = vpop.f32.mrf.mxu0
  %v655 = vadd.f32 %v99, %v654
  %v656 = vpop.f32.mrf.mxu0
  %v657 = vadd.f32 %v99, %v656
  %658 = vmatmul.bf16.gmra.mxu0 %v337
  %v659 = vpop.f32.mrf.mxu0
  %v660 = vadd.f32 %v99, %v659
  %v661 = vpop.f32.mrf.mxu0
  %v662 = vadd.f32 %v99, %v661
  %663 = vmatmul.bf16.gmra.mxu0 %v339
  %v664 = vpop.f32.mrf.mxu0
  %v665 = vadd.f32 %v99, %v664
  %v666 = vpop.f32.mrf.mxu0
  %v667 = vadd.f32 %v99, %v666
  %668 = vmatmul.bf16.gmra.mxu0 %v341
  %v669 = vpop.f32.mrf.mxu0
  %v670 = vadd.f32 %v99, %v669
  %v671 = vpop.f32.mrf.mxu0
  %v672 = vadd.f32 %v99, %v671
  %673 = vmatmul.bf16.gmra.mxu0 %v343
  %v674 = vpop.f32.mrf.mxu0
  %v675 = vadd.f32 %v99, %v674
  %v676 = vpop.f32.mrf.mxu0
  %v677 = vadd.f32 %v99, %v676
  %678 = vmatmul.bf16.gmra.mxu0 %v345
  %v679 = vpop.f32.mrf.mxu0
  %v680 = vadd.f32 %v99, %v679
  %v681 = vpop.f32.mrf.mxu0
  %v682 = vadd.f32 %v99, %v681
  %683 = vmatmul.bf16.gmra.mxu0 %v347
  %v684 = vpop.f32.mrf.mxu0
  %v685 = vadd.f32 %v99, %v684
  %v686 = vpop.f32.mrf.mxu0
  %v687 = vadd.f32 %v99, %v686
  %688 = vmatmul.bf16.gmra.mxu0 %v349
  %v689 = vpop.f32.mrf.mxu0
  %v690 = vadd.f32 %v99, %v689
  %v691 = vpop.f32.mrf.mxu0
  %v692 = vadd.f32 %v99, %v691
  %693 = vmatmul.bf16.gmra.mxu0 %v351
  %v694 = vpop.f32.mrf.mxu0
  %v695 = vadd.f32 %v99, %v694
  %v696 = vpop.f32.mrf.mxu0
  %v697 = vadd.f32 %v99, %v696
  %698 = vmatmul.bf16.gmra.mxu0 %v353
  %v699 = vpop.f32.mrf.mxu0
  %v700 = vadd.f32 %v99, %v699
  %v701 = vpop.f32.mrf.mxu0
  %v702 = vadd.f32 %v99, %v701
  %703 = vmatmul.bf16.gmra.mxu0 %v355
  %v704 = vpop.f32.mrf.mxu0
  %v705 = vadd.f32 %v99, %v704
  %v706 = vpop.f32.mrf.mxu0
  %v707 = vadd.f32 %v99, %v706
  %708 = vdwg.mxu0
  %709 = vmatpush.bf16.msra.mxu0 0
  %710 = vmatpush.bf16.msra.mxu0 0
  %711 = vmatpush.bf16.msra.mxu0 0
  %712 = vmatpush.bf16.msra.mxu0 0
  %713 = vmatpush.bf16.msra.mxu0 0
  %714 = vmatpush.bf16.msra.mxu0 0
  %715 = vmatpush.bf16.msra.mxu0 0
  %716 = vmatpush.bf16.msra.mxu0 %v433
  %717 = vmatmul.bf16.gmra.mxu0 %v445
  %v718 = vpop.f32.mrf.mxu0
  %v719 = vadd.f32 %v550, %v718
  %v720 = vpop.f32.mrf.mxu0
  %v721 = vadd.f32 %v552, %v720
  %722 = vmatmul.bf16.gmra.mxu0 %v448
  %v723 = vpop.f32.mrf.mxu0
  %v724 = vadd.f32 %v555, %v723
  %v725 = vpop.f32.mrf.mxu0
  %v726 = vadd.f32 %v557, %v725
  %727 = vmatmul.bf16.gmra.mxu0 %v451
  %v728 = vpop.f32.mrf.mxu0
  %v729 = vadd.f32 %v560, %v728
  %v730 = vpop.f32.mrf.mxu0
  %v731 = vadd.f32 %v562, %v730
  %732 = vmatmul.bf16.gmra.mxu0 %v454
  %v733 = vpop.f32.mrf.mxu0
  %v734 = vadd.f32 %v565, %v733
  %v735 = vpop.f32.mrf.mxu0
  %v736 = vadd.f32 %v567, %v735
  %737 = vmatmul.bf16.gmra.mxu0 %v457
  %v738 = vpop.f32.mrf.mxu0
  %v739 = vadd.f32 %v570, %v738
  %v740 = vpop.f32.mrf.mxu0
  %v741 = vadd.f32 %v572, %v740
  %742 = vmatmul.bf16.gmra.mxu0 %v460
  %v743 = vpop.f32.mrf.mxu0
  %v744 = vadd.f32 %v575, %v743
  %v745 = vpop.f32.mrf.mxu0
  %v746 = vadd.f32 %v577, %v745
  %747 = vmatmul.bf16.gmra.mxu0 %v463
  %v748 = vpop.f32.mrf.mxu0
  %v749 = vadd.f32 %v580, %v748
  %v750 = vpop.f32.mrf.mxu0
  %v751 = vadd.f32 %v582, %v750
  %752 = vmatmul.bf16.gmra.mxu0 %v466
  %v753 = vpop.f32.mrf.mxu0
  %v754 = vadd.f32 %v585, %v753
  %v755 = vpop.f32.mrf.mxu0
  %v756 = vadd.f32 %v587, %v755
  %757 = vmatmul.bf16.gmra.mxu0 %v469
  %v758 = vpop.f32.mrf.mxu0
  %v759 = vadd.f32 %v590, %v758
  %v760 = vpop.f32.mrf.mxu0
  %v761 = vadd.f32 %v592, %v760
  %762 = vmatmul.bf16.gmra.mxu0 %v472
  %v763 = vpop.f32.mrf.mxu0
  %v764 = vadd.f32 %v595, %v763
  %v765 = vpop.f32.mrf.mxu0
  %v766 = vadd.f32 %v597, %v765
  %767 = vmatmul.bf16.gmra.mxu0 %v475
  %v768 = vpop.f32.mrf.mxu0
  %v769 = vadd.f32 %v600, %v768
  %v770 = vpop.f32.mrf.mxu0
  %v771 = vadd.f32 %v602, %v770
  %772 = vmatmul.bf16.gmra.mxu0 %v478
  %v773 = vpop.f32.mrf.mxu0
  %v774 = vadd.f32 %v605, %v773
  %v775 = vpop.f32.mrf.mxu0
  %v776 = vadd.f32 %v607, %v775
  %777 = vmatmul.bf16.gmra.mxu0 %v481
  %v778 = vpop.f32.mrf.mxu0
  %v779 = vadd.f32 %v610, %v778
  %v780 = vpop.f32.mrf.mxu0
  %v781 = vadd.f32 %v612, %v780
  %782 = vmatmul.bf16.gmra.mxu0 %v484
  %v783 = vpop.f32.mrf.mxu0
  %v784 = vadd.f32 %v615, %v783
  %v785 = vpop.f32.mrf.mxu0
  %v786 = vadd.f32 %v617, %v785
  %787 = vmatmul.bf16.gmra.mxu0 %v487
  %v788 = vpop.f32.mrf.mxu0
  %v789 = vadd.f32 %v620, %v788
  %v790 = vpop.f32.mrf.mxu0
  %v791 = vadd.f32 %v622, %v790
  %792 = vmatmul.bf16.gmra.mxu0 %v490
  %v793 = vpop.f32.mrf.mxu0
  %v794 = vadd.f32 %v625, %v793
  %v795 = vpop.f32.mrf.mxu0
  %v796 = vadd.f32 %v627, %v795
  %797 = vmatmul.bf16.gmra.mxu0 %v493
  %v798 = vpop.f32.mrf.mxu0
  %v799 = vadd.f32 %v630, %v798
  %v800 = vpop.f32.mrf.mxu0
  %v801 = vadd.f32 %v632, %v800
  %802 = vmatmul.bf16.gmra.mxu0 %v496
  %v803 = vpop.f32.mrf.mxu0
  %v804 = vadd.f32 %v635, %v803
  %v805 = vpop.f32.mrf.mxu0
  %v806 = vadd.f32 %v637, %v805
  %807 = vmatmul.bf16.gmra.mxu0 %v499
  %v808 = vpop.f32.mrf.mxu0
  %v809 = vadd.f32 %v640, %v808
  %v810 = vpop.f32.mrf.mxu0
  %v811 = vadd.f32 %v642, %v810
  %812 = vmatmul.bf16.gmra.mxu0 %v502
  %v813 = vpop.f32.mrf.mxu0
  %v814 = vadd.f32 %v645, %v813
  %v815 = vpop.f32.mrf.mxu0
  %v816 = vadd.f32 %v647, %v815
  %817 = vmatmul.bf16.gmra.mxu0 %v505
  %v818 = vpop.f32.mrf.mxu0
  %v819 = vadd.f32 %v650, %v818
  %v820 = vpop.f32.mrf.mxu0
  %v821 = vadd.f32 %v652, %v820
  %822 = vmatmul.bf16.gmra.mxu0 %v508
  %v823 = vpop.f32.mrf.mxu0
  %v824 = vadd.f32 %v655, %v823
  %v825 = vpop.f32.mrf.mxu0
  %v826 = vadd.f32 %v657, %v825
  %827 = vmatmul.bf16.gmra.mxu0 %v511
  %v828 = vpop.f32.mrf.mxu0
  %v829 = vadd.f32 %v660, %v828
  %v830 = vpop.f32.mrf.mxu0
  %v831 = vadd.f32 %v662, %v830
  %832 = vmatmul.bf16.gmra.mxu0 %v514
  %v833 = vpop.f32.mrf.mxu0
  %v834 = vadd.f32 %v665, %v833
  %v835 = vpop.f32.mrf.mxu0
  %v836 = vadd.f32 %v667, %v835
  %837 = vmatmul.bf16.gmra.mxu0 %v517
  %v838 = vpop.f32.mrf.mxu0
  %v839 = vadd.f32 %v670, %v838
  %v840 = vpop.f32.mrf.mxu0
  %v841 = vadd.f32 %v672, %v840
  %842 = vmatmul.bf16.gmra.mxu0 %v520
  %v843 = vpop.f32.mrf.mxu0
  %v844 = vadd.f32 %v675, %v843
  %v845 = vpop.f32.mrf.mxu0
  %v846 = vadd.f32 %v677, %v845
  %847 = vmatmul.bf16.gmra.mxu0 %v523
  %v848 = vpop.f32.mrf.mxu0
  %v849 = vadd.f32 %v680, %v848
  %v850 = vpop.f32.mrf.mxu0
  %v851 = vadd.f32 %v682, %v850
  %852 = vmatmul.bf16.gmra.mxu0 %v526
  %v853 = vpop.f32.mrf.mxu0
  %v854 = vadd.f32 %v685, %v853
  %v855 = vpop.f32.mrf.mxu0
  %v856 = vadd.f32 %v687, %v855
  %857 = vmatmul.bf16.gmra.mxu0 %v529
  %v858 = vpop.f32.mrf.mxu0
  %v859 = vadd.f32 %v690, %v858
  %v860 = vpop.f32.mrf.mxu0
  %v861 = vadd.f32 %v692, %v860
  %862 = vmatmul.bf16.gmra.mxu0 %v532
  %v863 = vpop.f32.mrf.mxu0
  %v864 = vadd.f32 %v695, %v863
  %v865 = vpop.f32.mrf.mxu0
  %v866 = vadd.f32 %v697, %v865
  %867 = vmatmul.bf16.gmra.mxu0 %v535
  %v868 = vpop.f32.mrf.mxu0
  %v869 = vadd.f32 %v700, %v868
  %v870 = vpop.f32.mrf.mxu0
  %v871 = vadd.f32 %v702, %v870
  %872 = vmatmul.bf16.gmra.mxu0 %v538
  %v873 = vpop.f32.mrf.mxu0
  %v874 = vadd.f32 %v705, %v873
  %v875 = vpop.f32.mrf.mxu0
  %v876 = vadd.f32 %v707, %v875
  %877 = vdwg.mxu0
  %v878 = vmax.f32 %v719, 0.0
  %v879 = vmax.f32 %v721, 0.0
  %v880 = vmax.f32 %v724, 0.0
  %v881 = vmax.f32 %v726, 0.0
  %v882 = vmax.f32 %v729, 0.0
  %v883 = vmax.f32 %v731, 0.0
  %v884 = vmax.f32 %v734, 0.0
  %v885 = vmax.f32 %v736, 0.0
  %v886 = vmax.f32 %v739, 0.0
  %v887 = vmax.f32 %v741, 0.0
  %v888 = vmax.f32 %v744, 0.0
  %v889 = vmax.f32 %v746, 0.0
  %v890 = vmax.f32 %v749, 0.0
  %v891 = vmax.f32 %v751, 0.0
  %v892 = vmax.f32 %v754, 0.0
  %v893 = vmax.f32 %v756, 0.0
  %v894 = vmax.f32 %v759, 0.0
  %v895 = vmax.f32 %v761, 0.0
  %v896 = vmax.f32 %v764, 0.0
  %v897 = vmax.f32 %v766, 0.0
  %v898 = vmax.f32 %v769, 0.0
  %v899 = vmax.f32 %v771, 0.0
  %v900 = vmax.f32 %v774, 0.0
  %v901 = vmax.f32 %v776, 0.0
  %v902 = vmax.f32 %v779, 0.0
  %v903 = vmax.f32 %v781, 0.0
  %v904 = vmax.f32 %v784, 0.0
  %v905 = vmax.f32 %v786, 0.0
  %v906 = vmax.f32 %v789, 0.0
  %v907 = vmax.f32 %v791, 0.0
  %v908 = vmax.f32 %v794, 0.0
  %v909 = vmax.f32 %v796, 0.0
  %v910 = vmax.f32 %v799, 0.0
  %v911 = vmax.f32 %v801, 0.0
  %v912 = vmax.f32 %v804, 0.0
  %v913 = vmax.f32 %v806, 0.0
  %v914 = vmax.f32 %v809, 0.0
  %v915 = vmax.f32 %v811, 0.0
  %v916 = vmax.f32 %v814, 0.0
  %v917 = vmax.f32 %v816, 0.0
  %v918 = vmax.f32 %v819, 0.0
  %v919 = vmax.f32 %v821, 0.0
  %v920 = vmax.f32 %v824, 0.0
  %v921 = vmax.f32 %v826, 0.0
  %v922 = vmax.f32 %v829, 0.0
  %v923 = vmax.f32 %v831, 0.0
  %v924 = vmax.f32 %v834, 0.0
  %v925 = vmax.f32 %v836, 0.0
  %v926 = vmax.f32 %v839, 0.0
  %v927 = vmax.f32 %v841, 0.0
  %v928 = vmax.f32 %v844, 0.0
  %v929 = vmax.f32 %v846, 0.0
  %v930 = vmax.f32 %v849, 0.0
  %v931 = vmax.f32 %v851, 0.0
  %v932 = vmax.f32 %v854, 0.0
  %v933 = vmax.f32 %v856, 0.0
  %v934 = vmax.f32 %v859, 0.0
  %v935 = vmax.f32 %v861, 0.0
  %v936 = vmax.f32 %v864, 0.0
  %v937 = vmax.f32 %v866, 0.0
  %v938 = vmax.f32 %v869, 0.0
  %v939 = vmax.f32 %v871, 0.0
  %v940 = vmax.f32 %v874, 0.0
  %v941 = vmax.f32 %v876, 0.0
  %v942 = vpack.c.bf16 %v878, %v878
  %v943 = vpack.c.bf16 %v879, %v879
  %v944 = vpack.c.bf16 %v880, %v880
  %v945 = vpack.c.bf16 %v881, %v881
  %v946 = vpack.c.bf16 %v882, %v882
  %v947 = vpack.c.bf16 %v883, %v883
  %v948 = vpack.c.bf16 %v884, %v884
  %v949 = vpack.c.bf16 %v885, %v885
  %v950 = vpack.c.bf16 %v886, %v886
  %v951 = vpack.c.bf16 %v887, %v887
  %v952 = vpack.c.bf16 %v888, %v888
  %v953 = vpack.c.bf16 %v889, %v889
  %v954 = vpack.c.bf16 %v890, %v890
  %v955 = vpack.c.bf16 %v891, %v891
  %v956 = vpack.c.bf16 %v892, %v892
  %v957 = vpack.c.bf16 %v893, %v893
  %v958 = vpack.c.bf16 %v894, %v894
  %v959 = vpack.c.bf16 %v895, %v895
  %v960 = vpack.c.bf16 %v896, %v896
  %v961 = vpack.c.bf16 %v897, %v897
  %v962 = vpack.c.bf16 %v898, %v898
  %v963 = vpack.c.bf16 %v899, %v899
  %v964 = vpack.c.bf16 %v900, %v900
  %v965 = vpack.c.bf16 %v901, %v901
  %v966 = vpack.c.bf16 %v902, %v902
  %v967 = vpack.c.bf16 %v903, %v903
  %v968 = vpack.c.bf16 %v904, %v904
  %v969 = vpack.c.bf16 %v905, %v905
  %v970 = vpack.c.bf16 %v906, %v906
  %v971 = vpack.c.bf16 %v907, %v907
  %v972 = vpack.c.bf16 %v908, %v908
  %v973 = vpack.c.bf16 %v909, %v909
  %v974 = vpack.c.bf16 %v910, %v910
  %v975 = vpack.c.bf16 %v911, %v911
  %v976 = vpack.c.bf16 %v912, %v912
  %v977 = vpack.c.bf16 %v913, %v913
  %v978 = vpack.c.bf16 %v914, %v914
  %v979 = vpack.c.bf16 %v915, %v915
  %v980 = vpack.c.bf16 %v916, %v916
  %v981 = vpack.c.bf16 %v917, %v917
  %v982 = vpack.c.bf16 %v918, %v918
  %v983 = vpack.c.bf16 %v919, %v919
  %v984 = vpack.c.bf16 %v920, %v920
  %v985 = vpack.c.bf16 %v921, %v921
  %v986 = vpack.c.bf16 %v922, %v922
  %v987 = vpack.c.bf16 %v923, %v923
  %v988 = vpack.c.bf16 %v924, %v924
  %v989 = vpack.c.bf16 %v925, %v925
  %v990 = vpack.c.bf16 %v926, %v926
  %v991 = vpack.c.bf16 %v927, %v927
  %v992 = vpack.c.bf16 %v928, %v928
  %v993 = vpack.c.bf16 %v929, %v929
  %v994 = vpack.c.bf16 %v930, %v930
  %v995 = vpack.c.bf16 %v931, %v931
  %v996 = vpack.c.bf16 %v932, %v932
  %v997 = vpack.c.bf16 %v933, %v933
  %v998 = vpack.c.bf16 %v934, %v934
  %v999 = vpack.c.bf16 %v935, %v935
  %v1000 = vpack.c.bf16 %v936, %v936
  %v1001 = vpack.c.bf16 %v937, %v937
  %v1002 = vpack.c.bf16 %v938, %v938
  %v1003 = vpack.c.bf16 %v939, %v939
  %v1004 = vpack.c.bf16 %v940, %v940
  %v1005 = vpack.c.bf16 %v941, %v941
  %vm1006 = vcmask 125952
  %1007 = vst.msk [vmem:[%s3] sm:$0xf] %vm1006, %v942
  %1008 = vst.msk [vmem:[%s3 + $0x4] sm:$0xf] %vm1006, %v943
  %1009 = vst.msk [vmem:[%s3 + $0x8] sm:$0xf] %vm1006, %v944
  %1010 = vst.msk [vmem:[%s3 + $0xc] sm:$0xf] %vm1006, %v945
  %1011 = vst.msk [vmem:[%s3 + $0x10] sm:$0xf] %vm1006, %v946
  %1012 = vst.msk [vmem:[%s3 + $0x14] sm:$0xf] %vm1006, %v947
  %1013 = vst.msk [vmem:[%s3 + $0x18] sm:$0xf] %vm1006, %v948
  %1014 = vst.msk [vmem:[%s3 + $0x1c] sm:$0xf] %vm1006, %v949
  %1015 = vst.msk [vmem:[%s3 + $0x20] sm:$0xf] %vm1006, %v950
  %1016 = vst.msk [vmem:[%s3 + $0x24] sm:$0xf] %vm1006, %v951
  %1017 = vst.msk [vmem:[%s3 + $0x28] sm:$0xf] %vm1006, %v952
  %1018 = vst.msk [vmem:[%s3 + $0x2c] sm:$0xf] %vm1006, %v953
  %1019 = vst.msk [vmem:[%s3 + $0x30] sm:$0xf] %vm1006, %v954
  %1020 = vst.msk [vmem:[%s3 + $0x34] sm:$0xf] %vm1006, %v955
  %1021 = vst.msk [vmem:[%s3 + $0x38] sm:$0xf] %vm1006, %v956
  %1022 = vst.msk [vmem:[%s3 + $0x3c] sm:$0xf] %vm1006, %v957
  %1023 = vst.msk [vmem:[%s3 + $0x40] sm:$0xf] %vm1006, %v958
  %1024 = vst.msk [vmem:[%s3 + $0x44] sm:$0xf] %vm1006, %v959
  %1025 = vst.msk [vmem:[%s3 + $0x48] sm:$0xf] %vm1006, %v960
  %1026 = vst.msk [vmem:[%s3 + $0x4c] sm:$0xf] %vm1006, %v961
  %1027 = vst.msk [vmem:[%s3 + $0x50] sm:$0xf] %vm1006, %v962
  %1028 = vst.msk [vmem:[%s3 + $0x54] sm:$0xf] %vm1006, %v963
  %1029 = vst.msk [vmem:[%s3 + $0x58] sm:$0xf] %vm1006, %v964
  %1030 = vst.msk [vmem:[%s3 + $0x5c] sm:$0xf] %vm1006, %v965
  %1031 = vst.msk [vmem:[%s3 + $0x60] sm:$0xf] %vm1006, %v966
  %1032 = vst.msk [vmem:[%s3 + $0x64] sm:$0xf] %vm1006, %v967
  %1033 = vst.msk [vmem:[%s3 + $0x68] sm:$0xf] %vm1006, %v968
  %1034 = vst.msk [vmem:[%s3 + $0x6c] sm:$0xf] %vm1006, %v969
  %1035 = vst.msk [vmem:[%s3 + $0x70] sm:$0xf] %vm1006, %v970
  %1036 = vst.msk [vmem:[%s3 + $0x74] sm:$0xf] %vm1006, %v971
  %1037 = vst.msk [vmem:[%s3 + $0x78] sm:$0xf] %vm1006, %v972
  %1038 = vst.msk [vmem:[%s3 + $0x7c] sm:$0xf] %vm1006, %v973
  %1039 = vst.msk [vmem:[%s3 + $0x80] sm:$0xf] %vm1006, %v974
  %1040 = vst.msk [vmem:[%s3 + $0x84] sm:$0xf] %vm1006, %v975
  %1041 = vst.msk [vmem:[%s3 + $0x88] sm:$0xf] %vm1006, %v976
  %1042 = vst.msk [vmem:[%s3 + $0x8c] sm:$0xf] %vm1006, %v977
  %1043 = vst.msk [vmem:[%s3 + $0x90] sm:$0xf] %vm1006, %v978
  %1044 = vst.msk [vmem:[%s3 + $0x94] sm:$0xf] %vm1006, %v979
  %1045 = vst.msk [vmem:[%s3 + $0x98] sm:$0xf] %vm1006, %v980
  %1046 = vst.msk [vmem:[%s3 + $0x9c] sm:$0xf] %vm1006, %v981
  %1047 = vst.msk [vmem:[%s3 + $0xa0] sm:$0xf] %vm1006, %v982
  %1048 = vst.msk [vmem:[%s3 + $0xa4] sm:$0xf] %vm1006, %v983
  %1049 = vst.msk [vmem:[%s3 + $0xa8] sm:$0xf] %vm1006, %v984
  %1050 = vst.msk [vmem:[%s3 + $0xac] sm:$0xf] %vm1006, %v985
  %1051 = vst.msk [vmem:[%s3 + $0xb0] sm:$0xf] %vm1006, %v986
  %1052 = vst.msk [vmem:[%s3 + $0xb4] sm:$0xf] %vm1006, %v987
  %1053 = vst.msk [vmem:[%s3 + $0xb8] sm:$0xf] %vm1006, %v988
  %1054 = vst.msk [vmem:[%s3 + $0xbc] sm:$0xf] %vm1006, %v989
  %1055 = vst.msk [vmem:[%s3 + $0xc0] sm:$0xf] %vm1006, %v990
  %1056 = vst.msk [vmem:[%s3 + $0xc4] sm:$0xf] %vm1006, %v991
  %1057 = vst.msk [vmem:[%s3 + $0xc8] sm:$0xf] %vm1006, %v992
  %1058 = vst.msk [vmem:[%s3 + $0xcc] sm:$0xf] %vm1006, %v993
  %1059 = vst.msk [vmem:[%s3 + $0xd0] sm:$0xf] %vm1006, %v994
  %1060 = vst.msk [vmem:[%s3 + $0xd4] sm:$0xf] %vm1006, %v995
  %1061 = vst.msk [vmem:[%s3 + $0xd8] sm:$0xf] %vm1006, %v996
  %1062 = vst.msk [vmem:[%s3 + $0xdc] sm:$0xf] %vm1006, %v997
  %1063 = vst.msk [vmem:[%s3 + $0xe0] sm:$0xf] %vm1006, %v998
  %1064 = vst.msk [vmem:[%s3 + $0xe4] sm:$0xf] %vm1006, %v999
  %1065 = vst.msk [vmem:[%s3 + $0xe8] sm:$0xf] %vm1006, %v1000
  %1066 = vst.msk [vmem:[%s3 + $0xec] sm:$0xf] %vm1006, %v1001
  %1067 = vst.msk [vmem:[%s3 + $0xf0] sm:$0xf] %vm1006, %v1002
  %1068 = vst.msk [vmem:[%s3 + $0xf4] sm:$0xf] %vm1006, %v1003
  %1069 = vst.msk [vmem:[%s3 + $0xf8] sm:$0xf] %vm1006, %v1004
  %1070 = vst.msk [vmem:[%s3 + $0xfc] sm:$0xf] %vm1006, %v1005
  // Predicated region
  $region14: #{deeplab_forward.16} parent=0 // pred_check
    _
  $region15: #{deeplab_forward.16} parent=0 // pred_check_branch
    %1072 = sbr.rel (0) target = $region17
  $region16: #{deeplab_forward.16} parent=0 // pred_region
    _
  $region17: #{deeplab_forward.16} parent=0 // pred_fallthru
    _
  // Predicated region
  $region18: #{deeplab_forward.16} parent=0 // pred_check
    _
  $region19: #{deeplab_forward.16} parent=0 // pred_check_branch
    %1074 = sbr.rel (0) target = $region21
  $region20: #{deeplab_forward.16} parent=0 // pred_region
    _
  $region21: #{deeplab_forward.16} parent=0 // pred_fallthru
    _

// kernel: deeplab_forward.17
$region0: #{deeplab_forward.17}
  #allocation0 [shape = 'u32[]', space=smem, size = 0x4, offset = 0x4, fixed_abs, tag = 'smem constant byte address 0x4 - core index']
  #allocation1 [shape = 'u32[72,128]{1,0:T(1,128)}', space=vmem, size = 0x9000, scoped, tag = 'internal scratch']
  %s0 = inlined_call_operand.vmem [shape: bf16[128,144], index: 0, kind: input, shape index: {}]
  %s1 = inlined_call_operand.vmem [shape: bf16[144,32], index: 1, kind: input, shape index: {}]
  %s2 = inlined_call_operand.vmem [shape: f32[1,32], index: 2, kind: input, shape index: {}]
  %s3 = inlined_call_operand.vmem [shape: bf16[128,32], index: 3, kind: output, shape index: {}]
  %s4 = sld [smem:[#allocation0]]
  $region22: #{deeplab_forward.17} parent=0
    _
  %s6 = ssub.s32 1, %s4
  %s7 = scalar_select 0, %s6, %s4
  // Predicated region
  $region2: #{deeplab_forward.17} parent=0 // pred_check
    _
  $region3: #{deeplab_forward.17} parent=0 // pred_check_branch
    %9 = sbr.rel (0) target = $region5
  $region4: #{deeplab_forward.17} parent=0 // pred_region
    _
  $region5: #{deeplab_forward.17} parent=0 // pred_fallthru
    _
  // Predicated region
  $region6: #{deeplab_forward.17} parent=0 // pred_check
    _
  $region7: #{deeplab_forward.17} parent=0 // pred_check_branch
    %11 = sbr.rel (0) target = $region9
  $region8: #{deeplab_forward.17} parent=0 // pred_region
    _
  $region9: #{deeplab_forward.17} parent=0 // pred_fallthru
    _
  // Predicated region
  $region10: #{deeplab_forward.17} parent=0 // pred_check
    _
  $region11: #{deeplab_forward.17} parent=0 // pred_check_branch
    %13 = sbr.rel (0) target = $region13
  $region12: #{deeplab_forward.17} parent=0 // pred_region
    _
  $region13: #{deeplab_forward.17} parent=0 // pred_fallthru
    _
  %v15 = vld [vmem:[%s0] sm:$0xff]
  %v16 = vld [vmem:[%s0 + $0x8] sm:$0xff]
  %v17 = vld [vmem:[%s0 + $0x10] sm:$0xff]
  %v18 = vld [vmem:[%s0 + $0x18] sm:$0xff]
  %v19 = vld [vmem:[%s0 + $0x20] sm:$0xff]
  %v20 = vld [vmem:[%s0 + $0x28] sm:$0xff]
  %v21 = vld [vmem:[%s0 + $0x30] sm:$0xff]
  %v22 = vld [vmem:[%s0 + $0x38] sm:$0xff]
  %v23 = vld [vmem:[%s0 + $0x40] sm:$0xff]
  %v24 = vld [vmem:[%s0 + $0x48] sm:$0xff]
  %v25 = vld [vmem:[%s0 + $0x50] sm:$0xff]
  %v26 = vld [vmem:[%s0 + $0x58] sm:$0xff]
  %v27 = vld [vmem:[%s0 + $0x60] sm:$0xff]
  %v28 = vld [vmem:[%s0 + $0x68] sm:$0xff]
  %v29 = vld [vmem:[%s0 + $0x70] sm:$0xff]
  %v30 = vld [vmem:[%s0 + $0x78] sm:$0xff]
  %v31 = vld [vmem:[%s1] sm:$0xf]
  %v32 = vld [vmem:[%s1 + $0x4] sm:$0xf]
  %v33 = vld [vmem:[%s1 + $0x8] sm:$0xf]
  %v34 = vld [vmem:[%s1 + $0xc] sm:$0xf]
  %v35 = vld [vmem:[%s1 + $0x10] sm:$0xf]
  %v36 = vld [vmem:[%s1 + $0x14] sm:$0xf]
  %v37 = vld [vmem:[%s1 + $0x18] sm:$0xf]
  %v38 = vld [vmem:[%s1 + $0x1c] sm:$0xf]
  %v39 = vld [vmem:[%s1 + $0x20] sm:$0xf]
  %v40 = vld [vmem:[%s1 + $0x24] sm:$0xf]
  %v41 = vld [vmem:[%s1 + $0x28] sm:$0xf]
  %v42 = vld [vmem:[%s1 + $0x2c] sm:$0xf]
  %v43 = vld [vmem:[%s1 + $0x30] sm:$0xf]
  %v44 = vld [vmem:[%s1 + $0x34] sm:$0xf]
  %v45 = vld [vmem:[%s1 + $0x38] sm:$0xf]
  %v46 = vld [vmem:[%s1 + $0x3c] sm:$0xf]
  %v47 = vld [vmem:[%s1 + $0x40] sm:$0xf]
  %v48 = vld [vmem:[%s1 + $0x44] sm:$0xf]
  %v49 = vld [vmem:[%s2] sm:$0x1]
  %v51 = vperm.slane %v49, 0
  %v69 = vunpack.c.l.b16 %v15
  %v70 = vunpack.c.h.b16 %v15
  %v71 = vunpack.c.l.b16 %v16
  %v72 = vunpack.c.h.b16 %v16
  %v73 = vunpack.c.l.b16 %v17
  %v74 = vunpack.c.h.b16 %v17
  %v75 = vunpack.c.l.b16 %v18
  %v76 = vunpack.c.h.b16 %v18
  %v77 = vunpack.c.l.b16 %v19
  %v78 = vunpack.c.h.b16 %v19
  %v79 = vunpack.c.l.b16 %v20
  %v80 = vunpack.c.h.b16 %v20
  %v81 = vunpack.c.l.b16 %v21
  %v82 = vunpack.c.h.b16 %v21
  %v83 = vunpack.c.l.b16 %v22
  %v84 = vunpack.c.h.b16 %v22
  %v85 = vunpack.c.l.b16 %v23
  %v86 = vunpack.c.h.b16 %v23
  %v87 = vunpack.c.l.b16 %v24
  %v88 = vunpack.c.h.b16 %v24
  %v89 = vunpack.c.l.b16 %v25
  %v90 = vunpack.c.h.b16 %v25
  %v91 = vunpack.c.l.b16 %v26
  %v92 = vunpack.c.h.b16 %v26
  %v93 = vunpack.c.l.b16 %v27
  %v94 = vunpack.c.h.b16 %v27
  %v95 = vunpack.c.l.b16 %v28
  %v96 = vunpack.c.h.b16 %v28
  %v97 = vunpack.c.l.b16 %v29
  %v98 = vunpack.c.h.b16 %v29
  %v99 = vunpack.c.l.b16 %v30
  %v100 = vunpack.c.h.b16 %v30
  %v101 = vpack.c.b16 %v71, %v69
  %v102 = vpack.c.b16 %v72, %v70
  %v103 = vpack.c.b16 %v75, %v73
  %v104 = vpack.c.b16 %v76, %v74
  %v105 = vpack.c.b16 %v79, %v77
  %v106 = vpack.c.b16 %v80, %v78
  %v107 = vpack.c.b16 %v83, %v81
  %v108 = vpack.c.b16 %v84, %v82
  %v109 = vpack.c.b16 %v87, %v85
  %v110 = vpack.c.b16 %v88, %v86
  %v111 = vpack.c.b16 %v91, %v89
  %v112 = vpack.c.b16 %v92, %v90
  %v113 = vpack.c.b16 %v95, %v93
  %v114 = vpack.c.b16 %v96, %v94
  %v115 = vpack.c.b16 %v99, %v97
  %v116 = vpack.c.b16 %v100, %v98
  %v143 = vunpack.c.l.b16 %v31
  %v144 = vunpack.c.l.b16 %v32
  %v145 = vunpack.c.l.b16 %v33
  %v146 = vunpack.c.l.b16 %v34
  %v147 = vunpack.c.l.b16 %v35
  %v148 = vunpack.c.l.b16 %v36
  %v149 = vunpack.c.l.b16 %v37
  %v150 = vunpack.c.l.b16 %v38
  %v151 = vunpack.c.l.b16 %v39
  %v152 = vunpack.c.l.b16 %v40
  %v153 = vunpack.c.l.b16 %v41
  %v154 = vunpack.c.l.b16 %v42
  %v155 = vunpack.c.l.b16 %v43
  %v156 = vunpack.c.l.b16 %v44
  %v157 = vunpack.c.l.b16 %v45
  %v158 = vunpack.c.l.b16 %v46
  %v159 = vunpack.c.l.b16 %v47
  %v160 = vunpack.c.l.b16 %v48
  %v161 = vpack.c.b16 %v144, %v143
  %v162 = vpack.c.b16 %v146, %v145
  %v163 = vpack.c.b16 %v148, %v147
  %v164 = vpack.c.b16 %v150, %v149
  %v165 = vpack.c.b16 %v152, %v151
  %v166 = vpack.c.b16 %v154, %v153
  %v167 = vpack.c.b16 %v156, %v155
  %v168 = vpack.c.b16 %v158, %v157
  %v169 = vpack.c.b16 %v160, %v159
  %vm179 = vcmask 130048
  %v181 = vsel %vm179, %v102, 0
  %v184 = vsel %vm179, %v104, 0
  %v187 = vsel %vm179, %v106, 0
  %v190 = vsel %vm179, %v108, 0
  %v193 = vsel %vm179, %v110, 0
  %v196 = vsel %vm179, %v112, 0
  %v199 = vsel %vm179, %v114, 0
  %v202 = vsel %vm179, %v116, 0
  %204 = vmatpush.bf16.msra.mxu0 %v168
  %205 = vmatpush.bf16.msra.mxu0 %v167
  %206 = vmatpush.bf16.msra.mxu0 %v166
  %207 = vmatpush.bf16.msra.mxu0 %v165
  %208 = vmatpush.bf16.msra.mxu0 %v164
  %209 = vmatpush.bf16.msra.mxu0 %v163
  %210 = vmatpush.bf16.msra.mxu0 %v162
  %211 = vmatpush.bf16.msra.mxu0 %v161
  %212 = vmatmul.bf16.gmra.mxu0 %v101
  %v213 = vpop.f32.mrf.mxu0
  %v214 = vadd.f32 %v51, %v213
  %v215 = vpop.f32.mrf.mxu0
  %v216 = vadd.f32 %v51, %v215
  %217 = vmatmul.bf16.gmra.mxu0 %v103
  %v218 = vpop.f32.mrf.mxu0
  %v219 = vadd.f32 %v51, %v218
  %v220 = vpop.f32.mrf.mxu0
  %v221 = vadd.f32 %v51, %v220
  %222 = vmatmul.bf16.gmra.mxu0 %v105
  %v223 = vpop.f32.mrf.mxu0
  %v224 = vadd.f32 %v51, %v223
  %v225 = vpop.f32.mrf.mxu0
  %v226 = vadd.f32 %v51, %v225
  %227 = vmatmul.bf16.gmra.mxu0 %v107
  %v228 = vpop.f32.mrf.mxu0
  %v229 = vadd.f32 %v51, %v228
  %v230 = vpop.f32.mrf.mxu0
  %v231 = vadd.f32 %v51, %v230
  %232 = vmatmul.bf16.gmra.mxu0 %v109
  %v233 = vpop.f32.mrf.mxu0
  %v234 = vadd.f32 %v51, %v233
  %v235 = vpop.f32.mrf.mxu0
  %v236 = vadd.f32 %v51, %v235
  %237 = vmatmul.bf16.gmra.mxu0 %v111
  %v238 = vpop.f32.mrf.mxu0
  %v239 = vadd.f32 %v51, %v238
  %v240 = vpop.f32.mrf.mxu0
  %v241 = vadd.f32 %v51, %v240
  %242 = vmatmul.bf16.gmra.mxu0 %v113
  %v243 = vpop.f32.mrf.mxu0
  %v244 = vadd.f32 %v51, %v243
  %v245 = vpop.f32.mrf.mxu0
  %v246 = vadd.f32 %v51, %v245
  %247 = vmatmul.bf16.gmra.mxu0 %v115
  %v248 = vpop.f32.mrf.mxu0
  %v249 = vadd.f32 %v51, %v248
  %v250 = vpop.f32.mrf.mxu0
  %v251 = vadd.f32 %v51, %v250
  %252 = vdwg.mxu0
  %253 = vmatpush.bf16.msra.mxu0 0
  %254 = vmatpush.bf16.msra.mxu0 0
  %255 = vmatpush.bf16.msra.mxu0 0
  %256 = vmatpush.bf16.msra.mxu0 0
  %257 = vmatpush.bf16.msra.mxu0 0
  %258 = vmatpush.bf16.msra.mxu0 0
  %259 = vmatpush.bf16.msra.mxu0 0
  %260 = vmatpush.bf16.msra.mxu0 %v169
  %261 = vmatmul.bf16.gmra.mxu0 %v181
  %v262 = vpop.f32.mrf.mxu0
  %v263 = vadd.f32 %v214, %v262
  %v264 = vpop.f32.mrf.mxu0
  %v265 = vadd.f32 %v216, %v264
  %266 = vmatmul.bf16.gmra.mxu0 %v184
  %v267 = vpop.f32.mrf.mxu0
  %v268 = vadd.f32 %v219, %v267
  %v269 = vpop.f32.mrf.mxu0
  %v270 = vadd.f32 %v221, %v269
  %271 = vmatmul.bf16.gmra.mxu0 %v187
  %v272 = vpop.f32.mrf.mxu0
  %v273 = vadd.f32 %v224, %v272
  %v274 = vpop.f32.mrf.mxu0
  %v275 = vadd.f32 %v226, %v274
  %276 = vmatmul.bf16.gmra.mxu0 %v190
  %v277 = vpop.f32.mrf.mxu0
  %v278 = vadd.f32 %v229, %v277
  %v279 = vpop.f32.mrf.mxu0
  %v280 = vadd.f32 %v231, %v279
  %281 = vmatmul.bf16.gmra.mxu0 %v193
  %v282 = vpop.f32.mrf.mxu0
  %v283 = vadd.f32 %v234, %v282
  %v284 = vpop.f32.mrf.mxu0
  %v285 = vadd.f32 %v236, %v284
  %286 = vmatmul.bf16.gmra.mxu0 %v196
  %v287 = vpop.f32.mrf.mxu0
  %v288 = vadd.f32 %v239, %v287
  %v289 = vpop.f32.mrf.mxu0
  %v290 = vadd.f32 %v241, %v289
  %291 = vmatmul.bf16.gmra.mxu0 %v199
  %v292 = vpop.f32.mrf.mxu0
  %v293 = vadd.f32 %v244, %v292
  %v294 = vpop.f32.mrf.mxu0
  %v295 = vadd.f32 %v246, %v294
  %296 = vmatmul.bf16.gmra.mxu0 %v202
  %v297 = vpop.f32.mrf.mxu0
  %v298 = vadd.f32 %v249, %v297
  %v299 = vpop.f32.mrf.mxu0
  %v300 = vadd.f32 %v251, %v299
  %301 = vdwg.mxu0
  %v302 = vmax.f32 %v263, 0.0
  %v303 = vmax.f32 %v265, 0.0
  %v304 = vmax.f32 %v268, 0.0
  %v305 = vmax.f32 %v270, 0.0
  %v306 = vmax.f32 %v273, 0.0
  %v307 = vmax.f32 %v275, 0.0
  %v308 = vmax.f32 %v278, 0.0
  %v309 = vmax.f32 %v280, 0.0
  %v310 = vmax.f32 %v283, 0.0
  %v311 = vmax.f32 %v285, 0.0
  %v312 = vmax.f32 %v288, 0.0
  %v313 = vmax.f32 %v290, 0.0
  %v314 = vmax.f32 %v293, 0.0
  %v315 = vmax.f32 %v295, 0.0
  %v316 = vmax.f32 %v298, 0.0
  %v317 = vmax.f32 %v300, 0.0
  %v318 = vpack.c.bf16 %v302, %v302
  %v319 = vpack.c.bf16 %v303, %v303
  %v320 = vpack.c.bf16 %v304, %v304
  %v321 = vpack.c.bf16 %v305, %v305
  %v322 = vpack.c.bf16 %v306, %v306
  %v323 = vpack.c.bf16 %v307, %v307
  %v324 = vpack.c.bf16 %v308, %v308
  %v325 = vpack.c.bf16 %v309, %v309
  %v326 = vpack.c.bf16 %v310, %v310
  %v327 = vpack.c.bf16 %v311, %v311
  %v328 = vpack.c.bf16 %v312, %v312
  %v329 = vpack.c.bf16 %v313, %v313
  %v330 = vpack.c.bf16 %v314, %v314
  %v331 = vpack.c.bf16 %v315, %v315
  %v332 = vpack.c.bf16 %v316, %v316
  %v333 = vpack.c.bf16 %v317, %v317
  %vm334 = vcmask 257024
  %335 = vst.msk [vmem:[%s3] sm:$0xf] %vm334, %v318
  %336 = vst.msk [vmem:[%s3 + $0x4] sm:$0xf] %vm334, %v319
  %337 = vst.msk [vmem:[%s3 + $0x8] sm:$0xf] %vm334, %v320
  %338 = vst.msk [vmem:[%s3 + $0xc] sm:$0xf] %vm334, %v321
  %339 = vst.msk [vmem:[%s3 + $0x10] sm:$0xf] %vm334, %v322
  %340 = vst.msk [vmem:[%s3 + $0x14] sm:$0xf] %vm334, %v323
  %341 = vst.msk [vmem:[%s3 + $0x18] sm:$0xf] %vm334, %v324
  %342 = vst.msk [vmem:[%s3 + $0x1c] sm:$0xf] %vm334, %v325
  %343 = vst.msk [vmem:[%s3 + $0x20] sm:$0xf] %vm334, %v326
  %344 = vst.msk [vmem:[%s3 + $0x24] sm:$0xf] %vm334, %v327
  %345 = vst.msk [vmem:[%s3 + $0x28] sm:$0xf] %vm334, %v328
  %346 = vst.msk [vmem:[%s3 + $0x2c] sm:$0xf] %vm334, %v329
  %347 = vst.msk [vmem:[%s3 + $0x30] sm:$0xf] %vm334, %v330
  %348 = vst.msk [vmem:[%s3 + $0x34] sm:$0xf] %vm334, %v331
  %349 = vst.msk [vmem:[%s3 + $0x38] sm:$0xf] %vm334, %v332
  %350 = vst.msk [vmem:[%s3 + $0x3c] sm:$0xf] %vm334, %v333
  // Predicated region
  $region14: #{deeplab_forward.17} parent=0 // pred_check
    _
  $region15: #{deeplab_forward.17} parent=0 // pred_check_branch
    %352 = sbr.rel (0) target = $region17
  $region16: #{deeplab_forward.17} parent=0 // pred_region
    _
  $region17: #{deeplab_forward.17} parent=0 // pred_fallthru
    _
  // Predicated region
  $region18: #{deeplab_forward.17} parent=0 // pred_check
    _
  $region19: #{deeplab_forward.17} parent=0 // pred_check_branch
    %354 = sbr.rel (0) target = $region21
  $region20: #{deeplab_forward.17} parent=0 // pred_region
    _
  $region21: #{deeplab_forward.17} parent=0 // pred_fallthru
    _

// kernel: deeplab_forward.18
$region0: #{deeplab_forward.18}
  #allocation0 [shape = 'u32[]', space=smem, size = 0x4, offset = 0x4, fixed_abs, tag = 'smem constant byte address 0x4 - core index']
  #allocation1 [shape = 'u32[72,128]{1,0:T(1,128)}', space=vmem, size = 0x9000, scoped, tag = 'internal scratch']
  %s0 = inlined_call_operand.vmem [shape: bf16[32,288], index: 0, kind: input, shape index: {}]
  %s1 = inlined_call_operand.vmem [shape: bf16[288,48], index: 1, kind: input, shape index: {}]
  %s2 = inlined_call_operand.vmem [shape: f32[1,48], index: 2, kind: input, shape index: {}]
  %s3 = inlined_call_operand.vmem [shape: bf16[32,48], index: 3, kind: output, shape index: {}]
  %s4 = sld [smem:[#allocation0]]
  $region22: #{deeplab_forward.18} parent=0
    _
  %s6 = ssub.s32 1, %s4
  %s7 = scalar_select 0, %s6, %s4
  // Predicated region
  $region2: #{deeplab_forward.18} parent=0 // pred_check
    _
  $region3: #{deeplab_forward.18} parent=0 // pred_check_branch
    %9 = sbr.rel (0) target = $region5
  $region4: #{deeplab_forward.18} parent=0 // pred_region
    _
  $region5: #{deeplab_forward.18} parent=0 // pred_fallthru
    _
  // Predicated region
  $region6: #{deeplab_forward.18} parent=0 // pred_check
    _
  $region7: #{deeplab_forward.18} parent=0 // pred_check_branch
    %11 = sbr.rel (0) target = $region9
  $region8: #{deeplab_forward.18} parent=0 // pred_region
    _
  $region9: #{deeplab_forward.18} parent=0 // pred_fallthru
    _
  // Predicated region
  $region10: #{deeplab_forward.18} parent=0 // pred_check
    _
  $region11: #{deeplab_forward.18} parent=0 // pred_check_branch
    %13 = sbr.rel (0) target = $region13
  $region12: #{deeplab_forward.18} parent=0 // pred_region
    _
  $region13: #{deeplab_forward.18} parent=0 // pred_fallthru
    _
  %v15 = vld [vmem:[%s0] sm:$0xff]
  %v16 = vld [vmem:[%s0 + $0x8] sm:$0xf]
  %v17 = vld [vmem:[%s0 + $0xc] sm:$0xff]
  %v18 = vld [vmem:[%s0 + $0x14] sm:$0xf]
  %v19 = vld [vmem:[%s0 + $0x18] sm:$0xff]
  %v20 = vld [vmem:[%s0 + $0x20] sm:$0xf]
  %v21 = vld [vmem:[%s0 + $0x24] sm:$0xff]
  %v22 = vld [vmem:[%s0 + $0x2c] sm:$0xf]
  %v23 = vld [vmem:[%s1] sm:$0xf]
  %v24 = vld [vmem:[%s1 + $0x4] sm:$0xf]
  %v25 = vld [vmem:[%s1 + $0x8] sm:$0xf]
  %v26 = vld [vmem:[%s1 + $0xc] sm:$0xf]
  %v27 = vld [vmem:[%s1 + $0x10] sm:$0xf]
  %v28 = vld [vmem:[%s1 + $0x14] sm:$0xf]
  %v29 = vld [vmem:[%s1 + $0x18] sm:$0xf]
  %v30 = vld [vmem:[%s1 + $0x1c] sm:$0xf]
  %v31 = vld [vmem:[%s1 + $0x20] sm:$0xf]
  %v32 = vld [vmem:[%s1 + $0x24] sm:$0xf]
  %v33 = vld [vmem:[%s1 + $0x28] sm:$0xf]
  %v34 = vld [vmem:[%s1 + $0x2c] sm:$0xf]
  %v35 = vld [vmem:[%s1 + $0x30] sm:$0xf]
  %v36 = vld [vmem:[%s1 + $0x34] sm:$0xf]
  %v37 = vld [vmem:[%s1 + $0x38] sm:$0xf]
  %v38 = vld [vmem:[%s1 + $0x3c] sm:$0xf]
  %v39 = vld [vmem:[%s1 + $0x40] sm:$0xf]
  %v40 = vld [vmem:[%s1 + $0x44] sm:$0xf]
  %v41 = vld [vmem:[%s1 + $0x48] sm:$0xf]
  %v42 = vld [vmem:[%s1 + $0x4c] sm:$0xf]
  %v43 = vld [vmem:[%s1 + $0x50] sm:$0xf]
  %v44 = vld [vmem:[%s1 + $0x54] sm:$0xf]
  %v45 = vld [vmem:[%s1 + $0x58] sm:$0xf]
  %v46 = vld [vmem:[%s1 + $0x5c] sm:$0xf]
  %v47 = vld [vmem:[%s1 + $0x60] sm:$0xf]
  %v48 = vld [vmem:[%s1 + $0x64] sm:$0xf]
  %v49 = vld [vmem:[%s1 + $0x68] sm:$0xf]
  %v50 = vld [vmem:[%s1 + $0x6c] sm:$0xf]
  %v51 = vld [vmem:[%s1 + $0x70] sm:$0xf]
  %v52 = vld [vmem:[%s1 + $0x74] sm:$0xf]
  %v53 = vld [vmem:[%s1 + $0x78] sm:$0xf]
  %v54 = vld [vmem:[%s1 + $0x7c] sm:$0xf]
  %v55 = vld [vmem:[%s1 + $0x80] sm:$0xf]
  %v56 = vld [vmem:[%s1 + $0x84] sm:$0xf]
  %v57 = vld [vmem:[%s1 + $0x88] sm:$0xf]
  %v58 = vld [vmem:[%s1 + $0x8c] sm:$0xf]
  %v59 = vld [vmem:[%s2] sm:$0x1]
  %v61 = vperm.slane %v59, 0
  %v71 = vunpack.c.l.b16 %v15
  %v72 = vunpack.c.h.b16 %v15
  %v73 = vunpack.c.l.b16 %v16
  %v74 = vunpack.c.l.b16 %v17
  %v75 = vunpack.c.h.b16 %v17
  %v76 = vunpack.c.l.b16 %v18
  %v77 = vunpack.c.l.b16 %v19
  %v78 = vunpack.c.h.b16 %v19
  %v79 = vunpack.c.l.b16 %v20
  %v80 = vunpack.c.l.b16 %v21
  %v81 = vunpack.c.h.b16 %v21
  %v82 = vunpack.c.l.b16 %v22
  %v83 = vpack.c.b16 %v74, %v71
  %v84 = vpack.c.b16 %v75, %v72
  %v85 = vpack.c.b16 %v76, %v73
  %v86 = vpack.c.b16 %v80, %v77
  %v87 = vpack.c.b16 %v81, %v78
  %v88 = vpack.c.b16 %v82, %v79
  %v129 = vunpack.c.l.b16 %v23
  %v130 = vunpack.c.l.b16 %v24
  %v131 = vunpack.c.l.b16 %v25
  %v132 = vunpack.c.l.b16 %v26
  %v133 = vunpack.c.l.b16 %v27
  %v134 = vunpack.c.l.b16 %v28
  %v135 = vunpack.c.l.b16 %v29
  %v136 = vunpack.c.l.b16 %v30
  %v137 = vunpack.c.l.b16 %v31
  %v138 = vunpack.c.l.b16 %v32
  %v139 = vunpack.c.l.b16 %v33
  %v140 = vunpack.c.l.b16 %v34
  %v141 = vunpack.c.l.b16 %v35
  %v142 = vunpack.c.l.b16 %v36
  %v143 = vunpack.c.l.b16 %v37
  %v144 = vunpack.c.l.b16 %v38
  %v145 = vunpack.c.l.b16 %v39
  %v146 = vunpack.c.l.b16 %v40
  %v147 = vunpack.c.l.b16 %v41
  %v148 = vunpack.c.l.b16 %v42
  %v149 = vunpack.c.l.b16 %v43
  %v150 = vunpack.c.l.b16 %v44
  %v151 = vunpack.c.l.b16 %v45
  %v152 = vunpack.c.l.b16 %v46
  %v153 = vunpack.c.l.b16 %v47
  %v154 = vunpack.c.l.b16 %v48
  %v155 = vunpack.c.l.b16 %v49
  %v156 = vunpack.c.l.b16 %v50
  %v157 = vunpack.c.l.b16 %v51
  %v158 = vunpack.c.l.b16 %v52
  %v159 = vunpack.c.l.b16 %v53
  %v160 = vunpack.c.l.b16 %v54
  %v161 = vunpack.c.l.b16 %v55
  %v162 = vunpack.c.l.b16 %v56
  %v163 = vunpack.c.l.b16 %v57
  %v164 = vunpack.c.l.b16 %v58
  %v165 = vpack.c.b16 %v130, %v129
  %v166 = vpack.c.b16 %v132, %v131
  %v167 = vpack.c.b16 %v134, %v133
  %v168 = vpack.c.b16 %v136, %v135
  %v169 = vpack.c.b16 %v138, %v137
  %v170 = vpack.c.b16 %v140, %v139
  %v171 = vpack.c.b16 %v142, %v141
  %v172 = vpack.c.b16 %v144, %v143
  %v173 = vpack.c.b16 %v146, %v145
  %v174 = vpack.c.b16 %v148, %v147
  %v175 = vpack.c.b16 %v150, %v149
  %v176 = vpack.c.b16 %v152, %v151
  %v177 = vpack.c.b16 %v154, %v153
  %v178 = vpack.c.b16 %v156, %v155
  %v179 = vpack.c.b16 %v158, %v157
  %v180 = vpack.c.b16 %v160, %v159
  %v181 = vpack.c.b16 %v162, %v161
  %v182 = vpack.c.b16 %v164, %v163
  %vm201 = vcmask 261120
  %v203 = vsel %vm201, %v85, 0
  %v206 = vsel %vm201, %v88, 0
  %208 = vmatpush.bf16.msra.mxu0 %v172
  %209 = vmatpush.bf16.msra.mxu0 %v171
  %210 = vmatpush.bf16.msra.mxu0 %v170
  %211 = vmatpush.bf16.msra.mxu0 %v169
  %212 = vmatpush.bf16.msra.mxu0 %v168
  %213 = vmatpush.bf16.msra.mxu0 %v167
  %214 = vmatpush.bf16.msra.mxu0 %v166
  %215 = vmatpush.bf16.msra.mxu0 %v165
  %216 = vmatmul.bf16.gmra.mxu0 %v83
  %v217 = vpop.f32.mrf.mxu0
  %v218 = vadd.f32 %v61, %v217
  %v219 = vpop.f32.mrf.mxu0
  %v220 = vadd.f32 %v61, %v219
  %221 = vmatmul.bf16.gmra.mxu0 %v86
  %v222 = vpop.f32.mrf.mxu0
  %v223 = vadd.f32 %v61, %v222
  %v224 = vpop.f32.mrf.mxu0
  %v225 = vadd.f32 %v61, %v224
  %226 = vdwg.mxu0
  %227 = vmatpush.bf16.msra.mxu0 %v180
  %228 = vmatpush.bf16.msra.mxu0 %v179
  %229 = vmatpush.bf16.msra.mxu0 %v178
  %230 = vmatpush.bf16.msra.mxu0 %v177
  %231 = vmatpush.bf16.msra.mxu0 %v176
  %232 = vmatpush.bf16.msra.mxu0 %v175
  %233 = vmatpush.bf16.msra.mxu0 %v174
  %234 = vmatpush.bf16.msra.mxu0 %v173
  %235 = vmatmul.bf16.gmra.mxu0 %v84
  %v236 = vpop.f32.mrf.mxu0
  %v237 = vadd.f32 %v218, %v236
  %v238 = vpop.f32.mrf.mxu0
  %v239 = vadd.f32 %v220, %v238
  %240 = vmatmul.bf16.gmra.mxu0 %v87
  %v241 = vpop.f32.mrf.mxu0
  %v242 = vadd.f32 %v223, %v241
  %v243 = vpop.f32.mrf.mxu0
  %v244 = vadd.f32 %v225, %v243
  %245 = vdwg.mxu0
  %246 = vmatpush.bf16.msra.mxu0 0
  %247 = vmatpush.bf16.msra.mxu0 0
  %248 = vmatpush.bf16.msra.mxu0 0
  %249 = vmatpush.bf16.msra.mxu0 0
  %250 = vmatpush.bf16.msra.mxu0 0
  %251 = vmatpush.bf16.msra.mxu0 0
  %252 = vmatpush.bf16.msra.mxu0 %v182
  %253 = vmatpush.bf16.msra.mxu0 %v181
  %254 = vmatmul.bf16.gmra.mxu0 %v203
  %v255 = vpop.f32.mrf.mxu0
  %v256 = vadd.f32 %v237, %v255
  %v257 = vpop.f32.mrf.mxu0
  %v258 = vadd.f32 %v239, %v257
  %259 = vmatmul.bf16.gmra.mxu0 %v206
  %v260 = vpop.f32.mrf.mxu0
  %v261 = vadd.f32 %v242, %v260
  %v262 = vpop.f32.mrf.mxu0
  %v263 = vadd.f32 %v244, %v262
  %264 = vdwg.mxu0
  %v265 = vmax.f32 %v256, 0.0
  %v266 = vmax.f32 %v258, 0.0
  %v267 = vmax.f32 %v261, 0.0
  %v268 = vmax.f32 %v263, 0.0
  %v269 = vpack.c.bf16 %v265, %v265
  %v270 = vpack.c.bf16 %v266, %v266
  %v271 = vpack.c.bf16 %v267, %v267
  %v272 = vpack.c.bf16 %v268, %v268
  %vm273 = vcmask 388096
  %274 = vst.msk [vmem:[%s3] sm:$0xf] %vm273, %v269
  %275 = vst.msk [vmem:[%s3 + $0x4] sm:$0xf] %vm273, %v270
  %276 = vst.msk [vmem:[%s3 + $0x8] sm:$0xf] %vm273, %v271
  %277 = vst.msk [vmem:[%s3 + $0xc] sm:$0xf] %vm273, %v272
  // Predicated region
  $region14: #{deeplab_forward.18} parent=0 // pred_check
    _
  $region15: #{deeplab_forward.18} parent=0 // pred_check_branch
    %279 = sbr.rel (0) target = $region17
  $region16: #{deeplab_forward.18} parent=0 // pred_region
    _
  $region17: #{deeplab_forward.18} parent=0 // pred_fallthru
    _
  // Predicated region
  $region18: #{deeplab_forward.18} parent=0 // pred_check
    _
  $region19: #{deeplab_forward.18} parent=0 // pred_check_branch
    %281 = sbr.rel (0) target = $region21
  $region20: #{deeplab_forward.18} parent=0 // pred_region
    _
  $region21: #{deeplab_forward.18} parent=0 // pred_fallthru
    _

// kernel: deeplab_forward.23
$region0: #{deeplab_forward.23}
  #allocation0 [shape = 'u32[]', space=smem, size = 0x4, offset = 0x4, fixed_abs, tag = 'smem constant byte address 0x4 - core index']
  #allocation1 [shape = 'u32[72,128]{1,0:T(1,128)}', space=vmem, size = 0x9000, scoped, tag = 'internal scratch']
  %s0 = inlined_call_operand.vmem [shape: f32[2,64], index: 0, kind: input, shape index: {}]
  %s1 = inlined_call_operand.vmem [shape: f32[64,32], index: 1, kind: input, shape index: {}]
  %s2 = inlined_call_operand.vmem [shape: f32[1,32], index: 2, kind: input, shape index: {}]
  %s3 = inlined_call_operand.vmem [shape: f32[2,32], index: 3, kind: output, shape index: {}]
  %s4 = sld [smem:[#allocation0]]
  $region22: #{deeplab_forward.23} parent=0
    _
  %s6 = ssub.s32 1, %s4
  %s7 = scalar_select 0, %s6, %s4
  // Predicated region
  $region2: #{deeplab_forward.23} parent=0 // pred_check
    _
  $region3: #{deeplab_forward.23} parent=0 // pred_check_branch
    %9 = sbr.rel (0) target = $region5
  $region4: #{deeplab_forward.23} parent=0 // pred_region
    _
  $region5: #{deeplab_forward.23} parent=0 // pred_fallthru
    _
  // Predicated region
  $region6: #{deeplab_forward.23} parent=0 // pred_check
    _
  $region7: #{deeplab_forward.23} parent=0 // pred_check_branch
    %11 = sbr.rel (0) target = $region9
  $region8: #{deeplab_forward.23} parent=0 // pred_region
    _
  $region9: #{deeplab_forward.23} parent=0 // pred_fallthru
    _
  // Predicated region
  $region10: #{deeplab_forward.23} parent=0 // pred_check
    _
  $region11: #{deeplab_forward.23} parent=0 // pred_check_branch
    %13 = sbr.rel (0) target = $region13
  $region12: #{deeplab_forward.23} parent=0 // pred_region
    _
  $region13: #{deeplab_forward.23} parent=0 // pred_fallthru
    _
  %v14 = vld [vmem:[%s0] sm:$0x3]
  %v15 = vld [vmem:[%s1] sm:$0xff]
  %v16 = vld [vmem:[%s1 + $0x8] sm:$0xff]
  %v17 = vld [vmem:[%s1 + $0x10] sm:$0xff]
  %v18 = vld [vmem:[%s1 + $0x18] sm:$0xff]
  %v19 = vld [vmem:[%s1 + $0x20] sm:$0xff]
  %v20 = vld [vmem:[%s1 + $0x28] sm:$0xff]
  %v21 = vld [vmem:[%s1 + $0x30] sm:$0xff]
  %v22 = vld [vmem:[%s1 + $0x38] sm:$0xff]
  %v23 = vld [vmem:[%s2] sm:$0x1]
  %v25 = vperm.slane %v23, 0
  %vm27 = vcmask 523264
  %v29 = vsel %vm27, %v14, 0
  %31 = vmatpush.msra.mxu0 0.0
  %32 = vmatpush.msra.mxu0 0.0
  %33 = vmatpush.msra.mxu0 0.0
  %34 = vmatpush.msra.mxu0 0.0
  %35 = vmatpush.msra.mxu0 0.0
  %36 = vmatpush.msra.mxu0 0.0
  %37 = vmatpush.msra.mxu0 0.0
  %38 = vmatpush.msra.mxu0 0.0
  %39 = vmatpush.msra.mxu0 %v22
  %40 = vmatpush.msra.mxu0 %v21
  %41 = vmatpush.msra.mxu0 %v20
  %42 = vmatpush.msra.mxu0 %v19
  %43 = vmatpush.msra.mxu0 %v18
  %44 = vmatpush.msra.mxu0 %v17
  %45 = vmatpush.msra.mxu0 %v16
  %46 = vmatpush.msra.mxu0 %v15
  %47 = vmatmul.f32.gmra.mxu0 %v29
  %v48 = vpop.f32.mrf.mxu0
  %v49 = vadd.f32 %v25, %v48
  %50 = vdwg.mxu0
  %v51 = vmax.f32 %v49, 0.0
  %vm52 = vcmask 254976
  %53 = vst.msk [vmem:[%s3] sm:$0x3] %vm52, %v51
  // Predicated region
  $region14: #{deeplab_forward.23} parent=0 // pred_check
    _
  $region15: #{deeplab_forward.23} parent=0 // pred_check_branch
    %55 = sbr.rel (0) target = $region17
  $region16: #{deeplab_forward.23} parent=0 // pred_region
    _
  $region17: #{deeplab_forward.23} parent=0 // pred_fallthru
    _
  // Predicated region
  $region18: #{deeplab_forward.23} parent=0 // pred_check
    _
  $region19: #{deeplab_forward.23} parent=0 // pred_check_branch
    %57 = sbr.rel (0) target = $region21
  $region20: #{deeplab_forward.23} parent=0 // pred_region
    _
  $region21: #{deeplab_forward.23} parent=0 // pred_fallthru
    _

// kernel: deeplab_forward.24
$region0: #{deeplab_forward.24}
  #allocation0 [shape = 'u32[]', space=smem, size = 0x4, offset = 0x4, fixed_abs, tag = 'smem constant byte address 0x4 - core index']
  #allocation1 [shape = 'u32[72,128]{1,0:T(1,128)}', space=vmem, size = 0x9000, scoped, tag = 'internal scratch']
  %s0 = inlined_call_operand.vmem [shape: f32[2,32], index: 0, kind: input, shape index: {}]
  %s1 = inlined_call_operand.vmem [shape: f32[32,32], index: 1, kind: input, shape index: {}]
  %s2 = inlined_call_operand.vmem [shape: f32[1,32], index: 2, kind: input, shape index: {}]
  %s3 = inlined_call_operand.vmem [shape: f32[2,32], index: 3, kind: output, shape index: {}]
  %s4 = sld [smem:[#allocation0]]
  $region22: #{deeplab_forward.24} parent=0
    _
  %s6 = ssub.s32 1, %s4
  %s7 = scalar_select 0, %s6, %s4
  // Predicated region
  $region2: #{deeplab_forward.24} parent=0 // pred_check
    _
  $region3: #{deeplab_forward.24} parent=0 // pred_check_branch
    %9 = sbr.rel (0) target = $region5
  $region4: #{deeplab_forward.24} parent=0 // pred_region
    _
  $region5: #{deeplab_forward.24} parent=0 // pred_fallthru
    _
  // Predicated region
  $region6: #{deeplab_forward.24} parent=0 // pred_check
    _
  $region7: #{deeplab_forward.24} parent=0 // pred_check_branch
    %11 = sbr.rel (0) target = $region9
  $region8: #{deeplab_forward.24} parent=0 // pred_region
    _
  $region9: #{deeplab_forward.24} parent=0 // pred_fallthru
    _
  // Predicated region
  $region10: #{deeplab_forward.24} parent=0 // pred_check
    _
  $region11: #{deeplab_forward.24} parent=0 // pred_check_branch
    %13 = sbr.rel (0) target = $region13
  $region12: #{deeplab_forward.24} parent=0 // pred_region
    _
  $region13: #{deeplab_forward.24} parent=0 // pred_fallthru
    _
  %v14 = vld [vmem:[%s0] sm:$0x3]
  %v15 = vld [vmem:[%s1] sm:$0xff]
  %v16 = vld [vmem:[%s1 + $0x8] sm:$0xff]
  %v17 = vld [vmem:[%s1 + $0x10] sm:$0xff]
  %v18 = vld [vmem:[%s1 + $0x18] sm:$0xff]
  %v19 = vld [vmem:[%s2] sm:$0x1]
  %v21 = vperm.slane %v19, 0
  %vm23 = vcmask 261120
  %v25 = vsel %vm23, %v14, 0
  %27 = vmatpush.msra.mxu0 0.0
  %28 = vmatpush.msra.mxu0 0.0
  %29 = vmatpush.msra.mxu0 0.0
  %30 = vmatpush.msra.mxu0 0.0
  %31 = vmatpush.msra.mxu0 0.0
  %32 = vmatpush.msra.mxu0 0.0
  %33 = vmatpush.msra.mxu0 0.0
  %34 = vmatpush.msra.mxu0 0.0
  %35 = vmatpush.msra.mxu0 0.0
  %36 = vmatpush.msra.mxu0 0.0
  %37 = vmatpush.msra.mxu0 0.0
  %38 = vmatpush.msra.mxu0 0.0
  %39 = vmatpush.msra.mxu0 %v18
  %40 = vmatpush.msra.mxu0 %v17
  %41 = vmatpush.msra.mxu0 %v16
  %42 = vmatpush.msra.mxu0 %v15
  %43 = vmatmul.f32.gmra.mxu0 %v25
  %v44 = vpop.f32.mrf.mxu0
  %v45 = vadd.f32 %v21, %v44
  %46 = vdwg.mxu0
  %vm47 = vcmask 254976
  %48 = vst.msk [vmem:[%s3] sm:$0x3] %vm47, %v45
  // Predicated region
  $region14: #{deeplab_forward.24} parent=0 // pred_check
    _
  $region15: #{deeplab_forward.24} parent=0 // pred_check_branch
    %50 = sbr.rel (0) target = $region17
  $region16: #{deeplab_forward.24} parent=0 // pred_region
    _
  $region17: #{deeplab_forward.24} parent=0 // pred_fallthru
    _
  // Predicated region
  $region18: #{deeplab_forward.24} parent=0 // pred_check
    _
  $region19: #{deeplab_forward.24} parent=0 // pred_check_branch
    %52 = sbr.rel (0) target = $region21
  $region20: #{deeplab_forward.24} parent=0 // pred_region
    _
  $region21: #{deeplab_forward.24} parent=0 // pred_fallthru
    _

// kernel: deeplab_forward.19
$region0: #{deeplab_forward.19}
  #allocation0 [shape = 'u32[]', space=smem, size = 0x4, offset = 0x4, fixed_abs, tag = 'smem constant byte address 0x4 - core index']
  #allocation1 [shape = 'u32[72,128]{1,0:T(1,128)}', space=vmem, size = 0x9000, scoped, tag = 'internal scratch']
  %s0 = inlined_call_operand.vmem [shape: bf16[8,432], index: 0, kind: input, shape index: {}]
  %s1 = inlined_call_operand.vmem [shape: bf16[432,64], index: 1, kind: input, shape index: {}]
  %s2 = inlined_call_operand.vmem [shape: f32[1,64], index: 2, kind: input, shape index: {}]
  %s3 = inlined_call_operand.vmem [shape: bf16[8,64], index: 3, kind: output, shape index: {}]
  %s4 = sld [smem:[#allocation0]]
  $region22: #{deeplab_forward.19} parent=0
    _
  %s6 = ssub.s32 1, %s4
  %s7 = scalar_select 0, %s6, %s4
  // Predicated region
  $region2: #{deeplab_forward.19} parent=0 // pred_check
    _
  $region3: #{deeplab_forward.19} parent=0 // pred_check_branch
    %9 = sbr.rel (0) target = $region5
  $region4: #{deeplab_forward.19} parent=0 // pred_region
    _
  $region5: #{deeplab_forward.19} parent=0 // pred_fallthru
    _
  // Predicated region
  $region6: #{deeplab_forward.19} parent=0 // pred_check
    _
  $region7: #{deeplab_forward.19} parent=0 // pred_check_branch
    %11 = sbr.rel (0) target = $region9
  $region8: #{deeplab_forward.19} parent=0 // pred_region
    _
  $region9: #{deeplab_forward.19} parent=0 // pred_fallthru
    _
  // Predicated region
  $region10: #{deeplab_forward.19} parent=0 // pred_check
    _
  $region11: #{deeplab_forward.19} parent=0 // pred_check_branch
    %13 = sbr.rel (0) target = $region13
  $region12: #{deeplab_forward.19} parent=0 // pred_region
    _
  $region13: #{deeplab_forward.19} parent=0 // pred_fallthru
    _
  %v15 = vld [vmem:[%s0] sm:$0xff]
  %v16 = vld [vmem:[%s0 + $0x8] sm:$0xff]
  %v17 = vld [vmem:[%s1] sm:$0xf]
  %v18 = vld [vmem:[%s1 + $0x4] sm:$0xf]
  %v19 = vld [vmem:[%s1 + $0x8] sm:$0xf]
  %v20 = vld [vmem:[%s1 + $0xc] sm:$0xf]
  %v21 = vld [vmem:[%s1 + $0x10] sm:$0xf]
  %v22 = vld [vmem:[%s1 + $0x14] sm:$0xf]
  %v23 = vld [vmem:[%s1 + $0x18] sm:$0xf]
  %v24 = vld [vmem:[%s1 + $0x1c] sm:$0xf]
  %v25 = vld [vmem:[%s1 + $0x20] sm:$0xf]
  %v26 = vld [vmem:[%s1 + $0x24] sm:$0xf]
  %v27 = vld [vmem:[%s1 + $0x28] sm:$0xf]
  %v28 = vld [vmem:[%s1 + $0x2c] sm:$0xf]
  %v29 = vld [vmem:[%s1 + $0x30] sm:$0xf]
  %v30 = vld [vmem:[%s1 + $0x34] sm:$0xf]
  %v31 = vld [vmem:[%s1 + $0x38] sm:$0xf]
  %v32 = vld [vmem:[%s1 + $0x3c] sm:$0xf]
  %v33 = vld [vmem:[%s1 + $0x40] sm:$0xf]
  %v34 = vld [vmem:[%s1 + $0x44] sm:$0xf]
  %v35 = vld [vmem:[%s1 + $0x48] sm:$0xf]
  %v36 = vld [vmem:[%s1 + $0x4c] sm:$0xf]
  %v37 = vld [vmem:[%s1 + $0x50] sm:$0xf]
  %v38 = vld [vmem:[%s1 + $0x54] sm:$0xf]
  %v39 = vld [vmem:[%s1 + $0x58] sm:$0xf]
  %v40 = vld [vmem:[%s1 + $0x5c] sm:$0xf]
  %v41 = vld [vmem:[%s1 + $0x60] sm:$0xf]
  %v42 = vld [vmem:[%s1 + $0x64] sm:$0xf]
  %v43 = vld [vmem:[%s1 + $0x68] sm:$0xf]
  %v44 = vld [vmem:[%s1 + $0x6c] sm:$0xf]
  %v45 = vld [vmem:[%s1 + $0x70] sm:$0xf]
  %v46 = vld [vmem:[%s1 + $0x74] sm:$0xf]
  %v47 = vld [vmem:[%s1 + $0x78] sm:$0xf]
  %v48 = vld [vmem:[%s1 + $0x7c] sm:$0xf]
  %v49 = vld [vmem:[%s1 + $0x80] sm:$0xf]
  %v50 = vld [vmem:[%s1 + $0x84] sm:$0xf]
  %v51 = vld [vmem:[%s1 + $0x88] sm:$0xf]
  %v52 = vld [vmem:[%s1 + $0x8c] sm:$0xf]
  %v53 = vld [vmem:[%s1 + $0x90] sm:$0xf]
  %v54 = vld [vmem:[%s1 + $0x94] sm:$0xf]
  %v55 = vld [vmem:[%s1 + $0x98] sm:$0xf]
  %v56 = vld [vmem:[%s1 + $0x9c] sm:$0xf]
  %v57 = vld [vmem:[%s1 + $0xa0] sm:$0xf]
  %v58 = vld [vmem:[%s1 + $0xa4] sm:$0xf]
  %v59 = vld [vmem:[%s1 + $0xa8] sm:$0xf]
  %v60 = vld [vmem:[%s1 + $0xac] sm:$0xf]
  %v61 = vld [vmem:[%s1 + $0xb0] sm:$0xf]
  %v62 = vld [vmem:[%s1 + $0xb4] sm:$0xf]
  %v63 = vld [vmem:[%s1 + $0xb8] sm:$0xf]
  %v64 = vld [vmem:[%s1 + $0xbc] sm:$0xf]
  %v65 = vld [vmem:[%s1 + $0xc0] sm:$0xf]
  %v66 = vld [vmem:[%s1 + $0xc4] sm:$0xf]
  %v67 = vld [vmem:[%s1 + $0xc8] sm:$0xf]
  %v68 = vld [vmem:[%s1 + $0xcc] sm:$0xf]
  %v69 = vld [vmem:[%s1 + $0xd0] sm:$0xf]
  %v70 = vld [vmem:[%s1 + $0xd4] sm:$0xf]
  %v71 = vld [vmem:[%s2] sm:$0x1]
  %v73 = vperm.slane %v71, 0
  %v77 = vunpack.c.l.b16 %v15
  %v78 = vunpack.c.h.b16 %v15
  %v79 = vunpack.c.l.b16 %v16
  %v80 = vunpack.c.h.b16 %v16
  %v81 = vpack.c.b16 %v77, %v77
  %v82 = vpack.c.b16 %v78, %v78
  %v83 = vpack.c.b16 %v79, %v79
  %v84 = vpack.c.b16 %v80, %v80
  %v142 = vunpack.c.l.b16 %v17
  %v143 = vunpack.c.l.b16 %v18
  %v144 = vunpack.c.l.b16 %v19
  %v145 = vunpack.c.l.b16 %v20
  %v146 = vunpack.c.l.b16 %v21
  %v147 = vunpack.c.l.b16 %v22
  %v148 = vunpack.c.l.b16 %v23
  %v149 = vunpack.c.l.b16 %v24
  %v150 = vunpack.c.l.b16 %v25
  %v151 = vunpack.c.l.b16 %v26
  %v152 = vunpack.c.l.b16 %v27
  %v153 = vunpack.c.l.b16 %v28
  %v154 = vunpack.c.l.b16 %v29
  %v155 = vunpack.c.l.b16 %v30
  %v156 = vunpack.c.l.b16 %v31
  %v157 = vunpack.c.l.b16 %v32
  %v158 = vunpack.c.l.b16 %v33
  %v159 = vunpack.c.l.b16 %v34
  %v160 = vunpack.c.l.b16 %v35
  %v161 = vunpack.c.l.b16 %v36
  %v162 = vunpack.c.l.b16 %v37
  %v163 = vunpack.c.l.b16 %v38
  %v164 = vunpack.c.l.b16 %v39
  %v165 = vunpack.c.l.b16 %v40
  %v166 = vunpack.c.l.b16 %v41
  %v167 = vunpack.c.l.b16 %v42
  %v168 = vunpack.c.l.b16 %v43
  %v169 = vunpack.c.l.b16 %v44
  %v170 = vunpack.c.l.b16 %v45
  %v171 = vunpack.c.l.b16 %v46
  %v172 = vunpack.c.l.b16 %v47
  %v173 = vunpack.c.l.b16 %v48
  %v174 = vunpack.c.l.b16 %v49
  %v175 = vunpack.c.l.b16 %v50
  %v176 = vunpack.c.l.b16 %v51
  %v177 = vunpack.c.l.b16 %v52
  %v178 = vunpack.c.l.b16 %v53
  %v179 = vunpack.c.l.b16 %v54
  %v180 = vunpack.c.l.b16 %v55
  %v181 = vunpack.c.l.b16 %v56
  %v182 = vunpack.c.l.b16 %v57
  %v183 = vunpack.c.l.b16 %v58
  %v184 = vunpack.c.l.b16 %v59
  %v185 = vunpack.c.l.b16 %v60
  %v186 = vunpack.c.l.b16 %v61
  %v187 = vunpack.c.l.b16 %v62
  %v188 = vunpack.c.l.b16 %v63
  %v189 = vunpack.c.l.b16 %v64
  %v190 = vunpack.c.l.b16 %v65
  %v191 = vunpack.c.l.b16 %v66
  %v192 = vunpack.c.l.b16 %v67
  %v193 = vunpack.c.l.b16 %v68
  %v194 = vunpack.c.l.b16 %v69
  %v195 = vunpack.c.l.b16 %v70
  %v196 = vpack.c.b16 %v143, %v142
  %v197 = vpack.c.b16 %v145, %v144
  %v198 = vpack.c.b16 %v147, %v146
  %v199 = vpack.c.b16 %v149, %v148
  %v200 = vpack.c.b16 %v151, %v150
  %v201 = vpack.c.b16 %v153, %v152
  %v202 = vpack.c.b16 %v155, %v154
  %v203 = vpack.c.b16 %v157, %v156
  %v204 = vpack.c.b16 %v159, %v158
  %v205 = vpack.c.b16 %v161, %v160
  %v206 = vpack.c.b16 %v163, %v162
  %v207 = vpack.c.b16 %v165, %v164
  %v208 = vpack.c.b16 %v167, %v166
  %v209 = vpack.c.b16 %v169, %v168
  %v210 = vpack.c.b16 %v171, %v170
  %v211 = vpack.c.b16 %v173, %v172
  %v212 = vpack.c.b16 %v175, %v174
  %v213 = vpack.c.b16 %v177, %v176
  %v214 = vpack.c.b16 %v179, %v178
  %v215 = vpack.c.b16 %v181, %v180
  %v216 = vpack.c.b16 %v183, %v182
  %v217 = vpack.c.b16 %v185, %v184
  %v218 = vpack.c.b16 %v187, %v186
  %v219 = vpack.c.b16 %v189, %v188
  %v220 = vpack.c.b16 %v191, %v190
  %v221 = vpack.c.b16 %v193, %v192
  %v222 = vpack.c.b16 %v195, %v194
  %vm250 = vcmask 392192
  %v252 = vsel %vm250, %v84, 0
  %254 = vmatpush.bf16.msra.mxu0 %v203
  %255 = vmatpush.bf16.msra.mxu0 %v202
  %256 = vmatpush.bf16.msra.mxu0 %v201
  %257 = vmatpush.bf16.msra.mxu0 %v200
  %258 = vmatpush.bf16.msra.mxu0 %v199
  %259 = vmatpush.bf16.msra.mxu0 %v198
  %260 = vmatpush.bf16.msra.mxu0 %v197
  %261 = vmatpush.bf16.msra.mxu0 %v196
  %262 = vmatmul.bf16.gmra.mxu0 %v81
  %v263 = vpop.f32.mrf.mxu0
  %v264 = vadd.f32 %v73, %v263
  %v265 = vpop.f32.mrf.mxu0
  %266 = vdwg.mxu0
  %267 = vmatpush.bf16.msra.mxu0 %v211
  %268 = vmatpush.bf16.msra.mxu0 %v210
  %269 = vmatpush.bf16.msra.mxu0 %v209
  %270 = vmatpush.bf16.msra.mxu0 %v208
  %271 = vmatpush.bf16.msra.mxu0 %v207
  %272 = vmatpush.bf16.msra.mxu0 %v206
  %273 = vmatpush.bf16.msra.mxu0 %v205
  %274 = vmatpush.bf16.msra.mxu0 %v204
  %275 = vmatmul.bf16.gmra.mxu0 %v82
  %v276 = vpop.f32.mrf.mxu0
  %v277 = vadd.f32 %v264, %v276
  %v278 = vpop.f32.mrf.mxu0
  %279 = vdwg.mxu0
  %280 = vmatpush.bf16.msra.mxu0 %v219
  %281 = vmatpush.bf16.msra.mxu0 %v218
  %282 = vmatpush.bf16.msra.mxu0 %v217
  %283 = vmatpush.bf16.msra.mxu0 %v216
  %284 = vmatpush.bf16.msra.mxu0 %v215
  %285 = vmatpush.bf16.msra.mxu0 %v214
  %286 = vmatpush.bf16.msra.mxu0 %v213
  %287 = vmatpush.bf16.msra.mxu0 %v212
  %288 = vmatmul.bf16.gmra.mxu0 %v83
  %v289 = vpop.f32.mrf.mxu0
  %v290 = vadd.f32 %v277, %v289
  %v291 = vpop.f32.mrf.mxu0
  %292 = vdwg.mxu0
  %293 = vmatpush.bf16.msra.mxu0 0
  %294 = vmatpush.bf16.msra.mxu0 0
  %295 = vmatpush.bf16.msra.mxu0 0
  %296 = vmatpush.bf16.msra.mxu0 0
  %297 = vmatpush.bf16.msra.mxu0 0
  %298 = vmatpush.bf16.msra.mxu0 %v222
  %299 = vmatpush.bf16.msra.mxu0 %v221
  %300 = vmatpush.bf16.msra.mxu0 %v220
  %301 = vmatmul.bf16.gmra.mxu0 %v252
  %v302 = vpop.f32.mrf.mxu0
  %v303 = vadd.f32 %v290, %v302
  %v304 = vpop.f32.mrf.mxu0
  %305 = vdwg.mxu0
  %v306 = vmax.f32 %v303, 0.0
  %v307 = vpack.c.bf16 %v306, %v306
  %vm308 = vcmask 519168
  %309 = vst.msk [vmem:[%s3] sm:$0xf] %vm308, %v307
  // Predicated region
  $region14: #{deeplab_forward.19} parent=0 // pred_check
    _
  $region15: #{deeplab_forward.19} parent=0 // pred_check_branch
    %311 = sbr.rel (0) target = $region17
  $region16: #{deeplab_forward.19} parent=0 // pred_region
    _
  $region17: #{deeplab_forward.19} parent=0 // pred_fallthru
    _
  // Predicated region
  $region18: #{deeplab_forward.19} parent=0 // pred_check
    _
  $region19: #{deeplab_forward.19} parent=0 // pred_check_branch
    %313 = sbr.rel (0) target = $region21
  $region20: #{deeplab_forward.19} parent=0 // pred_region
    _
  $region21: #{deeplab_forward.19} parent=0 // pred_fallthru
    _

// kernel: deeplab_forward.22
$region0: #{deeplab_forward.22}
  #allocation0 [shape = 'u32[]', space=smem, size = 0x4, offset = 0x4, fixed_abs, tag = 'smem constant byte address 0x4 - core index']
  #allocation1 [shape = 'u32[72,128]{1,0:T(1,128)}', space=vmem, size = 0x9000, scoped, tag = 'internal scratch']
  %s0 = inlined_call_operand.vmem [shape: bf16[8,576], index: 0, kind: input, shape index: {}]
  %s1 = inlined_call_operand.vmem [shape: bf16[576,32], index: 1, kind: input, shape index: {}]
  %s2 = inlined_call_operand.vmem [shape: f32[1,32], index: 2, kind: input, shape index: {}]
  %s3 = inlined_call_operand.vmem [shape: bf16[8,32], index: 3, kind: output, shape index: {}]
  %s4 = sld [smem:[#allocation0]]
  $region22: #{deeplab_forward.22} parent=0
    _
  %s6 = ssub.s32 1, %s4
  %s7 = scalar_select 0, %s6, %s4
  // Predicated region
  $region2: #{deeplab_forward.22} parent=0 // pred_check
    _
  $region3: #{deeplab_forward.22} parent=0 // pred_check_branch
    %9 = sbr.rel (0) target = $region5
  $region4: #{deeplab_forward.22} parent=0 // pred_region
    _
  $region5: #{deeplab_forward.22} parent=0 // pred_fallthru
    _
  // Predicated region
  $region6: #{deeplab_forward.22} parent=0 // pred_check
    _
  $region7: #{deeplab_forward.22} parent=0 // pred_check_branch
    %11 = sbr.rel (0) target = $region9
  $region8: #{deeplab_forward.22} parent=0 // pred_region
    _
  $region9: #{deeplab_forward.22} parent=0 // pred_fallthru
    _
  // Predicated region
  $region10: #{deeplab_forward.22} parent=0 // pred_check
    _
  $region11: #{deeplab_forward.22} parent=0 // pred_check_branch
    %13 = sbr.rel (0) target = $region13
  $region12: #{deeplab_forward.22} parent=0 // pred_region
    _
  $region13: #{deeplab_forward.22} parent=0 // pred_fallthru
    _
  %v15 = vld [vmem:[%s0] sm:$0xff]
  %v16 = vld [vmem:[%s0 + $0x8] sm:$0xff]
  %v17 = vld [vmem:[%s0 + $0x10] sm:$0xf]
  %v18 = vld [vmem:[%s1] sm:$0xf]
  %v19 = vld [vmem:[%s1 + $0x4] sm:$0xf]
  %v20 = vld [vmem:[%s1 + $0x8] sm:$0xf]
  %v21 = vld [vmem:[%s1 + $0xc] sm:$0xf]
  %v22 = vld [vmem:[%s1 + $0x10] sm:$0xf]
  %v23 = vld [vmem:[%s1 + $0x14] sm:$0xf]
  %v24 = vld [vmem:[%s1 + $0x18] sm:$0xf]
  %v25 = vld [vmem:[%s1 + $0x1c] sm:$0xf]
  %v26 = vld [vmem:[%s1 + $0x20] sm:$0xf]
  %v27 = vld [vmem:[%s1 + $0x24] sm:$0xf]
  %v28 = vld [vmem:[%s1 + $0x28] sm:$0xf]
  %v29 = vld [vmem:[%s1 + $0x2c] sm:$0xf]
  %v30 = vld [vmem:[%s1 + $0x30] sm:$0xf]
  %v31 = vld [vmem:[%s1 + $0x34] sm:$0xf]
  %v32 = vld [vmem:[%s1 + $0x38] sm:$0xf]
  %v33 = vld [vmem:[%s1 + $0x3c] sm:$0xf]
  %v34 = vld [vmem:[%s1 + $0x40] sm:$0xf]
  %v35 = vld [vmem:[%s1 + $0x44] sm:$0xf]
  %v36 = vld [vmem:[%s1 + $0x48] sm:$0xf]
  %v37 = vld [vmem:[%s1 + $0x4c] sm:$0xf]
  %v38 = vld [vmem:[%s1 + $0x50] sm:$0xf]
  %v39 = vld [vmem:[%s1 + $0x54] sm:$0xf]
  %v40 = vld [vmem:[%s1 + $0x58] sm:$0xf]
  %v41 = vld [vmem:[%s1 + $0x5c] sm:$0xf]
  %v42 = vld [vmem:[%s1 + $0x60] sm:$0xf]
  %v43 = vld [vmem:[%s1 + $0x64] sm:$0xf]
  %v44 = vld [vmem:[%s1 + $0x68] sm:$0xf]
  %v45 = vld [vmem:[%s1 + $0x6c] sm:$0xf]
  %v46 = vld [vmem:[%s1 + $0x70] sm:$0xf]
  %v47 = vld [vmem:[%s1 + $0x74] sm:$0xf]
  %v48 = vld [vmem:[%s1 + $0x78] sm:$0xf]
  %v49 = vld [vmem:[%s1 + $0x7c] sm:$0xf]
  %v50 = vld [vmem:[%s1 + $0x80] sm:$0xf]
  %v51 = vld [vmem:[%s1 + $0x84] sm:$0xf]
  %v52 = vld [vmem:[%s1 + $0x88] sm:$0xf]
  %v53 = vld [vmem:[%s1 + $0x8c] sm:$0xf]
  %v54 = vld [vmem:[%s1 + $0x90] sm:$0xf]
  %v55 = vld [vmem:[%s1 + $0x94] sm:$0xf]
  %v56 = vld [vmem:[%s1 + $0x98] sm:$0xf]
  %v57 = vld [vmem:[%s1 + $0x9c] sm:$0xf]
  %v58 = vld [vmem:[%s1 + $0xa0] sm:$0xf]
  %v59 = vld [vmem:[%s1 + $0xa4] sm:$0xf]
  %v60 = vld [vmem:[%s1 + $0xa8] sm:$0xf]
  %v61 = vld [vmem:[%s1 + $0xac] sm:$0xf]
  %v62 = vld [vmem:[%s1 + $0xb0] sm:$0xf]
  %v63 = vld [vmem:[%s1 + $0xb4] sm:$0xf]
  %v64 = vld [vmem:[%s1 + $0xb8] sm:$0xf]
  %v65 = vld [vmem:[%s1 + $0xbc] sm:$0xf]
  %v66 = vld [vmem:[%s1 + $0xc0] sm:$0xf]
  %v67 = vld [vmem:[%s1 + $0xc4] sm:$0xf]
  %v68 = vld [vmem:[%s1 + $0xc8] sm:$0xf]
  %v69 = vld [vmem:[%s1 + $0xcc] sm:$0xf]
  %v70 = vld [vmem:[%s1 + $0xd0] sm:$0xf]
  %v71 = vld [vmem:[%s1 + $0xd4] sm:$0xf]
  %v72 = vld [vmem:[%s1 + $0xd8] sm:$0xf]
  %v73 = vld [vmem:[%s1 + $0xdc] sm:$0xf]
  %v74 = vld [vmem:[%s1 + $0xe0] sm:$0xf]
  %v75 = vld [vmem:[%s1 + $0xe4] sm:$0xf]
  %v76 = vld [vmem:[%s1 + $0xe8] sm:$0xf]
  %v77 = vld [vmem:[%s1 + $0xec] sm:$0xf]
  %v78 = vld [vmem:[%s1 + $0xf0] sm:$0xf]
  %v79 = vld [vmem:[%s1 + $0xf4] sm:$0xf]
  %v80 = vld [vmem:[%s1 + $0xf8] sm:$0xf]
  %v81 = vld [vmem:[%s1 + $0xfc] sm:$0xf]
  %v82 = vld [vmem:[%s1 + $0x100] sm:$0xf]
  %v83 = vld [vmem:[%s1 + $0x104] sm:$0xf]
  %v84 = vld [vmem:[%s1 + $0x108] sm:$0xf]
  %v85 = vld [vmem:[%s1 + $0x10c] sm:$0xf]
  %v86 = vld [vmem:[%s1 + $0x110] sm:$0xf]
  %v87 = vld [vmem:[%s1 + $0x114] sm:$0xf]
  %v88 = vld [vmem:[%s1 + $0x118] sm:$0xf]
  %v89 = vld [vmem:[%s1 + $0x11c] sm:$0xf]
  %v90 = vld [vmem:[%s2] sm:$0x1]
  %v92 = vperm.slane %v90, 0
  %v97 = vunpack.c.l.b16 %v15
  %v98 = vunpack.c.h.b16 %v15
  %v99 = vunpack.c.l.b16 %v16
  %v100 = vunpack.c.h.b16 %v16
  %v101 = vunpack.c.l.b16 %v17
  %v102 = vpack.c.b16 %v97, %v97
  %v103 = vpack.c.b16 %v98, %v98
  %v104 = vpack.c.b16 %v99, %v99
  %v105 = vpack.c.b16 %v100, %v100
  %v106 = vpack.c.b16 %v101, %v101
  %v183 = vunpack.c.l.b16 %v18
  %v184 = vunpack.c.l.b16 %v19
  %v185 = vunpack.c.l.b16 %v20
  %v186 = vunpack.c.l.b16 %v21
  %v187 = vunpack.c.l.b16 %v22
  %v188 = vunpack.c.l.b16 %v23
  %v189 = vunpack.c.l.b16 %v24
  %v190 = vunpack.c.l.b16 %v25
  %v191 = vunpack.c.l.b16 %v26
  %v192 = vunpack.c.l.b16 %v27
  %v193 = vunpack.c.l.b16 %v28
  %v194 = vunpack.c.l.b16 %v29
  %v195 = vunpack.c.l.b16 %v30
  %v196 = vunpack.c.l.b16 %v31
  %v197 = vunpack.c.l.b16 %v32
  %v198 = vunpack.c.l.b16 %v33
  %v199 = vunpack.c.l.b16 %v34
  %v200 = vunpack.c.l.b16 %v35
  %v201 = vunpack.c.l.b16 %v36
  %v202 = vunpack.c.l.b16 %v37
  %v203 = vunpack.c.l.b16 %v38
  %v204 = vunpack.c.l.b16 %v39
  %v205 = vunpack.c.l.b16 %v40
  %v206 = vunpack.c.l.b16 %v41
  %v207 = vunpack.c.l.b16 %v42
  %v208 = vunpack.c.l.b16 %v43
  %v209 = vunpack.c.l.b16 %v44
  %v210 = vunpack.c.l.b16 %v45
  %v211 = vunpack.c.l.b16 %v46
  %v212 = vunpack.c.l.b16 %v47
  %v213 = vunpack.c.l.b16 %v48
  %v214 = vunpack.c.l.b16 %v49
  %v215 = vunpack.c.l.b16 %v50
  %v216 = vunpack.c.l.b16 %v51
  %v217 = vunpack.c.l.b16 %v52
  %v218 = vunpack.c.l.b16 %v53
  %v219 = vunpack.c.l.b16 %v54
  %v220 = vunpack.c.l.b16 %v55
  %v221 = vunpack.c.l.b16 %v56
  %v222 = vunpack.c.l.b16 %v57
  %v223 = vunpack.c.l.b16 %v58
  %v224 = vunpack.c.l.b16 %v59
  %v225 = vunpack.c.l.b16 %v60
  %v226 = vunpack.c.l.b16 %v61
  %v227 = vunpack.c.l.b16 %v62
  %v228 = vunpack.c.l.b16 %v63
  %v229 = vunpack.c.l.b16 %v64
  %v230 = vunpack.c.l.b16 %v65
  %v231 = vunpack.c.l.b16 %v66
  %v232 = vunpack.c.l.b16 %v67
  %v233 = vunpack.c.l.b16 %v68
  %v234 = vunpack.c.l.b16 %v69
  %v235 = vunpack.c.l.b16 %v70
  %v236 = vunpack.c.l.b16 %v71
  %v237 = vunpack.c.l.b16 %v72
  %v238 = vunpack.c.l.b16 %v73
  %v239 = vunpack.c.l.b16 %v74
  %v240 = vunpack.c.l.b16 %v75
  %v241 = vunpack.c.l.b16 %v76
  %v242 = vunpack.c.l.b16 %v77
  %v243 = vunpack.c.l.b16 %v78
  %v244 = vunpack.c.l.b16 %v79
  %v245 = vunpack.c.l.b16 %v80
  %v246 = vunpack.c.l.b16 %v81
  %v247 = vunpack.c.l.b16 %v82
  %v248 = vunpack.c.l.b16 %v83
  %v249 = vunpack.c.l.b16 %v84
  %v250 = vunpack.c.l.b16 %v85
  %v251 = vunpack.c.l.b16 %v86
  %v252 = vunpack.c.l.b16 %v87
  %v253 = vunpack.c.l.b16 %v88
  %v254 = vunpack.c.l.b16 %v89
  %v255 = vpack.c.b16 %v184, %v183
  %v256 = vpack.c.b16 %v186, %v185
  %v257 = vpack.c.b16 %v188, %v187
  %v258 = vpack.c.b16 %v190, %v189
  %v259 = vpack.c.b16 %v192, %v191
  %v260 = vpack.c.b16 %v194, %v193
  %v261 = vpack.c.b16 %v196, %v195
  %v262 = vpack.c.b16 %v198, %v197
  %v263 = vpack.c.b16 %v200, %v199
  %v264 = vpack.c.b16 %v202, %v201
  %v265 = vpack.c.b16 %v204, %v203
  %v266 = vpack.c.b16 %v206, %v205
  %v267 = vpack.c.b16 %v208, %v207
  %v268 = vpack.c.b16 %v210, %v209
  %v269 = vpack.c.b16 %v212, %v211
  %v270 = vpack.c.b16 %v214, %v213
  %v271 = vpack.c.b16 %v216, %v215
  %v272 = vpack.c.b16 %v218, %v217
  %v273 = vpack.c.b16 %v220, %v219
  %v274 = vpack.c.b16 %v222, %v221
  %v275 = vpack.c.b16 %v224, %v223
  %v276 = vpack.c.b16 %v226, %v225
  %v277 = vpack.c.b16 %v228, %v227
  %v278 = vpack.c.b16 %v230, %v229
  %v279 = vpack.c.b16 %v232, %v231
  %v280 = vpack.c.b16 %v234, %v233
  %v281 = vpack.c.b16 %v236, %v235
  %v282 = vpack.c.b16 %v238, %v237
  %v283 = vpack.c.b16 %v240, %v239
  %v284 = vpack.c.b16 %v242, %v241
  %v285 = vpack.c.b16 %v244, %v243
  %v286 = vpack.c.b16 %v246, %v245
  %v287 = vpack.c.b16 %v248, %v247
  %v288 = vpack.c.b16 %v250, %v249
  %v289 = vpack.c.b16 %v252, %v251
  %v290 = vpack.c.b16 %v254, %v253
  %vm327 = vcmask 523264
  %v329 = vsel %vm327, %v106, 0
  %331 = vmatpush.bf16.msra.mxu0 %v262
  %332 = vmatpush.bf16.msra.mxu0 %v261
  %333 = vmatpush.bf16.msra.mxu0 %v260
  %334 = vmatpush.bf16.msra.mxu0 %v259
  %335 = vmatpush.bf16.msra.mxu0 %v258
  %336 = vmatpush.bf16.msra.mxu0 %v257
  %337 = vmatpush.bf16.msra.mxu0 %v256
  %338 = vmatpush.bf16.msra.mxu0 %v255
  %339 = vmatmul.bf16.gmra.mxu0 %v102
  %v340 = vpop.f32.mrf.mxu0
  %v341 = vadd.f32 %v92, %v340
  %v342 = vpop.f32.mrf.mxu0
  %343 = vdwg.mxu0
  %344 = vmatpush.bf16.msra.mxu0 %v270
  %345 = vmatpush.bf16.msra.mxu0 %v269
  %346 = vmatpush.bf16.msra.mxu0 %v268
  %347 = vmatpush.bf16.msra.mxu0 %v267
  %348 = vmatpush.bf16.msra.mxu0 %v266
  %349 = vmatpush.bf16.msra.mxu0 %v265
  %350 = vmatpush.bf16.msra.mxu0 %v264
  %351 = vmatpush.bf16.msra.mxu0 %v263
  %352 = vmatmul.bf16.gmra.mxu0 %v103
  %v353 = vpop.f32.mrf.mxu0
  %v354 = vadd.f32 %v341, %v353
  %v355 = vpop.f32.mrf.mxu0
  %356 = vdwg.mxu0
  %357 = vmatpush.bf16.msra.mxu0 %v278
  %358 = vmatpush.bf16.msra.mxu0 %v277
  %359 = vmatpush.bf16.msra.mxu0 %v276
  %360 = vmatpush.bf16.msra.mxu0 %v275
  %361 = vmatpush.bf16.msra.mxu0 %v274
  %362 = vmatpush.bf16.msra.mxu0 %v273
  %363 = vmatpush.bf16.msra.mxu0 %v272
  %364 = vmatpush.bf16.msra.mxu0 %v271
  %365 = vmatmul.bf16.gmra.mxu0 %v104
  %v366 = vpop.f32.mrf.mxu0
  %v367 = vadd.f32 %v354, %v366
  %v368 = vpop.f32.mrf.mxu0
  %369 = vdwg.mxu0
  %370 = vmatpush.bf16.msra.mxu0 %v286
  %371 = vmatpush.bf16.msra.mxu0 %v285
  %372 = vmatpush.bf16.msra.mxu0 %v284
  %373 = vmatpush.bf16.msra.mxu0 %v283
  %374 = vmatpush.bf16.msra.mxu0 %v282
  %375 = vmatpush.bf16.msra.mxu0 %v281
  %376 = vmatpush.bf16.msra.mxu0 %v280
  %377 = vmatpush.bf16.msra.mxu0 %v279
  %378 = vmatmul.bf16.gmra.mxu0 %v105
  %v379 = vpop.f32.mrf.mxu0
  %v380 = vadd.f32 %v367, %v379
  %v381 = vpop.f32.mrf.mxu0
  %382 = vdwg.mxu0
  %383 = vmatpush.bf16.msra.mxu0 0
  %384 = vmatpush.bf16.msra.mxu0 0
  %385 = vmatpush.bf16.msra.mxu0 0
  %386 = vmatpush.bf16.msra.mxu0 0
  %387 = vmatpush.bf16.msra.mxu0 %v290
  %388 = vmatpush.bf16.msra.mxu0 %v289
  %389 = vmatpush.bf16.msra.mxu0 %v288
  %390 = vmatpush.bf16.msra.mxu0 %v287
  %391 = vmatmul.bf16.gmra.mxu0 %v329
  %v392 = vpop.f32.mrf.mxu0
  %v393 = vadd.f32 %v380, %v392
  %v394 = vpop.f32.mrf.mxu0
  %395 = vdwg.mxu0
  %v396 = vmax.f32 %v393, 0.0
  %v397 = vpack.c.bf16 %v396, %v396
  %vm398 = vcmask 257024
  %399 = vst.msk [vmem:[%s3] sm:$0xf] %vm398, %v397
  // Predicated region
  $region14: #{deeplab_forward.22} parent=0 // pred_check
    _
  $region15: #{deeplab_forward.22} parent=0 // pred_check_branch
    %401 = sbr.rel (0) target = $region17
  $region16: #{deeplab_forward.22} parent=0 // pred_region
    _
  $region17: #{deeplab_forward.22} parent=0 // pred_fallthru
    _
  // Predicated region
  $region18: #{deeplab_forward.22} parent=0 // pred_check
    _
  $region19: #{deeplab_forward.22} parent=0 // pred_check_branch
    %403 = sbr.rel (0) target = $region21
  $region20: #{deeplab_forward.22} parent=0 // pred_region
    _
  $region21: #{deeplab_forward.22} parent=0 // pred_fallthru
    _

// kernel: deeplab_forward.26
$region0: #{deeplab_forward.26}
  #allocation0 [shape = 'u32[]', space=smem, size = 0x4, offset = 0x4, fixed_abs, tag = 'smem constant byte address 0x4 - core index']
  #allocation1 [shape = 'u32[72,128]{1,0:T(1,128)}', space=vmem, size = 0x9000, scoped, tag = 'internal scratch']
  %s0 = inlined_call_operand.vmem [shape: bf16[2,4,32], index: 0, kind: input, shape index: {}]
  %s1 = inlined_call_operand.vmem [shape: bf16[2,4,32], index: 1, kind: input, shape index: {}]
  %s2 = inlined_call_operand.vmem [shape: bf16[2,4,32], index: 2, kind: input, shape index: {}]
  %s3 = inlined_call_operand.vmem [shape: bf16[2,4,32], index: 3, kind: input, shape index: {}]
  %s4 = inlined_call_operand.vmem [shape: bf16[32,64], index: 4, kind: input, shape index: {}]
  %s5 = inlined_call_operand.vmem [shape: bf16[32,16], index: 5, kind: input, shape index: {}]
  %s6 = inlined_call_operand.vmem [shape: bf16[32,16], index: 6, kind: input, shape index: {}]
  %s7 = inlined_call_operand.vmem [shape: bf16[32,16], index: 7, kind: input, shape index: {}]
  %s8 = inlined_call_operand.vmem [shape: bf16[32,16], index: 8, kind: input, shape index: {}]
  %s9 = inlined_call_operand.vmem [shape: bf16[32,16], index: 9, kind: input, shape index: {}]
  %s10 = inlined_call_operand.vmem [shape: f32[1,64], index: 10, kind: input, shape index: {}]
  %s11 = inlined_call_operand.vmem [shape: bf16[2,4,64], index: 11, kind: output, shape index: {}]
  %s12 = sld [smem:[#allocation0]]
  $region77: #{deeplab_forward.26} parent=0
    _
  %s14 = ssub.s32 1, %s12
  %s15 = scalar_select 0, %s14, %s12
  loop: start=0, step=1, limit=4
  $region2: #{deeplab_forward.26} parent=0 // loop_pre_header
    _
  $region3: #{deeplab_forward.26} parent=0 // loop_header
    %s17 = sphi 0, %s21
    %p18 = scmp.ge.s32.totalorder %s17, 4
    %s24 = sphi 0, %s36
    %s25 = sphi 0, %s32
    %s26 = sphi 0, %s24
    %s27 = sphi 0, %s25
    %s28 = sphi 0, %s26
    %s29 = sphi 0, %s27
    %s41 = sphi 0, %s43
    %s44 = sphi 0, %s41
    %s45 = sphi 0, %s44
    %s61 = sphi 0, %s45
    %s69 = sphi 0, %s71
    %s72 = sphi 0, %s69
    %s73 = sphi 0, %s72
    %s89 = sphi 0, %s73
    %s97 = sphi 0, %s99
    %s100 = sphi 0, %s97
    %s101 = sphi 0, %s100
    %s117 = sphi 0, %s101
    %s125 = sphi 0, %s127
    %s128 = sphi 0, %s125
    %s129 = sphi 0, %s128
    %s145 = sphi 0, %s129
    %s149 = sphi 0, %s149
    %s151 = sphi 0, %s149
    %s152 = sphi 0, %s151
    %s166 = sphi 0, %s152
    %s170 = sphi 0, %s170
    %s172 = sphi 0, %s170
    %s173 = sphi 0, %s172
    %s187 = sphi 0, %s173
    %s191 = sphi 0, %s191
    %s193 = sphi 0, %s191
    %s194 = sphi 0, %s193
    %s208 = sphi 0, %s194
    %s212 = sphi 0, %s212
    %s214 = sphi 0, %s212
    %s215 = sphi 0, %s214
    %s229 = sphi 0, %s215
    %s233 = sphi 0, %s233
    %s235 = sphi 0, %s233
    %s236 = sphi 0, %s235
    %s250 = sphi 0, %s236
    %s254 = sphi 0, %s254
    %s256 = sphi 0, %s254
    %s257 = sphi 0, %s256
    %s271 = sphi 0, %s257
    %s275 = sphi 0, %s275
    %s277 = sphi 0, %s275
    %s278 = sphi 0, %s277
    %s292 = sphi 0, %s278
    %s300 = sphi 0, %s302
    %s303 = sphi 0, %s300
    %s304 = sphi 0, %s303
    %s320 = sphi 0, %s304
  $region4: #{deeplab_forward.26} parent=0 // loop_header_branch
    %20 = sbr.rel (%p18) target = $region8
  $region5: #{deeplab_forward.26} parent=0 // loop_body
    %s22 = ssub.s32 %s17, 1
    %s23 = ssub.s32 %s17, 2
    %s30 = sadd.s32 1, %s25
    %p31 = scmp.ge.s32.totalorder %s30, 1
    %s32 = scalar_select %p31, 0, %s30
    %s33 = sadd.s32 1, %s24
    %s34 = scalar_select %p31, %s33, %s24
    %p35 = scmp.ge.s32.totalorder %s34, 2
    %s36 = scalar_select %p35, 0, %s34
    %s37 = ssub.s32 %s24, %s36
    %s38 = ssub.s32 %s25, %s32
    %s39 = sor.u32 %s37, %s38
    %p40 = scmp.eq.s32.totalorder %s39, 0
    %s42 = sadd.s32 %s41, 1
    %s43 = scalar_select %p40, %s41, %s42
    %p46 = pneg %p40
    %p47 = scmp.eq.s32.totalorder %s17, 1
    %p48 = por %p46, %p47
    %p49 = scmp.ne.s32.totalorder %s41, %s44
    %p50 = scmp.eq.s32.totalorder %s17, 0
    %p51 = por %p49, %p50
    %p52 = scmp.ne.s32.totalorder %s41, %s44
    %p53 = scmp.eq.s32.totalorder %s22, 1
    %p54 = por %p52, %p53
    %p55 = scmp.ne.s32.totalorder %s44, %s45
    %p56 = scmp.eq.s32.totalorder %s22, 0
    %p57 = por %p55, %p56
    %p58 = scmp.ne.s32.totalorder %s44, %s45
    %p59 = scmp.eq.s32.totalorder %s23, 1
    %p60 = por %p58, %p59
    %p62 = scmp.ne.s32.totalorder %s45, %s61
    %p63 = scmp.eq.s32.totalorder %s23, 0
    %p64 = por %p62, %p63
    %s65 = ssub.s32 %s24, %s36
    %s66 = ssub.s32 %s25, %s32
    %s67 = sor.u32 %s65, %s66
    %p68 = scmp.eq.s32.totalorder %s67, 0
    %s70 = sadd.s32 %s69, 1
    %s71 = scalar_select %p68, %s69, %s70
    %p74 = pneg %p68
    %p75 = scmp.eq.s32.totalorder %s17, 1
    %p76 = por %p74, %p75
    %p77 = scmp.ne.s32.totalorder %s69, %s72
    %p78 = scmp.eq.s32.totalorder %s17, 0
    %p79 = por %p77, %p78
    %p80 = scmp.ne.s32.totalorder %s69, %s72
    %p81 = scmp.eq.s32.totalorder %s22, 1
    %p82 = por %p80, %p81
    %p83 = scmp.ne.s32.totalorder %s72, %s73
    %p84 = scmp.eq.s32.totalorder %s22, 0
    %p85 = por %p83, %p84
    %p86 = scmp.ne.s32.totalorder %s72, %s73
    %p87 = scmp.eq.s32.totalorder %s23, 1
    %p88 = por %p86, %p87
    %p90 = scmp.ne.s32.totalorder %s73, %s89
    %p91 = scmp.eq.s32.totalorder %s23, 0
    %p92 = por %p90, %p91
    %s93 = ssub.s32 %s24, %s36
    %s94 = ssub.s32 %s25, %s32
    %s95 = sor.u32 %s93, %s94
    %p96 = scmp.eq.s32.totalorder %s95, 0
    %s98 = sadd.s32 %s97, 1
    %s99 = scalar_select %p96, %s97, %s98
    %p102 = pneg %p96
    %p103 = scmp.eq.s32.totalorder %s17, 1
    %p104 = por %p102, %p103
    %p105 = scmp.ne.s32.totalorder %s97, %s100
    %p106 = scmp.eq.s32.totalorder %s17, 0
    %p107 = por %p105, %p106
    %p108 = scmp.ne.s32.totalorder %s97, %s100
    %p109 = scmp.eq.s32.totalorder %s22, 1
    %p110 = por %p108, %p109
    %p111 = scmp.ne.s32.totalorder %s100, %s101
    %p112 = scmp.eq.s32.totalorder %s22, 0
    %p113 = por %p111, %p112
    %p114 = scmp.ne.s32.totalorder %s100, %s101
    %p115 = scmp.eq.s32.totalorder %s23, 1
    %p116 = por %p114, %p115
    %p118 = scmp.ne.s32.totalorder %s101, %s117
    %p119 = scmp.eq.s32.totalorder %s23, 0
    %p120 = por %p118, %p119
    %s121 = ssub.s32 %s24, %s36
    %s122 = ssub.s32 %s25, %s32
    %s123 = sor.u32 %s121, %s122
    %p124 = scmp.eq.s32.totalorder %s123, 0
    %s126 = sadd.s32 %s125, 1
    %s127 = scalar_select %p124, %s125, %s126
    %p130 = pneg %p124
    %p131 = scmp.eq.s32.totalorder %s17, 1
    %p132 = por %p130, %p131
    %p133 = scmp.ne.s32.totalorder %s125, %s128
    %p134 = scmp.eq.s32.totalorder %s17, 0
    %p135 = por %p133, %p134
    %p136 = scmp.ne.s32.totalorder %s125, %s128
    %p137 = scmp.eq.s32.totalorder %s22, 1
    %p138 = por %p136, %p137
    %p139 = scmp.ne.s32.totalorder %s128, %s129
    %p140 = scmp.eq.s32.totalorder %s22, 0
    %p141 = por %p139, %p140
    %p142 = scmp.ne.s32.totalorder %s128, %s129
    %p143 = scmp.eq.s32.totalorder %s23, 1
    %p144 = por %p142, %p143
    %p146 = scmp.ne.s32.totalorder %s129, %s145
    %p147 = scmp.eq.s32.totalorder %s23, 0
    %p148 = por %p146, %p147
    %s150 = sadd.s32 %s149, 1
    %p153 = scmp.eq.s32.totalorder %s17, 1
    %p154 = scmp.ne.s32.totalorder %s149, %s151
    %p155 = scmp.eq.s32.totalorder %s17, 0
    %p156 = por %p154, %p155
    %p157 = scmp.ne.s32.totalorder %s149, %s151
    %p158 = scmp.eq.s32.totalorder %s22, 1
    %p159 = por %p157, %p158
    %p160 = scmp.ne.s32.totalorder %s151, %s152
    %p161 = scmp.eq.s32.totalorder %s22, 0
    %p162 = por %p160, %p161
    %p163 = scmp.ne.s32.totalorder %s151, %s152
    %p164 = scmp.eq.s32.totalorder %s23, 1
    %p165 = por %p163, %p164
    %p167 = scmp.ne.s32.totalorder %s152, %s166
    %p168 = scmp.eq.s32.totalorder %s23, 0
    %p169 = por %p167, %p168
    %s171 = sadd.s32 %s170, 1
    %p174 = scmp.eq.s32.totalorder %s17, 1
    %p175 = scmp.ne.s32.totalorder %s170, %s172
    %p176 = scmp.eq.s32.totalorder %s17, 0
    %p177 = por %p175, %p176
    %p178 = scmp.ne.s32.totalorder %s170, %s172
    %p179 = scmp.eq.s32.totalorder %s22, 1
    %p180 = por %p178, %p179
    %p181 = scmp.ne.s32.totalorder %s172, %s173
    %p182 = scmp.eq.s32.totalorder %s22, 0
    %p183 = por %p181, %p182
    %p184 = scmp.ne.s32.totalorder %s172, %s173
    %p185 = scmp.eq.s32.totalorder %s23, 1
    %p186 = por %p184, %p185
    %p188 = scmp.ne.s32.totalorder %s173, %s187
    %p189 = scmp.eq.s32.totalorder %s23, 0
    %p190 = por %p188, %p189
    %s192 = sadd.s32 %s191, 1
    %p195 = scmp.eq.s32.totalorder %s17, 1
    %p196 = scmp.ne.s32.totalorder %s191, %s193
    %p197 = scmp.eq.s32.totalorder %s17, 0
    %p198 = por %p196, %p197
    %p199 = scmp.ne.s32.totalorder %s191, %s193
    %p200 = scmp.eq.s32.totalorder %s22, 1
    %p201 = por %p199, %p200
    %p202 = scmp.ne.s32.totalorder %s193, %s194
    %p203 = scmp.eq.s32.totalorder %s22, 0
    %p204 = por %p202, %p203
    %p205 = scmp.ne.s32.totalorder %s193, %s194
    %p206 = scmp.eq.s32.totalorder %s23, 1
    %p207 = por %p205, %p206
    %p209 = scmp.ne.s32.totalorder %s194, %s208
    %p210 = scmp.eq.s32.totalorder %s23, 0
    %p211 = por %p209, %p210
    %s213 = sadd.s32 %s212, 1
    %p216 = scmp.eq.s32.totalorder %s17, 1
    %p217 = scmp.ne.s32.totalorder %s212, %s214
    %p218 = scmp.eq.s32.totalorder %s17, 0
    %p219 = por %p217, %p218
    %p220 = scmp.ne.s32.totalorder %s212, %s214
    %p221 = scmp.eq.s32.totalorder %s22, 1
    %p222 = por %p220, %p221
    %p223 = scmp.ne.s32.totalorder %s214, %s215
    %p224 = scmp.eq.s32.totalorder %s22, 0
    %p225 = por %p223, %p224
    %p226 = scmp.ne.s32.totalorder %s214, %s215
    %p227 = scmp.eq.s32.totalorder %s23, 1
    %p228 = por %p226, %p227
    %p230 = scmp.ne.s32.totalorder %s215, %s229
    %p231 = scmp.eq.s32.totalorder %s23, 0
    %p232 = por %p230, %p231
    %s234 = sadd.s32 %s233, 1
    %p237 = scmp.eq.s32.totalorder %s17, 1
    %p238 = scmp.ne.s32.totalorder %s233, %s235
    %p239 = scmp.eq.s32.totalorder %s17, 0
    %p240 = por %p238, %p239
    %p241 = scmp.ne.s32.totalorder %s233, %s235
    %p242 = scmp.eq.s32.totalorder %s22, 1
    %p243 = por %p241, %p242
    %p244 = scmp.ne.s32.totalorder %s235, %s236
    %p245 = scmp.eq.s32.totalorder %s22, 0
    %p246 = por %p244, %p245
    %p247 = scmp.ne.s32.totalorder %s235, %s236
    %p248 = scmp.eq.s32.totalorder %s23, 1
    %p249 = por %p247, %p248
    %p251 = scmp.ne.s32.totalorder %s236, %s250
    %p252 = scmp.eq.s32.totalorder %s23, 0
    %p253 = por %p251, %p252
    %s255 = sadd.s32 %s254, 1
    %p258 = scmp.eq.s32.totalorder %s17, 1
    %p259 = scmp.ne.s32.totalorder %s254, %s256
    %p260 = scmp.eq.s32.totalorder %s17, 0
    %p261 = por %p259, %p260
    %p262 = scmp.ne.s32.totalorder %s254, %s256
    %p263 = scmp.eq.s32.totalorder %s22, 1
    %p264 = por %p262, %p263
    %p265 = scmp.ne.s32.totalorder %s256, %s257
    %p266 = scmp.eq.s32.totalorder %s22, 0
    %p267 = por %p265, %p266
    %p268 = scmp.ne.s32.totalorder %s256, %s257
    %p269 = scmp.eq.s32.totalorder %s23, 1
    %p270 = por %p268, %p269
    %p272 = scmp.ne.s32.totalorder %s257, %s271
    %p273 = scmp.eq.s32.totalorder %s23, 0
    %p274 = por %p272, %p273
    %s276 = sadd.s32 %s275, 1
    %p279 = scmp.eq.s32.totalorder %s17, 1
    %p280 = scmp.ne.s32.totalorder %s275, %s277
    %p281 = scmp.eq.s32.totalorder %s17, 0
    %p282 = por %p280, %p281
    %p283 = scmp.ne.s32.totalorder %s275, %s277
    %p284 = scmp.eq.s32.totalorder %s22, 1
    %p285 = por %p283, %p284
    %p286 = scmp.ne.s32.totalorder %s277, %s278
    %p287 = scmp.eq.s32.totalorder %s22, 0
    %p288 = por %p286, %p287
    %p289 = scmp.ne.s32.totalorder %s277, %s278
    %p290 = scmp.eq.s32.totalorder %s23, 1
    %p291 = por %p289, %p290
    %p293 = scmp.ne.s32.totalorder %s278, %s292
    %p294 = scmp.eq.s32.totalorder %s23, 0
    %p295 = por %p293, %p294
    %s296 = ssub.s32 %s24, %s36
    %s297 = ssub.s32 %s25, %s32
    %s298 = sor.u32 %s296, %s297
    %p299 = scmp.eq.s32.totalorder %s298, 0
    %s301 = sadd.s32 %s300, 1
    %s302 = scalar_select %p299, %s300, %s301
    %p305 = pneg %p299
    %p306 = scmp.eq.s32.totalorder %s17, 1
    %p307 = por %p305, %p306
    %p308 = scmp.ne.s32.totalorder %s300, %s303
    %p309 = scmp.eq.s32.totalorder %s17, 0
    %p310 = por %p308, %p309
    %p311 = scmp.ne.s32.totalorder %s300, %s303
    %p312 = scmp.eq.s32.totalorder %s22, 1
    %p313 = por %p311, %p312
    %p314 = scmp.ne.s32.totalorder %s303, %s304
    %p315 = scmp.eq.s32.totalorder %s22, 0
    %p316 = por %p314, %p315
    %p317 = scmp.ne.s32.totalorder %s303, %s304
    %p318 = scmp.eq.s32.totalorder %s23, 1
    %p319 = por %p317, %p318
    %p321 = scmp.ne.s32.totalorder %s304, %s320
    %p322 = scmp.eq.s32.totalorder %s23, 0
    %p323 = por %p321, %p322
    %p324 = scmp.le.s32.totalorder 1, %s17
    %p325 = scmp.lt.s32.totalorder %s17, 3
    %p326 = pnand %p324, %p325
    %p327 = pneg %p326
    // Predicated region
    $region9: #{deeplab_forward.26} parent=5 // pred_check
      _
    $region10: #{deeplab_forward.26} parent=5 // pred_check_branch
      %329 = sbr.rel (%p326) target = $region12
    $region11: #{deeplab_forward.26} parent=5 // pred_region
      %s330 = ssub.s32 %s17, 1
      // Predicated region
      $region13: #{deeplab_forward.26} parent=11 // pred_check
        %p331 = pneg %p162
      $region14: #{deeplab_forward.26} parent=11 // pred_check_branch
        %333 = sbr.rel (%p331) target = $region16
      $region15: #{deeplab_forward.26} parent=11 // pred_region
        _
      $region16: #{deeplab_forward.26} parent=11 // pred_fallthru
        _
      // Predicated region
      $region17: #{deeplab_forward.26} parent=11 // pred_check
        %p334 = pneg %p183
      $region18: #{deeplab_forward.26} parent=11 // pred_check_branch
        %336 = sbr.rel (%p334) target = $region20
      $region19: #{deeplab_forward.26} parent=11 // pred_region
        _
      $region20: #{deeplab_forward.26} parent=11 // pred_fallthru
        _
      // Predicated region
      $region21: #{deeplab_forward.26} parent=11 // pred_check
        %p337 = pneg %p204
      $region22: #{deeplab_forward.26} parent=11 // pred_check_branch
        %339 = sbr.rel (%p337) target = $region24
      $region23: #{deeplab_forward.26} parent=11 // pred_region
        _
      $region24: #{deeplab_forward.26} parent=11 // pred_fallthru
        _
      // Predicated region
      $region25: #{deeplab_forward.26} parent=11 // pred_check
        %p340 = pneg %p225
      $region26: #{deeplab_forward.26} parent=11 // pred_check_branch
        %342 = sbr.rel (%p340) target = $region28
      $region27: #{deeplab_forward.26} parent=11 // pred_region
        _
      $region28: #{deeplab_forward.26} parent=11 // pred_fallthru
        _
      // Predicated region
      $region29: #{deeplab_forward.26} parent=11 // pred_check
        %p343 = pneg %p246
      $region30: #{deeplab_forward.26} parent=11 // pred_check_branch
        %345 = sbr.rel (%p343) target = $region32
      $region31: #{deeplab_forward.26} parent=11 // pred_region
        _
      $region32: #{deeplab_forward.26} parent=11 // pred_fallthru
        _
      // Predicated region
      $region33: #{deeplab_forward.26} parent=11 // pred_check
        %p346 = pneg %p267
      $region34: #{deeplab_forward.26} parent=11 // pred_check_branch
        %348 = sbr.rel (%p346) target = $region36
      $region35: #{deeplab_forward.26} parent=11 // pred_region
        _
      $region36: #{deeplab_forward.26} parent=11 // pred_fallthru
        _
      // Predicated region
      $region37: #{deeplab_forward.26} parent=11 // pred_check
        %p349 = pneg %p288
      $region38: #{deeplab_forward.26} parent=11 // pred_check_branch
        %351 = sbr.rel (%p349) target = $region40
      $region39: #{deeplab_forward.26} parent=11 // pred_region
        _
      $region40: #{deeplab_forward.26} parent=11 // pred_fallthru
        _
    $region12: #{deeplab_forward.26} parent=5 // pred_fallthru
      _
    %p352 = scmp.lt.s32.totalorder %s17, 2
    // Predicated region
    $region41: #{deeplab_forward.26} parent=5 // pred_check
      %p353 = pneg %p352
    $region42: #{deeplab_forward.26} parent=5 // pred_check_branch
      %355 = sbr.rel (%p353) target = $region44
    $region43: #{deeplab_forward.26} parent=5 // pred_region
      // Predicated region
      $region45: #{deeplab_forward.26} parent=43 // pred_check
        %p356 = pneg %p51
      $region46: #{deeplab_forward.26} parent=43 // pred_check_branch
        %358 = sbr.rel (%p356) target = $region48
      $region47: #{deeplab_forward.26} parent=43 // pred_region
        %p359 = scmp.lt.s32.totalorder %s24, 1
        %s360 = scalar_select %p359, %s24, 1
        %p361 = scmp.lt.s32.totalorder %s25, 0
        %s362 = scalar_select %p361, %s25, 0
        %s363 = sadd.s32 %s362, %s360
        %s364 = smul.addr %s363, 2
        %s365 = scalar_lea.vmem %s0, %s364
      $region48: #{deeplab_forward.26} parent=43 // pred_fallthru
        _
      // Predicated region
      $region49: #{deeplab_forward.26} parent=43 // pred_check
        %p366 = pneg %p79
      $region50: #{deeplab_forward.26} parent=43 // pred_check_branch
        %368 = sbr.rel (%p366) target = $region52
      $region51: #{deeplab_forward.26} parent=43 // pred_region
        %p369 = scmp.lt.s32.totalorder %s24, 1
        %s370 = scalar_select %p369, %s24, 1
        %p371 = scmp.lt.s32.totalorder %s25, 0
        %s372 = scalar_select %p371, %s25, 0
        %s373 = sadd.s32 %s372, %s370
        %s374 = smul.addr %s373, 2
        %s375 = scalar_lea.vmem %s1, %s374
      $region52: #{deeplab_forward.26} parent=43 // pred_fallthru
        _
      // Predicated region
      $region53: #{deeplab_forward.26} parent=43 // pred_check
        %p376 = pneg %p107
      $region54: #{deeplab_forward.26} parent=43 // pred_check_branch
        %378 = sbr.rel (%p376) target = $region56
      $region55: #{deeplab_forward.26} parent=43 // pred_region
        %p379 = scmp.lt.s32.totalorder %s24, 1
        %s380 = scalar_select %p379, %s24, 1
        %p381 = scmp.lt.s32.totalorder %s25, 0
        %s382 = scalar_select %p381, %s25, 0
        %s383 = sadd.s32 %s382, %s380
        %s384 = smul.addr %s383, 2
        %s385 = scalar_lea.vmem %s2, %s384
      $region56: #{deeplab_forward.26} parent=43 // pred_fallthru
        _
      // Predicated region
      $region57: #{deeplab_forward.26} parent=43 // pred_check
        %p386 = pneg %p135
      $region58: #{deeplab_forward.26} parent=43 // pred_check_branch
        %388 = sbr.rel (%p386) target = $region60
      $region59: #{deeplab_forward.26} parent=43 // pred_region
        %p389 = scmp.lt.s32.totalorder %s24, 1
        %s390 = scalar_select %p389, %s24, 1
        %p391 = scmp.lt.s32.totalorder %s25, 0
        %s392 = scalar_select %p391, %s25, 0
        %s393 = sadd.s32 %s392, %s390
        %s394 = smul.addr %s393, 2
        %s395 = scalar_lea.vmem %s3, %s394
      $region60: #{deeplab_forward.26} parent=43 // pred_fallthru
        _
    $region44: #{deeplab_forward.26} parent=5 // pred_fallthru
      _
    %p396 = scmp.le.s32.totalorder 1, %s17
    %p397 = scmp.lt.s32.totalorder %s17, 3
    %p398 = pnand %p396, %p397
    %p399 = pneg %p398
    // Predicated region
    $region61: #{deeplab_forward.26} parent=5 // pred_check
      _
    $region62: #{deeplab_forward.26} parent=5 // pred_check_branch
      %401 = sbr.rel (%p398) target = $region64
    $region63: #{deeplab_forward.26} parent=5 // pred_region
      %s402 = ssub.s32 %s17, 1
      %p403 = scmp.lt.s32.totalorder %s26, 1
      %s404 = scalar_select %p403, %s26, 1
      %p405 = scmp.lt.s32.totalorder %s27, 0
      %s406 = scalar_select %p405, %s27, 0
      %s407 = sadd.s32 %s406, %s404
      %s408 = smul.addr %s407, 2
      %s409 = scalar_lea.vmem %s0, %s408
      %p410 = pneg %p57
      %p411 = pneg %p54
      %p412 = scmp.lt.s32.totalorder %s26, 1
      %s413 = scalar_select %p412, %s26, 1
      %p414 = scmp.lt.s32.totalorder %s27, 0
      %s415 = scalar_select %p414, %s27, 0
      %s416 = sadd.s32 %s415, %s413
      %s417 = smul.addr %s416, 2
      %s418 = scalar_lea.vmem %s1, %s417
      %p419 = pneg %p85
      %p420 = pneg %p82
      %p421 = scmp.lt.s32.totalorder %s26, 1
      %s422 = scalar_select %p421, %s26, 1
      %p423 = scmp.lt.s32.totalorder %s27, 0
      %s424 = scalar_select %p423, %s27, 0
      %s425 = sadd.s32 %s424, %s422
      %s426 = smul.addr %s425, 2
      %s427 = scalar_lea.vmem %s2, %s426
      %p428 = pneg %p113
      %p429 = pneg %p110
      %p430 = scmp.lt.s32.totalorder %s26, 1
      %s431 = scalar_select %p430, %s26, 1
      %p432 = scmp.lt.s32.totalorder %s27, 0
      %s433 = scalar_select %p432, %s27, 0
      %s434 = sadd.s32 %s433, %s431
      %s435 = smul.addr %s434, 2
      %s436 = scalar_lea.vmem %s3, %s435
      %p437 = pneg %p141
      %p438 = pneg %p138
      %p439 = pneg %p162
      %p440 = pneg %p159
      %p441 = pneg %p183
      %p442 = pneg %p180
      %p443 = pneg %p204
      %p444 = pneg %p201
      %p445 = pneg %p225
      %p446 = pneg %p222
      %p447 = pneg %p246
      %p448 = pneg %p243
      %p449 = pneg %p267
      %p450 = pneg %p264
      %p451 = pneg %p288
      %p452 = pneg %p285
      %p453 = pneg %p316
      %p454 = pneg %p313
      %p455 = scmp.lt.s32.totalorder %s26, 1
      %s456 = scalar_select %p455, %s26, 1
      %p457 = scmp.lt.s32.totalorder %s27, 0
      %s458 = scalar_select %p457, %s27, 0
      %s459 = sadd.s32 %s458, %s456
      %s460 = smul.addr %s459, 2
      %s461 = scalar_lea.vmem %s11, %s460
      %p462 = scmp.lt.s32.totalorder %s26, 1
      %s463 = scalar_select %p462, %s26, 1
      %p464 = scmp.lt.s32.totalorder %s27, 0
      %s465 = scalar_select %p464, %s27, 0
      %s466 = sadd.s32 %s465, %s463
      %s467 = smul.addr %s466, 2
      %s468 = scalar_lea.vmem %s0, %s467
      %p469 = scmp.lt.s32.totalorder %s26, 1
      %s470 = scalar_select %p469, %s26, 1
      %p471 = scmp.lt.s32.totalorder %s27, 0
      %s472 = scalar_select %p471, %s27, 0
      %s473 = sadd.s32 %s472, %s470
      %s474 = smul.addr %s473, 2
      %s475 = scalar_lea.vmem %s1, %s474
      %p476 = scmp.lt.s32.totalorder %s26, 1
      %s477 = scalar_select %p476, %s26, 1
      %p478 = scmp.lt.s32.totalorder %s27, 0
      %s479 = scalar_select %p478, %s27, 0
      %s480 = sadd.s32 %s479, %s477
      %s481 = smul.addr %s480, 2
      %s482 = scalar_lea.vmem %s2, %s481
      %p483 = scmp.lt.s32.totalorder %s26, 1
      %s484 = scalar_select %p483, %s26, 1
      %p485 = scmp.lt.s32.totalorder %s27, 0
      %s486 = scalar_select %p485, %s27, 0
      %s487 = sadd.s32 %s486, %s484
      %s488 = smul.addr %s487, 2
      %s489 = scalar_lea.vmem %s3, %s488
      %p490 = scmp.lt.s32.totalorder %s26, 1
      %s491 = scalar_select %p490, %s26, 1
      %p492 = scmp.lt.s32.totalorder %s27, 0
      %s493 = scalar_select %p492, %s27, 0
      %s494 = sadd.s32 %s493, %s491
      %s495 = smul.addr %s494, 2
      %s496 = scalar_lea.vmem %s11, %s495
      %v498 = vld [vmem:[%s468] sm:$0x3]
      %v499 = vld [vmem:[%s475] sm:$0x3]
      %v500 = vld [vmem:[%s482] sm:$0x3]
      %v501 = vld [vmem:[%s489] sm:$0x3]
      %v502 = vld [vmem:[%s4] sm:$0xf]
      %v503 = vld [vmem:[%s4 + $0x4] sm:$0xf]
      %v504 = vld [vmem:[%s4 + $0x8] sm:$0xf]
      %v505 = vld [vmem:[%s4 + $0xc] sm:$0xf]
      %v510 = vunpack.c.l.b16 %v502
      %v511 = vunpack.c.l.b16 %v503
      %v512 = vunpack.c.l.b16 %v504
      %v513 = vunpack.c.l.b16 %v505
      %v514 = vpack.c.b16 %v511, %v510
      %v515 = vpack.c.b16 %v513, %v512
      %vm518 = vcmask 261120
      %v520 = vsel %vm518, %v498, 0
      %522 = vmatpush.bf16.msra.mxu0 0
      %523 = vmatpush.bf16.msra.mxu0 0
      %524 = vmatpush.bf16.msra.mxu0 0
      %525 = vmatpush.bf16.msra.mxu0 0
      %526 = vmatpush.bf16.msra.mxu0 0
      %527 = vmatpush.bf16.msra.mxu0 0
      %528 = vmatpush.bf16.msra.mxu0 %v515
      %529 = vmatpush.bf16.msra.mxu0 %v514
      %530 = vmatmul.bf16.gmra.mxu0 %v520
      %v531 = vpop.f32.mrf.mxu0
      %v532 = vadd.f32 0.0, %v531
      %v533 = vpop.f32.mrf.mxu0
      %534 = vdwg.mxu0
      %v535 = vld [vmem:[%s5] sm:$0xf]
      %v536 = vld [vmem:[%s5 + $0x4] sm:$0xf]
      %v537 = vld [vmem:[%s5 + $0x8] sm:$0xf]
      %v538 = vld [vmem:[%s5 + $0xc] sm:$0xf]
      %v543 = vunpack.c.l.b16 %v535
      %v544 = vunpack.c.l.b16 %v536
      %v545 = vunpack.c.l.b16 %v537
      %v546 = vunpack.c.l.b16 %v538
      %v547 = vpack.c.b16 %v544, %v543
      %v548 = vpack.c.b16 %v546, %v545
      %v552 = vsel %vm518, %v499, 0
      %554 = vmatpush.bf16.msra.mxu0 0
      %555 = vmatpush.bf16.msra.mxu0 0
      %556 = vmatpush.bf16.msra.mxu0 0
      %557 = vmatpush.bf16.msra.mxu0 0
      %558 = vmatpush.bf16.msra.mxu0 0
      %559 = vmatpush.bf16.msra.mxu0 0
      %560 = vmatpush.bf16.msra.mxu0 %v548
      %561 = vmatpush.bf16.msra.mxu0 %v547
      %562 = vmatmul.bf16.gmra.mxu0 %v552
      %v563 = vpop.f32.mrf.mxu0
      %v564 = vadd.f32 0.0, %v563
      %v565 = vpop.f32.mrf.mxu0
      %566 = vdwg.mxu0
      %568 = vrot.lane.b32.xlu0 %v564, 16
      %v569 = vpop.permute.xlu0 %568
      %v571 = vadd.f32 %v532, %v569
      %v572 = vld [vmem:[%s6] sm:$0xf]
      %v573 = vld [vmem:[%s6 + $0x4] sm:$0xf]
      %v574 = vld [vmem:[%s6 + $0x8] sm:$0xf]
      %v575 = vld [vmem:[%s6 + $0xc] sm:$0xf]
      %v580 = vunpack.c.l.b16 %v572
      %v581 = vunpack.c.l.b16 %v573
      %v582 = vunpack.c.l.b16 %v574
      %v583 = vunpack.c.l.b16 %v575
      %v584 = vpack.c.b16 %v581, %v580
      %v585 = vpack.c.b16 %v583, %v582
      %v589 = vsel %vm518, %v500, 0
      %591 = vmatpush.bf16.msra.mxu0 0
      %592 = vmatpush.bf16.msra.mxu0 0
      %593 = vmatpush.bf16.msra.mxu0 0
      %594 = vmatpush.bf16.msra.mxu0 0
      %595 = vmatpush.bf16.msra.mxu0 0
      %596 = vmatpush.bf16.msra.mxu0 0
      %597 = vmatpush.bf16.msra.mxu0 %v585
      %598 = vmatpush.bf16.msra.mxu0 %v584
      %599 = vmatmul.bf16.gmra.mxu0 %v589
      %v600 = vpop.f32.mrf.mxu0
      %v601 = vadd.f32 0.0, %v600
      %v602 = vpop.f32.mrf.mxu0
      %603 = vdwg.mxu0
      %605 = vrot.lane.b32.xlu0 %v601, 32
      %v606 = vpop.permute.xlu0 %605
      %v608 = vadd.f32 %v532, %v606
      %v609 = vld [vmem:[%s7] sm:$0xf]
      %v610 = vld [vmem:[%s7 + $0x4] sm:$0xf]
      %v611 = vld [vmem:[%s7 + $0x8] sm:$0xf]
      %v612 = vld [vmem:[%s7 + $0xc] sm:$0xf]
      %v617 = vunpack.c.l.b16 %v609
      %v618 = vunpack.c.l.b16 %v610
      %v619 = vunpack.c.l.b16 %v611
      %v620 = vunpack.c.l.b16 %v612
      %v621 = vpack.c.b16 %v618, %v617
      %v622 = vpack.c.b16 %v620, %v619
      %625 = vmatpush.bf16.msra.mxu0 0
      %626 = vmatpush.bf16.msra.mxu0 0
      %627 = vmatpush.bf16.msra.mxu0 0
      %628 = vmatpush.bf16.msra.mxu0 0
      %629 = vmatpush.bf16.msra.mxu0 0
      %630 = vmatpush.bf16.msra.mxu0 0
      %631 = vmatpush.bf16.msra.mxu0 %v622
      %632 = vmatpush.bf16.msra.mxu0 %v621
      %633 = vmatmul.bf16.gmra.mxu0 %v552
      %v634 = vpop.f32.mrf.mxu0
      %v635 = vadd.f32 0.0, %v634
      %v636 = vpop.f32.mrf.mxu0
      %637 = vdwg.mxu0
      %639 = vrot.lane.b32.xlu0 %v635, 48
      %v640 = vpop.permute.xlu0 %639
      %v642 = vadd.f32 %v532, %v640
      %v643 = vld [vmem:[%s8] sm:$0xf]
      %v644 = vld [vmem:[%s8 + $0x4] sm:$0xf]
      %v645 = vld [vmem:[%s8 + $0x8] sm:$0xf]
      %v646 = vld [vmem:[%s8 + $0xc] sm:$0xf]
      %v651 = vunpack.c.l.b16 %v643
      %v652 = vunpack.c.l.b16 %v644
      %v653 = vunpack.c.l.b16 %v645
      %v654 = vunpack.c.l.b16 %v646
      %v655 = vpack.c.b16 %v652, %v651
      %v656 = vpack.c.b16 %v654, %v653
      %659 = vmatpush.bf16.msra.mxu0 0
      %660 = vmatpush.bf16.msra.mxu0 0
      %661 = vmatpush.bf16.msra.mxu0 0
      %662 = vmatpush.bf16.msra.mxu0 0
      %663 = vmatpush.bf16.msra.mxu0 0
      %664 = vmatpush.bf16.msra.mxu0 0
      %665 = vmatpush.bf16.msra.mxu0 %v656
      %666 = vmatpush.bf16.msra.mxu0 %v655
      %667 = vmatmul.bf16.gmra.mxu0 %v589
      %v668 = vpop.f32.mrf.mxu0
      %v669 = vadd.f32 0.0, %v668
      %v670 = vpop.f32.mrf.mxu0
      %671 = vdwg.mxu0
      %673 = vrot.lane.b32.xlu0 %v669, 48
      %v674 = vpop.permute.xlu0 %673
      %v676 = vadd.f32 %v642, %v674
      %v677 = vld [vmem:[%s9] sm:$0xf]
      %v678 = vld [vmem:[%s9 + $0x4] sm:$0xf]
      %v679 = vld [vmem:[%s9 + $0x8] sm:$0xf]
      %v680 = vld [vmem:[%s9 + $0xc] sm:$0xf]
      %v685 = vunpack.c.l.b16 %v677
      %v686 = vunpack.c.l.b16 %v678
      %v687 = vunpack.c.l.b16 %v679
      %v688 = vunpack.c.l.b16 %v680
      %v689 = vpack.c.b16 %v686, %v685
      %v690 = vpack.c.b16 %v688, %v687
      %v694 = vsel %vm518, %v501, 0
      %696 = vmatpush.bf16.msra.mxu0 0
      %697 = vmatpush.bf16.msra.mxu0 0
      %698 = vmatpush.bf16.msra.mxu0 0
      %699 = vmatpush.bf16.msra.mxu0 0
      %700 = vmatpush.bf16.msra.mxu0 0
      %701 = vmatpush.bf16.msra.mxu0 0
      %702 = vmatpush.bf16.msra.mxu0 %v690
      %703 = vmatpush.bf16.msra.mxu0 %v689
      %704 = vmatmul.bf16.gmra.mxu0 %v694
      %v705 = vpop.f32.mrf.mxu0
      %v706 = vadd.f32 0.0, %v705
      %v707 = vpop.f32.mrf.mxu0
      %708 = vdwg.mxu0
      %710 = vrot.lane.b32.xlu0 %v706, 48
      %v711 = vpop.permute.xlu0 %710
      %v713 = vadd.f32 %v676, %v711
      %vm714 = vcmask 130048
      %v715 = vsel %vm714, %v532, %v571
      %v716 = vsel %vm518, %v715, %v608
      %vm717 = vcmask 392192
      %v718 = vsel %vm717, %v716, %v713
      %v719 = vld [vmem:[%s10] sm:$0x1]
      %v721 = vperm.slane %v719, 0
      %v723 = vadd.f32 %v718, %v721
      %v724 = vmax.f32 %v723, 0.0
      %v725 = vpack.c.bf16 %v724, %v724
      %vm726 = vcmask 517120
      %727 = vst.msk [vmem:[%s496] sm:$0x3] %vm726, %v725
      %p728 = scmp.lt.s32.totalorder %s26, 1
      %s729 = scalar_select %p728, %s26, 1
      %p730 = scmp.lt.s32.totalorder %s27, 0
      %s731 = scalar_select %p730, %s27, 0
      %s732 = sadd.s32 %s731, %s729
      %s733 = smul.addr %s732, 2
      %s734 = scalar_lea.vmem %s11, %s733
      // Predicated region
      $region65: #{deeplab_forward.26} parent=63 // pred_check
        %p735 = pneg %p313
      $region66: #{deeplab_forward.26} parent=63 // pred_check_branch
        %737 = sbr.rel (%p735) target = $region68
      $region67: #{deeplab_forward.26} parent=63 // pred_region
        _
      $region68: #{deeplab_forward.26} parent=63 // pred_fallthru
        _
    $region64: #{deeplab_forward.26} parent=5 // pred_fallthru
      _
    %p738 = scmp.le.s32.totalorder 2, %s17
    // Predicated region
    $region69: #{deeplab_forward.26} parent=5 // pred_check
      %p739 = pneg %p738
    $region70: #{deeplab_forward.26} parent=5 // pred_check_branch
      %741 = sbr.rel (%p739) target = $region72
    $region71: #{deeplab_forward.26} parent=5 // pred_region
      %s742 = ssub.s32 %s17, 2
      // Predicated region
      $region73: #{deeplab_forward.26} parent=71 // pred_check
        %p743 = pneg %p319
      $region74: #{deeplab_forward.26} parent=71 // pred_check_branch
        %745 = sbr.rel (%p743) target = $region76
      $region75: #{deeplab_forward.26} parent=71 // pred_region
        %p746 = scmp.lt.s32.totalorder %s28, 1
        %s747 = scalar_select %p746, %s28, 1
        %p748 = scmp.lt.s32.totalorder %s29, 0
        %s749 = scalar_select %p748, %s29, 0
        %s750 = sadd.s32 %s749, %s747
        %s751 = smul.addr %s750, 2
        %s752 = scalar_lea.vmem %s11, %s751
      $region76: #{deeplab_forward.26} parent=71 // pred_fallthru
        _
    $region72: #{deeplab_forward.26} parent=5 // pred_fallthru
      _
  $region6: #{deeplab_forward.26} parent=0 // loop_footer
    %s21 = sadd.s32 1, %s17
  $region7: #{deeplab_forward.26} parent=0 // loop_footer_branch
    %16 = sbr.rel target = $region3
  $region8: #{deeplab_forward.26} parent=0 // loop_exit
    _

// kernel: deeplab_forward.25
$region0: #{deeplab_forward.25}
  #allocation0 [shape = 'u32[]', space=smem, size = 0x4, offset = 0x4, fixed_abs, tag = 'smem constant byte address 0x4 - core index']
  #allocation1 [shape = 'u32[72,128]{1,0:T(1,128)}', space=vmem, size = 0x9000, scoped, tag = 'internal scratch']
  %s0 = inlined_call_operand.vmem [shape: bf16[2,4,32], index: 0, kind: input, shape index: {}]
  %s1 = inlined_call_operand.vmem [shape: bf16[2,4,32], index: 1, kind: input, shape index: {}]
  %s2 = inlined_call_operand.vmem [shape: bf16[2,4,32], index: 2, kind: input, shape index: {}]
  %s3 = inlined_call_operand.vmem [shape: bf16[32,32], index: 3, kind: input, shape index: {}]
  %s4 = inlined_call_operand.vmem [shape: bf16[32,32], index: 4, kind: input, shape index: {}]
  %s5 = inlined_call_operand.vmem [shape: bf16[32,32], index: 5, kind: input, shape index: {}]
  %s6 = inlined_call_operand.vmem [shape: f32[2,1,32], index: 6, kind: input, shape index: {}]
  %s7 = inlined_call_operand.vmem [shape: bf16[2,4,32], index: 7, kind: output, shape index: {}]
  %s8 = sld [smem:[#allocation0]]
  $region61: #{deeplab_forward.25} parent=0
    _
  %s10 = ssub.s32 1, %s8
  %s11 = scalar_select 0, %s10, %s8
  loop: start=0, step=1, limit=4
  $region2: #{deeplab_forward.25} parent=0 // loop_pre_header
    _
  $region3: #{deeplab_forward.25} parent=0 // loop_header
    %s13 = sphi 0, %s17
    %p14 = scmp.ge.s32.totalorder %s13, 4
    %s20 = sphi 0, %s32
    %s21 = sphi 0, %s28
    %s22 = sphi 0, %s20
    %s23 = sphi 0, %s21
    %s24 = sphi 0, %s22
    %s25 = sphi 0, %s23
    %s37 = sphi 0, %s39
    %s40 = sphi 0, %s37
    %s41 = sphi 0, %s40
    %s57 = sphi 0, %s41
    %s65 = sphi 0, %s67
    %s68 = sphi 0, %s65
    %s69 = sphi 0, %s68
    %s85 = sphi 0, %s69
    %s93 = sphi 0, %s95
    %s96 = sphi 0, %s93
    %s97 = sphi 0, %s96
    %s113 = sphi 0, %s97
    %s117 = sphi 0, %s117
    %s119 = sphi 0, %s117
    %s120 = sphi 0, %s119
    %s134 = sphi 0, %s120
    %s138 = sphi 0, %s138
    %s140 = sphi 0, %s138
    %s141 = sphi 0, %s140
    %s155 = sphi 0, %s141
    %s159 = sphi 0, %s159
    %s161 = sphi 0, %s159
    %s162 = sphi 0, %s161
    %s176 = sphi 0, %s162
    %s182 = sphi 0, %s184
    %s185 = sphi 0, %s182
    %s186 = sphi 0, %s185
    %s202 = sphi 0, %s186
    %s210 = sphi 0, %s212
    %s213 = sphi 0, %s210
    %s214 = sphi 0, %s213
    %s230 = sphi 0, %s214
  $region4: #{deeplab_forward.25} parent=0 // loop_header_branch
    %16 = sbr.rel (%p14) target = $region8
  $region5: #{deeplab_forward.25} parent=0 // loop_body
    %s18 = ssub.s32 %s13, 1
    %s19 = ssub.s32 %s13, 2
    %s26 = sadd.s32 1, %s21
    %p27 = scmp.ge.s32.totalorder %s26, 1
    %s28 = scalar_select %p27, 0, %s26
    %s29 = sadd.s32 1, %s20
    %s30 = scalar_select %p27, %s29, %s20
    %p31 = scmp.ge.s32.totalorder %s30, 2
    %s32 = scalar_select %p31, 0, %s30
    %s33 = ssub.s32 %s20, %s32
    %s34 = ssub.s32 %s21, %s28
    %s35 = sor.u32 %s33, %s34
    %p36 = scmp.eq.s32.totalorder %s35, 0
    %s38 = sadd.s32 %s37, 1
    %s39 = scalar_select %p36, %s37, %s38
    %p42 = pneg %p36
    %p43 = scmp.eq.s32.totalorder %s13, 1
    %p44 = por %p42, %p43
    %p45 = scmp.ne.s32.totalorder %s37, %s40
    %p46 = scmp.eq.s32.totalorder %s13, 0
    %p47 = por %p45, %p46
    %p48 = scmp.ne.s32.totalorder %s37, %s40
    %p49 = scmp.eq.s32.totalorder %s18, 1
    %p50 = por %p48, %p49
    %p51 = scmp.ne.s32.totalorder %s40, %s41
    %p52 = scmp.eq.s32.totalorder %s18, 0
    %p53 = por %p51, %p52
    %p54 = scmp.ne.s32.totalorder %s40, %s41
    %p55 = scmp.eq.s32.totalorder %s19, 1
    %p56 = por %p54, %p55
    %p58 = scmp.ne.s32.totalorder %s41, %s57
    %p59 = scmp.eq.s32.totalorder %s19, 0
    %p60 = por %p58, %p59
    %s61 = ssub.s32 %s20, %s32
    %s62 = ssub.s32 %s21, %s28
    %s63 = sor.u32 %s61, %s62
    %p64 = scmp.eq.s32.totalorder %s63, 0
    %s66 = sadd.s32 %s65, 1
    %s67 = scalar_select %p64, %s65, %s66
    %p70 = pneg %p64
    %p71 = scmp.eq.s32.totalorder %s13, 1
    %p72 = por %p70, %p71
    %p73 = scmp.ne.s32.totalorder %s65, %s68
    %p74 = scmp.eq.s32.totalorder %s13, 0
    %p75 = por %p73, %p74
    %p76 = scmp.ne.s32.totalorder %s65, %s68
    %p77 = scmp.eq.s32.totalorder %s18, 1
    %p78 = por %p76, %p77
    %p79 = scmp.ne.s32.totalorder %s68, %s69
    %p80 = scmp.eq.s32.totalorder %s18, 0
    %p81 = por %p79, %p80
    %p82 = scmp.ne.s32.totalorder %s68, %s69
    %p83 = scmp.eq.s32.totalorder %s19, 1
    %p84 = por %p82, %p83
    %p86 = scmp.ne.s32.totalorder %s69, %s85
    %p87 = scmp.eq.s32.totalorder %s19, 0
    %p88 = por %p86, %p87
    %s89 = ssub.s32 %s20, %s32
    %s90 = ssub.s32 %s21, %s28
    %s91 = sor.u32 %s89, %s90
    %p92 = scmp.eq.s32.totalorder %s91, 0
    %s94 = sadd.s32 %s93, 1
    %s95 = scalar_select %p92, %s93, %s94
    %p98 = pneg %p92
    %p99 = scmp.eq.s32.totalorder %s13, 1
    %p100 = por %p98, %p99
    %p101 = scmp.ne.s32.totalorder %s93, %s96
    %p102 = scmp.eq.s32.totalorder %s13, 0
    %p103 = por %p101, %p102
    %p104 = scmp.ne.s32.totalorder %s93, %s96
    %p105 = scmp.eq.s32.totalorder %s18, 1
    %p106 = por %p104, %p105
    %p107 = scmp.ne.s32.totalorder %s96, %s97
    %p108 = scmp.eq.s32.totalorder %s18, 0
    %p109 = por %p107, %p108
    %p110 = scmp.ne.s32.totalorder %s96, %s97
    %p111 = scmp.eq.s32.totalorder %s19, 1
    %p112 = por %p110, %p111
    %p114 = scmp.ne.s32.totalorder %s97, %s113
    %p115 = scmp.eq.s32.totalorder %s19, 0
    %p116 = por %p114, %p115
    %s118 = sadd.s32 %s117, 1
    %p121 = scmp.eq.s32.totalorder %s13, 1
    %p122 = scmp.ne.s32.totalorder %s117, %s119
    %p123 = scmp.eq.s32.totalorder %s13, 0
    %p124 = por %p122, %p123
    %p125 = scmp.ne.s32.totalorder %s117, %s119
    %p126 = scmp.eq.s32.totalorder %s18, 1
    %p127 = por %p125, %p126
    %p128 = scmp.ne.s32.totalorder %s119, %s120
    %p129 = scmp.eq.s32.totalorder %s18, 0
    %p130 = por %p128, %p129
    %p131 = scmp.ne.s32.totalorder %s119, %s120
    %p132 = scmp.eq.s32.totalorder %s19, 1
    %p133 = por %p131, %p132
    %p135 = scmp.ne.s32.totalorder %s120, %s134
    %p136 = scmp.eq.s32.totalorder %s19, 0
    %p137 = por %p135, %p136
    %s139 = sadd.s32 %s138, 1
    %p142 = scmp.eq.s32.totalorder %s13, 1
    %p143 = scmp.ne.s32.totalorder %s138, %s140
    %p144 = scmp.eq.s32.totalorder %s13, 0
    %p145 = por %p143, %p144
    %p146 = scmp.ne.s32.totalorder %s138, %s140
    %p147 = scmp.eq.s32.totalorder %s18, 1
    %p148 = por %p146, %p147
    %p149 = scmp.ne.s32.totalorder %s140, %s141
    %p150 = scmp.eq.s32.totalorder %s18, 0
    %p151 = por %p149, %p150
    %p152 = scmp.ne.s32.totalorder %s140, %s141
    %p153 = scmp.eq.s32.totalorder %s19, 1
    %p154 = por %p152, %p153
    %p156 = scmp.ne.s32.totalorder %s141, %s155
    %p157 = scmp.eq.s32.totalorder %s19, 0
    %p158 = por %p156, %p157
    %s160 = sadd.s32 %s159, 1
    %p163 = scmp.eq.s32.totalorder %s13, 1
    %p164 = scmp.ne.s32.totalorder %s159, %s161
    %p165 = scmp.eq.s32.totalorder %s13, 0
    %p166 = por %p164, %p165
    %p167 = scmp.ne.s32.totalorder %s159, %s161
    %p168 = scmp.eq.s32.totalorder %s18, 1
    %p169 = por %p167, %p168
    %p170 = scmp.ne.s32.totalorder %s161, %s162
    %p171 = scmp.eq.s32.totalorder %s18, 0
    %p172 = por %p170, %p171
    %p173 = scmp.ne.s32.totalorder %s161, %s162
    %p174 = scmp.eq.s32.totalorder %s19, 1
    %p175 = por %p173, %p174
    %p177 = scmp.ne.s32.totalorder %s162, %s176
    %p178 = scmp.eq.s32.totalorder %s19, 0
    %p179 = por %p177, %p178
    %s180 = ssub.s32 %s20, %s32
    %p181 = scmp.eq.s32.totalorder %s180, 0
    %s183 = sadd.s32 %s182, 1
    %s184 = scalar_select %p181, %s182, %s183
    %p187 = pneg %p181
    %p188 = scmp.eq.s32.totalorder %s13, 1
    %p189 = por %p187, %p188
    %p190 = scmp.ne.s32.totalorder %s182, %s185
    %p191 = scmp.eq.s32.totalorder %s13, 0
    %p192 = por %p190, %p191
    %p193 = scmp.ne.s32.totalorder %s182, %s185
    %p194 = scmp.eq.s32.totalorder %s18, 1
    %p195 = por %p193, %p194
    %p196 = scmp.ne.s32.totalorder %s185, %s186
    %p197 = scmp.eq.s32.totalorder %s18, 0
    %p198 = por %p196, %p197
    %p199 = scmp.ne.s32.totalorder %s185, %s186
    %p200 = scmp.eq.s32.totalorder %s19, 1
    %p201 = por %p199, %p200
    %p203 = scmp.ne.s32.totalorder %s186, %s202
    %p204 = scmp.eq.s32.totalorder %s19, 0
    %p205 = por %p203, %p204
    %s206 = ssub.s32 %s20, %s32
    %s207 = ssub.s32 %s21, %s28
    %s208 = sor.u32 %s206, %s207
    %p209 = scmp.eq.s32.totalorder %s208, 0
    %s211 = sadd.s32 %s210, 1
    %s212 = scalar_select %p209, %s210, %s211
    %p215 = pneg %p209
    %p216 = scmp.eq.s32.totalorder %s13, 1
    %p217 = por %p215, %p216
    %p218 = scmp.ne.s32.totalorder %s210, %s213
    %p219 = scmp.eq.s32.totalorder %s13, 0
    %p220 = por %p218, %p219
    %p221 = scmp.ne.s32.totalorder %s210, %s213
    %p222 = scmp.eq.s32.totalorder %s18, 1
    %p223 = por %p221, %p222
    %p224 = scmp.ne.s32.totalorder %s213, %s214
    %p225 = scmp.eq.s32.totalorder %s18, 0
    %p226 = por %p224, %p225
    %p227 = scmp.ne.s32.totalorder %s213, %s214
    %p228 = scmp.eq.s32.totalorder %s19, 1
    %p229 = por %p227, %p228
    %p231 = scmp.ne.s32.totalorder %s214, %s230
    %p232 = scmp.eq.s32.totalorder %s19, 0
    %p233 = por %p231, %p232
    %p234 = scmp.le.s32.totalorder 1, %s13
    %p235 = scmp.lt.s32.totalorder %s13, 3
    %p236 = pnand %p234, %p235
    %p237 = pneg %p236
    // Predicated region
    $region9: #{deeplab_forward.25} parent=5 // pred_check
      _
    $region10: #{deeplab_forward.25} parent=5 // pred_check_branch
      %239 = sbr.rel (%p236) target = $region12
    $region11: #{deeplab_forward.25} parent=5 // pred_region
      %s240 = ssub.s32 %s13, 1
      // Predicated region
      $region13: #{deeplab_forward.25} parent=11 // pred_check
        %p241 = pneg %p130
      $region14: #{deeplab_forward.25} parent=11 // pred_check_branch
        %243 = sbr.rel (%p241) target = $region16
      $region15: #{deeplab_forward.25} parent=11 // pred_region
        _
      $region16: #{deeplab_forward.25} parent=11 // pred_fallthru
        _
      // Predicated region
      $region17: #{deeplab_forward.25} parent=11 // pred_check
        %p244 = pneg %p151
      $region18: #{deeplab_forward.25} parent=11 // pred_check_branch
        %246 = sbr.rel (%p244) target = $region20
      $region19: #{deeplab_forward.25} parent=11 // pred_region
        _
      $region20: #{deeplab_forward.25} parent=11 // pred_fallthru
        _
      // Predicated region
      $region21: #{deeplab_forward.25} parent=11 // pred_check
        %p247 = pneg %p172
      $region22: #{deeplab_forward.25} parent=11 // pred_check_branch
        %249 = sbr.rel (%p247) target = $region24
      $region23: #{deeplab_forward.25} parent=11 // pred_region
        _
      $region24: #{deeplab_forward.25} parent=11 // pred_fallthru
        _
    $region12: #{deeplab_forward.25} parent=5 // pred_fallthru
      _
    %p250 = scmp.lt.s32.totalorder %s13, 2
    // Predicated region
    $region25: #{deeplab_forward.25} parent=5 // pred_check
      %p251 = pneg %p250
    $region26: #{deeplab_forward.25} parent=5 // pred_check_branch
      %253 = sbr.rel (%p251) target = $region28
    $region27: #{deeplab_forward.25} parent=5 // pred_region
      // Predicated region
      $region29: #{deeplab_forward.25} parent=27 // pred_check
        %p254 = pneg %p47
      $region30: #{deeplab_forward.25} parent=27 // pred_check_branch
        %256 = sbr.rel (%p254) target = $region32
      $region31: #{deeplab_forward.25} parent=27 // pred_region
        %p257 = scmp.lt.s32.totalorder %s20, 1
        %s258 = scalar_select %p257, %s20, 1
        %p259 = scmp.lt.s32.totalorder %s21, 0
        %s260 = scalar_select %p259, %s21, 0
        %s261 = sadd.s32 %s260, %s258
        %s262 = smul.addr %s261, 2
        %s263 = scalar_lea.vmem %s0, %s262
      $region32: #{deeplab_forward.25} parent=27 // pred_fallthru
        _
      // Predicated region
      $region33: #{deeplab_forward.25} parent=27 // pred_check
        %p264 = pneg %p75
      $region34: #{deeplab_forward.25} parent=27 // pred_check_branch
        %266 = sbr.rel (%p264) target = $region36
      $region35: #{deeplab_forward.25} parent=27 // pred_region
        %p267 = scmp.lt.s32.totalorder %s20, 1
        %s268 = scalar_select %p267, %s20, 1
        %p269 = scmp.lt.s32.totalorder %s21, 0
        %s270 = scalar_select %p269, %s21, 0
        %s271 = sadd.s32 %s270, %s268
        %s272 = smul.addr %s271, 2
        %s273 = scalar_lea.vmem %s1, %s272
      $region36: #{deeplab_forward.25} parent=27 // pred_fallthru
        _
      // Predicated region
      $region37: #{deeplab_forward.25} parent=27 // pred_check
        %p274 = pneg %p103
      $region38: #{deeplab_forward.25} parent=27 // pred_check_branch
        %276 = sbr.rel (%p274) target = $region40
      $region39: #{deeplab_forward.25} parent=27 // pred_region
        %p277 = scmp.lt.s32.totalorder %s20, 1
        %s278 = scalar_select %p277, %s20, 1
        %p279 = scmp.lt.s32.totalorder %s21, 0
        %s280 = scalar_select %p279, %s21, 0
        %s281 = sadd.s32 %s280, %s278
        %s282 = smul.addr %s281, 2
        %s283 = scalar_lea.vmem %s2, %s282
      $region40: #{deeplab_forward.25} parent=27 // pred_fallthru
        _
      // Predicated region
      $region41: #{deeplab_forward.25} parent=27 // pred_check
        %p284 = pneg %p192
      $region42: #{deeplab_forward.25} parent=27 // pred_check_branch
        %286 = sbr.rel (%p284) target = $region44
      $region43: #{deeplab_forward.25} parent=27 // pred_region
        %p287 = scmp.lt.s32.totalorder %s20, 1
        %s288 = scalar_select %p287, %s20, 1
        %s289 = scalar_lea.vmem %s6, %s288
      $region44: #{deeplab_forward.25} parent=27 // pred_fallthru
        _
    $region28: #{deeplab_forward.25} parent=5 // pred_fallthru
      _
    %p290 = scmp.le.s32.totalorder 1, %s13
    %p291 = scmp.lt.s32.totalorder %s13, 3
    %p292 = pnand %p290, %p291
    %p293 = pneg %p292
    // Predicated region
    $region45: #{deeplab_forward.25} parent=5 // pred_check
      _
    $region46: #{deeplab_forward.25} parent=5 // pred_check_branch
      %295 = sbr.rel (%p292) target = $region48
    $region47: #{deeplab_forward.25} parent=5 // pred_region
      %s296 = ssub.s32 %s13, 1
      %p297 = scmp.lt.s32.totalorder %s22, 1
      %s298 = scalar_select %p297, %s22, 1
      %p299 = scmp.lt.s32.totalorder %s23, 0
      %s300 = scalar_select %p299, %s23, 0
      %s301 = sadd.s32 %s300, %s298
      %s302 = smul.addr %s301, 2
      %s303 = scalar_lea.vmem %s0, %s302
      %p304 = pneg %p53
      %p305 = pneg %p50
      %p306 = scmp.lt.s32.totalorder %s22, 1
      %s307 = scalar_select %p306, %s22, 1
      %p308 = scmp.lt.s32.totalorder %s23, 0
      %s309 = scalar_select %p308, %s23, 0
      %s310 = sadd.s32 %s309, %s307
      %s311 = smul.addr %s310, 2
      %s312 = scalar_lea.vmem %s1, %s311
      %p313 = pneg %p81
      %p314 = pneg %p78
      %p315 = scmp.lt.s32.totalorder %s22, 1
      %s316 = scalar_select %p315, %s22, 1
      %p317 = scmp.lt.s32.totalorder %s23, 0
      %s318 = scalar_select %p317, %s23, 0
      %s319 = sadd.s32 %s318, %s316
      %s320 = smul.addr %s319, 2
      %s321 = scalar_lea.vmem %s2, %s320
      %p322 = pneg %p109
      %p323 = pneg %p106
      %p324 = pneg %p130
      %p325 = pneg %p127
      %p326 = pneg %p151
      %p327 = pneg %p148
      %p328 = pneg %p172
      %p329 = pneg %p169
      %p330 = scmp.lt.s32.totalorder %s22, 1
      %s331 = scalar_select %p330, %s22, 1
      %s332 = scalar_lea.vmem %s6, %s331
      %p333 = pneg %p198
      %p334 = pneg %p195
      %p335 = pneg %p226
      %p336 = pneg %p223
      %p337 = scmp.lt.s32.totalorder %s22, 1
      %s338 = scalar_select %p337, %s22, 1
      %p339 = scmp.lt.s32.totalorder %s23, 0
      %s340 = scalar_select %p339, %s23, 0
      %s341 = sadd.s32 %s340, %s338
      %s342 = smul.addr %s341, 2
      %s343 = scalar_lea.vmem %s7, %s342
      %p344 = scmp.lt.s32.totalorder %s22, 1
      %s345 = scalar_select %p344, %s22, 1
      %p346 = scmp.lt.s32.totalorder %s23, 0
      %s347 = scalar_select %p346, %s23, 0
      %s348 = sadd.s32 %s347, %s345
      %s349 = smul.addr %s348, 2
      %s350 = scalar_lea.vmem %s0, %s349
      %p351 = scmp.lt.s32.totalorder %s22, 1
      %s352 = scalar_select %p351, %s22, 1
      %p353 = scmp.lt.s32.totalorder %s23, 0
      %s354 = scalar_select %p353, %s23, 0
      %s355 = sadd.s32 %s354, %s352
      %s356 = smul.addr %s355, 2
      %s357 = scalar_lea.vmem %s1, %s356
      %p358 = scmp.lt.s32.totalorder %s22, 1
      %s359 = scalar_select %p358, %s22, 1
      %p360 = scmp.lt.s32.totalorder %s23, 0
      %s361 = scalar_select %p360, %s23, 0
      %s362 = sadd.s32 %s361, %s359
      %s363 = smul.addr %s362, 2
      %s364 = scalar_lea.vmem %s2, %s363
      %p365 = scmp.lt.s32.totalorder %s22, 1
      %s366 = scalar_select %p365, %s22, 1
      %s367 = scalar_lea.vmem %s6, %s366
      %p368 = scmp.lt.s32.totalorder %s22, 1
      %s369 = scalar_select %p368, %s22, 1
      %p370 = scmp.lt.s32.totalorder %s23, 0
      %s371 = scalar_select %p370, %s23, 0
      %s372 = sadd.s32 %s371, %s369
      %s373 = smul.addr %s372, 2
      %s374 = scalar_lea.vmem %s7, %s373
      %v376 = vld [vmem:[%s350] sm:$0x3]
      %v377 = vld [vmem:[%s3] sm:$0xf]
      %v378 = vld [vmem:[%s3 + $0x4] sm:$0xf]
      %v379 = vld [vmem:[%s3 + $0x8] sm:$0xf]
      %v380 = vld [vmem:[%s3 + $0xc] sm:$0xf]
      %v381 = vld [vmem:[%s357] sm:$0x3]
      %v382 = vld [vmem:[%s4] sm:$0xf]
      %v383 = vld [vmem:[%s4 + $0x4] sm:$0xf]
      %v384 = vld [vmem:[%s4 + $0x8] sm:$0xf]
      %v385 = vld [vmem:[%s4 + $0xc] sm:$0xf]
      %v390 = vunpack.c.l.b16 %v382
      %v391 = vunpack.c.l.b16 %v383
      %v392 = vunpack.c.l.b16 %v384
      %v393 = vunpack.c.l.b16 %v385
      %v394 = vpack.c.b16 %v391, %v390
      %v395 = vpack.c.b16 %v393, %v392
      %vm398 = vcmask 261120
      %v400 = vsel %vm398, %v381, 0
      %402 = vmatpush.bf16.msra.mxu0 0
      %403 = vmatpush.bf16.msra.mxu0 0
      %404 = vmatpush.bf16.msra.mxu0 0
      %405 = vmatpush.bf16.msra.mxu0 0
      %406 = vmatpush.bf16.msra.mxu0 0
      %407 = vmatpush.bf16.msra.mxu0 0
      %408 = vmatpush.bf16.msra.mxu0 %v395
      %409 = vmatpush.bf16.msra.mxu0 %v394
      %410 = vmatmul.bf16.gmra.mxu0 %v400
      %v411 = vpop.f32.mrf.mxu0
      %v412 = vadd.f32 0.0, %v411
      %v413 = vpop.f32.mrf.mxu0
      %414 = vdwg.mxu0
      %v419 = vunpack.c.l.b16 %v377
      %v420 = vunpack.c.l.b16 %v378
      %v421 = vunpack.c.l.b16 %v379
      %v422 = vunpack.c.l.b16 %v380
      %v423 = vpack.c.b16 %v420, %v419
      %v424 = vpack.c.b16 %v422, %v421
      %v428 = vsel %vm398, %v376, 0
      %430 = vmatpush.bf16.msra.mxu0 0
      %431 = vmatpush.bf16.msra.mxu0 0
      %432 = vmatpush.bf16.msra.mxu0 0
      %433 = vmatpush.bf16.msra.mxu0 0
      %434 = vmatpush.bf16.msra.mxu0 0
      %435 = vmatpush.bf16.msra.mxu0 0
      %436 = vmatpush.bf16.msra.mxu0 %v424
      %437 = vmatpush.bf16.msra.mxu0 %v423
      %438 = vmatmul.bf16.gmra.mxu0 %v428
      %v439 = vpop.f32.mrf.mxu0
      %v440 = vadd.f32 %v412, %v439
      %v441 = vpop.f32.mrf.mxu0
      %442 = vdwg.mxu0
      %v443 = vld [vmem:[%s364] sm:$0x3]
      %v444 = vld [vmem:[%s5] sm:$0xf]
      %v445 = vld [vmem:[%s5 + $0x4] sm:$0xf]
      %v446 = vld [vmem:[%s5 + $0x8] sm:$0xf]
      %v447 = vld [vmem:[%s5 + $0xc] sm:$0xf]
      %v452 = vunpack.c.l.b16 %v444
      %v453 = vunpack.c.l.b16 %v445
      %v454 = vunpack.c.l.b16 %v446
      %v455 = vunpack.c.l.b16 %v447
      %v456 = vpack.c.b16 %v453, %v452
      %v457 = vpack.c.b16 %v455, %v454
      %v461 = vsel %vm398, %v443, 0
      %463 = vmatpush.bf16.msra.mxu0 0
      %464 = vmatpush.bf16.msra.mxu0 0
      %465 = vmatpush.bf16.msra.mxu0 0
      %466 = vmatpush.bf16.msra.mxu0 0
      %467 = vmatpush.bf16.msra.mxu0 0
      %468 = vmatpush.bf16.msra.mxu0 0
      %469 = vmatpush.bf16.msra.mxu0 %v457
      %470 = vmatpush.bf16.msra.mxu0 %v456
      %471 = vmatmul.bf16.gmra.mxu0 %v461
      %v472 = vpop.f32.mrf.mxu0
      %v473 = vadd.f32 0.0, %v472
      %v474 = vpop.f32.mrf.mxu0
      %475 = vdwg.mxu0
      %v476 = vadd.f32 %v440, %v473
      %v477 = vld [vmem:[%s367] sm:$0x1]
      %v479 = vperm.slane %v477, 0
      %v481 = vadd.f32 %v476, %v479
      %v482 = vmax.f32 %v481, 0.0
      %v483 = vpack.c.bf16 %v482, %v482
      %vm484 = vcmask 254976
      %485 = vst.msk [vmem:[%s374] sm:$0x3] %vm484, %v483
      %p486 = scmp.lt.s32.totalorder %s22, 1
      %s487 = scalar_select %p486, %s22, 1
      %p488 = scmp.lt.s32.totalorder %s23, 0
      %s489 = scalar_select %p488, %s23, 0
      %s490 = sadd.s32 %s489, %s487
      %s491 = smul.addr %s490, 2
      %s492 = scalar_lea.vmem %s7, %s491
      // Predicated region
      $region49: #{deeplab_forward.25} parent=47 // pred_check
        %p493 = pneg %p223
      $region50: #{deeplab_forward.25} parent=47 // pred_check_branch
        %495 = sbr.rel (%p493) target = $region52
      $region51: #{deeplab_forward.25} parent=47 // pred_region
        _
      $region52: #{deeplab_forward.25} parent=47 // pred_fallthru
        _
    $region48: #{deeplab_forward.25} parent=5 // pred_fallthru
      _
    %p496 = scmp.le.s32.totalorder 2, %s13
    // Predicated region
    $region53: #{deeplab_forward.25} parent=5 // pred_check
      %p497 = pneg %p496
    $region54: #{deeplab_forward.25} parent=5 // pred_check_branch
      %499 = sbr.rel (%p497) target = $region56
    $region55: #{deeplab_forward.25} parent=5 // pred_region
      %s500 = ssub.s32 %s13, 2
      // Predicated region
      $region57: #{deeplab_forward.25} parent=55 // pred_check
        %p501 = pneg %p229
      $region58: #{deeplab_forward.25} parent=55 // pred_check_branch
        %503 = sbr.rel (%p501) target = $region60
      $region59: #{deeplab_forward.25} parent=55 // pred_region
        %p504 = scmp.lt.s32.totalorder %s24, 1
        %s505 = scalar_select %p504, %s24, 1
        %p506 = scmp.lt.s32.totalorder %s25, 0
        %s507 = scalar_select %p506, %s25, 0
        %s508 = sadd.s32 %s507, %s505
        %s509 = smul.addr %s508, 2
        %s510 = scalar_lea.vmem %s7, %s509
      $region60: #{deeplab_forward.25} parent=55 // pred_fallthru
        _
    $region56: #{deeplab_forward.25} parent=5 // pred_fallthru
      _
  $region6: #{deeplab_forward.25} parent=0 // loop_footer
    %s17 = sadd.s32 1, %s13
  $region7: #{deeplab_forward.25} parent=0 // loop_footer_branch
    %12 = sbr.rel target = $region3
  $region8: #{deeplab_forward.25} parent=0 // loop_exit
    _

// kernel: deeplab_forward.27
$region0: #{deeplab_forward.27}
  #allocation0 [shape = 'u32[]', space=smem, size = 0x4, offset = 0x4, fixed_abs, tag = 'smem constant byte address 0x4 - core index']
  #allocation1 [shape = 'u32[72,128]{1,0:T(1,128)}', space=vmem, size = 0x9000, scoped, tag = 'internal scratch']
  #allocation2 [shape = 'f32[6,16]{1,0:T(8,128)}', space=vmem, size = 0x1000, scoped, tag = 'scratch operand']
  #allocation3 [shape = 'f32[6,1]{1,0:T(8,128)}', space=vmem, size = 0x1000, scoped, tag = 'scratch operand']
  %s0 = inlined_call_operand.vmem [shape: bf16[2,16,16], index: 0, kind: input, shape index: {}]
  %s1 = inlined_call_operand.vmem [shape: bf16[16,6], index: 1, kind: input, shape index: {}]
  %s2 = inlined_call_operand.vmem [shape: f32[1,6], index: 2, kind: input, shape index: {}]
  %s3 = inlined_call_operand.vmem [shape: f32[2,16,1], index: 3, kind: input, shape index: {}]
  %s4 = inlined_call_operand.vmem [shape: f32[2,6,16], index: 4, kind: output, shape index: {}]
  %s5 = sld [smem:[#allocation0]]
  $region57: #{deeplab_forward.27} parent=0
    _
  %s7 = ssub.s32 1, %s5
  %s8 = scalar_select 0, %s7, %s5
  loop: start=0, step=1, limit=4
  $region2: #{deeplab_forward.27} parent=0 // loop_pre_header
    _
  $region3: #{deeplab_forward.27} parent=0 // loop_header
    %s10 = sphi 0, %s14
    %p11 = scmp.ge.s32.totalorder %s10, 4
    %s17 = sphi 0, %s29
    %s18 = sphi 0, %s25
    %s19 = sphi 0, %s17
    %s20 = sphi 0, %s18
    %s21 = sphi 0, %s19
    %s22 = sphi 0, %s20
    %s34 = sphi 0, %s36
    %s37 = sphi 0, %s34
    %s38 = sphi 0, %s37
    %s54 = sphi 0, %s38
    %s58 = sphi 0, %s58
    %s60 = sphi 0, %s58
    %s61 = sphi 0, %s60
    %s75 = sphi 0, %s61
    %s79 = sphi 0, %s79
    %s81 = sphi 0, %s79
    %s82 = sphi 0, %s81
    %s96 = sphi 0, %s82
    %s104 = sphi 0, %s106
    %s107 = sphi 0, %s104
    %s108 = sphi 0, %s107
    %s124 = sphi 0, %s108
    %s130 = sphi 0, %s132
    %s133 = sphi 0, %s130
    %s134 = sphi 0, %s133
    %s150 = sphi 0, %s134
  $region4: #{deeplab_forward.27} parent=0 // loop_header_branch
    %13 = sbr.rel (%p11) target = $region8
  $region5: #{deeplab_forward.27} parent=0 // loop_body
    %s15 = ssub.s32 %s10, 1
    %s16 = ssub.s32 %s10, 2
    %s23 = sadd.s32 1, %s18
    %p24 = scmp.ge.s32.totalorder %s23, 1
    %s25 = scalar_select %p24, 0, %s23
    %s26 = sadd.s32 1, %s17
    %s27 = scalar_select %p24, %s26, %s17
    %p28 = scmp.ge.s32.totalorder %s27, 2
    %s29 = scalar_select %p28, 0, %s27
    %s30 = ssub.s32 %s17, %s29
    %s31 = ssub.s32 %s18, %s25
    %s32 = sor.u32 %s30, %s31
    %p33 = scmp.eq.s32.totalorder %s32, 0
    %s35 = sadd.s32 %s34, 1
    %s36 = scalar_select %p33, %s34, %s35
    %p39 = pneg %p33
    %p40 = scmp.eq.s32.totalorder %s10, 1
    %p41 = por %p39, %p40
    %p42 = scmp.ne.s32.totalorder %s34, %s37
    %p43 = scmp.eq.s32.totalorder %s10, 0
    %p44 = por %p42, %p43
    %p45 = scmp.ne.s32.totalorder %s34, %s37
    %p46 = scmp.eq.s32.totalorder %s15, 1
    %p47 = por %p45, %p46
    %p48 = scmp.ne.s32.totalorder %s37, %s38
    %p49 = scmp.eq.s32.totalorder %s15, 0
    %p50 = por %p48, %p49
    %p51 = scmp.ne.s32.totalorder %s37, %s38
    %p52 = scmp.eq.s32.totalorder %s16, 1
    %p53 = por %p51, %p52
    %p55 = scmp.ne.s32.totalorder %s38, %s54
    %p56 = scmp.eq.s32.totalorder %s16, 0
    %p57 = por %p55, %p56
    %s59 = sadd.s32 %s58, 1
    %p62 = scmp.eq.s32.totalorder %s10, 1
    %p63 = scmp.ne.s32.totalorder %s58, %s60
    %p64 = scmp.eq.s32.totalorder %s10, 0
    %p65 = por %p63, %p64
    %p66 = scmp.ne.s32.totalorder %s58, %s60
    %p67 = scmp.eq.s32.totalorder %s15, 1
    %p68 = por %p66, %p67
    %p69 = scmp.ne.s32.totalorder %s60, %s61
    %p70 = scmp.eq.s32.totalorder %s15, 0
    %p71 = por %p69, %p70
    %p72 = scmp.ne.s32.totalorder %s60, %s61
    %p73 = scmp.eq.s32.totalorder %s16, 1
    %p74 = por %p72, %p73
    %p76 = scmp.ne.s32.totalorder %s61, %s75
    %p77 = scmp.eq.s32.totalorder %s16, 0
    %p78 = por %p76, %p77
    %s80 = sadd.s32 %s79, 1
    %p83 = scmp.eq.s32.totalorder %s10, 1
    %p84 = scmp.ne.s32.totalorder %s79, %s81
    %p85 = scmp.eq.s32.totalorder %s10, 0
    %p86 = por %p84, %p85
    %p87 = scmp.ne.s32.totalorder %s79, %s81
    %p88 = scmp.eq.s32.totalorder %s15, 1
    %p89 = por %p87, %p88
    %p90 = scmp.ne.s32.totalorder %s81, %s82
    %p91 = scmp.eq.s32.totalorder %s15, 0
    %p92 = por %p90, %p91
    %p93 = scmp.ne.s32.totalorder %s81, %s82
    %p94 = scmp.eq.s32.totalorder %s16, 1
    %p95 = por %p93, %p94
    %p97 = scmp.ne.s32.totalorder %s82, %s96
    %p98 = scmp.eq.s32.totalorder %s16, 0
    %p99 = por %p97, %p98
    %s100 = ssub.s32 %s17, %s29
    %s101 = ssub.s32 %s18, %s25
    %s102 = sor.u32 %s100, %s101
    %p103 = scmp.eq.s32.totalorder %s102, 0
    %s105 = sadd.s32 %s104, 1
    %s106 = scalar_select %p103, %s104, %s105
    %p109 = pneg %p103
    %p110 = scmp.eq.s32.totalorder %s10, 1
    %p111 = por %p109, %p110
    %p112 = scmp.ne.s32.totalorder %s104, %s107
    %p113 = scmp.eq.s32.totalorder %s10, 0
    %p114 = por %p112, %p113
    %p115 = scmp.ne.s32.totalorder %s104, %s107
    %p116 = scmp.eq.s32.totalorder %s15, 1
    %p117 = por %p115, %p116
    %p118 = scmp.ne.s32.totalorder %s107, %s108
    %p119 = scmp.eq.s32.totalorder %s15, 0
    %p120 = por %p118, %p119
    %p121 = scmp.ne.s32.totalorder %s107, %s108
    %p122 = scmp.eq.s32.totalorder %s16, 1
    %p123 = por %p121, %p122
    %p125 = scmp.ne.s32.totalorder %s108, %s124
    %p126 = scmp.eq.s32.totalorder %s16, 0
    %p127 = por %p125, %p126
    %s128 = ssub.s32 %s17, %s29
    %p129 = scmp.eq.s32.totalorder %s128, 0
    %s131 = sadd.s32 %s130, 1
    %s132 = scalar_select %p129, %s130, %s131
    %p135 = pneg %p129
    %p136 = scmp.eq.s32.totalorder %s10, 1
    %p137 = por %p135, %p136
    %p138 = scmp.ne.s32.totalorder %s130, %s133
    %p139 = scmp.eq.s32.totalorder %s10, 0
    %p140 = por %p138, %p139
    %p141 = scmp.ne.s32.totalorder %s130, %s133
    %p142 = scmp.eq.s32.totalorder %s15, 1
    %p143 = por %p141, %p142
    %p144 = scmp.ne.s32.totalorder %s133, %s134
    %p145 = scmp.eq.s32.totalorder %s15, 0
    %p146 = por %p144, %p145
    %p147 = scmp.ne.s32.totalorder %s133, %s134
    %p148 = scmp.eq.s32.totalorder %s16, 1
    %p149 = por %p147, %p148
    %p151 = scmp.ne.s32.totalorder %s134, %s150
    %p152 = scmp.eq.s32.totalorder %s16, 0
    %p153 = por %p151, %p152
    %p154 = scmp.le.s32.totalorder 1, %s10
    %p155 = scmp.lt.s32.totalorder %s10, 3
    %p156 = pnand %p154, %p155
    %p157 = pneg %p156
    // Predicated region
    $region9: #{deeplab_forward.27} parent=5 // pred_check
      _
    $region10: #{deeplab_forward.27} parent=5 // pred_check_branch
      %159 = sbr.rel (%p156) target = $region12
    $region11: #{deeplab_forward.27} parent=5 // pred_region
      %s160 = ssub.s32 %s10, 1
      // Predicated region
      $region13: #{deeplab_forward.27} parent=11 // pred_check
        %p161 = pneg %p71
      $region14: #{deeplab_forward.27} parent=11 // pred_check_branch
        %163 = sbr.rel (%p161) target = $region16
      $region15: #{deeplab_forward.27} parent=11 // pred_region
        _
      $region16: #{deeplab_forward.27} parent=11 // pred_fallthru
        _
      // Predicated region
      $region17: #{deeplab_forward.27} parent=11 // pred_check
        %p164 = pneg %p92
      $region18: #{deeplab_forward.27} parent=11 // pred_check_branch
        %166 = sbr.rel (%p164) target = $region20
      $region19: #{deeplab_forward.27} parent=11 // pred_region
        _
      $region20: #{deeplab_forward.27} parent=11 // pred_fallthru
        _
    $region12: #{deeplab_forward.27} parent=5 // pred_fallthru
      _
    %p167 = scmp.lt.s32.totalorder %s10, 2
    // Predicated region
    $region21: #{deeplab_forward.27} parent=5 // pred_check
      %p168 = pneg %p167
    $region22: #{deeplab_forward.27} parent=5 // pred_check_branch
      %170 = sbr.rel (%p168) target = $region24
    $region23: #{deeplab_forward.27} parent=5 // pred_region
      // Predicated region
      $region25: #{deeplab_forward.27} parent=23 // pred_check
        %p171 = pneg %p44
      $region26: #{deeplab_forward.27} parent=23 // pred_check_branch
        %173 = sbr.rel (%p171) target = $region28
      $region27: #{deeplab_forward.27} parent=23 // pred_region
        %s174 = smul.u32 2, %s18
        %p175 = scmp.lt.s32.totalorder %s17, 1
        %s176 = scalar_select %p175, %s17, 1
        %p177 = scmp.lt.s32.totalorder %s174, 1
        %s178 = scalar_select %p177, %s174, 1
        %s179 = smul.addr %s176, 2
        %s180 = sadd.s32 %s178, %s179
        %s181 = smul.addr %s180, 4
        %s182 = scalar_lea.vmem %s0, %s181
        %s183 = smul.u32 2, %s18
      $region28: #{deeplab_forward.27} parent=23 // pred_fallthru
        _
      // Predicated region
      $region29: #{deeplab_forward.27} parent=23 // pred_check
        %p184 = pneg %p114
      $region30: #{deeplab_forward.27} parent=23 // pred_check_branch
        %186 = sbr.rel (%p184) target = $region32
      $region31: #{deeplab_forward.27} parent=23 // pred_region
        %s187 = smul.u32 2, %s18
        %p188 = scmp.lt.s32.totalorder %s17, 1
        %s189 = scalar_select %p188, %s17, 1
        %p190 = scmp.lt.s32.totalorder %s187, 1
        %s191 = scalar_select %p190, %s187, 1
        %s192 = smul.addr %s189, 2
        %s193 = sadd.s32 %s191, %s192
        %s194 = smul.addr %s193, 8
        %s195 = scalar_lea.vmem %s3, %s194
        %s196 = smul.u32 2, %s18
      $region32: #{deeplab_forward.27} parent=23 // pred_fallthru
        _
    $region24: #{deeplab_forward.27} parent=5 // pred_fallthru
      _
    %p197 = scmp.le.s32.totalorder 1, %s10
    %p198 = scmp.lt.s32.totalorder %s10, 3
    %p199 = pnand %p197, %p198
    %p200 = pneg %p199
    // Predicated region
    $region33: #{deeplab_forward.27} parent=5 // pred_check
      _
    $region34: #{deeplab_forward.27} parent=5 // pred_check_branch
      %202 = sbr.rel (%p199) target = $region36
    $region35: #{deeplab_forward.27} parent=5 // pred_region
      %s203 = ssub.s32 %s10, 1
      %s204 = smul.u32 2, %s20
      %p205 = scmp.lt.s32.totalorder %s19, 1
      %s206 = scalar_select %p205, %s19, 1
      %p207 = scmp.lt.s32.totalorder %s204, 1
      %s208 = scalar_select %p207, %s204, 1
      %s209 = smul.addr %s206, 2
      %s210 = sadd.s32 %s208, %s209
      %s211 = smul.addr %s210, 4
      %s212 = scalar_lea.vmem %s0, %s211
      %p213 = pneg %p50
      %p214 = pneg %p47
      %p215 = pneg %p71
      %p216 = pneg %p68
      %p217 = pneg %p92
      %p218 = pneg %p89
      %s219 = smul.u32 2, %s20
      %p220 = scmp.lt.s32.totalorder %s19, 1
      %s221 = scalar_select %p220, %s19, 1
      %p222 = scmp.lt.s32.totalorder %s219, 1
      %s223 = scalar_select %p222, %s219, 1
      %s224 = smul.addr %s221, 2
      %s225 = sadd.s32 %s223, %s224
      %s226 = smul.addr %s225, 8
      %s227 = scalar_lea.vmem %s3, %s226
      %p228 = pneg %p120
      %p229 = pneg %p117
      %p230 = pneg %p146
      %p231 = pneg %p143
      %p232 = scmp.lt.s32.totalorder %s19, 1
      %s233 = scalar_select %p232, %s19, 1
      %s234 = smul.addr %s233, 8
      %s235 = scalar_lea.vmem %s4, %s234
      %s236 = smul.u32 2, %s20
      %p237 = scmp.lt.s32.totalorder %s19, 1
      %s238 = scalar_select %p237, %s19, 1
      %p239 = scmp.lt.s32.totalorder %s236, 1
      %s240 = scalar_select %p239, %s236, 1
      %s241 = smul.addr %s238, 2
      %s242 = sadd.s32 %s240, %s241
      %s243 = smul.addr %s242, 4
      %s244 = scalar_lea.vmem %s0, %s243
      %s245 = smul.u32 2, %s20
      %s246 = smul.u32 2, %s20
      %p247 = scmp.lt.s32.totalorder %s19, 1
      %s248 = scalar_select %p247, %s19, 1
      %p249 = scmp.lt.s32.totalorder %s246, 1
      %s250 = scalar_select %p249, %s246, 1
      %s251 = smul.addr %s248, 2
      %s252 = sadd.s32 %s250, %s251
      %s253 = smul.addr %s252, 8
      %s254 = scalar_lea.vmem %s3, %s253
      %s255 = smul.u32 2, %s20
      %p256 = scmp.lt.s32.totalorder %s19, 1
      %s257 = scalar_select %p256, %s19, 1
      %s258 = smul.addr %s257, 8
      %s259 = scalar_lea.vmem %s4, %s258
      %p261 = scmp.eq.s32.totalorder %s20, 0
      // Predicated region
      $region37: #{deeplab_forward.27} parent=35 // pred_check
        %p262 = pneg %p261
      $region38: #{deeplab_forward.27} parent=35 // pred_check_branch
        %264 = sbr.rel (%p262) target = $region40
      $region39: #{deeplab_forward.27} parent=35 // pred_region
        %vm265 = vcmask 128000
        %266 = vst.msk [vmem:[#allocation2] sm:$0x3f] %vm265, 0.0
        %vm267 = vcmask 5120
        %268 = vst.msk [vmem:[#allocation3] sm:$0x3f] %vm267, 0.0
      $region40: #{deeplab_forward.27} parent=35 // pred_fallthru
        _
      %v269 = vld [vmem:[%s244] sm:$0xf]
      %v270 = vld [vmem:[%s244 + $0x4] sm:$0xf]
      %v271 = vld [vmem:[%s1] sm:$0xf]
      %v272 = vld [vmem:[%s1 + $0x4] sm:$0xf]
      %v273 = vld [vmem:[%s2] sm:$0x1]
      %v275 = vperm.slane %v273, 0
      %v279 = vunpack.c.l.b16 %v269
      %v280 = vunpack.c.l.b16 %v270
      %v281 = vpack.c.b16 %v280, %v279
      %v284 = vunpack.c.l.b16 %v271
      %v285 = vunpack.c.l.b16 %v272
      %v286 = vpack.c.b16 %v285, %v284
      %vm288 = vcmask 130048
      %v290 = vsel %vm288, %v281, 0
      %292 = vmatpush.bf16.msra.mxu0 0
      %293 = vmatpush.bf16.msra.mxu0 0
      %294 = vmatpush.bf16.msra.mxu0 0
      %295 = vmatpush.bf16.msra.mxu0 0
      %296 = vmatpush.bf16.msra.mxu0 0
      %297 = vmatpush.bf16.msra.mxu0 0
      %298 = vmatpush.bf16.msra.mxu0 0
      %299 = vmatpush.bf16.msra.mxu0 %v286
      %300 = vmatmul.bf16.gmra.mxu0 %v290
      %v301 = vpop.f32.mrf.mxu0
      %v302 = vadd.f32 %v275, %v301
      %v303 = vpop.f32.mrf.mxu0
      %v304 = vadd.f32 %v275, %v303
      %305 = vdwg.mxu0
      %vm306 = vcmask 48128
      %v307 = vsel %vm306, %v302, -inf
      %308 = vmax.xlane.f32.xlu0 %v307
      %v309 = vpop.xlane.xlu0 %308
      %v310 = vsel %vm306, %v304, -inf
      %311 = vmax.xlane.f32.xlu0 %v310
      %v312 = vpop.xlane.xlu0 %311
      %v313 = vlaneseq
      %v314 = vand.u32 %v313, 127
      %vm315 = vcmp.eq.f32.partialorder %v302, %v309
      %vm316 = vcmp.eq.f32.partialorder %v304, %v312
      %v317 = vsel %vm315, %v314, 6
      %v318 = vsel %vm316, %v314, 6
      %v319 = vsel %vm306, %v317, 2147483647
      %v320 = vand.u32 %v319, 65535
      %v321 = vshra.s32 %v319, 16
      %v322 = vcvt.s32.f32 %v320
      %v323 = vcvt.s32.f32 %v321
      %324 = vmin.xlane.f32.xlu0 %v323
      %v325 = vpop.xlane.xlu0 %324
      %vm326 = vcmp.eq.f32.partialorder %v323, %v325
      %v327 = vsel %vm326, %v322, inf
      %328 = vmin.xlane.f32.xlu0 %v327
      %v329 = vpop.xlane.xlu0 %328
      %v330 = vcvt.f32.s32 %v329
      %v331 = vcvt.f32.s32 %v325
      %v332 = vshll.u32 %v331, 16
      %v333 = vadd.s32 %v332, %v330
      %v334 = vsel %vm306, %v318, 2147483647
      %v335 = vand.u32 %v334, 65535
      %v336 = vshra.s32 %v334, 16
      %v337 = vcvt.s32.f32 %v335
      %v338 = vcvt.s32.f32 %v336
      %339 = vmin.xlane.f32.xlu0 %v338
      %v340 = vpop.xlane.xlu0 %339
      %vm341 = vcmp.eq.f32.partialorder %v338, %v340
      %v342 = vsel %vm341, %v337, inf
      %343 = vmin.xlane.f32.xlu0 %v342
      %v344 = vpop.xlane.xlu0 %343
      %v345 = vcvt.f32.s32 %v344
      %v346 = vcvt.f32.s32 %v340
      %v347 = vshll.u32 %v346, 16
      %v348 = vadd.s32 %v347, %v345
      %vm349 = vcmp.eq.s32.totalorder %v333, %v314
      %vm350 = vcmp.eq.s32.totalorder %v348, %v314
      %v351 = vsel %vm349, 1, 0
      %v352 = vsel %vm350, 1, 0
      %v353 = vcvt.s32.f32 %v351
      %v354 = vcvt.s32.f32 %v352
      %v355 = vld [vmem:[%s254] sm:$0xff]
      %v356 = vld [vmem:[%s254 + $0x8] sm:$0xff]
      %358 = vset.pattern.permute.xlu0 0
      %359 = vperm.xlu0 %358, %v355
      %v360 = vpop.permute.xlu0 %359
      %363 = vset.pattern.permute.xlu0 0
      %364 = vperm.xlu0 %363, %v356
      %v365 = vpop.permute.xlu0 %364
      %v367 = vmul.f32 %v353, %v360
      %v368 = vmul.f32 %v354, %v365
      %v369 = vld [vmem:[#allocation2] sm:$0x3f]
      %v370 = vunpack.c.l.bf16 %v269
      %v371 = vunpack.c.l.bf16 %v270
      %372 = vxpose.xlu0.b32.start [1/16] %v367, 128
      %373 = vxpose.xlu0.b32.cont [2/16] %v368, 128
      %374 = vxpose.xlu0.b32.cont [3/16] 0.0, 128
      %375 = vxpose.xlu0.b32.cont [4/16] 0.0, 128
      %376 = vxpose.xlu0.b32.cont [5/16] 0.0, 128
      %377 = vxpose.xlu0.b32.cont [6/16] 0.0, 128
      %378 = vxpose.xlu0.b32.cont [7/16] 0.0, 128
      %379 = vxpose.xlu0.b32.cont [8/16] 0.0, 128
      %380 = vxpose.xlu0.b32.cont [9/16] 0.0, 128
      %381 = vxpose.xlu0.b32.cont [10/16] 0.0, 128
      %382 = vxpose.xlu0.b32.cont [11/16] 0.0, 128
      %383 = vxpose.xlu0.b32.cont [12/16] 0.0, 128
      %384 = vxpose.xlu0.b32.cont [13/16] 0.0, 128
      %385 = vxpose.xlu0.b32.cont [14/16] 0.0, 128
      %386 = vxpose.xlu0.b32.cont [15/16] 0.0, 128
      %387 = vxpose.xlu0.b32.end [16/16] 0.0, 128
      %v388 = vpop.trf.xlu0
      %v389 = vpop.trf.xlu0
      %v390 = vpop.trf.xlu0
      %v391 = vpop.trf.xlu0
      %v392 = vpop.trf.xlu0
      %v393 = vpop.trf.xlu0
      %v394 = vpop.trf.xlu0
      %v395 = vpop.trf.xlu0
      %v396 = vpop.trf.xlu0
      %v397 = vpop.trf.xlu0
      %v398 = vpop.trf.xlu0
      %v399 = vpop.trf.xlu0
      %v400 = vpop.trf.xlu0
      %v401 = vpop.trf.xlu0
      %v402 = vpop.trf.xlu0
      %v403 = vpop.trf.xlu0
      %v405 = vsel %vm288, %v388, 0
      %407 = vmatpush.msra.mxu0 0.0
      %408 = vmatpush.msra.mxu0 0.0
      %409 = vmatpush.msra.mxu0 0.0
      %410 = vmatpush.msra.mxu0 0.0
      %411 = vmatpush.msra.mxu0 0.0
      %412 = vmatpush.msra.mxu0 0.0
      %413 = vmatpush.msra.mxu0 0.0
      %414 = vmatpush.msra.mxu0 0.0
      %415 = vmatpush.msra.mxu0 0.0
      %416 = vmatpush.msra.mxu0 0.0
      %417 = vmatpush.msra.mxu0 0.0
      %418 = vmatpush.msra.mxu0 0.0
      %419 = vmatpush.msra.mxu0 0.0
      %420 = vmatpush.msra.mxu0 0.0
      %421 = vmatpush.msra.mxu0 %v371
      %422 = vmatpush.msra.mxu0 %v370
      %423 = vmatmul.f32.gmra.mxu0 %v405
      %v424 = vpop.f32.mrf.mxu0
      %v425 = vadd.f32 0.0, %v424
      %426 = vdwg.mxu0
      %v427 = vadd.f32 %v369, %v425
      %vm428 = vcmask 128000
      %429 = vst.msk [vmem:[#allocation2] sm:$0x3f] %vm428, %v427
      %v430 = vld [vmem:[#allocation3] sm:$0x3f]
      %431 = vmatpush.msra.mxu0 0.0
      %432 = vmatpush.msra.mxu0 0.0
      %433 = vmatpush.msra.mxu0 0.0
      %434 = vmatpush.msra.mxu0 0.0
      %435 = vmatpush.msra.mxu0 0.0
      %436 = vmatpush.msra.mxu0 0.0
      %437 = vmatpush.msra.mxu0 0.0
      %438 = vmatpush.msra.mxu0 0.0
      %439 = vmatpush.msra.mxu0 0.0
      %440 = vmatpush.msra.mxu0 0.0
      %441 = vmatpush.msra.mxu0 0.0
      %442 = vmatpush.msra.mxu0 0.0
      %443 = vmatpush.msra.mxu0 0.0
      %444 = vmatpush.msra.mxu0 0.0
      %445 = vmatpush.msra.mxu0 1.0
      %446 = vmatpush.msra.mxu0 1.0
      %447 = vmatmul.f32.gmra.mxu0 %v405
      %v448 = vpop.f32.mrf.mxu0
      %v449 = vadd.f32 0.0, %v448
      %450 = vdwg.mxu0
      %v451 = vadd.f32 %v430, %v449
      %vm452 = vcmask 5120
      %453 = vst.msk [vmem:[#allocation3] sm:$0x3f] %vm452, %v451
      // Predicated region
      $region41: #{deeplab_forward.27} parent=35 // pred_check
        %p454 = pneg %p261
      $region42: #{deeplab_forward.27} parent=35 // pred_check_branch
        %456 = sbr.rel (%p454) target = $region44
      $region43: #{deeplab_forward.27} parent=35 // pred_region
        %v457 = vld [vmem:[#allocation2] sm:$0x3f]
        %v458 = vld [vmem:[#allocation3] sm:$0x3f]
        %v459 = vadd.f32 %v458, 1e-05
        %v460 = vrcp.pop %v459
        %v461 = vmul.f32 %v459, %v460
        %v462 = vsub.f32 1.0, %v461
        %v463 = vmul.f32 %v460, %v462
        %v464 = vadd.f32 %v460, %v463
        %vm465 = vweird.f32 %v459
        %vm466 = vweird.f32 %v460
        %vm467 = vmor %vm465, %vm466
        %v468 = vsel %vm467, %v460, %v464
        %v469 = vand.u32 2147483647, %v459
        %vm470 = vcmp.eq.f32.partialorder %v469, 8.507059e+37
        %v471 = vand.u32 %v459, 2147483648
        %v472 = vor.u32 1.1754944e-38, %v471
        %v473 = vsel %vm470, %v472, %v468
        %v474 = vmul.f32 1.0, %v473
        %476 = vset.pattern.permute.xlu0 0
        %477 = vperm.xlu0 %476, %v474
        %v478 = vpop.permute.xlu0 %477
        %v480 = vmul.f32 %v457, %v478
        %481 = vst.msk [vmem:[%s259] sm:$0x3f] %vm428, %v480
      $region44: #{deeplab_forward.27} parent=35 // pred_fallthru
        _
      %p482 = scmp.lt.s32.totalorder %s19, 1
      %s483 = scalar_select %p482, %s19, 1
      %s484 = smul.addr %s483, 8
      %s485 = scalar_lea.vmem %s4, %s484
      // Predicated region
      $region45: #{deeplab_forward.27} parent=35 // pred_check
        %p486 = pneg %p143
      $region46: #{deeplab_forward.27} parent=35 // pred_check_branch
        %488 = sbr.rel (%p486) target = $region48
      $region47: #{deeplab_forward.27} parent=35 // pred_region
        _
      $region48: #{deeplab_forward.27} parent=35 // pred_fallthru
        _
    $region36: #{deeplab_forward.27} parent=5 // pred_fallthru
      _
    %p489 = scmp.le.s32.totalorder 2, %s10
    // Predicated region
    $region49: #{deeplab_forward.27} parent=5 // pred_check
      %p490 = pneg %p489
    $region50: #{deeplab_forward.27} parent=5 // pred_check_branch
      %492 = sbr.rel (%p490) target = $region52
    $region51: #{deeplab_forward.27} parent=5 // pred_region
      %s493 = ssub.s32 %s10, 2
      // Predicated region
      $region53: #{deeplab_forward.27} parent=51 // pred_check
        %p494 = pneg %p149
      $region54: #{deeplab_forward.27} parent=51 // pred_check_branch
        %496 = sbr.rel (%p494) target = $region56
      $region55: #{deeplab_forward.27} parent=51 // pred_region
        %p497 = scmp.lt.s32.totalorder %s21, 1
        %s498 = scalar_select %p497, %s21, 1
        %s499 = smul.addr %s498, 8
        %s500 = scalar_lea.vmem %s4, %s499
      $region56: #{deeplab_forward.27} parent=51 // pred_fallthru
        _
    $region52: #{deeplab_forward.27} parent=5 // pred_fallthru
      _
  $region6: #{deeplab_forward.27} parent=0 // loop_footer
    %s14 = sadd.s32 1, %s10
  $region7: #{deeplab_forward.27} parent=0 // loop_footer_branch
    %9 = sbr.rel target = $region3
  $region8: #{deeplab_forward.27} parent=0 // loop_exit
    _

// kernel: deeplab_forward.28
$region0: #{deeplab_forward.28}
  #allocation0 [shape = 'u32[]', space=smem, size = 0x4, offset = 0x4, fixed_abs, tag = 'smem constant byte address 0x4 - core index']
  #allocation1 [shape = 'u32[72,128]{1,0:T(1,128)}', space=vmem, size = 0x9000, scoped, tag = 'internal scratch']
  %s0 = inlined_call_operand.vmem [shape: bf16[2,16,16], index: 0, kind: input, shape index: {}]
  %s1 = inlined_call_operand.vmem [shape: f32[2,6,16], index: 1, kind: input, shape index: {}]
  %s2 = inlined_call_operand.vmem [shape: bf16[16,16], index: 2, kind: input, shape index: {}]
  %s3 = inlined_call_operand.vmem [shape: f32[1,16], index: 3, kind: input, shape index: {}]
  %s4 = inlined_call_operand.vmem [shape: f32[16,128], index: 4, kind: input, shape index: {}]
  %s5 = inlined_call_operand.vmem [shape: f32[1,128], index: 5, kind: input, shape index: {}]
  %s6 = inlined_call_operand.vmem [shape: f32[2,16,128], index: 6, kind: output, shape index: {0}]
  %s7 = inlined_call_operand.hbm [shape: f32[2,16,16], index: 7, kind: output, shape index: {1}]
  %8 = xla_tuple %s6, %s7
  %s9 = sld [smem:[#allocation0]]
  $region65: #{deeplab_forward.28} parent=0
    _
  %s11 = ssub.s32 1, %s9
  %s12 = scalar_select 0, %s11, %s9
  $region1: #{deeplab_forward.28} parent=0
    #allocation2 [shape = 'u8[16384]{0}', space=vmem, size = 0x4000, scoped, tag = 'output window, operand 1']
    #allocation3 [shape = 's32[2]{0}', space=sflag, size = 0x8, scoped, tag = 'scoped memory for deeplab_forward.28']
    %13 = vsyncpa [#allocation3], 0
    %s14 = scalar_lea.sflag [#allocation3], 1
    %15 = vsyncpa %s14, 0
    loop: start=0, step=1, limit=4
    $region2: #{deeplab_forward.28} parent=1 // loop_pre_header
      _
    $region3: #{deeplab_forward.28} parent=1 // loop_header
      %s17 = sphi 0, %s21
      %p18 = scmp.ge.s32.totalorder %s17, 4
      %s24 = sphi 0, %s36
      %s25 = sphi 0, %s32
      %s26 = sphi 0, %s24
      %s27 = sphi 0, %s25
      %s28 = sphi 0, %s26
      %s29 = sphi 0, %s27
      %s41 = sphi 0, %s43
      %s44 = sphi 0, %s41
      %s45 = sphi 0, %s44
      %s61 = sphi 0, %s45
      %s67 = sphi 0, %s69
      %s70 = sphi 0, %s67
      %s71 = sphi 0, %s70
      %s87 = sphi 0, %s71
      %s91 = sphi 0, %s91
      %s93 = sphi 0, %s91
      %s94 = sphi 0, %s93
      %s108 = sphi 0, %s94
      %s112 = sphi 0, %s112
      %s114 = sphi 0, %s112
      %s115 = sphi 0, %s114
      %s129 = sphi 0, %s115
      %s133 = sphi 0, %s133
      %s135 = sphi 0, %s133
      %s136 = sphi 0, %s135
      %s150 = sphi 0, %s136
      %s154 = sphi 0, %s154
      %s156 = sphi 0, %s154
      %s157 = sphi 0, %s156
      %s171 = sphi 0, %s157
      %s179 = sphi 0, %s181
      %s182 = sphi 0, %s179
      %s183 = sphi 0, %s182
      %s199 = sphi 0, %s183
      %s207 = sphi 0, %s209
      %s210 = sphi 0, %s207
      %s211 = sphi 0, %s210
      %s227 = sphi 0, %s211
    $region4: #{deeplab_forward.28} parent=1 // loop_header_branch
      %20 = sbr.rel (%p18) target = $region8
    $region5: #{deeplab_forward.28} parent=1 // loop_body
      %s22 = ssub.s32 %s17, 1
      %s23 = ssub.s32 %s17, 2
      %s30 = sadd.s32 1, %s25
      %p31 = scmp.ge.s32.totalorder %s30, 1
      %s32 = scalar_select %p31, 0, %s30
      %s33 = sadd.s32 1, %s24
      %s34 = scalar_select %p31, %s33, %s24
      %p35 = scmp.ge.s32.totalorder %s34, 2
      %s36 = scalar_select %p35, 0, %s34
      %s37 = ssub.s32 %s24, %s36
      %s38 = ssub.s32 %s25, %s32
      %s39 = sor.u32 %s37, %s38
      %p40 = scmp.eq.s32.totalorder %s39, 0
      %s42 = sadd.s32 %s41, 1
      %s43 = scalar_select %p40, %s41, %s42
      %p46 = pneg %p40
      %p47 = scmp.eq.s32.totalorder %s17, 1
      %p48 = por %p46, %p47
      %p49 = scmp.ne.s32.totalorder %s41, %s44
      %p50 = scmp.eq.s32.totalorder %s17, 0
      %p51 = por %p49, %p50
      %p52 = scmp.ne.s32.totalorder %s41, %s44
      %p53 = scmp.eq.s32.totalorder %s22, 1
      %p54 = por %p52, %p53
      %p55 = scmp.ne.s32.totalorder %s44, %s45
      %p56 = scmp.eq.s32.totalorder %s22, 0
      %p57 = por %p55, %p56
      %p58 = scmp.ne.s32.totalorder %s44, %s45
      %p59 = scmp.eq.s32.totalorder %s23, 1
      %p60 = por %p58, %p59
      %p62 = scmp.ne.s32.totalorder %s45, %s61
      %p63 = scmp.eq.s32.totalorder %s23, 0
      %p64 = por %p62, %p63
      %s65 = ssub.s32 %s24, %s36
      %p66 = scmp.eq.s32.totalorder %s65, 0
      %s68 = sadd.s32 %s67, 1
      %s69 = scalar_select %p66, %s67, %s68
      %p72 = pneg %p66
      %p73 = scmp.eq.s32.totalorder %s17, 1
      %p74 = por %p72, %p73
      %p75 = scmp.ne.s32.totalorder %s67, %s70
      %p76 = scmp.eq.s32.totalorder %s17, 0
      %p77 = por %p75, %p76
      %p78 = scmp.ne.s32.totalorder %s67, %s70
      %p79 = scmp.eq.s32.totalorder %s22, 1
      %p80 = por %p78, %p79
      %p81 = scmp.ne.s32.totalorder %s70, %s71
      %p82 = scmp.eq.s32.totalorder %s22, 0
      %p83 = por %p81, %p82
      %p84 = scmp.ne.s32.totalorder %s70, %s71
      %p85 = scmp.eq.s32.totalorder %s23, 1
      %p86 = por %p84, %p85
      %p88 = scmp.ne.s32.totalorder %s71, %s87
      %p89 = scmp.eq.s32.totalorder %s23, 0
      %p90 = por %p88, %p89
      %s92 = sadd.s32 %s91, 1
      %p95 = scmp.eq.s32.totalorder %s17, 1
      %p96 = scmp.ne.s32.totalorder %s91, %s93
      %p97 = scmp.eq.s32.totalorder %s17, 0
      %p98 = por %p96, %p97
      %p99 = scmp.ne.s32.totalorder %s91, %s93
      %p100 = scmp.eq.s32.totalorder %s22, 1
      %p101 = por %p99, %p100
      %p102 = scmp.ne.s32.totalorder %s93, %s94
      %p103 = scmp.eq.s32.totalorder %s22, 0
      %p104 = por %p102, %p103
      %p105 = scmp.ne.s32.totalorder %s93, %s94
      %p106 = scmp.eq.s32.totalorder %s23, 1
      %p107 = por %p105, %p106
      %p109 = scmp.ne.s32.totalorder %s94, %s108
      %p110 = scmp.eq.s32.totalorder %s23, 0
      %p111 = por %p109, %p110
      %s113 = sadd.s32 %s112, 1
      %p116 = scmp.eq.s32.totalorder %s17, 1
      %p117 = scmp.ne.s32.totalorder %s112, %s114
      %p118 = scmp.eq.s32.totalorder %s17, 0
      %p119 = por %p117, %p118
      %p120 = scmp.ne.s32.totalorder %s112, %s114
      %p121 = scmp.eq.s32.totalorder %s22, 1
      %p122 = por %p120, %p121
      %p123 = scmp.ne.s32.totalorder %s114, %s115
      %p124 = scmp.eq.s32.totalorder %s22, 0
      %p125 = por %p123, %p124
      %p126 = scmp.ne.s32.totalorder %s114, %s115
      %p127 = scmp.eq.s32.totalorder %s23, 1
      %p128 = por %p126, %p127
      %p130 = scmp.ne.s32.totalorder %s115, %s129
      %p131 = scmp.eq.s32.totalorder %s23, 0
      %p132 = por %p130, %p131
      %s134 = sadd.s32 %s133, 1
      %p137 = scmp.eq.s32.totalorder %s17, 1
      %p138 = scmp.ne.s32.totalorder %s133, %s135
      %p139 = scmp.eq.s32.totalorder %s17, 0
      %p140 = por %p138, %p139
      %p141 = scmp.ne.s32.totalorder %s133, %s135
      %p142 = scmp.eq.s32.totalorder %s22, 1
      %p143 = por %p141, %p142
      %p144 = scmp.ne.s32.totalorder %s135, %s136
      %p145 = scmp.eq.s32.totalorder %s22, 0
      %p146 = por %p144, %p145
      %p147 = scmp.ne.s32.totalorder %s135, %s136
      %p148 = scmp.eq.s32.totalorder %s23, 1
      %p149 = por %p147, %p148
      %p151 = scmp.ne.s32.totalorder %s136, %s150
      %p152 = scmp.eq.s32.totalorder %s23, 0
      %p153 = por %p151, %p152
      %s155 = sadd.s32 %s154, 1
      %p158 = scmp.eq.s32.totalorder %s17, 1
      %p159 = scmp.ne.s32.totalorder %s154, %s156
      %p160 = scmp.eq.s32.totalorder %s17, 0
      %p161 = por %p159, %p160
      %p162 = scmp.ne.s32.totalorder %s154, %s156
      %p163 = scmp.eq.s32.totalorder %s22, 1
      %p164 = por %p162, %p163
      %p165 = scmp.ne.s32.totalorder %s156, %s157
      %p166 = scmp.eq.s32.totalorder %s22, 0
      %p167 = por %p165, %p166
      %p168 = scmp.ne.s32.totalorder %s156, %s157
      %p169 = scmp.eq.s32.totalorder %s23, 1
      %p170 = por %p168, %p169
      %p172 = scmp.ne.s32.totalorder %s157, %s171
      %p173 = scmp.eq.s32.totalorder %s23, 0
      %p174 = por %p172, %p173
      %s175 = ssub.s32 %s24, %s36
      %s176 = ssub.s32 %s25, %s32
      %s177 = sor.u32 %s175, %s176
      %p178 = scmp.eq.s32.totalorder %s177, 0
      %s180 = sadd.s32 %s179, 1
      %s181 = scalar_select %p178, %s179, %s180
      %p184 = pneg %p178
      %p185 = scmp.eq.s32.totalorder %s17, 1
      %p186 = por %p184, %p185
      %p187 = scmp.ne.s32.totalorder %s179, %s182
      %p188 = scmp.eq.s32.totalorder %s17, 0
      %p189 = por %p187, %p188
      %p190 = scmp.ne.s32.totalorder %s179, %s182
      %p191 = scmp.eq.s32.totalorder %s22, 1
      %p192 = por %p190, %p191
      %p193 = scmp.ne.s32.totalorder %s182, %s183
      %p194 = scmp.eq.s32.totalorder %s22, 0
      %p195 = por %p193, %p194
      %p196 = scmp.ne.s32.totalorder %s182, %s183
      %p197 = scmp.eq.s32.totalorder %s23, 1
      %p198 = por %p196, %p197
      %p200 = scmp.ne.s32.totalorder %s183, %s199
      %p201 = scmp.eq.s32.totalorder %s23, 0
      %p202 = por %p200, %p201
      %s203 = ssub.s32 %s24, %s36
      %s204 = ssub.s32 %s25, %s32
      %s205 = sor.u32 %s203, %s204
      %p206 = scmp.eq.s32.totalorder %s205, 0
      %s208 = sadd.s32 %s207, 1
      %s209 = scalar_select %p206, %s207, %s208
      %p212 = pneg %p206
      %p213 = scmp.eq.s32.totalorder %s17, 1
      %p214 = por %p212, %p213
      %p215 = scmp.ne.s32.totalorder %s207, %s210
      %p216 = scmp.eq.s32.totalorder %s17, 0
      %p217 = por %p215, %p216
      %p218 = scmp.ne.s32.totalorder %s207, %s210
      %p219 = scmp.eq.s32.totalorder %s22, 1
      %p220 = por %p218, %p219
      %p221 = scmp.ne.s32.totalorder %s210, %s211
      %p222 = scmp.eq.s32.totalorder %s22, 0
      %p223 = por %p221, %p222
      %p224 = scmp.ne.s32.totalorder %s210, %s211
      %p225 = scmp.eq.s32.totalorder %s23, 1
      %p226 = por %p224, %p225
      %p228 = scmp.ne.s32.totalorder %s211, %s227
      %p229 = scmp.eq.s32.totalorder %s23, 0
      %p230 = por %p228, %p229
      %p231 = scmp.le.s32.totalorder 1, %s17
      %p232 = scmp.lt.s32.totalorder %s17, 3
      %p233 = pnand %p231, %p232
      %p234 = pneg %p233
      // Predicated region
      $region9: #{deeplab_forward.28} parent=5 // pred_check
        _
      $region10: #{deeplab_forward.28} parent=5 // pred_check_branch
        %236 = sbr.rel (%p233) target = $region12
      $region11: #{deeplab_forward.28} parent=5 // pred_region
        %s237 = ssub.s32 %s17, 1
        // Predicated region
        $region13: #{deeplab_forward.28} parent=11 // pred_check
          %p238 = pneg %p104
        $region14: #{deeplab_forward.28} parent=11 // pred_check_branch
          %240 = sbr.rel (%p238) target = $region16
        $region15: #{deeplab_forward.28} parent=11 // pred_region
          _
        $region16: #{deeplab_forward.28} parent=11 // pred_fallthru
          _
        // Predicated region
        $region17: #{deeplab_forward.28} parent=11 // pred_check
          %p241 = pneg %p125
        $region18: #{deeplab_forward.28} parent=11 // pred_check_branch
          %243 = sbr.rel (%p241) target = $region20
        $region19: #{deeplab_forward.28} parent=11 // pred_region
          _
        $region20: #{deeplab_forward.28} parent=11 // pred_fallthru
          _
        // Predicated region
        $region21: #{deeplab_forward.28} parent=11 // pred_check
          %p244 = pneg %p146
        $region22: #{deeplab_forward.28} parent=11 // pred_check_branch
          %246 = sbr.rel (%p244) target = $region24
        $region23: #{deeplab_forward.28} parent=11 // pred_region
          _
        $region24: #{deeplab_forward.28} parent=11 // pred_fallthru
          _
        // Predicated region
        $region25: #{deeplab_forward.28} parent=11 // pred_check
          %p247 = pneg %p167
        $region26: #{deeplab_forward.28} parent=11 // pred_check_branch
          %249 = sbr.rel (%p247) target = $region28
        $region27: #{deeplab_forward.28} parent=11 // pred_region
          _
        $region28: #{deeplab_forward.28} parent=11 // pred_fallthru
          _
      $region12: #{deeplab_forward.28} parent=5 // pred_fallthru
        _
      %p250 = scmp.lt.s32.totalorder %s17, 2
      // Predicated region
      $region29: #{deeplab_forward.28} parent=5 // pred_check
        %p251 = pneg %p250
      $region30: #{deeplab_forward.28} parent=5 // pred_check_branch
        %253 = sbr.rel (%p251) target = $region32
      $region31: #{deeplab_forward.28} parent=5 // pred_region
        // Predicated region
        $region33: #{deeplab_forward.28} parent=31 // pred_check
          %p254 = pneg %p51
        $region34: #{deeplab_forward.28} parent=31 // pred_check_branch
          %256 = sbr.rel (%p254) target = $region36
        $region35: #{deeplab_forward.28} parent=31 // pred_region
          %s257 = smul.u32 2, %s25
          %p258 = scmp.lt.s32.totalorder %s24, 1
          %s259 = scalar_select %p258, %s24, 1
          %p260 = scmp.lt.s32.totalorder %s257, 1
          %s261 = scalar_select %p260, %s257, 1
          %s262 = smul.addr %s259, 2
          %s263 = sadd.s32 %s261, %s262
          %s264 = smul.addr %s263, 4
          %s265 = scalar_lea.vmem %s0, %s264
          %s266 = smul.u32 2, %s25
        $region36: #{deeplab_forward.28} parent=31 // pred_fallthru
          _
        // Predicated region
        $region37: #{deeplab_forward.28} parent=31 // pred_check
          %p267 = pneg %p77
        $region38: #{deeplab_forward.28} parent=31 // pred_check_branch
          %269 = sbr.rel (%p267) target = $region40
        $region39: #{deeplab_forward.28} parent=31 // pred_region
          %p270 = scmp.lt.s32.totalorder %s24, 1
          %s271 = scalar_select %p270, %s24, 1
          %s272 = smul.addr %s271, 8
          %s273 = scalar_lea.vmem %s1, %s272
        $region40: #{deeplab_forward.28} parent=31 // pred_fallthru
          _
      $region32: #{deeplab_forward.28} parent=5 // pred_fallthru
        _
      %p274 = scmp.le.s32.totalorder 1, %s17
      %p275 = scmp.lt.s32.totalorder %s17, 3
      %p276 = pnand %p274, %p275
      %p277 = pneg %p276
      // Predicated region
      $region41: #{deeplab_forward.28} parent=5 // pred_check
        _
      $region42: #{deeplab_forward.28} parent=5 // pred_check_branch
        %279 = sbr.rel (%p276) target = $region44
      $region43: #{deeplab_forward.28} parent=5 // pred_region
        %s280 = ssub.s32 %s17, 1
        %s281 = smul.u32 2, %s27
        %p282 = scmp.lt.s32.totalorder %s26, 1
        %s283 = scalar_select %p282, %s26, 1
        %p284 = scmp.lt.s32.totalorder %s281, 1
        %s285 = scalar_select %p284, %s281, 1
        %s286 = smul.addr %s283, 2
        %s287 = sadd.s32 %s285, %s286
        %s288 = smul.addr %s287, 4
        %s289 = scalar_lea.vmem %s0, %s288
        %p290 = pneg %p57
        %p291 = pneg %p54
        %p292 = scmp.lt.s32.totalorder %s26, 1
        %s293 = scalar_select %p292, %s26, 1
        %s294 = smul.addr %s293, 8
        %s295 = scalar_lea.vmem %s1, %s294
        %p296 = pneg %p83
        %p297 = pneg %p80
        %p298 = pneg %p104
        %p299 = pneg %p101
        %p300 = pneg %p125
        %p301 = pneg %p122
        %p302 = pneg %p146
        %p303 = pneg %p143
        %p304 = pneg %p167
        %p305 = pneg %p164
        %p306 = pneg %p195
        %p307 = pneg %p192
        %s308 = smul.u32 2, %s27
        %p309 = scmp.lt.s32.totalorder %s26, 1
        %s310 = scalar_select %p309, %s26, 1
        %p311 = scmp.lt.s32.totalorder %s308, 1
        %s312 = scalar_select %p311, %s308, 1
        %s313 = smul.addr %s310, 2
        %s314 = sadd.s32 %s312, %s313
        %s315 = smul.addr %s314, 8
        %s316 = scalar_lea.vmem %s6, %s315
        %p317 = pneg %p223
        %p318 = pneg %p220
        %s319 = sand.u32 %s210, 1
        %s320 = scalar_lea.sflag [#allocation3], %s319
        %s321 = sand.u32 %s210, 1
        %s322 = smul.addr %s321, 16
        %s323 = scalar_lea.vmem [#allocation2], %s322
        %s324 = smul.u32 2, %s27
        %p325 = scmp.lt.s32.totalorder %s26, 1
        %s326 = scalar_select %p325, %s26, 1
        %p327 = scmp.lt.s32.totalorder %s324, 1
        %s328 = scalar_select %p327, %s324, 1
        %s329 = smul.addr %s326, 2
        %s330 = sadd.s32 %s328, %s329
        %s331 = smul.addr %s330, 4
        %s332 = scalar_lea.vmem %s0, %s331
        %s333 = smul.u32 2, %s27
        %p334 = scmp.lt.s32.totalorder %s26, 1
        %s335 = scalar_select %p334, %s26, 1
        %s336 = smul.addr %s335, 8
        %s337 = scalar_lea.vmem %s1, %s336
        %s338 = smul.u32 2, %s27
        %p339 = scmp.lt.s32.totalorder %s26, 1
        %s340 = scalar_select %p339, %s26, 1
        %p341 = scmp.lt.s32.totalorder %s338, 1
        %s342 = scalar_select %p341, %s338, 1
        %s343 = smul.addr %s340, 2
        %s344 = sadd.s32 %s342, %s343
        %s345 = smul.addr %s344, 8
        %s346 = scalar_lea.vmem %s6, %s345
        %s347 = smul.u32 2, %s27
        %s348 = smul.u32 2, %s27
        %v350 = vld [vmem:[%s332] sm:$0xf]
        %v351 = vld [vmem:[%s332 + $0x4] sm:$0xf]
        %v352 = vld [vmem:[%s337] sm:$0x3f]
        %v353 = vld [vmem:[%s2] sm:$0xf]
        %v354 = vld [vmem:[%s2 + $0x4] sm:$0xf]
        %v355 = vld [vmem:[%s3] sm:$0x1]
        %v357 = vperm.slane %v355, 0
        %v361 = vunpack.c.l.b16 %v350
        %v362 = vunpack.c.l.b16 %v351
        %v363 = vpack.c.b16 %v362, %v361
        %v366 = vunpack.c.l.b16 %v353
        %v367 = vunpack.c.l.b16 %v354
        %v368 = vpack.c.b16 %v367, %v366
        %vm370 = vcmask 130048
        %v372 = vsel %vm370, %v363, 0
        %374 = vmatpush.bf16.msra.mxu0 0
        %375 = vmatpush.bf16.msra.mxu0 0
        %376 = vmatpush.bf16.msra.mxu0 0
        %377 = vmatpush.bf16.msra.mxu0 0
        %378 = vmatpush.bf16.msra.mxu0 0
        %379 = vmatpush.bf16.msra.mxu0 0
        %380 = vmatpush.bf16.msra.mxu0 0
        %381 = vmatpush.bf16.msra.mxu0 %v368
        %382 = vmatmul.bf16.gmra.mxu0 %v372
        %v383 = vpop.f32.mrf.mxu0
        %v384 = vadd.f32 %v357, %v383
        %v385 = vpop.f32.mrf.mxu0
        %v386 = vadd.f32 %v357, %v385
        %387 = vdwg.mxu0
        %v389 = vsel %vm370, %v384, 0
        %v392 = vsel %vm370, %v386, 0
        %v395 = vsel %vm370, %v352, 0
        %397 = vmatpush.xpose.msra.mxu0 0.0
        %398 = vmatpush.xpose.msra.mxu0 0.0
        %399 = vmatpush.xpose.msra.mxu0 0.0
        %400 = vmatpush.xpose.msra.mxu0 0.0
        %401 = vmatpush.xpose.msra.mxu0 0.0
        %402 = vmatpush.xpose.msra.mxu0 0.0
        %403 = vmatpush.xpose.msra.mxu0 0.0
        %404 = vmatpush.xpose.msra.mxu0 0.0
        %405 = vmatpush.xpose.msra.mxu0 0.0
        %406 = vmatpush.xpose.msra.mxu0 0.0
        %407 = vmatpush.xpose.msra.mxu0 0.0
        %408 = vmatpush.xpose.msra.mxu0 0.0
        %409 = vmatpush.xpose.msra.mxu0 0.0
        %410 = vmatpush.xpose.msra.mxu0 0.0
        %411 = vmatpush.xpose.msra.mxu0 0.0
        %412 = vmatpush.xpose.msra.mxu0 %v395
        %413 = vmatmul.f32.gmra.mxu0 %v389
        %v414 = vpop.f32.mrf.mxu0
        %v415 = vadd.f32 0.0, %v414
        %416 = vmatmul.f32.gmra.mxu0 %v392
        %v417 = vpop.f32.mrf.mxu0
        %v418 = vadd.f32 0.0, %v417
        %419 = vdwg.mxu0
        %vm420 = vcmask 48128
        %v421 = vsel %vm420, %v415, -inf
        %422 = vmax.xlane.f32.xlu0 %v421
        %v423 = vpop.xlane.xlu0 %422
        %v424 = vsel %vm420, %v418, -inf
        %425 = vmax.xlane.f32.xlu0 %v424
        %v426 = vpop.xlane.xlu0 %425
        %v427 = vsub.f32 %v415, %v423
        %v428 = vsub.f32 %v418, %v426
        %v429 = vmul.f32 %v427, 1.442695
        %v430 = vpow.pop %v429
        %v431 = vmul.f32 %v428, 1.442695
        %v432 = vpow.pop %v431
        %v433 = vsel %vm420, %v430, 0.0
        %434 = vadd.xlane.f32.xlu0 %v433
        %v435 = vpop.xlane.xlu0 %434
        %v436 = vsel %vm420, %v432, 0.0
        %437 = vadd.xlane.f32.xlu0 %v436
        %v438 = vpop.xlane.xlu0 %437
        %v439 = vrcp.pop %v435
        %v440 = vmul.f32 %v435, %v439
        %v441 = vsub.f32 1.0, %v440
        %v442 = vmul.f32 %v439, %v441
        %v443 = vadd.f32 %v439, %v442
        %vm444 = vweird.f32 %v435
        %vm445 = vweird.f32 %v439
        %vm446 = vmor %vm444, %vm445
        %v447 = vsel %vm446, %v439, %v443
        %v448 = vand.u32 2147483647, %v435
        %vm449 = vcmp.eq.f32.partialorder %v448, 8.507059e+37
        %v450 = vand.u32 %v435, 2147483648
        %v451 = vor.u32 1.1754944e-38, %v450
        %v452 = vsel %vm449, %v451, %v447
        %v453 = vmul.f32 %v430, %v452
        %v454 = vrcp.pop %v438
        %v455 = vmul.f32 %v438, %v454
        %v456 = vsub.f32 1.0, %v455
        %v457 = vmul.f32 %v454, %v456
        %v458 = vadd.f32 %v454, %v457
        %vm459 = vweird.f32 %v438
        %vm460 = vweird.f32 %v454
        %vm461 = vmor %vm459, %vm460
        %v462 = vsel %vm461, %v454, %v458
        %v463 = vand.u32 2147483647, %v438
        %vm464 = vcmp.eq.f32.partialorder %v463, 8.507059e+37
        %v465 = vand.u32 %v438, 2147483648
        %v466 = vor.u32 1.1754944e-38, %v465
        %v467 = vsel %vm464, %v466, %v462
        %v468 = vmul.f32 %v432, %v467
        %v469 = vsel %vm420, %v453, -inf
        %470 = vmax.xlane.f32.xlu0 %v469
        %v471 = vpop.xlane.xlu0 %470
        %v472 = vsel %vm420, %v468, -inf
        %473 = vmax.xlane.f32.xlu0 %v472
        %v474 = vpop.xlane.xlu0 %473
        %v475 = vunpack.c.l.bf16 %v350
        %v476 = vunpack.c.l.bf16 %v351
        %v477 = vmul.f32 %v475, %v471
        %v478 = vmul.f32 %v476, %v474
        %479 = vst.msk [vmem:[%s323] sm:$0xff] %vm370, %v477
        %480 = vst.msk [vmem:[%s323 + $0x8] sm:$0xff] %vm370, %v478
        %v481 = vld [vmem:[%s4] sm:$0xff]
        %v482 = vld [vmem:[%s4 + $0x8] sm:$0xff]
        %v483 = vld [vmem:[%s5] sm:$0x1]
        %v485 = vperm.slane %v483, 0
        %v488 = vsel %vm370, %v477, 0
        %v491 = vsel %vm370, %v478, 0
        %493 = vmatpush.msra.mxu0 0.0
        %494 = vmatpush.msra.mxu0 0.0
        %495 = vmatpush.msra.mxu0 0.0
        %496 = vmatpush.msra.mxu0 0.0
        %497 = vmatpush.msra.mxu0 0.0
        %498 = vmatpush.msra.mxu0 0.0
        %499 = vmatpush.msra.mxu0 0.0
        %500 = vmatpush.msra.mxu0 0.0
        %501 = vmatpush.msra.mxu0 0.0
        %502 = vmatpush.msra.mxu0 0.0
        %503 = vmatpush.msra.mxu0 0.0
        %504 = vmatpush.msra.mxu0 0.0
        %505 = vmatpush.msra.mxu0 0.0
        %506 = vmatpush.msra.mxu0 0.0
        %507 = vmatpush.msra.mxu0 %v482
        %508 = vmatpush.msra.mxu0 %v481
        %509 = vmatmul.f32.gmra.mxu0 %v488
        %v510 = vpop.f32.mrf.mxu0
        %v511 = vadd.f32 %v485, %v510
        %512 = vmatmul.f32.gmra.mxu0 %v491
        %v513 = vpop.f32.mrf.mxu0
        %v514 = vadd.f32 %v485, %v513
        %515 = vdwg.mxu0
        %516 = vst [vmem:[%s346] sm:$0xff] %v511
        %517 = vst [vmem:[%s346 + $0x8] sm:$0xff] %v514
        %s518 = smul.u32 2, %s27
        %p519 = scmp.lt.s32.totalorder %s26, 1
        %s520 = scalar_select %p519, %s26, 1
        %p521 = scmp.lt.s32.totalorder %s518, 1
        %s522 = scalar_select %p521, %s518, 1
        %s523 = smul.addr %s520, 2
        %s524 = sadd.s32 %s522, %s523
        %s525 = smul.addr %s524, 8
        %s526 = scalar_lea.vmem %s6, %s525
        %s527 = sand.u32 %s210, 1
        %s528 = scalar_lea.sflag [#allocation3], %s527
        %s529 = sand.u32 %s210, 1
        %s530 = smul.addr %s529, 16
        %s531 = scalar_lea.vmem [#allocation2], %s530
        // Predicated region
        $region45: #{deeplab_forward.28} parent=43 // pred_check
          %p532 = pneg %p192
        $region46: #{deeplab_forward.28} parent=43 // pred_check_branch
          %534 = sbr.rel (%p532) target = $region48
        $region47: #{deeplab_forward.28} parent=43 // pred_region
          %s535 = smul.u32 2, %s27
        $region48: #{deeplab_forward.28} parent=43 // pred_fallthru
          _
        // Predicated region
        $region49: #{deeplab_forward.28} parent=43 // pred_check
          %p536 = pneg %p220
        $region50: #{deeplab_forward.28} parent=43 // pred_check_branch
          %538 = sbr.rel (%p536) target = $region52
        $region51: #{deeplab_forward.28} parent=43 // pred_region
          %s539 = smul.u32 2, %s27
          %541 = vsyncadd %s528, 0
          %s542 = smul.addr %s26, 2
          %s543 = sadd.s32 %s539, %s542
          %s544 = smul.addr %s543, 8
          %s545 = scalar_lea.hbm %s7, %s544
          %s546 = sshll.u32 %s531, 4
          %s547 = int_to_ptr.vmem [resolvable:$true] %s546
          %s548 = sshll.u32 %s545, 4
          %s549 = int_to_ptr.hbm [resolvable:$true] %s548
          %554 = dma.vmem_to_hbm [thread:$0]  %s547, 256, %s549, %s528, 128, 128, 8
        $region52: #{deeplab_forward.28} parent=43 // pred_fallthru
          _
      $region44: #{deeplab_forward.28} parent=5 // pred_fallthru
        _
      %p555 = scmp.le.s32.totalorder 2, %s17
      // Predicated region
      $region53: #{deeplab_forward.28} parent=5 // pred_check
        %p556 = pneg %p555
      $region54: #{deeplab_forward.28} parent=5 // pred_check_branch
        %558 = sbr.rel (%p556) target = $region56
      $region55: #{deeplab_forward.28} parent=5 // pred_region
        %s559 = ssub.s32 %s17, 2
        // Predicated region
        $region57: #{deeplab_forward.28} parent=55 // pred_check
          %p560 = pneg %p198
        $region58: #{deeplab_forward.28} parent=55 // pred_check_branch
          %562 = sbr.rel (%p560) target = $region60
        $region59: #{deeplab_forward.28} parent=55 // pred_region
          %s563 = smul.u32 2, %s29
          %p564 = scmp.lt.s32.totalorder %s28, 1
          %s565 = scalar_select %p564, %s28, 1
          %p566 = scmp.lt.s32.totalorder %s563, 1
          %s567 = scalar_select %p566, %s563, 1
          %s568 = smul.addr %s565, 2
          %s569 = sadd.s32 %s567, %s568
          %s570 = smul.addr %s569, 8
          %s571 = scalar_lea.vmem %s6, %s570
        $region60: #{deeplab_forward.28} parent=55 // pred_fallthru
          _
        // Predicated region
        $region61: #{deeplab_forward.28} parent=55 // pred_check
          %p572 = pneg %p226
        $region62: #{deeplab_forward.28} parent=55 // pred_check_branch
          %574 = sbr.rel (%p572) target = $region64
        $region63: #{deeplab_forward.28} parent=55 // pred_region
          %s575 = sand.u32 %s211, 1
          %s576 = scalar_lea.sflag [#allocation3], %s575
          %s577 = sand.u32 %s211, 1
          %s578 = smul.addr %s577, 16
          %s579 = scalar_lea.vmem [#allocation2], %s578
          %581 = dma.done %s576, 256
        $region64: #{deeplab_forward.28} parent=55 // pred_fallthru
          _
      $region56: #{deeplab_forward.28} parent=5 // pred_fallthru
        _
    $region6: #{deeplab_forward.28} parent=1 // loop_footer
      %s21 = sadd.s32 1, %s17
    $region7: #{deeplab_forward.28} parent=1 // loop_footer_branch
      %16 = sbr.rel target = $region3
    $region8: #{deeplab_forward.28} parent=1 // loop_exit
      _
    %582 = vsyncpa [#allocation3], 1
    %s583 = scalar_lea.sflag [#allocation3], 1
    %584 = vsyncpa %s583, 1

// kernel: deeplab_forward.29
$region0: #{deeplab_forward.29}
  #allocation0 [shape = 'u32[]', space=smem, size = 0x4, offset = 0x4, fixed_abs, tag = 'smem constant byte address 0x4 - core index']
  #allocation1 [shape = 'u32[72,128]{1,0:T(1,128)}', space=vmem, size = 0x9000, scoped, tag = 'internal scratch']
  %s0 = inlined_call_operand.vmem [shape: f32[12,4,4], index: 0, kind: input, shape index: {}]
  %s1 = inlined_call_operand.vmem [shape: f32[16,4], index: 1, kind: input, shape index: {}]
  %s2 = inlined_call_operand.vmem [shape: f32[4,16], index: 2, kind: input, shape index: {}]
  %s3 = inlined_call_operand.hbm [shape: f32[12,16,16], index: 3, kind: output, shape index: {}]
  %s4 = sld [smem:[#allocation0]]
  $region45: #{deeplab_forward.29} parent=0
    _
  %s6 = ssub.s32 1, %s4
  %s7 = scalar_select 0, %s6, %s4
  $region1: #{deeplab_forward.29} parent=0
    #allocation2 [shape = 'u8[98304]{0}', space=vmem, size = 0x18000, scoped, tag = 'output window, operand 0']
    #allocation3 [shape = 's32[2]{0}', space=sflag, size = 0x8, scoped, tag = 'scoped memory for deeplab_forward.29']
    %8 = vsyncpa [#allocation3], 0
    %s9 = scalar_lea.sflag [#allocation3], 1
    %10 = vsyncpa %s9, 0
    loop: start=0, step=1, limit=4
    $region2: #{deeplab_forward.29} parent=1 // loop_pre_header
      _
    $region3: #{deeplab_forward.29} parent=1 // loop_header
      %s12 = sphi 0, %s16
      %p13 = scmp.ge.s32.totalorder %s12, 4
      %s22 = sphi 0, %s24
      %s25 = sphi 0, %s22
      %s26 = sphi 0, %s25
      %s42 = sphi 0, %s26
      %s46 = sphi 0, %s46
      %s48 = sphi 0, %s46
      %s49 = sphi 0, %s48
      %s63 = sphi 0, %s49
      %s67 = sphi 0, %s67
      %s69 = sphi 0, %s67
      %s70 = sphi 0, %s69
      %s84 = sphi 0, %s70
      %s90 = sphi 0, %s92
      %s93 = sphi 0, %s90
      %s94 = sphi 0, %s93
      %s110 = sphi 0, %s94
    $region4: #{deeplab_forward.29} parent=1 // loop_header_branch
      %15 = sbr.rel (%p13) target = $region8
    $region5: #{deeplab_forward.29} parent=1 // loop_body
      %s17 = ssub.s32 %s12, 1
      %s18 = ssub.s32 %s12, 2
      %s19 = sadd.s32 %s12, 1
      %s20 = ssub.s32 %s12, %s19
      %p21 = scmp.eq.s32.totalorder %s20, 0
      %s23 = sadd.s32 %s22, 1
      %s24 = scalar_select %p21, %s22, %s23
      %p27 = pneg %p21
      %p28 = scmp.eq.s32.totalorder %s12, 1
      %p29 = por %p27, %p28
      %p30 = scmp.ne.s32.totalorder %s22, %s25
      %p31 = scmp.eq.s32.totalorder %s12, 0
      %p32 = por %p30, %p31
      %p33 = scmp.ne.s32.totalorder %s22, %s25
      %p34 = scmp.eq.s32.totalorder %s17, 1
      %p35 = por %p33, %p34
      %p36 = scmp.ne.s32.totalorder %s25, %s26
      %p37 = scmp.eq.s32.totalorder %s17, 0
      %p38 = por %p36, %p37
      %p39 = scmp.ne.s32.totalorder %s25, %s26
      %p40 = scmp.eq.s32.totalorder %s18, 1
      %p41 = por %p39, %p40
      %p43 = scmp.ne.s32.totalorder %s26, %s42
      %p44 = scmp.eq.s32.totalorder %s18, 0
      %p45 = por %p43, %p44
      %s47 = sadd.s32 %s46, 1
      %p50 = scmp.eq.s32.totalorder %s12, 1
      %p51 = scmp.ne.s32.totalorder %s46, %s48
      %p52 = scmp.eq.s32.totalorder %s12, 0
      %p53 = por %p51, %p52
      %p54 = scmp.ne.s32.totalorder %s46, %s48
      %p55 = scmp.eq.s32.totalorder %s17, 1
      %p56 = por %p54, %p55
      %p57 = scmp.ne.s32.totalorder %s48, %s49
      %p58 = scmp.eq.s32.totalorder %s17, 0
      %p59 = por %p57, %p58
      %p60 = scmp.ne.s32.totalorder %s48, %s49
      %p61 = scmp.eq.s32.totalorder %s18, 1
      %p62 = por %p60, %p61
      %p64 = scmp.ne.s32.totalorder %s49, %s63
      %p65 = scmp.eq.s32.totalorder %s18, 0
      %p66 = por %p64, %p65
      %s68 = sadd.s32 %s67, 1
      %p71 = scmp.eq.s32.totalorder %s12, 1
      %p72 = scmp.ne.s32.totalorder %s67, %s69
      %p73 = scmp.eq.s32.totalorder %s12, 0
      %p74 = por %p72, %p73
      %p75 = scmp.ne.s32.totalorder %s67, %s69
      %p76 = scmp.eq.s32.totalorder %s17, 1
      %p77 = por %p75, %p76
      %p78 = scmp.ne.s32.totalorder %s69, %s70
      %p79 = scmp.eq.s32.totalorder %s17, 0
      %p80 = por %p78, %p79
      %p81 = scmp.ne.s32.totalorder %s69, %s70
      %p82 = scmp.eq.s32.totalorder %s18, 1
      %p83 = por %p81, %p82
      %p85 = scmp.ne.s32.totalorder %s70, %s84
      %p86 = scmp.eq.s32.totalorder %s18, 0
      %p87 = por %p85, %p86
      %s88 = ssub.s32 %s12, %s19
      %p89 = scmp.eq.s32.totalorder %s88, 0
      %s91 = sadd.s32 %s90, 1
      %s92 = scalar_select %p89, %s90, %s91
      %p95 = pneg %p89
      %p96 = scmp.eq.s32.totalorder %s12, 1
      %p97 = por %p95, %p96
      %p98 = scmp.ne.s32.totalorder %s90, %s93
      %p99 = scmp.eq.s32.totalorder %s12, 0
      %p100 = por %p98, %p99
      %p101 = scmp.ne.s32.totalorder %s90, %s93
      %p102 = scmp.eq.s32.totalorder %s17, 1
      %p103 = por %p101, %p102
      %p104 = scmp.ne.s32.totalorder %s93, %s94
      %p105 = scmp.eq.s32.totalorder %s17, 0
      %p106 = por %p104, %p105
      %p107 = scmp.ne.s32.totalorder %s93, %s94
      %p108 = scmp.eq.s32.totalorder %s18, 1
      %p109 = por %p107, %p108
      %p111 = scmp.ne.s32.totalorder %s94, %s110
      %p112 = scmp.eq.s32.totalorder %s18, 0
      %p113 = por %p111, %p112
      %p114 = scmp.le.s32.totalorder 1, %s12
      %p115 = scmp.lt.s32.totalorder %s12, 3
      %p116 = pnand %p114, %p115
      %p117 = pneg %p116
      // Predicated region
      $region9: #{deeplab_forward.29} parent=5 // pred_check
        _
      $region10: #{deeplab_forward.29} parent=5 // pred_check_branch
        %119 = sbr.rel (%p116) target = $region12
      $region11: #{deeplab_forward.29} parent=5 // pred_region
        %s120 = ssub.s32 %s12, 1
        // Predicated region
        $region13: #{deeplab_forward.29} parent=11 // pred_check
          %p121 = pneg %p59
        $region14: #{deeplab_forward.29} parent=11 // pred_check_branch
          %123 = sbr.rel (%p121) target = $region16
        $region15: #{deeplab_forward.29} parent=11 // pred_region
          _
        $region16: #{deeplab_forward.29} parent=11 // pred_fallthru
          _
        // Predicated region
        $region17: #{deeplab_forward.29} parent=11 // pred_check
          %p124 = pneg %p80
        $region18: #{deeplab_forward.29} parent=11 // pred_check_branch
          %126 = sbr.rel (%p124) target = $region20
        $region19: #{deeplab_forward.29} parent=11 // pred_region
          _
        $region20: #{deeplab_forward.29} parent=11 // pred_fallthru
          _
      $region12: #{deeplab_forward.29} parent=5 // pred_fallthru
        _
      %p127 = scmp.lt.s32.totalorder %s12, 2
      // Predicated region
      $region21: #{deeplab_forward.29} parent=5 // pred_check
        %p128 = pneg %p127
      $region22: #{deeplab_forward.29} parent=5 // pred_check_branch
        %130 = sbr.rel (%p128) target = $region24
      $region23: #{deeplab_forward.29} parent=5 // pred_region
        // Predicated region
        $region25: #{deeplab_forward.29} parent=23 // pred_check
          %p131 = pneg %p32
        $region26: #{deeplab_forward.29} parent=23 // pred_check_branch
          %133 = sbr.rel (%p131) target = $region28
        $region27: #{deeplab_forward.29} parent=23 // pred_region
          %s134 = smul.u32 6, %s12
          %p135 = scmp.lt.s32.totalorder %s134, 11
          %s136 = scalar_select %p135, %s134, 11
          %s137 = smul.addr %s136, 4
          %s138 = scalar_lea.vmem %s0, %s137
          %s139 = smul.u32 6, %s12
        $region28: #{deeplab_forward.29} parent=23 // pred_fallthru
          _
      $region24: #{deeplab_forward.29} parent=5 // pred_fallthru
        _
      %p140 = scmp.le.s32.totalorder 1, %s12
      %p141 = scmp.lt.s32.totalorder %s12, 3
      %p142 = pnand %p140, %p141
      %p143 = pneg %p142
      // Predicated region
      $region29: #{deeplab_forward.29} parent=5 // pred_check
        _
      $region30: #{deeplab_forward.29} parent=5 // pred_check_branch
        %145 = sbr.rel (%p142) target = $region32
      $region31: #{deeplab_forward.29} parent=5 // pred_region
        %s146 = ssub.s32 %s12, 1
        %s147 = smul.u32 6, %s17
        %p148 = scmp.lt.s32.totalorder %s147, 11
        %s149 = scalar_select %p148, %s147, 11
        %s150 = smul.addr %s149, 4
        %s151 = scalar_lea.vmem %s0, %s150
        %p152 = pneg %p38
        %p153 = pneg %p35
        %p154 = pneg %p59
        %p155 = pneg %p56
        %p156 = pneg %p80
        %p157 = pneg %p77
        %p158 = pneg %p106
        %p159 = pneg %p103
        %s160 = sand.u32 %s93, 1
        %s161 = scalar_lea.sflag [#allocation3], %s160
        %s162 = sand.u32 %s93, 1
        %s163 = smul.addr %s162, 96
        %s164 = scalar_lea.vmem [#allocation2], %s163
        %s165 = smul.u32 6, %s17
        %p166 = scmp.lt.s32.totalorder %s165, 11
        %s167 = scalar_select %p166, %s165, 11
        %s168 = smul.addr %s167, 4
        %s169 = scalar_lea.vmem %s0, %s168
        %s170 = smul.u32 6, %s17
        %s171 = smul.u32 6, %s17
        %v172 = vld [vmem:[%s1] sm:$0xff]
        %v173 = vld [vmem:[%s1 + $0x8] sm:$0xff]
        %v174 = vld [vmem:[%s2] sm:$0xf]
        %v175 = vld [vmem:[%s169] sm:$0xf]
        %vm176 = vcmask 31744
        %v178 = vsel %vm176, %v175, 0
        %vm180 = vcmask 1043456
        %v182 = vsel %vm180, %v174, 0
        %184 = vmatpush.msra.mxu0 0.0
        %185 = vmatpush.msra.mxu0 0.0
        %186 = vmatpush.msra.mxu0 0.0
        %187 = vmatpush.msra.mxu0 0.0
        %188 = vmatpush.msra.mxu0 0.0
        %189 = vmatpush.msra.mxu0 0.0
        %190 = vmatpush.msra.mxu0 0.0
        %191 = vmatpush.msra.mxu0 0.0
        %192 = vmatpush.msra.mxu0 0.0
        %193 = vmatpush.msra.mxu0 0.0
        %194 = vmatpush.msra.mxu0 0.0
        %195 = vmatpush.msra.mxu0 0.0
        %196 = vmatpush.msra.mxu0 0.0
        %197 = vmatpush.msra.mxu0 0.0
        %198 = vmatpush.msra.mxu0 0.0
        %199 = vmatpush.msra.mxu0 %v182
        %200 = vmatmul.f32.gmra.mxu0 %v178
        %v201 = vpop.f32.mrf.mxu0
        %v202 = vadd.f32 0.0, %v201
        %203 = vdwg.mxu0
        %v205 = vsel %vm176, %v172, 0
        %v208 = vsel %vm176, %v173, 0
        %v211 = vsel %vm180, %v202, 0
        %213 = vmatpush.msra.mxu0 0.0
        %214 = vmatpush.msra.mxu0 0.0
        %215 = vmatpush.msra.mxu0 0.0
        %216 = vmatpush.msra.mxu0 0.0
        %217 = vmatpush.msra.mxu0 0.0
        %218 = vmatpush.msra.mxu0 0.0
        %219 = vmatpush.msra.mxu0 0.0
        %220 = vmatpush.msra.mxu0 0.0
        %221 = vmatpush.msra.mxu0 0.0
        %222 = vmatpush.msra.mxu0 0.0
        %223 = vmatpush.msra.mxu0 0.0
        %224 = vmatpush.msra.mxu0 0.0
        %225 = vmatpush.msra.mxu0 0.0
        %226 = vmatpush.msra.mxu0 0.0
        %227 = vmatpush.msra.mxu0 0.0
        %228 = vmatpush.msra.mxu0 %v211
        %229 = vmatmul.f32.gmra.mxu0 %v205
        %v230 = vpop.f32.mrf.mxu0
        %v231 = vadd.f32 0.0, %v230
        %232 = vmatmul.f32.gmra.mxu0 %v208
        %v233 = vpop.f32.mrf.mxu0
        %v234 = vadd.f32 0.0, %v233
        %235 = vdwg.mxu0
        %vm236 = vcmask 130048
        %237 = vst.msk [vmem:[%s164] sm:$0xff] %vm236, %v231
        %238 = vst.msk [vmem:[%s164 + $0x8] sm:$0xff] %vm236, %v234
        %s239 = scalar_lea.vmem %s169, 4
        %v240 = vld [vmem:[%s239] sm:$0xf]
        %v242 = vsel %vm176, %v240, 0
        %244 = vmatpush.msra.mxu0 0.0
        %245 = vmatpush.msra.mxu0 0.0
        %246 = vmatpush.msra.mxu0 0.0
        %247 = vmatpush.msra.mxu0 0.0
        %248 = vmatpush.msra.mxu0 0.0
        %249 = vmatpush.msra.mxu0 0.0
        %250 = vmatpush.msra.mxu0 0.0
        %251 = vmatpush.msra.mxu0 0.0
        %252 = vmatpush.msra.mxu0 0.0
        %253 = vmatpush.msra.mxu0 0.0
        %254 = vmatpush.msra.mxu0 0.0
        %255 = vmatpush.msra.mxu0 0.0
        %256 = vmatpush.msra.mxu0 0.0
        %257 = vmatpush.msra.mxu0 0.0
        %258 = vmatpush.msra.mxu0 0.0
        %259 = vmatpush.msra.mxu0 %v182
        %260 = vmatmul.f32.gmra.mxu0 %v242
        %v261 = vpop.f32.mrf.mxu0
        %v262 = vadd.f32 0.0, %v261
        %263 = vdwg.mxu0
        %v265 = vsel %vm180, %v262, 0
        %267 = vmatpush.msra.mxu0 0.0
        %268 = vmatpush.msra.mxu0 0.0
        %269 = vmatpush.msra.mxu0 0.0
        %270 = vmatpush.msra.mxu0 0.0
        %271 = vmatpush.msra.mxu0 0.0
        %272 = vmatpush.msra.mxu0 0.0
        %273 = vmatpush.msra.mxu0 0.0
        %274 = vmatpush.msra.mxu0 0.0
        %275 = vmatpush.msra.mxu0 0.0
        %276 = vmatpush.msra.mxu0 0.0
        %277 = vmatpush.msra.mxu0 0.0
        %278 = vmatpush.msra.mxu0 0.0
        %279 = vmatpush.msra.mxu0 0.0
        %280 = vmatpush.msra.mxu0 0.0
        %281 = vmatpush.msra.mxu0 0.0
        %282 = vmatpush.msra.mxu0 %v265
        %283 = vmatmul.f32.gmra.mxu0 %v205
        %v284 = vpop.f32.mrf.mxu0
        %v285 = vadd.f32 0.0, %v284
        %286 = vmatmul.f32.gmra.mxu0 %v208
        %v287 = vpop.f32.mrf.mxu0
        %v288 = vadd.f32 0.0, %v287
        %289 = vdwg.mxu0
        %s290 = scalar_lea.vmem %s164, 16 [#allocation2]
        %291 = vst.msk [vmem:[%s290] sm:$0xff] %vm236, %v285
        %292 = vst.msk [vmem:[%s290 + $0x8] sm:$0xff] %vm236, %v288
        %s293 = scalar_lea.vmem %s169, 8
        %v294 = vld [vmem:[%s293] sm:$0xf]
        %v296 = vsel %vm176, %v294, 0
        %298 = vmatpush.msra.mxu0 0.0
        %299 = vmatpush.msra.mxu0 0.0
        %300 = vmatpush.msra.mxu0 0.0
        %301 = vmatpush.msra.mxu0 0.0
        %302 = vmatpush.msra.mxu0 0.0
        %303 = vmatpush.msra.mxu0 0.0
        %304 = vmatpush.msra.mxu0 0.0
        %305 = vmatpush.msra.mxu0 0.0
        %306 = vmatpush.msra.mxu0 0.0
        %307 = vmatpush.msra.mxu0 0.0
        %308 = vmatpush.msra.mxu0 0.0
        %309 = vmatpush.msra.mxu0 0.0
        %310 = vmatpush.msra.mxu0 0.0
        %311 = vmatpush.msra.mxu0 0.0
        %312 = vmatpush.msra.mxu0 0.0
        %313 = vmatpush.msra.mxu0 %v182
        %314 = vmatmul.f32.gmra.mxu0 %v296
        %v315 = vpop.f32.mrf.mxu0
        %v316 = vadd.f32 0.0, %v315
        %317 = vdwg.mxu0
        %v319 = vsel %vm180, %v316, 0
        %321 = vmatpush.msra.mxu0 0.0
        %322 = vmatpush.msra.mxu0 0.0
        %323 = vmatpush.msra.mxu0 0.0
        %324 = vmatpush.msra.mxu0 0.0
        %325 = vmatpush.msra.mxu0 0.0
        %326 = vmatpush.msra.mxu0 0.0
        %327 = vmatpush.msra.mxu0 0.0
        %328 = vmatpush.msra.mxu0 0.0
        %329 = vmatpush.msra.mxu0 0.0
        %330 = vmatpush.msra.mxu0 0.0
        %331 = vmatpush.msra.mxu0 0.0
        %332 = vmatpush.msra.mxu0 0.0
        %333 = vmatpush.msra.mxu0 0.0
        %334 = vmatpush.msra.mxu0 0.0
        %335 = vmatpush.msra.mxu0 0.0
        %336 = vmatpush.msra.mxu0 %v319
        %337 = vmatmul.f32.gmra.mxu0 %v205
        %v338 = vpop.f32.mrf.mxu0
        %v339 = vadd.f32 0.0, %v338
        %340 = vmatmul.f32.gmra.mxu0 %v208
        %v341 = vpop.f32.mrf.mxu0
        %v342 = vadd.f32 0.0, %v341
        %343 = vdwg.mxu0
        %s344 = scalar_lea.vmem %s164, 32 [#allocation2]
        %345 = vst.msk [vmem:[%s344] sm:$0xff] %vm236, %v339
        %346 = vst.msk [vmem:[%s344 + $0x8] sm:$0xff] %vm236, %v342
        %s347 = scalar_lea.vmem %s169, 12
        %v348 = vld [vmem:[%s347] sm:$0xf]
        %v350 = vsel %vm176, %v348, 0
        %352 = vmatpush.msra.mxu0 0.0
        %353 = vmatpush.msra.mxu0 0.0
        %354 = vmatpush.msra.mxu0 0.0
        %355 = vmatpush.msra.mxu0 0.0
        %356 = vmatpush.msra.mxu0 0.0
        %357 = vmatpush.msra.mxu0 0.0
        %358 = vmatpush.msra.mxu0 0.0
        %359 = vmatpush.msra.mxu0 0.0
        %360 = vmatpush.msra.mxu0 0.0
        %361 = vmatpush.msra.mxu0 0.0
        %362 = vmatpush.msra.mxu0 0.0
        %363 = vmatpush.msra.mxu0 0.0
        %364 = vmatpush.msra.mxu0 0.0
        %365 = vmatpush.msra.mxu0 0.0
        %366 = vmatpush.msra.mxu0 0.0
        %367 = vmatpush.msra.mxu0 %v182
        %368 = vmatmul.f32.gmra.mxu0 %v350
        %v369 = vpop.f32.mrf.mxu0
        %v370 = vadd.f32 0.0, %v369
        %371 = vdwg.mxu0
        %v373 = vsel %vm180, %v370, 0
        %375 = vmatpush.msra.mxu0 0.0
        %376 = vmatpush.msra.mxu0 0.0
        %377 = vmatpush.msra.mxu0 0.0
        %378 = vmatpush.msra.mxu0 0.0
        %379 = vmatpush.msra.mxu0 0.0
        %380 = vmatpush.msra.mxu0 0.0
        %381 = vmatpush.msra.mxu0 0.0
        %382 = vmatpush.msra.mxu0 0.0
        %383 = vmatpush.msra.mxu0 0.0
        %384 = vmatpush.msra.mxu0 0.0
        %385 = vmatpush.msra.mxu0 0.0
        %386 = vmatpush.msra.mxu0 0.0
        %387 = vmatpush.msra.mxu0 0.0
        %388 = vmatpush.msra.mxu0 0.0
        %389 = vmatpush.msra.mxu0 0.0
        %390 = vmatpush.msra.mxu0 %v373
        %391 = vmatmul.f32.gmra.mxu0 %v205
        %v392 = vpop.f32.mrf.mxu0
        %v393 = vadd.f32 0.0, %v392
        %394 = vmatmul.f32.gmra.mxu0 %v208
        %v395 = vpop.f32.mrf.mxu0
        %v396 = vadd.f32 0.0, %v395
        %397 = vdwg.mxu0
        %s398 = scalar_lea.vmem %s164, 48 [#allocation2]
        %399 = vst.msk [vmem:[%s398] sm:$0xff] %vm236, %v393
        %400 = vst.msk [vmem:[%s398 + $0x8] sm:$0xff] %vm236, %v396
        %s401 = scalar_lea.vmem %s169, 16
        %v402 = vld [vmem:[%s401] sm:$0xf]
        %v404 = vsel %vm176, %v402, 0
        %406 = vmatpush.msra.mxu0 0.0
        %407 = vmatpush.msra.mxu0 0.0
        %408 = vmatpush.msra.mxu0 0.0
        %409 = vmatpush.msra.mxu0 0.0
        %410 = vmatpush.msra.mxu0 0.0
        %411 = vmatpush.msra.mxu0 0.0
        %412 = vmatpush.msra.mxu0 0.0
        %413 = vmatpush.msra.mxu0 0.0
        %414 = vmatpush.msra.mxu0 0.0
        %415 = vmatpush.msra.mxu0 0.0
        %416 = vmatpush.msra.mxu0 0.0
        %417 = vmatpush.msra.mxu0 0.0
        %418 = vmatpush.msra.mxu0 0.0
        %419 = vmatpush.msra.mxu0 0.0
        %420 = vmatpush.msra.mxu0 0.0
        %421 = vmatpush.msra.mxu0 %v182
        %422 = vmatmul.f32.gmra.mxu0 %v404
        %v423 = vpop.f32.mrf.mxu0
        %v424 = vadd.f32 0.0, %v423
        %425 = vdwg.mxu0
        %v427 = vsel %vm180, %v424, 0
        %429 = vmatpush.msra.mxu0 0.0
        %430 = vmatpush.msra.mxu0 0.0
        %431 = vmatpush.msra.mxu0 0.0
        %432 = vmatpush.msra.mxu0 0.0
        %433 = vmatpush.msra.mxu0 0.0
        %434 = vmatpush.msra.mxu0 0.0
        %435 = vmatpush.msra.mxu0 0.0
        %436 = vmatpush.msra.mxu0 0.0
        %437 = vmatpush.msra.mxu0 0.0
        %438 = vmatpush.msra.mxu0 0.0
        %439 = vmatpush.msra.mxu0 0.0
        %440 = vmatpush.msra.mxu0 0.0
        %441 = vmatpush.msra.mxu0 0.0
        %442 = vmatpush.msra.mxu0 0.0
        %443 = vmatpush.msra.mxu0 0.0
        %444 = vmatpush.msra.mxu0 %v427
        %445 = vmatmul.f32.gmra.mxu0 %v205
        %v446 = vpop.f32.mrf.mxu0
        %v447 = vadd.f32 0.0, %v446
        %448 = vmatmul.f32.gmra.mxu0 %v208
        %v449 = vpop.f32.mrf.mxu0
        %v450 = vadd.f32 0.0, %v449
        %451 = vdwg.mxu0
        %s452 = scalar_lea.vmem %s164, 64 [#allocation2]
        %453 = vst.msk [vmem:[%s452] sm:$0xff] %vm236, %v447
        %454 = vst.msk [vmem:[%s452 + $0x8] sm:$0xff] %vm236, %v450
        %s455 = scalar_lea.vmem %s169, 20
        %v456 = vld [vmem:[%s455] sm:$0xf]
        %v458 = vsel %vm176, %v456, 0
        %460 = vmatpush.msra.mxu0 0.0
        %461 = vmatpush.msra.mxu0 0.0
        %462 = vmatpush.msra.mxu0 0.0
        %463 = vmatpush.msra.mxu0 0.0
        %464 = vmatpush.msra.mxu0 0.0
        %465 = vmatpush.msra.mxu0 0.0
        %466 = vmatpush.msra.mxu0 0.0
        %467 = vmatpush.msra.mxu0 0.0
        %468 = vmatpush.msra.mxu0 0.0
        %469 = vmatpush.msra.mxu0 0.0
        %470 = vmatpush.msra.mxu0 0.0
        %471 = vmatpush.msra.mxu0 0.0
        %472 = vmatpush.msra.mxu0 0.0
        %473 = vmatpush.msra.mxu0 0.0
        %474 = vmatpush.msra.mxu0 0.0
        %475 = vmatpush.msra.mxu0 %v182
        %476 = vmatmul.f32.gmra.mxu0 %v458
        %v477 = vpop.f32.mrf.mxu0
        %v478 = vadd.f32 0.0, %v477
        %479 = vdwg.mxu0
        %v481 = vsel %vm180, %v478, 0
        %483 = vmatpush.msra.mxu0 0.0
        %484 = vmatpush.msra.mxu0 0.0
        %485 = vmatpush.msra.mxu0 0.0
        %486 = vmatpush.msra.mxu0 0.0
        %487 = vmatpush.msra.mxu0 0.0
        %488 = vmatpush.msra.mxu0 0.0
        %489 = vmatpush.msra.mxu0 0.0
        %490 = vmatpush.msra.mxu0 0.0
        %491 = vmatpush.msra.mxu0 0.0
        %492 = vmatpush.msra.mxu0 0.0
        %493 = vmatpush.msra.mxu0 0.0
        %494 = vmatpush.msra.mxu0 0.0
        %495 = vmatpush.msra.mxu0 0.0
        %496 = vmatpush.msra.mxu0 0.0
        %497 = vmatpush.msra.mxu0 0.0
        %498 = vmatpush.msra.mxu0 %v481
        %499 = vmatmul.f32.gmra.mxu0 %v205
        %v500 = vpop.f32.mrf.mxu0
        %v501 = vadd.f32 0.0, %v500
        %502 = vmatmul.f32.gmra.mxu0 %v208
        %v503 = vpop.f32.mrf.mxu0
        %v504 = vadd.f32 0.0, %v503
        %505 = vdwg.mxu0
        %s506 = scalar_lea.vmem %s164, 80 [#allocation2]
        %507 = vst.msk [vmem:[%s506] sm:$0xff] %vm236, %v501
        %508 = vst.msk [vmem:[%s506 + $0x8] sm:$0xff] %vm236, %v504
        %s509 = sand.u32 %s93, 1
        %s510 = scalar_lea.sflag [#allocation3], %s509
        %s511 = sand.u32 %s93, 1
        %s512 = smul.addr %s511, 96
        %s513 = scalar_lea.vmem [#allocation2], %s512
        // Predicated region
        $region33: #{deeplab_forward.29} parent=31 // pred_check
          %p514 = pneg %p103
        $region34: #{deeplab_forward.29} parent=31 // pred_check_branch
          %516 = sbr.rel (%p514) target = $region36
        $region35: #{deeplab_forward.29} parent=31 // pred_region
          %s517 = smul.u32 6, %s17
          %519 = vsyncadd %s510, 0
          %s520 = smul.addr %s517, 2
          %s521 = smul.addr %s520, 8
          %s522 = scalar_lea.hbm %s3, %s521
          %s523 = sshll.u32 %s513, 4
          %s524 = int_to_ptr.vmem [resolvable:$true] %s523
          %s525 = sshll.u32 %s522, 4
          %s526 = int_to_ptr.hbm [resolvable:$true] %s525
          %531 = dma.vmem_to_hbm [thread:$0]  %s524, 1536, %s526, %s510, 128, 128, 8
        $region36: #{deeplab_forward.29} parent=31 // pred_fallthru
          _
      $region32: #{deeplab_forward.29} parent=5 // pred_fallthru
        _
      %p532 = scmp.le.s32.totalorder 2, %s12
      // Predicated region
      $region37: #{deeplab_forward.29} parent=5 // pred_check
        %p533 = pneg %p532
      $region38: #{deeplab_forward.29} parent=5 // pred_check_branch
        %535 = sbr.rel (%p533) target = $region40
      $region39: #{deeplab_forward.29} parent=5 // pred_region
        %s536 = ssub.s32 %s12, 2
        // Predicated region
        $region41: #{deeplab_forward.29} parent=39 // pred_check
          %p537 = pneg %p109
        $region42: #{deeplab_forward.29} parent=39 // pred_check_branch
          %539 = sbr.rel (%p537) target = $region44
        $region43: #{deeplab_forward.29} parent=39 // pred_region
          %s540 = sand.u32 %s94, 1
          %s541 = scalar_lea.sflag [#allocation3], %s540
          %s542 = sand.u32 %s94, 1
          %s543 = smul.addr %s542, 96
          %s544 = scalar_lea.vmem [#allocation2], %s543
          %546 = dma.done %s541, 1536
        $region44: #{deeplab_forward.29} parent=39 // pred_fallthru
          _
      $region40: #{deeplab_forward.29} parent=5 // pred_fallthru
        _
    $region6: #{deeplab_forward.29} parent=1 // loop_footer
      %s16 = sadd.s32 1, %s12
    $region7: #{deeplab_forward.29} parent=1 // loop_footer_branch
      %11 = sbr.rel target = $region3
    $region8: #{deeplab_forward.29} parent=1 // loop_exit
      _
    %547 = vsyncpa [#allocation3], 1
    %s548 = scalar_lea.sflag [#allocation3], 1
    %549 = vsyncpa %s548, 1

</llo_original>
